<compile_context>
chip_gen: v6e
topology: v6e:2x2x1
jax: 0.10.0
libtpu: 0.0.40
codegen_flags: <defaults>
</compile_context>

<pallas_src>
import math
from functools import partial

import jax
import jax.numpy as jnp
from jax.experimental import pallas as pl
from jax.experimental.pallas import tpu as pltpu


# ---------------------------------------------------------------------------
# Conv geometry / prep: 3x3 conv as a sum of shifted 1x1 GEMMs (no im2col)
# ---------------------------------------------------------------------------

def _conv_geometry(h, w, kh, kw, stride, padding):
    s = stride
    ho = (h + 2 * padding - kh) // s + 1
    wo = (w + 2 * padding - kw) // s + 1
    hq = ho + (kh - 1) // s
    wq = wo + (kw - 1) // s
    return ho, wo, hq, wq


def _conv_prep(x_nchw, kh, kw, stride, padding):
    """Pad (+ phase-decompose for stride>1) an NCHW input once in the wrapper.

    Returns (B, s*s*C, Hq, Wq).  For stride 1 this is just the spatially padded
    input (no transpose).  For stride s the s*s phases are stacked along the
    channel dim so the kernel can take plain (unstrided) shifted windows per tap.
    """
    n, c, h, w = x_nchw.shape
    s = stride
    ho, wo, hq, wq = _conv_geometry(h, w, kh, kw, stride, padding)
    hp, wp = s * hq, s * wq
    xp = jnp.pad(x_nchw, ((0, 0), (0, 0),
                          (padding, hp - h - padding),
                          (padding, wp - w - padding)))
    if s > 1:
        xp = xp.reshape(n, c, hq, s, wq, s)
        xp = xp.transpose(0, 3, 5, 1, 2, 4).reshape(n, s * s * c, hq, wq)
    return xp


def _conv_taps(xph_ref, w_ref, *, cin, kh, kw, stride, ho, wo):
    """sum_t W[t] @ shifted_window_t  ->  (Cout, ho*wo) float32 accumulator."""
    s = stride
    acc = None
    t = 0
    for i in range(kh):
        iq, ir = i // s, i % s
        for j in range(kw):
            jq, jr = j // s, j % s
            ph = ir * s + jr
            win = xph_ref[ph * cin:(ph + 1) * cin, iq:iq + ho, jq:jq + wo]  # (cin, ho, wo)
            a = win.reshape(cin, ho * wo).astype(jnp.bfloat16)
            contrib = jnp.dot(w_ref[t], a, preferred_element_type=jnp.float32)
            acc = contrib if acc is None else acc + contrib
            t += 1
    return acc


def _full_spec(a):
    """BlockSpec covering the whole (small) array; constant index -> no re-DMA."""
    return pl.BlockSpec(a.shape, lambda b, _nd=a.ndim: (0,) * _nd)


# ---------------------------------------------------------------------------
# Fused BasicBlock kernel: conv1(+BN+ReLU) -> conv2(+BN) -> +skip -> ReLU
# ---------------------------------------------------------------------------

def _basic_block_kernel(*refs, cfg):
    if cfg["has_skip_conv"]:
        xph_ref, w1_ref, b1_ref, w2_ref, b2_ref, wsk_ref, bsk_ref, o_ref, ypad_ref = refs
    else:
        xph_ref, w1_ref, b1_ref, w2_ref, b2_ref, o_ref, ypad_ref = refs
        wsk_ref = bsk_ref = None

    cin, cout = cfg["cin"], cfg["cout"]
    s, pad = cfg["stride"], cfg["padding"]
    ho, wo = cfg["ho"], cfg["wo"]
    ho2, wo2 = cfg["ho2"], cfg["wo2"]

    # conv1 (3x3, stride s, padding pad) with folded BN, then ReLU
    y = _conv_taps(xph_ref, w1_ref, cin=cin, kh=3, kw=3, stride=s, ho=ho, wo=wo)
    y = jnp.maximum(y + b1_ref[...], 0.0)                       # (cout, ho*wo) f32

    # conv1 output never leaves VMEM: write it into a zero-padded scratch for conv2
    ypad_ref[...] = jnp.zeros_like(ypad_ref)
    ypad_ref[:, pad:pad + ho, pad:pad + wo] = y.reshape(cout, ho, wo)

    # conv2 (3x3, stride 1, padding pad) with folded BN
    out = _conv_taps(ypad_ref, w2_ref, cin=cout, kh=3, kw=3, stride=1, ho=ho2, wo=wo2)
    out = out + b2_ref[...]

    # skip path from the same padded input block (identity, or 1x1 stride-s conv)
    pr = pad % s
    off = pad // s
    ph = pr * s + pr
    skip_win = xph_ref[ph * cin:(ph + 1) * cin, off:off + ho2, off:off + wo2]
    skip = skip_win.reshape(cin, ho2 * wo2)
    if cfg["has_skip_conv"]:
        skip = jnp.dot(wsk_ref[...], skip.astype(jnp.bfloat16),
                       preferred_element_type=jnp.float32) + bsk_ref[...]

    o_ref[...] = jnp.maximum(out + skip, 0.0).astype(o_ref.dtype)


def basic_block(x, w, cfg):
    """x: (B, Cin, H, W) f32  ->  (B, Cout, Ho*Wo) f32 (NCHW-flat).  One pallas_call."""
    n, cin, h, wid = x.shape
    s, pad = cfg["stride"], cfg["padding"]
    cout = cfg["out_channels"]
    ho, wo, _, _ = _conv_geometry(h, wid, 3, 3, s, pad)
    ho2, wo2, _, _ = _conv_geometry(ho, wo, 3, 3, 1, pad)
    xph = _conv_prep(x, 3, 3, s, pad)                           # (B, s*s*Cin, Hq, Wq)

    kcfg = dict(cin=cin, cout=cout, stride=s, padding=pad,
                ho=ho, wo=wo, ho2=ho2, wo2=wo2,
                has_skip_conv=w["skip_w"] is not None)

    in_specs = [pl.BlockSpec((pl.Squeezed(),) + xph.shape[1:], lambda b: (b, 0, 0, 0)),
                _full_spec(w["conv1_w"]), _full_spec(w["conv1_b"]),
                _full_spec(w["conv2_w"]), _full_spec(w["conv2_b"])]
    inputs = [xph, w["conv1_w"], w["conv1_b"], w["conv2_w"], w["conv2_b"]]
    if kcfg["has_skip_conv"]:
        in_specs += [_full_spec(w["skip_w"]), _full_spec(w["skip_b"])]
        inputs += [w["skip_w"], w["skip_b"]]

    out = pl.pallas_call(
        partial(_basic_block_kernel, cfg=kcfg),
        out_shape=jax.ShapeDtypeStruct((n, cout, ho2 * wo2), jnp.float32),
        grid=(n,),
        in_specs=in_specs,
        out_specs=pl.BlockSpec((pl.Squeezed(), cout, ho2 * wo2), lambda b: (b, 0, 0)),
        scratch_shapes=[pltpu.VMEM((cout, ho + 2 * pad, wo + 2 * pad), jnp.float32)],
        compiler_params=pltpu.CompilerParams(dimension_semantics=("parallel",)),
    )(*inputs)
    return out, ho2, wo2


# ---------------------------------------------------------------------------
# Single 3x3 conv kernel (used by Downsample, stride 2)
# ---------------------------------------------------------------------------

def _conv_kernel(xph_ref, w_ref, b_ref, o_ref, *, cin, stride, ho, wo):
    acc = _conv_taps(xph_ref, w_ref, cin=cin, kh=3, kw=3, stride=stride, ho=ho, wo=wo)
    o_ref[...] = (acc + b_ref[...]).astype(o_ref.dtype)


def conv3x3(x, w, b, stride, padding):
    """x: (B, C, H, W) f32 -> (B, Cout, Ho*Wo) f32 (NCHW-flat).  One pallas_call."""
    n, cin, h, wid = x.shape
    cout = w.shape[1]
    ho, wo, _, _ = _conv_geometry(h, wid, 3, 3, stride, padding)
    xph = _conv_prep(x, 3, 3, stride, padding)
    out = pl.pallas_call(
        partial(_conv_kernel, cin=cin, stride=stride, ho=ho, wo=wo),
        out_shape=jax.ShapeDtypeStruct((n, cout, ho * wo), jnp.float32),
        grid=(n,),
        in_specs=[pl.BlockSpec((pl.Squeezed(),) + xph.shape[1:], lambda bb: (bb, 0, 0, 0)),
                  _full_spec(w), _full_spec(b)],
        out_specs=pl.BlockSpec((pl.Squeezed(), cout, ho * wo), lambda bb: (bb, 0, 0)),
        compiler_params=pltpu.CompilerParams(dimension_semantics=("parallel",)),
    )(xph, w, b)
    return out, ho, wo


# ---------------------------------------------------------------------------
# Fused transformer encoder layer (post-LN):
#   MHA -> add & LN -> Linear/ReLU/Linear -> add & LN, one pallas_call per layer
# ---------------------------------------------------------------------------

def _encoder_layer_kernel(x_ref, wqkv_ref, bqkv_ref, wo_ref, bo_ref,
                          ln1g_ref, ln1b_ref, w1_ref, b1_ref, w2_ref, b2_ref,
                          ln2g_ref, ln2b_ref, o_ref, *, n_heads, eps):
    S, D = x_ref.shape
    dh = D // n_heads
    scale = 1.0 / math.sqrt(dh)

    x = x_ref[...]                                              # (S, D) f32 residual
    xb = x.astype(jnp.bfloat16)

    # Fused QKV projection (one GEMM, weights pre-concatenated & bf16).
    qkv = jnp.dot(xb, wqkv_ref[...], preferred_element_type=jnp.float32) + bqkv_ref[...]

    # Per-head attention with the output projection folded into the head loop:
    #   concat_h(o_h) @ Wo == sum_h o_h @ Wo[h*dh:(h+1)*dh]  -> no head concat / relayout.
    proj = jnp.zeros((S, D), jnp.float32)
    for h in range(n_heads):
        lo = h * dh
        qh = qkv[:, lo:lo + dh].astype(jnp.bfloat16)
        kh = qkv[:, D + lo:D + lo + dh].astype(jnp.bfloat16)
        vh = qkv[:, 2 * D + lo:2 * D + lo + dh].astype(jnp.bfloat16)
        logits = jax.lax.dot_general(qh, kh, (((1,), (1,)), ((), ())),
                                     preferred_element_type=jnp.float32) * scale
        m = jnp.max(logits, axis=-1, keepdims=True)
        p = jnp.exp(logits - m)
        p = p * pl.reciprocal(jnp.sum(p, axis=-1, keepdims=True), approx=True)
        oh = jnp.dot(p.astype(jnp.bfloat16), vh, preferred_element_type=jnp.float32)
        proj += jnp.dot(oh.astype(jnp.bfloat16), wo_ref[lo:lo + dh, :],
                        preferred_element_type=jnp.float32)

    # Add & LayerNorm 1 (block covers the full feature dim -> exact mean/var).
    t = proj + bo_ref[...] + x
    mu = jnp.mean(t, axis=-1, keepdims=True)
    c = t - mu
    var = jnp.mean(c * c, axis=-1, keepdims=True)
    t = c * jax.lax.rsqrt(var + eps) * ln1g_ref[...] + ln1b_ref[...]

    # FFN (Linear -> ReLU -> Linear) + Add & LayerNorm 2.
    ff = jnp.maximum(jnp.dot(t.astype(jnp.bfloat16), w1_ref[...],
                             preferred_element_type=jnp.float32) + b1_ref[...], 0.0)
    u = jnp.dot(ff.astype(jnp.bfloat16), w2_ref[...],
                preferred_element_type=jnp.float32) + b2_ref[...] + t
    mu2 = jnp.mean(u, axis=-1, keepdims=True)
    c2 = u - mu2
    var2 = jnp.mean(c2 * c2, axis=-1, keepdims=True)
    o_ref[...] = (c2 * jax.lax.rsqrt(var2 + eps) * ln2g_ref[...]
                  + ln2b_ref[...]).astype(o_ref.dtype)


def encoder_layer(x, lw, n_heads, eps=1e-5):
    """x: (B, S, D) f32 -> (B, S, D) f32.  One pallas_call (grid over batch)."""
    b, s, d = x.shape
    xspec = pl.BlockSpec((pl.Squeezed(), s, d), lambda bb: (bb, 0, 0))
    ws = [lw["wqkv"], lw["bqkv"], lw["wo"], lw["bo"], lw["ln1_g"], lw["ln1_b"],
          lw["w1"], lw["b1"], lw["w2"], lw["b2"], lw["ln2_g"], lw["ln2_b"]]
    return pl.pallas_call(
        partial(_encoder_layer_kernel, n_heads=n_heads, eps=eps),
        out_shape=jax.ShapeDtypeStruct((b, s, d), jnp.float32),
        grid=(b,),
        in_specs=[xspec] + [_full_spec(a) for a in ws],
        out_specs=xspec,
        compiler_params=pltpu.CompilerParams(dimension_semantics=("parallel",)),
    )(x, *ws)


# ---------------------------------------------------------------------------
# Full module forward
# ---------------------------------------------------------------------------

def trans_encoder_block(x, weights, cfg):
    """Forward of TransEncoderBlock.  x: (B, C_in, H, W) NCHW f32."""
    p_sq = cfg["patch_dim"] ** 2
    cout = cfg["out_channels"]
    b = x.shape[0]

    # BasicBlock (single fused kernel), output NCHW-flat -> free reshapes below.
    res_flat, ho, wo = basic_block(x, weights["resnet"], cfg)   # (B, cout, ho*wo)
    res_o = res_flat.reshape(b, cout, ho, wo)

    # x.view(b, c*p, h*w//p).permute(0, 2, 1): split is a free bitcast, permute is one
    # small XLA transpose (module-mandated layout boundary).
    seq = (ho * wo) // p_sq
    d_model = cout * p_sq
    t = res_flat.reshape(b, d_model, seq).transpose(0, 2, 1)    # (B, seq, d_model)

    for lw in weights["transformer"]:
        t = encoder_layer(t, lw, cfg["n_heads"])
    tran_o = t

    # permute back + reshape to NCHW, then Downsample (conv3x3 stride 2 padding 1).
    xd = t.transpose(0, 2, 1).reshape(b, cout, ho, wo)
    down_flat, hd, wd = conv3x3(xd, weights["down_w"], weights["down_b"],
                                stride=2, padding=1)
    out = down_flat.reshape(b, cout, hd, wd)
    return out, res_o, tran_o


# ---------------------------------------------------------------------------
# Deterministic parameters: BN folded, weights pre-packed / pre-cast to bf16 ONCE
# ---------------------------------------------------------------------------

def fold_bn(w, b, gamma, beta, mean, var, eps=1e-5):
    sc = gamma / jnp.sqrt(var + eps)
    return w * sc[:, None, None, None], (b - mean) * sc + beta


def _pack_conv3x3(w, b):
    """(Cout, Cin, 3, 3) f32 -> tap-major (9, Cout, Cin) bf16; bias -> (Cout, 1) f32."""
    cout, cin = w.shape[0], w.shape[1]
    wp = jnp.transpose(w, (2, 3, 0, 1)).reshape(9, cout, cin).astype(jnp.bfloat16)
    return wp, b.reshape(cout, 1).astype(jnp.float32)


def make_params(key, in_channels, out_channels, patch_dim, n_heads, stride,
                padding, resnet_bias, dim_ff, num_layers):
    d_model = patch_dim * patch_dim * out_channels
    keys = iter(jax.random.split(key, 128))

    def w(shape, scale=0.05):
        return jax.random.normal(next(keys), shape, dtype=jnp.float32) * scale

    zeros = lambda s: jnp.zeros(s, jnp.float32)
    ones = lambda s: jnp.ones(s, jnp.float32)

    # BasicBlock convs with eval-mode BatchNorm folded in.
    c1w = w((out_channels, in_channels, 3, 3))
    c1b = w((out_channels,)) if resnet_bias else zeros((out_channels,))
    c1w, c1b = fold_bn(c1w, c1b, ones((out_channels,)), zeros((out_channels,)),
                       zeros((out_channels,)), ones((out_channels,)))
    c2w = w((out_channels, out_channels, 3, 3))
    c2b = w((out_channels,)) if resnet_bias else zeros((out_channels,))
    c2w, c2b = fold_bn(c2w, c2b, ones((out_channels,)), zeros((out_channels,)),
                       zeros((out_channels,)), ones((out_channels,)))
    w1p, b1p = _pack_conv3x3(c1w, c1b)
    w2p, b2p = _pack_conv3x3(c2w, c2b)

    has_skip = (in_channels != out_channels) or (stride != 1)
    resnet = {
        "conv1_w": w1p, "conv1_b": b1p,
        "conv2_w": w2p, "conv2_b": b2p,
        "skip_w": (w((out_channels, in_channels, 1, 1)).reshape(out_channels, in_channels)
                   .astype(jnp.bfloat16) if has_skip else None),
        "skip_b": (zeros((out_channels, 1)) if has_skip else None),
    }

    transformer = []
    for _ in range(num_layers):
        wq, wk, wv = w((d_model, d_model)), w((d_model, d_model)), w((d_model, d_model))
        transformer.append({
            "wqkv": jnp.concatenate([wq, wk, wv], axis=1).astype(jnp.bfloat16),
            "bqkv": zeros((1, 3 * d_model)),
            "wo": w((d_model, d_model)).astype(jnp.bfloat16), "bo": zeros((1, d_model)),
            "ln1_g": ones((1, d_model)), "ln1_b": zeros((1, d_model)),
            "w1": w((d_model, dim_ff)).astype(jnp.bfloat16), "b1": zeros((1, dim_ff)),
            "w2": w((dim_ff, d_model)).astype(jnp.bfloat16), "b2": zeros((1, d_model)),
            "ln2_g": ones((1, d_model)), "ln2_b": zeros((1, d_model)),
        })

    dwp, dbp = _pack_conv3x3(w((out_channels, out_channels, 3, 3)), zeros((out_channels,)))

    weights = {"resnet": resnet, "transformer": transformer, "down_w": dwp, "down_b": dbp}
    cfg = {"in_channels": in_channels, "out_channels": out_channels,
           "patch_dim": patch_dim, "n_heads": n_heads,
           "stride": stride, "padding": padding}
    return weights, cfg


# ---------------------------------------------------------------------------
# Main
# ---------------------------------------------------------------------------

if __name__ == "__main__":
    key = jax.random.PRNGKey(0)
    k_x, k_p = jax.random.split(key)

    # Module config: in=4, out=4, patch_dim=2 -> p=4, d_model=16, heads=2,
    # stride=1, padding=1, no resnet bias, dim_ff=32, 1 layer.
    B, C_IN, C_OUT, H, W = 2, 4, 4, 16, 16
    weights, cfg = make_params(k_p, in_channels=C_IN, out_channels=C_OUT, patch_dim=2,
                               n_heads=2, stride=1, padding=1, resnet_bias=False,
                               dim_ff=32, num_layers=1)

    x = jax.random.normal(k_x, (B, C_IN, H, W), dtype=jnp.float32)

    fwd = jax.jit(lambda xx, ww: trans_encoder_block(xx, ww, cfg))
    out, res_o, tran_o = fwd(x, weights)
    jax.block_until_ready((out, res_o, tran_o))

    assert out.shape == (B, C_OUT, H // 2, W // 2)
    assert res_o.shape == (B, C_OUT, H, W)
    assert tran_o.shape == (B, (H * W) // 4, 4 * C_OUT)
    assert bool(jnp.all(jnp.isfinite(out)))
    print("KERNEL_OK")
</pallas_src>

<mosaic_0001>
module attributes {stable_mosaic.version = 11 : i64} {
  func.func @_basic_block_kernel(%arg0: i32, %arg1: memref<1x4x18x18xf32, #tpu.memory_space<vmem>>, %arg2: memref<9x4x4xbf16, #tpu.memory_space<vmem>>, %arg3: memref<4x1xf32, #tpu.memory_space<vmem>>, %arg4: memref<9x4x4xbf16, #tpu.memory_space<vmem>>, %arg5: memref<4x1xf32, #tpu.memory_space<vmem>>, %arg6: memref<1x4x256xf32, #tpu.memory_space<vmem>>, %arg7: memref<4x18x18xf32, #tpu.memory_space<vmem>>) attributes {dimension_semantics = [#tpu.dimension_semantics<parallel>], iteration_bounds = array<i64: 2>, scalar_prefetch = 0 : i64, scratch_operands = 1 : i64, tpu.core_type = #tpu.core_type<tc>, window_params = [{transform_indices = @transform_0, window_bounds = array<i64: 1, 4, 18, 18>}, {pipeline_mode = #tpu.pipeline_mode<synchronous>, transform_indices = @transform_1, window_bounds = array<i64: 9, 4, 4>}, {pipeline_mode = #tpu.pipeline_mode<synchronous>, transform_indices = @transform_2, window_bounds = array<i64: 4, 1>}, {pipeline_mode = #tpu.pipeline_mode<synchronous>, transform_indices = @transform_3, window_bounds = array<i64: 9, 4, 4>}, {pipeline_mode = #tpu.pipeline_mode<synchronous>, transform_indices = @transform_4, window_bounds = array<i64: 4, 1>}, {transform_indices = @transform_5, window_bounds = array<i64: 1, 4, 256>}]} {
    %c0 = arith.constant 0 : index
    %c0_0 = arith.constant 0 : index
    %c0_1 = arith.constant 0 : index
    %c0_2 = arith.constant 0 : index
    %0 = vector.load %arg1[%c0, %c0_0, %c0_1, %c0_2] : memref<1x4x18x18xf32, #tpu.memory_space<vmem>>, vector<1x4x16x16xf32>
    %1 = vector.shape_cast %0 : vector<1x4x16x16xf32> to vector<4x16x16xf32>
    %2 = vector.shape_cast %1 : vector<4x16x16xf32> to vector<4x256xf32>
    %3 = arith.truncf %2 : vector<4x256xf32> to vector<4x256xbf16>
    %c0_3 = arith.constant 0 : index
    %c0_4 = arith.constant 0 : index
    %c0_5 = arith.constant 0 : index
    %4 = vector.load %arg2[%c0_3, %c0_4, %c0_5] : memref<9x4x4xbf16, #tpu.memory_space<vmem>>, vector<1x4x4xbf16>
    %5 = vector.shape_cast %4 : vector<1x4x4xbf16> to vector<4x4xbf16>
    %cst = arith.constant dense<0.000000e+00> : vector<4x256xf32>
    %6 = tpu.matmul %5, %3, %cst {dimension_numbers = #tpu.dot_dimension_numbers<[1], [0], [0], [1], [0, 0, 1, 1], [], []>} : vector<4x4xbf16>, vector<4x256xbf16>, vector<4x256xf32> -> vector<4x256xf32>
    %c0_6 = arith.constant 0 : index
    %c0_7 = arith.constant 0 : index
    %c0_8 = arith.constant 0 : index
    %c1 = arith.constant 1 : index
    %7 = vector.load %arg1[%c0_6, %c0_7, %c0_8, %c1] : memref<1x4x18x18xf32, #tpu.memory_space<vmem>>, vector<1x4x16x16xf32>
    %8 = vector.shape_cast %7 : vector<1x4x16x16xf32> to vector<4x16x16xf32>
    %9 = vector.shape_cast %8 : vector<4x16x16xf32> to vector<4x256xf32>
    %10 = arith.truncf %9 : vector<4x256xf32> to vector<4x256xbf16>
    %c1_9 = arith.constant 1 : index
    %c0_10 = arith.constant 0 : index
    %c0_11 = arith.constant 0 : index
    %11 = vector.load %arg2[%c1_9, %c0_10, %c0_11] : memref<9x4x4xbf16, #tpu.memory_space<vmem>>, vector<1x4x4xbf16>
    %12 = vector.shape_cast %11 : vector<1x4x4xbf16> to vector<4x4xbf16>
    %cst_12 = arith.constant dense<0.000000e+00> : vector<4x256xf32>
    %13 = tpu.matmul %12, %10, %cst_12 {dimension_numbers = #tpu.dot_dimension_numbers<[1], [0], [0], [1], [0, 0, 1, 1], [], []>} : vector<4x4xbf16>, vector<4x256xbf16>, vector<4x256xf32> -> vector<4x256xf32>
    %14 = arith.addf %6, %13 : vector<4x256xf32>
    %c0_13 = arith.constant 0 : index
    %c0_14 = arith.constant 0 : index
    %c0_15 = arith.constant 0 : index
    %c2 = arith.constant 2 : index
    %15 = vector.load %arg1[%c0_13, %c0_14, %c0_15, %c2] : memref<1x4x18x18xf32, #tpu.memory_space<vmem>>, vector<1x4x16x16xf32>
    %16 = vector.shape_cast %15 : vector<1x4x16x16xf32> to vector<4x16x16xf32>
    %17 = vector.shape_cast %16 : vector<4x16x16xf32> to vector<4x256xf32>
    %18 = arith.truncf %17 : vector<4x256xf32> to vector<4x256xbf16>
    %c2_16 = arith.constant 2 : index
    %c0_17 = arith.constant 0 : index
    %c0_18 = arith.constant 0 : index
    %19 = vector.load %arg2[%c2_16, %c0_17, %c0_18] : memref<9x4x4xbf16, #tpu.memory_space<vmem>>, vector<1x4x4xbf16>
    %20 = vector.shape_cast %19 : vector<1x4x4xbf16> to vector<4x4xbf16>
    %cst_19 = arith.constant dense<0.000000e+00> : vector<4x256xf32>
    %21 = tpu.matmul %20, %18, %cst_19 {dimension_numbers = #tpu.dot_dimension_numbers<[1], [0], [0], [1], [0, 0, 1, 1], [], []>} : vector<4x4xbf16>, vector<4x256xbf16>, vector<4x256xf32> -> vector<4x256xf32>
    %22 = arith.addf %14, %21 : vector<4x256xf32>
    %c0_20 = arith.constant 0 : index
    %c0_21 = arith.constant 0 : index
    %c1_22 = arith.constant 1 : index
    %c0_23 = arith.constant 0 : index
    %23 = vector.load %arg1[%c0_20, %c0_21, %c1_22, %c0_23] : memref<1x4x18x18xf32, #tpu.memory_space<vmem>>, vector<1x4x16x16xf32>
    %24 = vector.shape_cast %23 : vector<1x4x16x16xf32> to vector<4x16x16xf32>
    %25 = vector.shape_cast %24 : vector<4x16x16xf32> to vector<4x256xf32>
    %26 = arith.truncf %25 : vector<4x256xf32> to vector<4x256xbf16>
    %c3 = arith.constant 3 : index
    %c0_24 = arith.constant 0 : index
    %c0_25 = arith.constant 0 : index
    %27 = vector.load %arg2[%c3, %c0_24, %c0_25] : memref<9x4x4xbf16, #tpu.memory_space<vmem>>, vector<1x4x4xbf16>
    %28 = vector.shape_cast %27 : vector<1x4x4xbf16> to vector<4x4xbf16>
    %cst_26 = arith.constant dense<0.000000e+00> : vector<4x256xf32>
    %29 = tpu.matmul %28, %26, %cst_26 {dimension_numbers = #tpu.dot_dimension_numbers<[1], [0], [0], [1], [0, 0, 1, 1], [], []>} : vector<4x4xbf16>, vector<4x256xbf16>, vector<4x256xf32> -> vector<4x256xf32>
    %30 = arith.addf %22, %29 : vector<4x256xf32>
    %c0_27 = arith.constant 0 : index
    %c0_28 = arith.constant 0 : index
    %c1_29 = arith.constant 1 : index
    %c1_30 = arith.constant 1 : index
    %31 = vector.load %arg1[%c0_27, %c0_28, %c1_29, %c1_30] : memref<1x4x18x18xf32, #tpu.memory_space<vmem>>, vector<1x4x16x16xf32>
    %32 = vector.shape_cast %31 : vector<1x4x16x16xf32> to vector<4x16x16xf32>
    %33 = vector.shape_cast %32 : vector<4x16x16xf32> to vector<4x256xf32>
    %34 = arith.truncf %33 : vector<4x256xf32> to vector<4x256xbf16>
    %c4 = arith.constant 4 : index
    %c0_31 = arith.constant 0 : index
    %c0_32 = arith.constant 0 : index
    %35 = vector.load %arg2[%c4, %c0_31, %c0_32] : memref<9x4x4xbf16, #tpu.memory_space<vmem>>, vector<1x4x4xbf16>
    %36 = vector.shape_cast %35 : vector<1x4x4xbf16> to vector<4x4xbf16>
    %cst_33 = arith.constant dense<0.000000e+00> : vector<4x256xf32>
    %37 = tpu.matmul %36, %34, %cst_33 {dimension_numbers = #tpu.dot_dimension_numbers<[1], [0], [0], [1], [0, 0, 1, 1], [], []>} : vector<4x4xbf16>, vector<4x256xbf16>, vector<4x256xf32> -> vector<4x256xf32>
    %38 = arith.addf %30, %37 : vector<4x256xf32>
    %c0_34 = arith.constant 0 : index
    %c0_35 = arith.constant 0 : index
    %c1_36 = arith.constant 1 : index
    %c2_37 = arith.constant 2 : index
    %39 = vector.load %arg1[%c0_34, %c0_35, %c1_36, %c2_37] : memref<1x4x18x18xf32, #tpu.memory_space<vmem>>, vector<1x4x16x16xf32>
    %40 = vector.shape_cast %39 : vector<1x4x16x16xf32> to vector<4x16x16xf32>
    %41 = vector.shape_cast %40 : vector<4x16x16xf32> to vector<4x256xf32>
    %42 = arith.truncf %41 : vector<4x256xf32> to vector<4x256xbf16>
    %c5 = arith.constant 5 : index
    %c0_38 = arith.constant 0 : index
    %c0_39 = arith.constant 0 : index
    %43 = vector.load %arg2[%c5, %c0_38, %c0_39] : memref<9x4x4xbf16, #tpu.memory_space<vmem>>, vector<1x4x4xbf16>
    %44 = vector.shape_cast %43 : vector<1x4x4xbf16> to vector<4x4xbf16>
    %cst_40 = arith.constant dense<0.000000e+00> : vector<4x256xf32>
    %45 = tpu.matmul %44, %42, %cst_40 {dimension_numbers = #tpu.dot_dimension_numbers<[1], [0], [0], [1], [0, 0, 1, 1], [], []>} : vector<4x4xbf16>, vector<4x256xbf16>, vector<4x256xf32> -> vector<4x256xf32>
    %46 = arith.addf %38, %45 : vector<4x256xf32>
    %c0_41 = arith.constant 0 : index
    %c0_42 = arith.constant 0 : index
    %c2_43 = arith.constant 2 : index
    %c0_44 = arith.constant 0 : index
    %47 = vector.load %arg1[%c0_41, %c0_42, %c2_43, %c0_44] : memref<1x4x18x18xf32, #tpu.memory_space<vmem>>, vector<1x4x16x16xf32>
    %48 = vector.shape_cast %47 : vector<1x4x16x16xf32> to vector<4x16x16xf32>
    %49 = vector.shape_cast %48 : vector<4x16x16xf32> to vector<4x256xf32>
    %50 = arith.truncf %49 : vector<4x256xf32> to vector<4x256xbf16>
    %c6 = arith.constant 6 : index
    %c0_45 = arith.constant 0 : index
    %c0_46 = arith.constant 0 : index
    %51 = vector.load %arg2[%c6, %c0_45, %c0_46] : memref<9x4x4xbf16, #tpu.memory_space<vmem>>, vector<1x4x4xbf16>
    %52 = vector.shape_cast %51 : vector<1x4x4xbf16> to vector<4x4xbf16>
    %cst_47 = arith.constant dense<0.000000e+00> : vector<4x256xf32>
    %53 = tpu.matmul %52, %50, %cst_47 {dimension_numbers = #tpu.dot_dimension_numbers<[1], [0], [0], [1], [0, 0, 1, 1], [], []>} : vector<4x4xbf16>, vector<4x256xbf16>, vector<4x256xf32> -> vector<4x256xf32>
    %54 = arith.addf %46, %53 : vector<4x256xf32>
    %c0_48 = arith.constant 0 : index
    %c0_49 = arith.constant 0 : index
    %c2_50 = arith.constant 2 : index
    %c1_51 = arith.constant 1 : index
    %55 = vector.load %arg1[%c0_48, %c0_49, %c2_50, %c1_51] : memref<1x4x18x18xf32, #tpu.memory_space<vmem>>, vector<1x4x16x16xf32>
    %56 = vector.shape_cast %55 : vector<1x4x16x16xf32> to vector<4x16x16xf32>
    %57 = vector.shape_cast %56 : vector<4x16x16xf32> to vector<4x256xf32>
    %58 = arith.truncf %57 : vector<4x256xf32> to vector<4x256xbf16>
    %c7 = arith.constant 7 : index
    %c0_52 = arith.constant 0 : index
    %c0_53 = arith.constant 0 : index
    %59 = vector.load %arg2[%c7, %c0_52, %c0_53] : memref<9x4x4xbf16, #tpu.memory_space<vmem>>, vector<1x4x4xbf16>
    %60 = vector.shape_cast %59 : vector<1x4x4xbf16> to vector<4x4xbf16>
    %cst_54 = arith.constant dense<0.000000e+00> : vector<4x256xf32>
    %61 = tpu.matmul %60, %58, %cst_54 {dimension_numbers = #tpu.dot_dimension_numbers<[1], [0], [0], [1], [0, 0, 1, 1], [], []>} : vector<4x4xbf16>, vector<4x256xbf16>, vector<4x256xf32> -> vector<4x256xf32>
    %62 = arith.addf %54, %61 : vector<4x256xf32>
    %c0_55 = arith.constant 0 : index
    %c0_56 = arith.constant 0 : index
    %c2_57 = arith.constant 2 : index
    %c2_58 = arith.constant 2 : index
    %63 = vector.load %arg1[%c0_55, %c0_56, %c2_57, %c2_58] : memref<1x4x18x18xf32, #tpu.memory_space<vmem>>, vector<1x4x16x16xf32>
    %64 = vector.shape_cast %63 : vector<1x4x16x16xf32> to vector<4x16x16xf32>
    %65 = vector.shape_cast %64 : vector<4x16x16xf32> to vector<4x256xf32>
    %66 = arith.truncf %65 : vector<4x256xf32> to vector<4x256xbf16>
    %c8 = arith.constant 8 : index
    %c0_59 = arith.constant 0 : index
    %c0_60 = arith.constant 0 : index
    %67 = vector.load %arg2[%c8, %c0_59, %c0_60] : memref<9x4x4xbf16, #tpu.memory_space<vmem>>, vector<1x4x4xbf16>
    %68 = vector.shape_cast %67 : vector<1x4x4xbf16> to vector<4x4xbf16>
    %cst_61 = arith.constant dense<0.000000e+00> : vector<4x256xf32>
    %69 = tpu.matmul %68, %66, %cst_61 {dimension_numbers = #tpu.dot_dimension_numbers<[1], [0], [0], [1], [0, 0, 1, 1], [], []>} : vector<4x4xbf16>, vector<4x256xbf16>, vector<4x256xf32> -> vector<4x256xf32>
    %70 = arith.addf %62, %69 : vector<4x256xf32>
    %c0_62 = arith.constant 0 : index
    %c0_63 = arith.constant 0 : index
    %71 = vector.load %arg3[%c0_62, %c0_63] : memref<4x1xf32, #tpu.memory_space<vmem>>, vector<4x1xf32>
    %72 = vector.broadcast %71 : vector<4x1xf32> to vector<4x256xf32>
    %73 = arith.addf %70, %72 : vector<4x256xf32>
    %cst_64 = arith.constant 0.000000e+00 : f32
    %74 = vector.broadcast %cst_64 : f32 to vector<4x256xf32>
    %75 = arith.maximumf %73, %74 : vector<4x256xf32>
    %cst_65 = arith.constant 0.000000e+00 : f32
    %76 = vector.broadcast %cst_65 : f32 to vector<4x18x18xf32>
    %c0_66 = arith.constant 0 : index
    %c0_67 = arith.constant 0 : index
    %c0_68 = arith.constant 0 : index
    %77 = vector.load %arg7[%c0_66, %c0_67, %c0_68] : memref<4x18x18xf32, #tpu.memory_space<vmem>>, vector<4x18x18xf32>
    tpu.vector_store %arg7[%c0_66, %c0_67, %c0_68], %76 {strides = array<i32>} : memref<4x18x18xf32, #tpu.memory_space<vmem>>, vector<4x18x18xf32>,
    %78 = vector.shape_cast %75 : vector<4x256xf32> to vector<4x16x16xf32>
    %c0_69 = arith.constant 0 : index
    %c1_70 = arith.constant 1 : index
    %c1_71 = arith.constant 1 : index
    %79 = vector.load %arg7[%c0_69, %c1_70, %c1_71] : memref<4x18x18xf32, #tpu.memory_space<vmem>>, vector<4x16x16xf32>
    tpu.vector_store %arg7[%c0_69, %c1_70, %c1_71], %78 {strides = array<i32>} : memref<4x18x18xf32, #tpu.memory_space<vmem>>, vector<4x16x16xf32>,
    %c0_72 = arith.constant 0 : index
    %c0_73 = arith.constant 0 : index
    %c0_74 = arith.constant 0 : index
    %80 = vector.load %arg7[%c0_72, %c0_73, %c0_74] : memref<4x18x18xf32, #tpu.memory_space<vmem>>, vector<4x16x16xf32>
    %81 = vector.shape_cast %80 : vector<4x16x16xf32> to vector<4x256xf32>
    %82 = arith.truncf %81 : vector<4x256xf32> to vector<4x256xbf16>
    %c0_75 = arith.constant 0 : index
    %c0_76 = arith.constant 0 : index
    %c0_77 = arith.constant 0 : index
    %83 = vector.load %arg4[%c0_75, %c0_76, %c0_77] : memref<9x4x4xbf16, #tpu.memory_space<vmem>>, vector<1x4x4xbf16>
    %84 = vector.shape_cast %83 : vector<1x4x4xbf16> to vector<4x4xbf16>
    %cst_78 = arith.constant dense<0.000000e+00> : vector<4x256xf32>
    %85 = tpu.matmul %84, %82, %cst_78 {dimension_numbers = #tpu.dot_dimension_numbers<[1], [0], [0], [1], [0, 0, 1, 1], [], []>} : vector<4x4xbf16>, vector<4x256xbf16>, vector<4x256xf32> -> vector<4x256xf32>
    %c0_79 = arith.constant 0 : index
    %c0_80 = arith.constant 0 : index
    %c1_81 = arith.constant 1 : index
    %86 = vector.load %arg7[%c0_79, %c0_80, %c1_81] : memref<4x18x18xf32, #tpu.memory_space<vmem>>, vector<4x16x16xf32>
    %87 = vector.shape_cast %86 : vector<4x16x16xf32> to vector<4x256xf32>
    %88 = arith.truncf %87 : vector<4x256xf32> to vector<4x256xbf16>
    %c1_82 = arith.constant 1 : index
    %c0_83 = arith.constant 0 : index
    %c0_84 = arith.constant 0 : index
    %89 = vector.load %arg4[%c1_82, %c0_83, %c0_84] : memref<9x4x4xbf16, #tpu.memory_space<vmem>>, vector<1x4x4xbf16>
    %90 = vector.shape_cast %89 : vector<1x4x4xbf16> to vector<4x4xbf16>
    %cst_85 = arith.constant dense<0.000000e+00> : vector<4x256xf32>
    %91 = tpu.matmul %90, %88, %cst_85 {dimension_numbers = #tpu.dot_dimension_numbers<[1], [0], [0], [1], [0, 0, 1, 1], [], []>} : vector<4x4xbf16>, vector<4x256xbf16>, vector<4x256xf32> -> vector<4x256xf32>
    %92 = arith.addf %85, %91 : vector<4x256xf32>
    %c0_86 = arith.constant 0 : index
    %c0_87 = arith.constant 0 : index
    %c2_88 = arith.constant 2 : index
    %93 = vector.load %arg7[%c0_86, %c0_87, %c2_88] : memref<4x18x18xf32, #tpu.memory_space<vmem>>, vector<4x16x16xf32>
    %94 = vector.shape_cast %93 : vector<4x16x16xf32> to vector<4x256xf32>
    %95 = arith.truncf %94 : vector<4x256xf32> to vector<4x256xbf16>
    %c2_89 = arith.constant 2 : index
    %c0_90 = arith.constant 0 : index
    %c0_91 = arith.constant 0 : index
    %96 = vector.load %arg4[%c2_89, %c0_90, %c0_91] : memref<9x4x4xbf16, #tpu.memory_space<vmem>>, vector<1x4x4xbf16>
    %97 = vector.shape_cast %96 : vector<1x4x4xbf16> to vector<4x4xbf16>
    %cst_92 = arith.constant dense<0.000000e+00> : vector<4x256xf32>
    %98 = tpu.matmul %97, %95, %cst_92 {dimension_numbers = #tpu.dot_dimension_numbers<[1], [0], [0], [1], [0, 0, 1, 1], [], []>} : vector<4x4xbf16>, vector<4x256xbf16>, vector<4x256xf32> -> vector<4x256xf32>
    %99 = arith.addf %92, %98 : vector<4x256xf32>
    %c0_93 = arith.constant 0 : index
    %c1_94 = arith.constant 1 : index
    %c0_95 = arith.constant 0 : index
    %100 = vector.load %arg7[%c0_93, %c1_94, %c0_95] : memref<4x18x18xf32, #tpu.memory_space<vmem>>, vector<4x16x16xf32>
    %101 = vector.shape_cast %100 : vector<4x16x16xf32> to vector<4x256xf32>
    %102 = arith.truncf %101 : vector<4x256xf32> to vector<4x256xbf16>
    %c3_96 = arith.constant 3 : index
    %c0_97 = arith.constant 0 : index
    %c0_98 = arith.constant 0 : index
    %103 = vector.load %arg4[%c3_96, %c0_97, %c0_98] : memref<9x4x4xbf16, #tpu.memory_space<vmem>>, vector<1x4x4xbf16>
    %104 = vector.shape_cast %103 : vector<1x4x4xbf16> to vector<4x4xbf16>
    %cst_99 = arith.constant dense<0.000000e+00> : vector<4x256xf32>
    %105 = tpu.matmul %104, %102, %cst_99 {dimension_numbers = #tpu.dot_dimension_numbers<[1], [0], [0], [1], [0, 0, 1, 1], [], []>} : vector<4x4xbf16>, vector<4x256xbf16>, vector<4x256xf32> -> vector<4x256xf32>
    %106 = arith.addf %99, %105 : vector<4x256xf32>
    %c0_100 = arith.constant 0 : index
    %c1_101 = arith.constant 1 : index
    %c1_102 = arith.constant 1 : index
    %107 = vector.load %arg7[%c0_100, %c1_101, %c1_102] : memref<4x18x18xf32, #tpu.memory_space<vmem>>, vector<4x16x16xf32>
    %108 = vector.shape_cast %107 : vector<4x16x16xf32> to vector<4x256xf32>
    %109 = arith.truncf %108 : vector<4x256xf32> to vector<4x256xbf16>
    %c4_103 = arith.constant 4 : index
    %c0_104 = arith.constant 0 : index
    %c0_105 = arith.constant 0 : index
    %110 = vector.load %arg4[%c4_103, %c0_104, %c0_105] : memref<9x4x4xbf16, #tpu.memory_space<vmem>>, vector<1x4x4xbf16>
    %111 = vector.shape_cast %110 : vector<1x4x4xbf16> to vector<4x4xbf16>
    %cst_106 = arith.constant dense<0.000000e+00> : vector<4x256xf32>
    %112 = tpu.matmul %111, %109, %cst_106 {dimension_numbers = #tpu.dot_dimension_numbers<[1], [0], [0], [1], [0, 0, 1, 1], [], []>} : vector<4x4xbf16>, vector<4x256xbf16>, vector<4x256xf32> -> vector<4x256xf32>
    %113 = arith.addf %106, %112 : vector<4x256xf32>
    %c0_107 = arith.constant 0 : index
    %c1_108 = arith.constant 1 : index
    %c2_109 = arith.constant 2 : index
    %114 = vector.load %arg7[%c0_107, %c1_108, %c2_109] : memref<4x18x18xf32, #tpu.memory_space<vmem>>, vector<4x16x16xf32>
    %115 = vector.shape_cast %114 : vector<4x16x16xf32> to vector<4x256xf32>
    %116 = arith.truncf %115 : vector<4x256xf32> to vector<4x256xbf16>
    %c5_110 = arith.constant 5 : index
    %c0_111 = arith.constant 0 : index
    %c0_112 = arith.constant 0 : index
    %117 = vector.load %arg4[%c5_110, %c0_111, %c0_112] : memref<9x4x4xbf16, #tpu.memory_space<vmem>>, vector<1x4x4xbf16>
    %118 = vector.shape_cast %117 : vector<1x4x4xbf16> to vector<4x4xbf16>
    %cst_113 = arith.constant dense<0.000000e+00> : vector<4x256xf32>
    %119 = tpu.matmul %118, %116, %cst_113 {dimension_numbers = #tpu.dot_dimension_numbers<[1], [0], [0], [1], [0, 0, 1, 1], [], []>} : vector<4x4xbf16>, vector<4x256xbf16>, vector<4x256xf32> -> vector<4x256xf32>
    %120 = arith.addf %113, %119 : vector<4x256xf32>
    %c0_114 = arith.constant 0 : index
    %c2_115 = arith.constant 2 : index
    %c0_116 = arith.constant 0 : index
    %121 = vector.load %arg7[%c0_114, %c2_115, %c0_116] : memref<4x18x18xf32, #tpu.memory_space<vmem>>, vector<4x16x16xf32>
    %122 = vector.shape_cast %121 : vector<4x16x16xf32> to vector<4x256xf32>
    %123 = arith.truncf %122 : vector<4x256xf32> to vector<4x256xbf16>
    %c6_117 = arith.constant 6 : index
    %c0_118 = arith.constant 0 : index
    %c0_119 = arith.constant 0 : index
    %124 = vector.load %arg4[%c6_117, %c0_118, %c0_119] : memref<9x4x4xbf16, #tpu.memory_space<vmem>>, vector<1x4x4xbf16>
    %125 = vector.shape_cast %124 : vector<1x4x4xbf16> to vector<4x4xbf16>
    %cst_120 = arith.constant dense<0.000000e+00> : vector<4x256xf32>
    %126 = tpu.matmul %125, %123, %cst_120 {dimension_numbers = #tpu.dot_dimension_numbers<[1], [0], [0], [1], [0, 0, 1, 1], [], []>} : vector<4x4xbf16>, vector<4x256xbf16>, vector<4x256xf32> -> vector<4x256xf32>
    %127 = arith.addf %120, %126 : vector<4x256xf32>
    %c0_121 = arith.constant 0 : index
    %c2_122 = arith.constant 2 : index
    %c1_123 = arith.constant 1 : index
    %128 = vector.load %arg7[%c0_121, %c2_122, %c1_123] : memref<4x18x18xf32, #tpu.memory_space<vmem>>, vector<4x16x16xf32>
    %129 = vector.shape_cast %128 : vector<4x16x16xf32> to vector<4x256xf32>
    %130 = arith.truncf %129 : vector<4x256xf32> to vector<4x256xbf16>
    %c7_124 = arith.constant 7 : index
    %c0_125 = arith.constant 0 : index
    %c0_126 = arith.constant 0 : index
    %131 = vector.load %arg4[%c7_124, %c0_125, %c0_126] : memref<9x4x4xbf16, #tpu.memory_space<vmem>>, vector<1x4x4xbf16>
    %132 = vector.shape_cast %131 : vector<1x4x4xbf16> to vector<4x4xbf16>
    %cst_127 = arith.constant dense<0.000000e+00> : vector<4x256xf32>
    %133 = tpu.matmul %132, %130, %cst_127 {dimension_numbers = #tpu.dot_dimension_numbers<[1], [0], [0], [1], [0, 0, 1, 1], [], []>} : vector<4x4xbf16>, vector<4x256xbf16>, vector<4x256xf32> -> vector<4x256xf32>
    %134 = arith.addf %127, %133 : vector<4x256xf32>
    %c0_128 = arith.constant 0 : index
    %c2_129 = arith.constant 2 : index
    %c2_130 = arith.constant 2 : index
    %135 = vector.load %arg7[%c0_128, %c2_129, %c2_130] : memref<4x18x18xf32, #tpu.memory_space<vmem>>, vector<4x16x16xf32>
    %136 = vector.shape_cast %135 : vector<4x16x16xf32> to vector<4x256xf32>
    %137 = arith.truncf %136 : vector<4x256xf32> to vector<4x256xbf16>
    %c8_131 = arith.constant 8 : index
    %c0_132 = arith.constant 0 : index
    %c0_133 = arith.constant 0 : index
    %138 = vector.load %arg4[%c8_131, %c0_132, %c0_133] : memref<9x4x4xbf16, #tpu.memory_space<vmem>>, vector<1x4x4xbf16>
    %139 = vector.shape_cast %138 : vector<1x4x4xbf16> to vector<4x4xbf16>
    %cst_134 = arith.constant dense<0.000000e+00> : vector<4x256xf32>
    %140 = tpu.matmul %139, %137, %cst_134 {dimension_numbers = #tpu.dot_dimension_numbers<[1], [0], [0], [1], [0, 0, 1, 1], [], []>} : vector<4x4xbf16>, vector<4x256xbf16>, vector<4x256xf32> -> vector<4x256xf32>
    %141 = arith.addf %134, %140 : vector<4x256xf32>
    %c0_135 = arith.constant 0 : index
    %c0_136 = arith.constant 0 : index
    %142 = vector.load %arg5[%c0_135, %c0_136] : memref<4x1xf32, #tpu.memory_space<vmem>>, vector<4x1xf32>
    %143 = vector.broadcast %142 : vector<4x1xf32> to vector<4x256xf32>
    %144 = arith.addf %141, %143 : vector<4x256xf32>
    %c0_137 = arith.constant 0 : index
    %c0_138 = arith.constant 0 : index
    %c1_139 = arith.constant 1 : index
    %c1_140 = arith.constant 1 : index
    %145 = vector.load %arg1[%c0_137, %c0_138, %c1_139, %c1_140] : memref<1x4x18x18xf32, #tpu.memory_space<vmem>>, vector<1x4x16x16xf32>
    %146 = vector.shape_cast %145 : vector<1x4x16x16xf32> to vector<4x16x16xf32>
    %147 = vector.shape_cast %146 : vector<4x16x16xf32> to vector<4x256xf32>
    %148 = arith.addf %144, %147 : vector<4x256xf32>
    %cst_141 = arith.constant 0.000000e+00 : f32
    %149 = vector.broadcast %cst_141 : f32 to vector<4x256xf32>
    %150 = arith.maximumf %148, %149 : vector<4x256xf32>
    %c0_142 = arith.constant 0 : index
    %c0_143 = arith.constant 0 : index
    %c0_144 = arith.constant 0 : index
    %151 = vector.load %arg6[%c0_142, %c0_143, %c0_144] : memref<1x4x256xf32, #tpu.memory_space<vmem>>, vector<1x4x256xf32>
    %152 = vector.shape_cast %151 : vector<1x4x256xf32> to vector<4x256xf32>
    %153 = vector.shape_cast %150 : vector<4x256xf32> to vector<1x4x256xf32>
    tpu.vector_store %arg6[%c0_142, %c0_143, %c0_144], %153 {strides = array<i32>} : memref<1x4x256xf32, #tpu.memory_space<vmem>>, vector<1x4x256xf32>,
    return
  }
  func.func @transform_0(%arg0: i32) -> (i32, i32, i32, i32) {
    %c0_i32 = arith.constant 0 : i32
    %c0_i32_0 = arith.constant 0 : i32
    %c0_i32_1 = arith.constant 0 : i32
    %c0_i32_2 = arith.constant 0 : i32
    return %arg0, %c0_i32, %c0_i32_0, %c0_i32_1 : i32, i32, i32, i32
  }
  func.func @transform_1(%arg0: i32) -> (i32, i32, i32) {
    %c0_i32 = arith.constant 0 : i32
    %c0_i32_0 = arith.constant 0 : i32
    %c0_i32_1 = arith.constant 0 : i32
    %c0_i32_2 = arith.constant 0 : i32
    return %c0_i32, %c0_i32_0, %c0_i32_1 : i32, i32, i32
  }
  func.func @transform_2(%arg0: i32) -> (i32, i32) {
    %c0_i32 = arith.constant 0 : i32
    %c0_i32_0 = arith.constant 0 : i32
    %c0_i32_1 = arith.constant 0 : i32
    return %c0_i32, %c0_i32_0 : i32, i32
  }
  func.func @transform_3(%arg0: i32) -> (i32, i32, i32) {
    %c0_i32 = arith.constant 0 : i32
    %c0_i32_0 = arith.constant 0 : i32
    %c0_i32_1 = arith.constant 0 : i32
    %c0_i32_2 = arith.constant 0 : i32
    return %c0_i32, %c0_i32_0, %c0_i32_1 : i32, i32, i32
  }
  func.func @transform_4(%arg0: i32) -> (i32, i32) {
    %c0_i32 = arith.constant 0 : i32
    %c0_i32_0 = arith.constant 0 : i32
    %c0_i32_1 = arith.constant 0 : i32
    return %c0_i32, %c0_i32_0 : i32, i32
  }
  func.func @transform_5(%arg0: i32) -> (i32, i32, i32) {
    %c0_i32 = arith.constant 0 : i32
    %c0_i32_0 = arith.constant 0 : i32
    %c0_i32_1 = arith.constant 0 : i32
    return %arg0, %c0_i32, %c0_i32_0 : i32, i32, i32
  }
}

module attributes {stable_mosaic.version = 11 : i64} {
  func.func @_encoder_layer_kernel(%arg0: i32, %arg1: memref<1x64x16xf32, #tpu.memory_space<vmem>>, %arg2: memref<16x48xbf16, #tpu.memory_space<vmem>>, %arg3: memref<1x48xf32, #tpu.memory_space<vmem>>, %arg4: memref<16x16xbf16, #tpu.memory_space<vmem>>, %arg5: memref<1x16xf32, #tpu.memory_space<vmem>>, %arg6: memref<1x16xf32, #tpu.memory_space<vmem>>, %arg7: memref<1x16xf32, #tpu.memory_space<vmem>>, %arg8: memref<16x32xbf16, #tpu.memory_space<vmem>>, %arg9: memref<1x32xf32, #tpu.memory_space<vmem>>, %arg10: memref<32x16xbf16, #tpu.memory_space<vmem>>, %arg11: memref<1x16xf32, #tpu.memory_space<vmem>>, %arg12: memref<1x16xf32, #tpu.memory_space<vmem>>, %arg13: memref<1x16xf32, #tpu.memory_space<vmem>>, %arg14: memref<1x64x16xf32, #tpu.memory_space<vmem>>) attributes {dimension_semantics = [#tpu.dimension_semantics<parallel>], iteration_bounds = array<i64: 2>, scalar_prefetch = 0 : i64, scratch_operands = 0 : i64, tpu.core_type = #tpu.core_type<tc>, window_params = [{transform_indices = @transform_0, window_bounds = array<i64: 1, 64, 16>}, {pipeline_mode = #tpu.pipeline_mode<synchronous>, transform_indices = @transform_1, window_bounds = array<i64: 16, 48>}, {pipeline_mode = #tpu.pipeline_mode<synchronous>, transform_indices = @transform_2, window_bounds = array<i64: 1, 48>}, {pipeline_mode = #tpu.pipeline_mode<synchronous>, transform_indices = @transform_3, window_bounds = array<i64: 16, 16>}, {pipeline_mode = #tpu.pipeline_mode<synchronous>, transform_indices = @transform_4, window_bounds = array<i64: 1, 16>}, {pipeline_mode = #tpu.pipeline_mode<synchronous>, transform_indices = @transform_5, window_bounds = array<i64: 1, 16>}, {pipeline_mode = #tpu.pipeline_mode<synchronous>, transform_indices = @transform_6, window_bounds = array<i64: 1, 16>}, {pipeline_mode = #tpu.pipeline_mode<synchronous>, transform_indices = @transform_7, window_bounds = array<i64: 16, 32>}, {pipeline_mode = #tpu.pipeline_mode<synchronous>, transform_indices = @transform_8, window_bounds = array<i64: 1, 32>}, {pipeline_mode = #tpu.pipeline_mode<synchronous>, transform_indices = @transform_9, window_bounds = array<i64: 32, 16>}, {pipeline_mode = #tpu.pipeline_mode<synchronous>, transform_indices = @transform_10, window_bounds = array<i64: 1, 16>}, {pipeline_mode = #tpu.pipeline_mode<synchronous>, transform_indices = @transform_11, window_bounds = array<i64: 1, 16>}, {pipeline_mode = #tpu.pipeline_mode<synchronous>, transform_indices = @transform_12, window_bounds = array<i64: 1, 16>}, {transform_indices = @transform_13, window_bounds = array<i64: 1, 64, 16>}]} {
    %c0 = arith.constant 0 : index
    %c0_0 = arith.constant 0 : index
    %c0_1 = arith.constant 0 : index
    %0 = vector.load %arg1[%c0, %c0_0, %c0_1] : memref<1x64x16xf32, #tpu.memory_space<vmem>>, vector<1x64x16xf32>
    %1 = vector.shape_cast %0 : vector<1x64x16xf32> to vector<64x16xf32>
    %2 = arith.truncf %1 : vector<64x16xf32> to vector<64x16xbf16>
    %c0_2 = arith.constant 0 : index
    %c0_3 = arith.constant 0 : index
    %3 = vector.load %arg2[%c0_2, %c0_3] : memref<16x48xbf16, #tpu.memory_space<vmem>>, vector<16x48xbf16>
    %cst = arith.constant dense<0.000000e+00> : vector<64x48xf32>
    %4 = tpu.matmul %2, %3, %cst {dimension_numbers = #tpu.dot_dimension_numbers<[1], [0], [0], [1], [0, 0, 1, 1], [], []>} : vector<64x16xbf16>, vector<16x48xbf16>, vector<64x48xf32> -> vector<64x48xf32>
    %c0_4 = arith.constant 0 : index
    %c0_5 = arith.constant 0 : index
    %5 = vector.load %arg3[%c0_4, %c0_5] : memref<1x48xf32, #tpu.memory_space<vmem>>, vector<1x48xf32>
    %6 = vector.broadcast %5 : vector<1x48xf32> to vector<64x48xf32>
    %7 = arith.addf %4, %6 : vector<64x48xf32>
    %cst_6 = arith.constant 0.000000e+00 : f32
    %8 = vector.broadcast %cst_6 : f32 to vector<64x16xf32>
    %9 = vector.extract_strided_slice %7 {offsets = [0, 0], sizes = [64, 8], strides = [1, 1]} : vector<64x48xf32> to vector<64x8xf32>
    %10 = arith.truncf %9 : vector<64x8xf32> to vector<64x8xbf16>
    %11 = vector.extract_strided_slice %7 {offsets = [0, 16], sizes = [64, 8], strides = [1, 1]} : vector<64x48xf32> to vector<64x8xf32>
    %12 = arith.truncf %11 : vector<64x8xf32> to vector<64x8xbf16>
    %13 = vector.extract_strided_slice %7 {offsets = [0, 32], sizes = [64, 8], strides = [1, 1]} : vector<64x48xf32> to vector<64x8xf32>
    %14 = arith.truncf %13 : vector<64x8xf32> to vector<64x8xbf16>
    %cst_7 = arith.constant dense<0.000000e+00> : vector<64x64xf32>
    %15 = tpu.matmul %10, %12, %cst_7 {dimension_numbers = #tpu.dot_dimension_numbers<[1], [1], [0], [0], [0, 0, 1, 0], [], []>} : vector<64x8xbf16>, vector<64x8xbf16>, vector<64x64xf32> -> vector<64x64xf32>
    %cst_8 = arith.constant 0.353553385 : f32
    %16 = vector.broadcast %cst_8 : f32 to vector<64x64xf32>
    %17 = arith.mulf %15, %16 : vector<64x64xf32>
    %cst_9 = arith.constant dense<0xFF800000> : vector<64xf32>
    %18 = vector.multi_reduction <maximumf>, %17, %cst_9 [1] : vector<64x64xf32> to vector<64xf32>
    %19 = vector.shape_cast %18 : vector<64xf32> to vector<64x1xf32>
    %20 = vector.broadcast %19 : vector<64x1xf32> to vector<64x64xf32>
    %21 = arith.subf %17, %20 : vector<64x64xf32>
    %22 = math.exp %21 : vector<64x64xf32>
    %cst_10 = arith.constant dense<0.000000e+00> : vector<64xf32>
    %23 = vector.multi_reduction <add>, %22, %cst_10 [1] : vector<64x64xf32> to vector<64xf32>
    %24 = vector.shape_cast %23 : vector<64xf32> to vector<64x1xf32>
    %25 = tpu.reciprocal %24 {approx = true} : vector<64x1xf32> -> vector<64x1xf32>
    %26 = vector.broadcast %25 : vector<64x1xf32> to vector<64x64xf32>
    %27 = arith.mulf %22, %26 : vector<64x64xf32>
    %28 = arith.truncf %27 : vector<64x64xf32> to vector<64x64xbf16>
    %cst_11 = arith.constant dense<0.000000e+00> : vector<64x8xf32>
    %29 = tpu.matmul %28, %14, %cst_11 {dimension_numbers = #tpu.dot_dimension_numbers<[1], [0], [0], [1], [0, 0, 1, 1], [], []>} : vector<64x64xbf16>, vector<64x8xbf16>, vector<64x8xf32> -> vector<64x8xf32>
    %30 = arith.truncf %29 : vector<64x8xf32> to vector<64x8xbf16>
    %c0_12 = arith.constant 0 : index
    %c0_13 = arith.constant 0 : index
    %31 = vector.load %arg4[%c0_12, %c0_13] : memref<16x16xbf16, #tpu.memory_space<vmem>>, vector<8x16xbf16>
    %cst_14 = arith.constant dense<0.000000e+00> : vector<64x16xf32>
    %32 = tpu.matmul %30, %31, %cst_14 {dimension_numbers = #tpu.dot_dimension_numbers<[1], [0], [0], [1], [0, 0, 1, 1], [], []>} : vector<64x8xbf16>, vector<8x16xbf16>, vector<64x16xf32> -> vector<64x16xf32>
    %33 = arith.addf %8, %32 : vector<64x16xf32>
    %34 = vector.extract_strided_slice %7 {offsets = [0, 8], sizes = [64, 8], strides = [1, 1]} : vector<64x48xf32> to vector<64x8xf32>
    %35 = arith.truncf %34 : vector<64x8xf32> to vector<64x8xbf16>
    %36 = vector.extract_strided_slice %7 {offsets = [0, 24], sizes = [64, 8], strides = [1, 1]} : vector<64x48xf32> to vector<64x8xf32>
    %37 = arith.truncf %36 : vector<64x8xf32> to vector<64x8xbf16>
    %38 = vector.extract_strided_slice %7 {offsets = [0, 40], sizes = [64, 8], strides = [1, 1]} : vector<64x48xf32> to vector<64x8xf32>
    %39 = arith.truncf %38 : vector<64x8xf32> to vector<64x8xbf16>
    %cst_15 = arith.constant dense<0.000000e+00> : vector<64x64xf32>
    %40 = tpu.matmul %35, %37, %cst_15 {dimension_numbers = #tpu.dot_dimension_numbers<[1], [1], [0], [0], [0, 0, 1, 0], [], []>} : vector<64x8xbf16>, vector<64x8xbf16>, vector<64x64xf32> -> vector<64x64xf32>
    %cst_16 = arith.constant 0.353553385 : f32
    %41 = vector.broadcast %cst_16 : f32 to vector<64x64xf32>
    %42 = arith.mulf %40, %41 : vector<64x64xf32>
    %cst_17 = arith.constant dense<0xFF800000> : vector<64xf32>
    %43 = vector.multi_reduction <maximumf>, %42, %cst_17 [1] : vector<64x64xf32> to vector<64xf32>
    %44 = vector.shape_cast %43 : vector<64xf32> to vector<64x1xf32>
    %45 = vector.broadcast %44 : vector<64x1xf32> to vector<64x64xf32>
    %46 = arith.subf %42, %45 : vector<64x64xf32>
    %47 = math.exp %46 : vector<64x64xf32>
    %cst_18 = arith.constant dense<0.000000e+00> : vector<64xf32>
    %48 = vector.multi_reduction <add>, %47, %cst_18 [1] : vector<64x64xf32> to vector<64xf32>
    %49 = vector.shape_cast %48 : vector<64xf32> to vector<64x1xf32>
    %50 = tpu.reciprocal %49 {approx = true} : vector<64x1xf32> -> vector<64x1xf32>
    %51 = vector.broadcast %50 : vector<64x1xf32> to vector<64x64xf32>
    %52 = arith.mulf %47, %51 : vector<64x64xf32>
    %53 = arith.truncf %52 : vector<64x64xf32> to vector<64x64xbf16>
    %cst_19 = arith.constant dense<0.000000e+00> : vector<64x8xf32>
    %54 = tpu.matmul %53, %39, %cst_19 {dimension_numbers = #tpu.dot_dimension_numbers<[1], [0], [0], [1], [0, 0, 1, 1], [], []>} : vector<64x64xbf16>, vector<64x8xbf16>, vector<64x8xf32> -> vector<64x8xf32>
    %55 = arith.truncf %54 : vector<64x8xf32> to vector<64x8xbf16>
    %c8 = arith.constant 8 : index
    %c0_20 = arith.constant 0 : index
    %56 = vector.load %arg4[%c8, %c0_20] : memref<16x16xbf16, #tpu.memory_space<vmem>>, vector<8x16xbf16>
    %cst_21 = arith.constant dense<0.000000e+00> : vector<64x16xf32>
    %57 = tpu.matmul %55, %56, %cst_21 {dimension_numbers = #tpu.dot_dimension_numbers<[1], [0], [0], [1], [0, 0, 1, 1], [], []>} : vector<64x8xbf16>, vector<8x16xbf16>, vector<64x16xf32> -> vector<64x16xf32>
    %58 = arith.addf %33, %57 : vector<64x16xf32>
    %c0_22 = arith.constant 0 : index
    %c0_23 = arith.constant 0 : index
    %59 = vector.load %arg5[%c0_22, %c0_23] : memref<1x16xf32, #tpu.memory_space<vmem>>, vector<1x16xf32>
    %60 = vector.broadcast %59 : vector<1x16xf32> to vector<64x16xf32>
    %61 = arith.addf %58, %60 : vector<64x16xf32>
    %62 = arith.addf %61, %1 : vector<64x16xf32>
    %cst_24 = arith.constant dense<0.000000e+00> : vector<64xf32>
    %63 = vector.multi_reduction <add>, %62, %cst_24 [1] : vector<64x16xf32> to vector<64xf32>
    %64 = vector.shape_cast %63 : vector<64xf32> to vector<64x1xf32>
    %cst_25 = arith.constant 1.600000e+01 : f32
    %65 = vector.broadcast %cst_25 : f32 to vector<64x1xf32>
    %66 = arith.divf %64, %65 : vector<64x1xf32>
    %67 = vector.broadcast %66 : vector<64x1xf32> to vector<64x16xf32>
    %68 = arith.subf %62, %67 : vector<64x16xf32>
    %69 = arith.mulf %68, %68 : vector<64x16xf32>
    %cst_26 = arith.constant dense<0.000000e+00> : vector<64xf32>
    %70 = vector.multi_reduction <add>, %69, %cst_26 [1] : vector<64x16xf32> to vector<64xf32>
    %71 = vector.shape_cast %70 : vector<64xf32> to vector<64x1xf32>
    %cst_27 = arith.constant 1.600000e+01 : f32
    %72 = vector.broadcast %cst_27 : f32 to vector<64x1xf32>
    %73 = arith.divf %71, %72 : vector<64x1xf32>
    %cst_28 = arith.constant 9.99999974E-6 : f32
    %74 = vector.broadcast %cst_28 : f32 to vector<64x1xf32>
    %75 = arith.addf %73, %74 : vector<64x1xf32>
    %76 = math.rsqrt %75 : vector<64x1xf32>
    %77 = vector.broadcast %76 : vector<64x1xf32> to vector<64x16xf32>
    %78 = arith.mulf %68, %77 : vector<64x16xf32>
    %c0_29 = arith.constant 0 : index
    %c0_30 = arith.constant 0 : index
    %79 = vector.load %arg6[%c0_29, %c0_30] : memref<1x16xf32, #tpu.memory_space<vmem>>, vector<1x16xf32>
    %80 = vector.broadcast %79 : vector<1x16xf32> to vector<64x16xf32>
    %81 = arith.mulf %78, %80 : vector<64x16xf32>
    %c0_31 = arith.constant 0 : index
    %c0_32 = arith.constant 0 : index
    %82 = vector.load %arg7[%c0_31, %c0_32] : memref<1x16xf32, #tpu.memory_space<vmem>>, vector<1x16xf32>
    %83 = vector.broadcast %82 : vector<1x16xf32> to vector<64x16xf32>
    %84 = arith.addf %81, %83 : vector<64x16xf32>
    %85 = arith.truncf %84 : vector<64x16xf32> to vector<64x16xbf16>
    %c0_33 = arith.constant 0 : index
    %c0_34 = arith.constant 0 : index
    %86 = vector.load %arg8[%c0_33, %c0_34] : memref<16x32xbf16, #tpu.memory_space<vmem>>, vector<16x32xbf16>
    %cst_35 = arith.constant dense<0.000000e+00> : vector<64x32xf32>
    %87 = tpu.matmul %85, %86, %cst_35 {dimension_numbers = #tpu.dot_dimension_numbers<[1], [0], [0], [1], [0, 0, 1, 1], [], []>} : vector<64x16xbf16>, vector<16x32xbf16>, vector<64x32xf32> -> vector<64x32xf32>
    %c0_36 = arith.constant 0 : index
    %c0_37 = arith.constant 0 : index
    %88 = vector.load %arg9[%c0_36, %c0_37] : memref<1x32xf32, #tpu.memory_space<vmem>>, vector<1x32xf32>
    %89 = vector.broadcast %88 : vector<1x32xf32> to vector<64x32xf32>
    %90 = arith.addf %87, %89 : vector<64x32xf32>
    %cst_38 = arith.constant 0.000000e+00 : f32
    %91 = vector.broadcast %cst_38 : f32 to vector<64x32xf32>
    %92 = arith.maximumf %90, %91 : vector<64x32xf32>
    %93 = arith.truncf %92 : vector<64x32xf32> to vector<64x32xbf16>
    %c0_39 = arith.constant 0 : index
    %c0_40 = arith.constant 0 : index
    %94 = vector.load %arg10[%c0_39, %c0_40] : memref<32x16xbf16, #tpu.memory_space<vmem>>, vector<32x16xbf16>
    %cst_41 = arith.constant dense<0.000000e+00> : vector<64x16xf32>
    %95 = tpu.matmul %93, %94, %cst_41 {dimension_numbers = #tpu.dot_dimension_numbers<[1], [0], [0], [1], [0, 0, 1, 1], [], []>} : vector<64x32xbf16>, vector<32x16xbf16>, vector<64x16xf32> -> vector<64x16xf32>
    %c0_42 = arith.constant 0 : index
    %c0_43 = arith.constant 0 : index
    %96 = vector.load %arg11[%c0_42, %c0_43] : memref<1x16xf32, #tpu.memory_space<vmem>>, vector<1x16xf32>
    %97 = vector.broadcast %96 : vector<1x16xf32> to vector<64x16xf32>
    %98 = arith.addf %95, %97 : vector<64x16xf32>
    %99 = arith.addf %98, %84 : vector<64x16xf32>
    %cst_44 = arith.constant dense<0.000000e+00> : vector<64xf32>
    %100 = vector.multi_reduction <add>, %99, %cst_44 [1] : vector<64x16xf32> to vector<64xf32>
    %101 = vector.shape_cast %100 : vector<64xf32> to vector<64x1xf32>
    %cst_45 = arith.constant 1.600000e+01 : f32
    %102 = vector.broadcast %cst_45 : f32 to vector<64x1xf32>
    %103 = arith.divf %101, %102 : vector<64x1xf32>
    %104 = vector.broadcast %103 : vector<64x1xf32> to vector<64x16xf32>
    %105 = arith.subf %99, %104 : vector<64x16xf32>
    %106 = arith.mulf %105, %105 : vector<64x16xf32>
    %cst_46 = arith.constant dense<0.000000e+00> : vector<64xf32>
    %107 = vector.multi_reduction <add>, %106, %cst_46 [1] : vector<64x16xf32> to vector<64xf32>
    %108 = vector.shape_cast %107 : vector<64xf32> to vector<64x1xf32>
    %cst_47 = arith.constant 1.600000e+01 : f32
    %109 = vector.broadcast %cst_47 : f32 to vector<64x1xf32>
    %110 = arith.divf %108, %109 : vector<64x1xf32>
    %cst_48 = arith.constant 9.99999974E-6 : f32
    %111 = vector.broadcast %cst_48 : f32 to vector<64x1xf32>
    %112 = arith.addf %110, %111 : vector<64x1xf32>
    %113 = math.rsqrt %112 : vector<64x1xf32>
    %114 = vector.broadcast %113 : vector<64x1xf32> to vector<64x16xf32>
    %115 = arith.mulf %105, %114 : vector<64x16xf32>
    %c0_49 = arith.constant 0 : index
    %c0_50 = arith.constant 0 : index
    %116 = vector.load %arg12[%c0_49, %c0_50] : memref<1x16xf32, #tpu.memory_space<vmem>>, vector<1x16xf32>
    %117 = vector.broadcast %116 : vector<1x16xf32> to vector<64x16xf32>
    %118 = arith.mulf %115, %117 : vector<64x16xf32>
    %c0_51 = arith.constant 0 : index
    %c0_52 = arith.constant 0 : index
    %119 = vector.load %arg13[%c0_51, %c0_52] : memref<1x16xf32, #tpu.memory_space<vmem>>, vector<1x16xf32>
    %120 = vector.broadcast %119 : vector<1x16xf32> to vector<64x16xf32>
    %121 = arith.addf %118, %120 : vector<64x16xf32>
    %c0_53 = arith.constant 0 : index
    %c0_54 = arith.constant 0 : index
    %c0_55 = arith.constant 0 : index
    %122 = vector.load %arg14[%c0_53, %c0_54, %c0_55] : memref<1x64x16xf32, #tpu.memory_space<vmem>>, vector<1x64x16xf32>
    %123 = vector.shape_cast %122 : vector<1x64x16xf32> to vector<64x16xf32>
    %124 = vector.shape_cast %121 : vector<64x16xf32> to vector<1x64x16xf32>
    tpu.vector_store %arg14[%c0_53, %c0_54, %c0_55], %124 {strides = array<i32>} : memref<1x64x16xf32, #tpu.memory_space<vmem>>, vector<1x64x16xf32>,
    return
  }
  func.func @transform_0(%arg0: i32) -> (i32, i32, i32) {
    %c0_i32 = arith.constant 0 : i32
    %c0_i32_0 = arith.constant 0 : i32
    %c0_i32_1 = arith.constant 0 : i32
    return %arg0, %c0_i32, %c0_i32_0 : i32, i32, i32
  }
  func.func @transform_1(%arg0: i32) -> (i32, i32) {
    %c0_i32 = arith.constant 0 : i32
    %c0_i32_0 = arith.constant 0 : i32
    %c0_i32_1 = arith.constant 0 : i32
    return %c0_i32, %c0_i32_0 : i32, i32
  }
  func.func @transform_2(%arg0: i32) -> (i32, i32) {
    %c0_i32 = arith.constant 0 : i32
    %c0_i32_0 = arith.constant 0 : i32
    %c0_i32_1 = arith.constant 0 : i32
    return %c0_i32, %c0_i32_0 : i32, i32
  }
  func.func @transform_3(%arg0: i32) -> (i32, i32) {
    %c0_i32 = arith.constant 0 : i32
    %c0_i32_0 = arith.constant 0 : i32
    %c0_i32_1 = arith.constant 0 : i32
    return %c0_i32, %c0_i32_0 : i32, i32
  }
  func.func @transform_4(%arg0: i32) -> (i32, i32) {
    %c0_i32 = arith.constant 0 : i32
    %c0_i32_0 = arith.constant 0 : i32
    %c0_i32_1 = arith.constant 0 : i32
    return %c0_i32, %c0_i32_0 : i32, i32
  }
  func.func @transform_5(%arg0: i32) -> (i32, i32) {
    %c0_i32 = arith.constant 0 : i32
    %c0_i32_0 = arith.constant 0 : i32
    %c0_i32_1 = arith.constant 0 : i32
    return %c0_i32, %c0_i32_0 : i32, i32
  }
  func.func @transform_6(%arg0: i32) -> (i32, i32) {
    %c0_i32 = arith.constant 0 : i32
    %c0_i32_0 = arith.constant 0 : i32
    %c0_i32_1 = arith.constant 0 : i32
    return %c0_i32, %c0_i32_0 : i32, i32
  }
  func.func @transform_7(%arg0: i32) -> (i32, i32) {
    %c0_i32 = arith.constant 0 : i32
    %c0_i32_0 = arith.constant 0 : i32
    %c0_i32_1 = arith.constant 0 : i32
    return %c0_i32, %c0_i32_0 : i32, i32
  }
  func.func @transform_8(%arg0: i32) -> (i32, i32) {
    %c0_i32 = arith.constant 0 : i32
    %c0_i32_0 = arith.constant 0 : i32
    %c0_i32_1 = arith.constant 0 : i32
    return %c0_i32, %c0_i32_0 : i32, i32
  }
  func.func @transform_9(%arg0: i32) -> (i32, i32) {
    %c0_i32 = arith.constant 0 : i32
    %c0_i32_0 = arith.constant 0 : i32
    %c0_i32_1 = arith.constant 0 : i32
    return %c0_i32, %c0_i32_0 : i32, i32
  }
  func.func @transform_10(%arg0: i32) -> (i32, i32) {
    %c0_i32 = arith.constant 0 : i32
    %c0_i32_0 = arith.constant 0 : i32
    %c0_i32_1 = arith.constant 0 : i32
    return %c0_i32, %c0_i32_0 : i32, i32
  }
  func.func @transform_11(%arg0: i32) -> (i32, i32) {
    %c0_i32 = arith.constant 0 : i32
    %c0_i32_0 = arith.constant 0 : i32
    %c0_i32_1 = arith.constant 0 : i32
    return %c0_i32, %c0_i32_0 : i32, i32
  }
  func.func @transform_12(%arg0: i32) -> (i32, i32) {
    %c0_i32 = arith.constant 0 : i32
    %c0_i32_0 = arith.constant 0 : i32
    %c0_i32_1 = arith.constant 0 : i32
    return %c0_i32, %c0_i32_0 : i32, i32
  }
  func.func @transform_13(%arg0: i32) -> (i32, i32, i32) {
    %c0_i32 = arith.constant 0 : i32
    %c0_i32_0 = arith.constant 0 : i32
    %c0_i32_1 = arith.constant 0 : i32
    return %arg0, %c0_i32, %c0_i32_0 : i32, i32, i32
  }
}

module attributes {stable_mosaic.version = 11 : i64} {
  func.func @_conv_kernel(%arg0: i32, %arg1: memref<1x16x9x9xf32, #tpu.memory_space<vmem>>, %arg2: memref<9x4x4xbf16, #tpu.memory_space<vmem>>, %arg3: memref<4x1xf32, #tpu.memory_space<vmem>>, %arg4: memref<1x4x64xf32, #tpu.memory_space<vmem>>) attributes {dimension_semantics = [#tpu.dimension_semantics<parallel>], iteration_bounds = array<i64: 2>, scalar_prefetch = 0 : i64, scratch_operands = 0 : i64, tpu.core_type = #tpu.core_type<tc>, window_params = [{transform_indices = @transform_0, window_bounds = array<i64: 1, 16, 9, 9>}, {pipeline_mode = #tpu.pipeline_mode<synchronous>, transform_indices = @transform_1, window_bounds = array<i64: 9, 4, 4>}, {pipeline_mode = #tpu.pipeline_mode<synchronous>, transform_indices = @transform_2, window_bounds = array<i64: 4, 1>}, {transform_indices = @transform_3, window_bounds = array<i64: 1, 4, 64>}]} {
    %c0 = arith.constant 0 : index
    %c0_0 = arith.constant 0 : index
    %c0_1 = arith.constant 0 : index
    %c0_2 = arith.constant 0 : index
    %0 = vector.load %arg1[%c0, %c0_0, %c0_1, %c0_2] : memref<1x16x9x9xf32, #tpu.memory_space<vmem>>, vector<1x4x8x8xf32>
    %1 = vector.shape_cast %0 : vector<1x4x8x8xf32> to vector<4x8x8xf32>
    %2 = vector.shape_cast %1 : vector<4x8x8xf32> to vector<4x64xf32>
    %3 = arith.truncf %2 : vector<4x64xf32> to vector<4x64xbf16>
    %c0_3 = arith.constant 0 : index
    %c0_4 = arith.constant 0 : index
    %c0_5 = arith.constant 0 : index
    %4 = vector.load %arg2[%c0_3, %c0_4, %c0_5] : memref<9x4x4xbf16, #tpu.memory_space<vmem>>, vector<1x4x4xbf16>
    %5 = vector.shape_cast %4 : vector<1x4x4xbf16> to vector<4x4xbf16>
    %cst = arith.constant dense<0.000000e+00> : vector<4x64xf32>
    %6 = tpu.matmul %5, %3, %cst {dimension_numbers = #tpu.dot_dimension_numbers<[1], [0], [0], [1], [0, 0, 1, 1], [], []>} : vector<4x4xbf16>, vector<4x64xbf16>, vector<4x64xf32> -> vector<4x64xf32>
    %c0_6 = arith.constant 0 : index
    %c4 = arith.constant 4 : index
    %c0_7 = arith.constant 0 : index
    %c0_8 = arith.constant 0 : index
    %7 = vector.load %arg1[%c0_6, %c4, %c0_7, %c0_8] : memref<1x16x9x9xf32, #tpu.memory_space<vmem>>, vector<1x4x8x8xf32>
    %8 = vector.shape_cast %7 : vector<1x4x8x8xf32> to vector<4x8x8xf32>
    %9 = vector.shape_cast %8 : vector<4x8x8xf32> to vector<4x64xf32>
    %10 = arith.truncf %9 : vector<4x64xf32> to vector<4x64xbf16>
    %c1 = arith.constant 1 : index
    %c0_9 = arith.constant 0 : index
    %c0_10 = arith.constant 0 : index
    %11 = vector.load %arg2[%c1, %c0_9, %c0_10] : memref<9x4x4xbf16, #tpu.memory_space<vmem>>, vector<1x4x4xbf16>
    %12 = vector.shape_cast %11 : vector<1x4x4xbf16> to vector<4x4xbf16>
    %cst_11 = arith.constant dense<0.000000e+00> : vector<4x64xf32>
    %13 = tpu.matmul %12, %10, %cst_11 {dimension_numbers = #tpu.dot_dimension_numbers<[1], [0], [0], [1], [0, 0, 1, 1], [], []>} : vector<4x4xbf16>, vector<4x64xbf16>, vector<4x64xf32> -> vector<4x64xf32>
    %14 = arith.addf %6, %13 : vector<4x64xf32>
    %c0_12 = arith.constant 0 : index
    %c0_13 = arith.constant 0 : index
    %c0_14 = arith.constant 0 : index
    %c1_15 = arith.constant 1 : index
    %15 = vector.load %arg1[%c0_12, %c0_13, %c0_14, %c1_15] : memref<1x16x9x9xf32, #tpu.memory_space<vmem>>, vector<1x4x8x8xf32>
    %16 = vector.shape_cast %15 : vector<1x4x8x8xf32> to vector<4x8x8xf32>
    %17 = vector.shape_cast %16 : vector<4x8x8xf32> to vector<4x64xf32>
    %18 = arith.truncf %17 : vector<4x64xf32> to vector<4x64xbf16>
    %c2 = arith.constant 2 : index
    %c0_16 = arith.constant 0 : index
    %c0_17 = arith.constant 0 : index
    %19 = vector.load %arg2[%c2, %c0_16, %c0_17] : memref<9x4x4xbf16, #tpu.memory_space<vmem>>, vector<1x4x4xbf16>
    %20 = vector.shape_cast %19 : vector<1x4x4xbf16> to vector<4x4xbf16>
    %cst_18 = arith.constant dense<0.000000e+00> : vector<4x64xf32>
    %21 = tpu.matmul %20, %18, %cst_18 {dimension_numbers = #tpu.dot_dimension_numbers<[1], [0], [0], [1], [0, 0, 1, 1], [], []>} : vector<4x4xbf16>, vector<4x64xbf16>, vector<4x64xf32> -> vector<4x64xf32>
    %22 = arith.addf %14, %21 : vector<4x64xf32>
    %c0_19 = arith.constant 0 : index
    %c8 = arith.constant 8 : index
    %c0_20 = arith.constant 0 : index
    %c0_21 = arith.constant 0 : index
    %23 = vector.load %arg1[%c0_19, %c8, %c0_20, %c0_21] : memref<1x16x9x9xf32, #tpu.memory_space<vmem>>, vector<1x4x8x8xf32>
    %24 = vector.shape_cast %23 : vector<1x4x8x8xf32> to vector<4x8x8xf32>
    %25 = vector.shape_cast %24 : vector<4x8x8xf32> to vector<4x64xf32>
    %26 = arith.truncf %25 : vector<4x64xf32> to vector<4x64xbf16>
    %c3 = arith.constant 3 : index
    %c0_22 = arith.constant 0 : index
    %c0_23 = arith.constant 0 : index
    %27 = vector.load %arg2[%c3, %c0_22, %c0_23] : memref<9x4x4xbf16, #tpu.memory_space<vmem>>, vector<1x4x4xbf16>
    %28 = vector.shape_cast %27 : vector<1x4x4xbf16> to vector<4x4xbf16>
    %cst_24 = arith.constant dense<0.000000e+00> : vector<4x64xf32>
    %29 = tpu.matmul %28, %26, %cst_24 {dimension_numbers = #tpu.dot_dimension_numbers<[1], [0], [0], [1], [0, 0, 1, 1], [], []>} : vector<4x4xbf16>, vector<4x64xbf16>, vector<4x64xf32> -> vector<4x64xf32>
    %30 = arith.addf %22, %29 : vector<4x64xf32>
    %c0_25 = arith.constant 0 : index
    %c12 = arith.constant 12 : index
    %c0_26 = arith.constant 0 : index
    %c0_27 = arith.constant 0 : index
    %31 = vector.load %arg1[%c0_25, %c12, %c0_26, %c0_27] : memref<1x16x9x9xf32, #tpu.memory_space<vmem>>, vector<1x4x8x8xf32>
    %32 = vector.shape_cast %31 : vector<1x4x8x8xf32> to vector<4x8x8xf32>
    %33 = vector.shape_cast %32 : vector<4x8x8xf32> to vector<4x64xf32>
    %34 = arith.truncf %33 : vector<4x64xf32> to vector<4x64xbf16>
    %c4_28 = arith.constant 4 : index
    %c0_29 = arith.constant 0 : index
    %c0_30 = arith.constant 0 : index
    %35 = vector.load %arg2[%c4_28, %c0_29, %c0_30] : memref<9x4x4xbf16, #tpu.memory_space<vmem>>, vector<1x4x4xbf16>
    %36 = vector.shape_cast %35 : vector<1x4x4xbf16> to vector<4x4xbf16>
    %cst_31 = arith.constant dense<0.000000e+00> : vector<4x64xf32>
    %37 = tpu.matmul %36, %34, %cst_31 {dimension_numbers = #tpu.dot_dimension_numbers<[1], [0], [0], [1], [0, 0, 1, 1], [], []>} : vector<4x4xbf16>, vector<4x64xbf16>, vector<4x64xf32> -> vector<4x64xf32>
    %38 = arith.addf %30, %37 : vector<4x64xf32>
    %c0_32 = arith.constant 0 : index
    %c8_33 = arith.constant 8 : index
    %c0_34 = arith.constant 0 : index
    %c1_35 = arith.constant 1 : index
    %39 = vector.load %arg1[%c0_32, %c8_33, %c0_34, %c1_35] : memref<1x16x9x9xf32, #tpu.memory_space<vmem>>, vector<1x4x8x8xf32>
    %40 = vector.shape_cast %39 : vector<1x4x8x8xf32> to vector<4x8x8xf32>
    %41 = vector.shape_cast %40 : vector<4x8x8xf32> to vector<4x64xf32>
    %42 = arith.truncf %41 : vector<4x64xf32> to vector<4x64xbf16>
    %c5 = arith.constant 5 : index
    %c0_36 = arith.constant 0 : index
    %c0_37 = arith.constant 0 : index
    %43 = vector.load %arg2[%c5, %c0_36, %c0_37] : memref<9x4x4xbf16, #tpu.memory_space<vmem>>, vector<1x4x4xbf16>
    %44 = vector.shape_cast %43 : vector<1x4x4xbf16> to vector<4x4xbf16>
    %cst_38 = arith.constant dense<0.000000e+00> : vector<4x64xf32>
    %45 = tpu.matmul %44, %42, %cst_38 {dimension_numbers = #tpu.dot_dimension_numbers<[1], [0], [0], [1], [0, 0, 1, 1], [], []>} : vector<4x4xbf16>, vector<4x64xbf16>, vector<4x64xf32> -> vector<4x64xf32>
    %46 = arith.addf %38, %45 : vector<4x64xf32>
    %c0_39 = arith.constant 0 : index
    %c0_40 = arith.constant 0 : index
    %c1_41 = arith.constant 1 : index
    %c0_42 = arith.constant 0 : index
    %47 = vector.load %arg1[%c0_39, %c0_40, %c1_41, %c0_42] : memref<1x16x9x9xf32, #tpu.memory_space<vmem>>, vector<1x4x8x8xf32>
    %48 = vector.shape_cast %47 : vector<1x4x8x8xf32> to vector<4x8x8xf32>
    %49 = vector.shape_cast %48 : vector<4x8x8xf32> to vector<4x64xf32>
    %50 = arith.truncf %49 : vector<4x64xf32> to vector<4x64xbf16>
    %c6 = arith.constant 6 : index
    %c0_43 = arith.constant 0 : index
    %c0_44 = arith.constant 0 : index
    %51 = vector.load %arg2[%c6, %c0_43, %c0_44] : memref<9x4x4xbf16, #tpu.memory_space<vmem>>, vector<1x4x4xbf16>
    %52 = vector.shape_cast %51 : vector<1x4x4xbf16> to vector<4x4xbf16>
    %cst_45 = arith.constant dense<0.000000e+00> : vector<4x64xf32>
    %53 = tpu.matmul %52, %50, %cst_45 {dimension_numbers = #tpu.dot_dimension_numbers<[1], [0], [0], [1], [0, 0, 1, 1], [], []>} : vector<4x4xbf16>, vector<4x64xbf16>, vector<4x64xf32> -> vector<4x64xf32>
    %54 = arith.addf %46, %53 : vector<4x64xf32>
    %c0_46 = arith.constant 0 : index
    %c4_47 = arith.constant 4 : index
    %c1_48 = arith.constant 1 : index
    %c0_49 = arith.constant 0 : index
    %55 = vector.load %arg1[%c0_46, %c4_47, %c1_48, %c0_49] : memref<1x16x9x9xf32, #tpu.memory_space<vmem>>, vector<1x4x8x8xf32>
    %56 = vector.shape_cast %55 : vector<1x4x8x8xf32> to vector<4x8x8xf32>
    %57 = vector.shape_cast %56 : vector<4x8x8xf32> to vector<4x64xf32>
    %58 = arith.truncf %57 : vector<4x64xf32> to vector<4x64xbf16>
    %c7 = arith.constant 7 : index
    %c0_50 = arith.constant 0 : index
    %c0_51 = arith.constant 0 : index
    %59 = vector.load %arg2[%c7, %c0_50, %c0_51] : memref<9x4x4xbf16, #tpu.memory_space<vmem>>, vector<1x4x4xbf16>
    %60 = vector.shape_cast %59 : vector<1x4x4xbf16> to vector<4x4xbf16>
    %cst_52 = arith.constant dense<0.000000e+00> : vector<4x64xf32>
    %61 = tpu.matmul %60, %58, %cst_52 {dimension_numbers = #tpu.dot_dimension_numbers<[1], [0], [0], [1], [0, 0, 1, 1], [], []>} : vector<4x4xbf16>, vector<4x64xbf16>, vector<4x64xf32> -> vector<4x64xf32>
    %62 = arith.addf %54, %61 : vector<4x64xf32>
    %c0_53 = arith.constant 0 : index
    %c0_54 = arith.constant 0 : index
    %c1_55 = arith.constant 1 : index
    %c1_56 = arith.constant 1 : index
    %63 = vector.load %arg1[%c0_53, %c0_54, %c1_55, %c1_56] : memref<1x16x9x9xf32, #tpu.memory_space<vmem>>, vector<1x4x8x8xf32>
    %64 = vector.shape_cast %63 : vector<1x4x8x8xf32> to vector<4x8x8xf32>
    %65 = vector.shape_cast %64 : vector<4x8x8xf32> to vector<4x64xf32>
    %66 = arith.truncf %65 : vector<4x64xf32> to vector<4x64xbf16>
    %c8_57 = arith.constant 8 : index
    %c0_58 = arith.constant 0 : index
    %c0_59 = arith.constant 0 : index
    %67 = vector.load %arg2[%c8_57, %c0_58, %c0_59] : memref<9x4x4xbf16, #tpu.memory_space<vmem>>, vector<1x4x4xbf16>
    %68 = vector.shape_cast %67 : vector<1x4x4xbf16> to vector<4x4xbf16>
    %cst_60 = arith.constant dense<0.000000e+00> : vector<4x64xf32>
    %69 = tpu.matmul %68, %66, %cst_60 {dimension_numbers = #tpu.dot_dimension_numbers<[1], [0], [0], [1], [0, 0, 1, 1], [], []>} : vector<4x4xbf16>, vector<4x64xbf16>, vector<4x64xf32> -> vector<4x64xf32>
    %70 = arith.addf %62, %69 : vector<4x64xf32>
    %c0_61 = arith.constant 0 : index
    %c0_62 = arith.constant 0 : index
    %71 = vector.load %arg3[%c0_61, %c0_62] : memref<4x1xf32, #tpu.memory_space<vmem>>, vector<4x1xf32>
    %72 = vector.broadcast %71 : vector<4x1xf32> to vector<4x64xf32>
    %73 = arith.addf %70, %72 : vector<4x64xf32>
    %c0_63 = arith.constant 0 : index
    %c0_64 = arith.constant 0 : index
    %c0_65 = arith.constant 0 : index
    %74 = vector.load %arg4[%c0_63, %c0_64, %c0_65] : memref<1x4x64xf32, #tpu.memory_space<vmem>>, vector<1x4x64xf32>
    %75 = vector.shape_cast %74 : vector<1x4x64xf32> to vector<4x64xf32>
    %76 = vector.shape_cast %73 : vector<4x64xf32> to vector<1x4x64xf32>
    tpu.vector_store %arg4[%c0_63, %c0_64, %c0_65], %76 {strides = array<i32>} : memref<1x4x64xf32, #tpu.memory_space<vmem>>, vector<1x4x64xf32>,
    return
  }
  func.func @transform_0(%arg0: i32) -> (i32, i32, i32, i32) {
    %c0_i32 = arith.constant 0 : i32
    %c0_i32_0 = arith.constant 0 : i32
    %c0_i32_1 = arith.constant 0 : i32
    %c0_i32_2 = arith.constant 0 : i32
    return %arg0, %c0_i32, %c0_i32_0, %c0_i32_1 : i32, i32, i32, i32
  }
  func.func @transform_1(%arg0: i32) -> (i32, i32, i32) {
    %c0_i32 = arith.constant 0 : i32
    %c0_i32_0 = arith.constant 0 : i32
    %c0_i32_1 = arith.constant 0 : i32
    %c0_i32_2 = arith.constant 0 : i32
    return %c0_i32, %c0_i32_0, %c0_i32_1 : i32, i32, i32
  }
  func.func @transform_2(%arg0: i32) -> (i32, i32) {
    %c0_i32 = arith.constant 0 : i32
    %c0_i32_0 = arith.constant 0 : i32
    %c0_i32_1 = arith.constant 0 : i32
    return %c0_i32, %c0_i32_0 : i32, i32
  }
  func.func @transform_3(%arg0: i32) -> (i32, i32, i32) {
    %c0_i32 = arith.constant 0 : i32
    %c0_i32_0 = arith.constant 0 : i32
    %c0_i32_1 = arith.constant 0 : i32
    return %arg0, %c0_i32, %c0_i32_0 : i32, i32, i32
  }
}

</mosaic_0001>

<llo_original>
// kernel: _lambda_.4
$region0: #{_lambda_.4}
  #allocation0 [shape = 'u32[]', space=smem, size = 0x4, offset = 0x4, fixed_abs, tag = 'smem constant byte address 0x4 - core index']
  #allocation1 [shape = 'u32[144,128]{1,0:T(1,128)}', space=vmem, size = 0x12000, scoped, tag = 'internal scratch']
  %s0 = inlined_call_operand.vmem [shape: f32[2,64,16], index: 0, kind: input, shape index: {}]
  %s1 = inlined_call_operand.vmem [shape: bf16[16,48], index: 1, kind: input, shape index: {}]
  %s2 = inlined_call_operand.vmem [shape: f32[1,48], index: 2, kind: input, shape index: {}]
  %s3 = inlined_call_operand.vmem [shape: bf16[16,16], index: 3, kind: input, shape index: {}]
  %s4 = inlined_call_operand.vmem [shape: f32[1,16], index: 4, kind: input, shape index: {}]
  %s5 = inlined_call_operand.vmem [shape: f32[1,16], index: 5, kind: input, shape index: {}]
  %s6 = inlined_call_operand.vmem [shape: f32[1,16], index: 6, kind: input, shape index: {}]
  %s7 = inlined_call_operand.vmem [shape: bf16[16,32], index: 7, kind: input, shape index: {}]
  %s8 = inlined_call_operand.vmem [shape: f32[1,32], index: 8, kind: input, shape index: {}]
  %s9 = inlined_call_operand.vmem [shape: bf16[32,16], index: 9, kind: input, shape index: {}]
  %s10 = inlined_call_operand.vmem [shape: f32[1,16], index: 10, kind: input, shape index: {}]
  %s11 = inlined_call_operand.vmem [shape: f32[1,16], index: 11, kind: input, shape index: {}]
  %s12 = inlined_call_operand.vmem [shape: f32[1,16], index: 12, kind: input, shape index: {}]
  %s13 = inlined_call_operand.vmem [shape: f32[2,64,16], index: 13, kind: output, shape index: {}]
  %s14 = sld [smem:[#allocation0]]
  $region85: #{_lambda_.4} parent=0
    _
  %s16 = ssub.s32 1, %s14
  %s17 = scalar_select 0, %s16, %s14
  loop: start=0, step=1, limit=4
  $region2: #{_lambda_.4} parent=0 // loop_pre_header
    _
  $region3: #{_lambda_.4} parent=0 // loop_header
    %s19 = sphi 0, %s23
    %p20 = scmp.ge.s32.totalorder %s19, 4
    %s29 = sphi 0, %s31
    %s32 = sphi 0, %s29
    %s33 = sphi 0, %s32
    %s49 = sphi 0, %s33
    %s53 = sphi 0, %s53
    %s55 = sphi 0, %s53
    %s56 = sphi 0, %s55
    %s70 = sphi 0, %s56
    %s74 = sphi 0, %s74
    %s76 = sphi 0, %s74
    %s77 = sphi 0, %s76
    %s91 = sphi 0, %s77
    %s95 = sphi 0, %s95
    %s97 = sphi 0, %s95
    %s98 = sphi 0, %s97
    %s112 = sphi 0, %s98
    %s116 = sphi 0, %s116
    %s118 = sphi 0, %s116
    %s119 = sphi 0, %s118
    %s133 = sphi 0, %s119
    %s137 = sphi 0, %s137
    %s139 = sphi 0, %s137
    %s140 = sphi 0, %s139
    %s154 = sphi 0, %s140
    %s158 = sphi 0, %s158
    %s160 = sphi 0, %s158
    %s161 = sphi 0, %s160
    %s175 = sphi 0, %s161
    %s179 = sphi 0, %s179
    %s181 = sphi 0, %s179
    %s182 = sphi 0, %s181
    %s196 = sphi 0, %s182
    %s200 = sphi 0, %s200
    %s202 = sphi 0, %s200
    %s203 = sphi 0, %s202
    %s217 = sphi 0, %s203
    %s221 = sphi 0, %s221
    %s223 = sphi 0, %s221
    %s224 = sphi 0, %s223
    %s238 = sphi 0, %s224
    %s242 = sphi 0, %s242
    %s244 = sphi 0, %s242
    %s245 = sphi 0, %s244
    %s259 = sphi 0, %s245
    %s263 = sphi 0, %s263
    %s265 = sphi 0, %s263
    %s266 = sphi 0, %s265
    %s280 = sphi 0, %s266
    %s284 = sphi 0, %s284
    %s286 = sphi 0, %s284
    %s287 = sphi 0, %s286
    %s301 = sphi 0, %s287
    %s307 = sphi 0, %s309
    %s310 = sphi 0, %s307
    %s311 = sphi 0, %s310
    %s327 = sphi 0, %s311
  $region4: #{_lambda_.4} parent=0 // loop_header_branch
    %22 = sbr.rel (%p20) target = $region8
  $region5: #{_lambda_.4} parent=0 // loop_body
    %s24 = ssub.s32 %s19, 1
    %s25 = ssub.s32 %s19, 2
    %s26 = sadd.s32 %s19, 1
    %s27 = ssub.s32 %s19, %s26
    %p28 = scmp.eq.s32.totalorder %s27, 0
    %s30 = sadd.s32 %s29, 1
    %s31 = scalar_select %p28, %s29, %s30
    %p34 = pneg %p28
    %p35 = scmp.eq.s32.totalorder %s19, 1
    %p36 = por %p34, %p35
    %p37 = scmp.ne.s32.totalorder %s29, %s32
    %p38 = scmp.eq.s32.totalorder %s19, 0
    %p39 = por %p37, %p38
    %p40 = scmp.ne.s32.totalorder %s29, %s32
    %p41 = scmp.eq.s32.totalorder %s24, 1
    %p42 = por %p40, %p41
    %p43 = scmp.ne.s32.totalorder %s32, %s33
    %p44 = scmp.eq.s32.totalorder %s24, 0
    %p45 = por %p43, %p44
    %p46 = scmp.ne.s32.totalorder %s32, %s33
    %p47 = scmp.eq.s32.totalorder %s25, 1
    %p48 = por %p46, %p47
    %p50 = scmp.ne.s32.totalorder %s33, %s49
    %p51 = scmp.eq.s32.totalorder %s25, 0
    %p52 = por %p50, %p51
    %s54 = sadd.s32 %s53, 1
    %p57 = scmp.eq.s32.totalorder %s19, 1
    %p58 = scmp.ne.s32.totalorder %s53, %s55
    %p59 = scmp.eq.s32.totalorder %s19, 0
    %p60 = por %p58, %p59
    %p61 = scmp.ne.s32.totalorder %s53, %s55
    %p62 = scmp.eq.s32.totalorder %s24, 1
    %p63 = por %p61, %p62
    %p64 = scmp.ne.s32.totalorder %s55, %s56
    %p65 = scmp.eq.s32.totalorder %s24, 0
    %p66 = por %p64, %p65
    %p67 = scmp.ne.s32.totalorder %s55, %s56
    %p68 = scmp.eq.s32.totalorder %s25, 1
    %p69 = por %p67, %p68
    %p71 = scmp.ne.s32.totalorder %s56, %s70
    %p72 = scmp.eq.s32.totalorder %s25, 0
    %p73 = por %p71, %p72
    %s75 = sadd.s32 %s74, 1
    %p78 = scmp.eq.s32.totalorder %s19, 1
    %p79 = scmp.ne.s32.totalorder %s74, %s76
    %p80 = scmp.eq.s32.totalorder %s19, 0
    %p81 = por %p79, %p80
    %p82 = scmp.ne.s32.totalorder %s74, %s76
    %p83 = scmp.eq.s32.totalorder %s24, 1
    %p84 = por %p82, %p83
    %p85 = scmp.ne.s32.totalorder %s76, %s77
    %p86 = scmp.eq.s32.totalorder %s24, 0
    %p87 = por %p85, %p86
    %p88 = scmp.ne.s32.totalorder %s76, %s77
    %p89 = scmp.eq.s32.totalorder %s25, 1
    %p90 = por %p88, %p89
    %p92 = scmp.ne.s32.totalorder %s77, %s91
    %p93 = scmp.eq.s32.totalorder %s25, 0
    %p94 = por %p92, %p93
    %s96 = sadd.s32 %s95, 1
    %p99 = scmp.eq.s32.totalorder %s19, 1
    %p100 = scmp.ne.s32.totalorder %s95, %s97
    %p101 = scmp.eq.s32.totalorder %s19, 0
    %p102 = por %p100, %p101
    %p103 = scmp.ne.s32.totalorder %s95, %s97
    %p104 = scmp.eq.s32.totalorder %s24, 1
    %p105 = por %p103, %p104
    %p106 = scmp.ne.s32.totalorder %s97, %s98
    %p107 = scmp.eq.s32.totalorder %s24, 0
    %p108 = por %p106, %p107
    %p109 = scmp.ne.s32.totalorder %s97, %s98
    %p110 = scmp.eq.s32.totalorder %s25, 1
    %p111 = por %p109, %p110
    %p113 = scmp.ne.s32.totalorder %s98, %s112
    %p114 = scmp.eq.s32.totalorder %s25, 0
    %p115 = por %p113, %p114
    %s117 = sadd.s32 %s116, 1
    %p120 = scmp.eq.s32.totalorder %s19, 1
    %p121 = scmp.ne.s32.totalorder %s116, %s118
    %p122 = scmp.eq.s32.totalorder %s19, 0
    %p123 = por %p121, %p122
    %p124 = scmp.ne.s32.totalorder %s116, %s118
    %p125 = scmp.eq.s32.totalorder %s24, 1
    %p126 = por %p124, %p125
    %p127 = scmp.ne.s32.totalorder %s118, %s119
    %p128 = scmp.eq.s32.totalorder %s24, 0
    %p129 = por %p127, %p128
    %p130 = scmp.ne.s32.totalorder %s118, %s119
    %p131 = scmp.eq.s32.totalorder %s25, 1
    %p132 = por %p130, %p131
    %p134 = scmp.ne.s32.totalorder %s119, %s133
    %p135 = scmp.eq.s32.totalorder %s25, 0
    %p136 = por %p134, %p135
    %s138 = sadd.s32 %s137, 1
    %p141 = scmp.eq.s32.totalorder %s19, 1
    %p142 = scmp.ne.s32.totalorder %s137, %s139
    %p143 = scmp.eq.s32.totalorder %s19, 0
    %p144 = por %p142, %p143
    %p145 = scmp.ne.s32.totalorder %s137, %s139
    %p146 = scmp.eq.s32.totalorder %s24, 1
    %p147 = por %p145, %p146
    %p148 = scmp.ne.s32.totalorder %s139, %s140
    %p149 = scmp.eq.s32.totalorder %s24, 0
    %p150 = por %p148, %p149
    %p151 = scmp.ne.s32.totalorder %s139, %s140
    %p152 = scmp.eq.s32.totalorder %s25, 1
    %p153 = por %p151, %p152
    %p155 = scmp.ne.s32.totalorder %s140, %s154
    %p156 = scmp.eq.s32.totalorder %s25, 0
    %p157 = por %p155, %p156
    %s159 = sadd.s32 %s158, 1
    %p162 = scmp.eq.s32.totalorder %s19, 1
    %p163 = scmp.ne.s32.totalorder %s158, %s160
    %p164 = scmp.eq.s32.totalorder %s19, 0
    %p165 = por %p163, %p164
    %p166 = scmp.ne.s32.totalorder %s158, %s160
    %p167 = scmp.eq.s32.totalorder %s24, 1
    %p168 = por %p166, %p167
    %p169 = scmp.ne.s32.totalorder %s160, %s161
    %p170 = scmp.eq.s32.totalorder %s24, 0
    %p171 = por %p169, %p170
    %p172 = scmp.ne.s32.totalorder %s160, %s161
    %p173 = scmp.eq.s32.totalorder %s25, 1
    %p174 = por %p172, %p173
    %p176 = scmp.ne.s32.totalorder %s161, %s175
    %p177 = scmp.eq.s32.totalorder %s25, 0
    %p178 = por %p176, %p177
    %s180 = sadd.s32 %s179, 1
    %p183 = scmp.eq.s32.totalorder %s19, 1
    %p184 = scmp.ne.s32.totalorder %s179, %s181
    %p185 = scmp.eq.s32.totalorder %s19, 0
    %p186 = por %p184, %p185
    %p187 = scmp.ne.s32.totalorder %s179, %s181
    %p188 = scmp.eq.s32.totalorder %s24, 1
    %p189 = por %p187, %p188
    %p190 = scmp.ne.s32.totalorder %s181, %s182
    %p191 = scmp.eq.s32.totalorder %s24, 0
    %p192 = por %p190, %p191
    %p193 = scmp.ne.s32.totalorder %s181, %s182
    %p194 = scmp.eq.s32.totalorder %s25, 1
    %p195 = por %p193, %p194
    %p197 = scmp.ne.s32.totalorder %s182, %s196
    %p198 = scmp.eq.s32.totalorder %s25, 0
    %p199 = por %p197, %p198
    %s201 = sadd.s32 %s200, 1
    %p204 = scmp.eq.s32.totalorder %s19, 1
    %p205 = scmp.ne.s32.totalorder %s200, %s202
    %p206 = scmp.eq.s32.totalorder %s19, 0
    %p207 = por %p205, %p206
    %p208 = scmp.ne.s32.totalorder %s200, %s202
    %p209 = scmp.eq.s32.totalorder %s24, 1
    %p210 = por %p208, %p209
    %p211 = scmp.ne.s32.totalorder %s202, %s203
    %p212 = scmp.eq.s32.totalorder %s24, 0
    %p213 = por %p211, %p212
    %p214 = scmp.ne.s32.totalorder %s202, %s203
    %p215 = scmp.eq.s32.totalorder %s25, 1
    %p216 = por %p214, %p215
    %p218 = scmp.ne.s32.totalorder %s203, %s217
    %p219 = scmp.eq.s32.totalorder %s25, 0
    %p220 = por %p218, %p219
    %s222 = sadd.s32 %s221, 1
    %p225 = scmp.eq.s32.totalorder %s19, 1
    %p226 = scmp.ne.s32.totalorder %s221, %s223
    %p227 = scmp.eq.s32.totalorder %s19, 0
    %p228 = por %p226, %p227
    %p229 = scmp.ne.s32.totalorder %s221, %s223
    %p230 = scmp.eq.s32.totalorder %s24, 1
    %p231 = por %p229, %p230
    %p232 = scmp.ne.s32.totalorder %s223, %s224
    %p233 = scmp.eq.s32.totalorder %s24, 0
    %p234 = por %p232, %p233
    %p235 = scmp.ne.s32.totalorder %s223, %s224
    %p236 = scmp.eq.s32.totalorder %s25, 1
    %p237 = por %p235, %p236
    %p239 = scmp.ne.s32.totalorder %s224, %s238
    %p240 = scmp.eq.s32.totalorder %s25, 0
    %p241 = por %p239, %p240
    %s243 = sadd.s32 %s242, 1
    %p246 = scmp.eq.s32.totalorder %s19, 1
    %p247 = scmp.ne.s32.totalorder %s242, %s244
    %p248 = scmp.eq.s32.totalorder %s19, 0
    %p249 = por %p247, %p248
    %p250 = scmp.ne.s32.totalorder %s242, %s244
    %p251 = scmp.eq.s32.totalorder %s24, 1
    %p252 = por %p250, %p251
    %p253 = scmp.ne.s32.totalorder %s244, %s245
    %p254 = scmp.eq.s32.totalorder %s24, 0
    %p255 = por %p253, %p254
    %p256 = scmp.ne.s32.totalorder %s244, %s245
    %p257 = scmp.eq.s32.totalorder %s25, 1
    %p258 = por %p256, %p257
    %p260 = scmp.ne.s32.totalorder %s245, %s259
    %p261 = scmp.eq.s32.totalorder %s25, 0
    %p262 = por %p260, %p261
    %s264 = sadd.s32 %s263, 1
    %p267 = scmp.eq.s32.totalorder %s19, 1
    %p268 = scmp.ne.s32.totalorder %s263, %s265
    %p269 = scmp.eq.s32.totalorder %s19, 0
    %p270 = por %p268, %p269
    %p271 = scmp.ne.s32.totalorder %s263, %s265
    %p272 = scmp.eq.s32.totalorder %s24, 1
    %p273 = por %p271, %p272
    %p274 = scmp.ne.s32.totalorder %s265, %s266
    %p275 = scmp.eq.s32.totalorder %s24, 0
    %p276 = por %p274, %p275
    %p277 = scmp.ne.s32.totalorder %s265, %s266
    %p278 = scmp.eq.s32.totalorder %s25, 1
    %p279 = por %p277, %p278
    %p281 = scmp.ne.s32.totalorder %s266, %s280
    %p282 = scmp.eq.s32.totalorder %s25, 0
    %p283 = por %p281, %p282
    %s285 = sadd.s32 %s284, 1
    %p288 = scmp.eq.s32.totalorder %s19, 1
    %p289 = scmp.ne.s32.totalorder %s284, %s286
    %p290 = scmp.eq.s32.totalorder %s19, 0
    %p291 = por %p289, %p290
    %p292 = scmp.ne.s32.totalorder %s284, %s286
    %p293 = scmp.eq.s32.totalorder %s24, 1
    %p294 = por %p292, %p293
    %p295 = scmp.ne.s32.totalorder %s286, %s287
    %p296 = scmp.eq.s32.totalorder %s24, 0
    %p297 = por %p295, %p296
    %p298 = scmp.ne.s32.totalorder %s286, %s287
    %p299 = scmp.eq.s32.totalorder %s25, 1
    %p300 = por %p298, %p299
    %p302 = scmp.ne.s32.totalorder %s287, %s301
    %p303 = scmp.eq.s32.totalorder %s25, 0
    %p304 = por %p302, %p303
    %s305 = ssub.s32 %s19, %s26
    %p306 = scmp.eq.s32.totalorder %s305, 0
    %s308 = sadd.s32 %s307, 1
    %s309 = scalar_select %p306, %s307, %s308
    %p312 = pneg %p306
    %p313 = scmp.eq.s32.totalorder %s19, 1
    %p314 = por %p312, %p313
    %p315 = scmp.ne.s32.totalorder %s307, %s310
    %p316 = scmp.eq.s32.totalorder %s19, 0
    %p317 = por %p315, %p316
    %p318 = scmp.ne.s32.totalorder %s307, %s310
    %p319 = scmp.eq.s32.totalorder %s24, 1
    %p320 = por %p318, %p319
    %p321 = scmp.ne.s32.totalorder %s310, %s311
    %p322 = scmp.eq.s32.totalorder %s24, 0
    %p323 = por %p321, %p322
    %p324 = scmp.ne.s32.totalorder %s310, %s311
    %p325 = scmp.eq.s32.totalorder %s25, 1
    %p326 = por %p324, %p325
    %p328 = scmp.ne.s32.totalorder %s311, %s327
    %p329 = scmp.eq.s32.totalorder %s25, 0
    %p330 = por %p328, %p329
    %p331 = scmp.le.s32.totalorder 1, %s19
    %p332 = scmp.lt.s32.totalorder %s19, 3
    %p333 = pnand %p331, %p332
    %p334 = pneg %p333
    // Predicated region
    $region9: #{_lambda_.4} parent=5 // pred_check
      _
    $region10: #{_lambda_.4} parent=5 // pred_check_branch
      %336 = sbr.rel (%p333) target = $region12
    $region11: #{_lambda_.4} parent=5 // pred_region
      %s337 = ssub.s32 %s19, 1
      // Predicated region
      $region13: #{_lambda_.4} parent=11 // pred_check
        %p338 = pneg %p66
      $region14: #{_lambda_.4} parent=11 // pred_check_branch
        %340 = sbr.rel (%p338) target = $region16
      $region15: #{_lambda_.4} parent=11 // pred_region
        _
      $region16: #{_lambda_.4} parent=11 // pred_fallthru
        _
      // Predicated region
      $region17: #{_lambda_.4} parent=11 // pred_check
        %p341 = pneg %p87
      $region18: #{_lambda_.4} parent=11 // pred_check_branch
        %343 = sbr.rel (%p341) target = $region20
      $region19: #{_lambda_.4} parent=11 // pred_region
        _
      $region20: #{_lambda_.4} parent=11 // pred_fallthru
        _
      // Predicated region
      $region21: #{_lambda_.4} parent=11 // pred_check
        %p344 = pneg %p108
      $region22: #{_lambda_.4} parent=11 // pred_check_branch
        %346 = sbr.rel (%p344) target = $region24
      $region23: #{_lambda_.4} parent=11 // pred_region
        _
      $region24: #{_lambda_.4} parent=11 // pred_fallthru
        _
      // Predicated region
      $region25: #{_lambda_.4} parent=11 // pred_check
        %p347 = pneg %p129
      $region26: #{_lambda_.4} parent=11 // pred_check_branch
        %349 = sbr.rel (%p347) target = $region28
      $region27: #{_lambda_.4} parent=11 // pred_region
        _
      $region28: #{_lambda_.4} parent=11 // pred_fallthru
        _
      // Predicated region
      $region29: #{_lambda_.4} parent=11 // pred_check
        %p350 = pneg %p150
      $region30: #{_lambda_.4} parent=11 // pred_check_branch
        %352 = sbr.rel (%p350) target = $region32
      $region31: #{_lambda_.4} parent=11 // pred_region
        _
      $region32: #{_lambda_.4} parent=11 // pred_fallthru
        _
      // Predicated region
      $region33: #{_lambda_.4} parent=11 // pred_check
        %p353 = pneg %p171
      $region34: #{_lambda_.4} parent=11 // pred_check_branch
        %355 = sbr.rel (%p353) target = $region36
      $region35: #{_lambda_.4} parent=11 // pred_region
        _
      $region36: #{_lambda_.4} parent=11 // pred_fallthru
        _
      // Predicated region
      $region37: #{_lambda_.4} parent=11 // pred_check
        %p356 = pneg %p192
      $region38: #{_lambda_.4} parent=11 // pred_check_branch
        %358 = sbr.rel (%p356) target = $region40
      $region39: #{_lambda_.4} parent=11 // pred_region
        _
      $region40: #{_lambda_.4} parent=11 // pred_fallthru
        _
      // Predicated region
      $region41: #{_lambda_.4} parent=11 // pred_check
        %p359 = pneg %p213
      $region42: #{_lambda_.4} parent=11 // pred_check_branch
        %361 = sbr.rel (%p359) target = $region44
      $region43: #{_lambda_.4} parent=11 // pred_region
        _
      $region44: #{_lambda_.4} parent=11 // pred_fallthru
        _
      // Predicated region
      $region45: #{_lambda_.4} parent=11 // pred_check
        %p362 = pneg %p234
      $region46: #{_lambda_.4} parent=11 // pred_check_branch
        %364 = sbr.rel (%p362) target = $region48
      $region47: #{_lambda_.4} parent=11 // pred_region
        _
      $region48: #{_lambda_.4} parent=11 // pred_fallthru
        _
      // Predicated region
      $region49: #{_lambda_.4} parent=11 // pred_check
        %p365 = pneg %p255
      $region50: #{_lambda_.4} parent=11 // pred_check_branch
        %367 = sbr.rel (%p365) target = $region52
      $region51: #{_lambda_.4} parent=11 // pred_region
        _
      $region52: #{_lambda_.4} parent=11 // pred_fallthru
        _
      // Predicated region
      $region53: #{_lambda_.4} parent=11 // pred_check
        %p368 = pneg %p276
      $region54: #{_lambda_.4} parent=11 // pred_check_branch
        %370 = sbr.rel (%p368) target = $region56
      $region55: #{_lambda_.4} parent=11 // pred_region
        _
      $region56: #{_lambda_.4} parent=11 // pred_fallthru
        _
      // Predicated region
      $region57: #{_lambda_.4} parent=11 // pred_check
        %p371 = pneg %p297
      $region58: #{_lambda_.4} parent=11 // pred_check_branch
        %373 = sbr.rel (%p371) target = $region60
      $region59: #{_lambda_.4} parent=11 // pred_region
        _
      $region60: #{_lambda_.4} parent=11 // pred_fallthru
        _
    $region12: #{_lambda_.4} parent=5 // pred_fallthru
      _
    %p374 = scmp.lt.s32.totalorder %s19, 2
    // Predicated region
    $region61: #{_lambda_.4} parent=5 // pred_check
      %p375 = pneg %p374
    $region62: #{_lambda_.4} parent=5 // pred_check_branch
      %377 = sbr.rel (%p375) target = $region64
    $region63: #{_lambda_.4} parent=5 // pred_region
      // Predicated region
      $region65: #{_lambda_.4} parent=63 // pred_check
        %p378 = pneg %p39
      $region66: #{_lambda_.4} parent=63 // pred_check_branch
        %380 = sbr.rel (%p378) target = $region68
      $region67: #{_lambda_.4} parent=63 // pred_region
        %p381 = scmp.lt.s32.totalorder %s19, 1
        %s382 = scalar_select %p381, %s19, 1
        %s383 = smul.addr %s382, 8
        %s384 = smul.addr %s383, 8
        %s385 = scalar_lea.vmem %s0, %s384
      $region68: #{_lambda_.4} parent=63 // pred_fallthru
        _
    $region64: #{_lambda_.4} parent=5 // pred_fallthru
      _
    %p386 = scmp.le.s32.totalorder 1, %s19
    %p387 = scmp.lt.s32.totalorder %s19, 3
    %p388 = pnand %p386, %p387
    %p389 = pneg %p388
    // Predicated region
    $region69: #{_lambda_.4} parent=5 // pred_check
      _
    $region70: #{_lambda_.4} parent=5 // pred_check_branch
      %391 = sbr.rel (%p388) target = $region72
    $region71: #{_lambda_.4} parent=5 // pred_region
      %s392 = ssub.s32 %s19, 1
      %p393 = scmp.lt.s32.totalorder %s24, 1
      %s394 = scalar_select %p393, %s24, 1
      %s395 = smul.addr %s394, 8
      %s396 = smul.addr %s395, 8
      %s397 = scalar_lea.vmem %s0, %s396
      %p398 = pneg %p45
      %p399 = pneg %p42
      %p400 = pneg %p66
      %p401 = pneg %p63
      %p402 = pneg %p87
      %p403 = pneg %p84
      %p404 = pneg %p108
      %p405 = pneg %p105
      %p406 = pneg %p129
      %p407 = pneg %p126
      %p408 = pneg %p150
      %p409 = pneg %p147
      %p410 = pneg %p171
      %p411 = pneg %p168
      %p412 = pneg %p192
      %p413 = pneg %p189
      %p414 = pneg %p213
      %p415 = pneg %p210
      %p416 = pneg %p234
      %p417 = pneg %p231
      %p418 = pneg %p255
      %p419 = pneg %p252
      %p420 = pneg %p276
      %p421 = pneg %p273
      %p422 = pneg %p297
      %p423 = pneg %p294
      %p424 = pneg %p323
      %p425 = pneg %p320
      %p426 = scmp.lt.s32.totalorder %s24, 1
      %s427 = scalar_select %p426, %s24, 1
      %s428 = smul.addr %s427, 8
      %s429 = smul.addr %s428, 8
      %s430 = scalar_lea.vmem %s13, %s429
      %p431 = scmp.lt.s32.totalorder %s24, 1
      %s432 = scalar_select %p431, %s24, 1
      %s433 = smul.addr %s432, 8
      %s434 = smul.addr %s433, 8
      %s435 = scalar_lea.vmem %s0, %s434
      %p436 = scmp.lt.s32.totalorder %s24, 1
      %s437 = scalar_select %p436, %s24, 1
      %s438 = smul.addr %s437, 8
      %s439 = smul.addr %s438, 8
      %s440 = scalar_lea.vmem %s13, %s439
      %v442 = vld [vmem:[%s435] sm:$0xff]
      %v443 = vld [vmem:[%s435 + $0x8] sm:$0xff]
      %v444 = vld [vmem:[%s435 + $0x10] sm:$0xff]
      %v445 = vld [vmem:[%s435 + $0x18] sm:$0xff]
      %v446 = vld [vmem:[%s435 + $0x20] sm:$0xff]
      %v447 = vld [vmem:[%s435 + $0x28] sm:$0xff]
      %v448 = vld [vmem:[%s435 + $0x30] sm:$0xff]
      %v449 = vld [vmem:[%s435 + $0x38] sm:$0xff]
      %v450 = vpack.c.bf16 %v443, %v442
      %v451 = vpack.c.bf16 %v445, %v444
      %v452 = vpack.c.bf16 %v447, %v446
      %v453 = vpack.c.bf16 %v449, %v448
      %v454 = vld [vmem:[%s1] sm:$0xf]
      %v455 = vld [vmem:[%s1 + $0x4] sm:$0xf]
      %v456 = vld [vmem:[%s2] sm:$0x1]
      %v458 = vlaneseq
      %v459 = vshrl.u32 %v458, 7
      %v460 = vsub.s32 0, %v459
      %v461 = vrot.slane %v456, %v460
      %v465 = vunpack.c.l.b16 %v454
      %v466 = vunpack.c.l.b16 %v455
      %v467 = vpack.c.b16 %v466, %v465
      %vm469 = vcmask 130048
      %v471 = vsel %vm469, %v450, 0
      %v474 = vsel %vm469, %v451, 0
      %v477 = vsel %vm469, %v452, 0
      %v480 = vsel %vm469, %v453, 0
      %482 = vmatprep.subr.bf16.mxu0 0
      %483 = vmatpush1.bf16.msra.mxu0 0
      %484 = vmatprep.subr.bf16.mxu0 0
      %485 = vmatpush1.bf16.msra.mxu0 0
      %486 = vmatprep.subr.bf16.mxu0 0
      %487 = vmatpush1.bf16.msra.mxu0 0
      %488 = vmatprep.subr.bf16.mxu0 0
      %489 = vmatpush1.bf16.msra.mxu0 0
      %490 = vmatprep.subr.bf16.mxu0 0
      %491 = vmatpush1.bf16.msra.mxu0 0
      %492 = vmatprep.subr.bf16.mxu0 0
      %493 = vmatpush1.bf16.msra.mxu0 0
      %494 = vmatprep.subr.bf16.mxu0 0
      %495 = vmatpush1.bf16.msra.mxu0 0
      %496 = vmatprep.subr.bf16.mxu0 0
      %497 = vmatpush1.bf16.msra.mxu0 %v467
      %498 = vmatprep.subr.bf16.mxu0 0
      %499 = vmatpush2.bf16.msra.mxu0 0
      %500 = vmatprep.subr.bf16.mxu0 0
      %501 = vmatpush2.bf16.msra.mxu0 0
      %502 = vmatprep.subr.bf16.mxu0 0
      %503 = vmatpush2.bf16.msra.mxu0 0
      %504 = vmatprep.subr.bf16.mxu0 0
      %505 = vmatpush2.bf16.msra.mxu0 0
      %506 = vmatprep.subr.bf16.mxu0 0
      %507 = vmatpush2.bf16.msra.mxu0 0
      %508 = vmatprep.subr.bf16.mxu0 0
      %509 = vmatpush2.bf16.msra.mxu0 0
      %510 = vmatprep.subr.bf16.mxu0 0
      %511 = vmatpush2.bf16.msra.mxu0 0
      %512 = vmatprep.subr.bf16.mxu0 0
      %513 = vmatpush2.bf16.msra.mxu0 0
      %514 = vmatprep.mubr.bf16.mxu0 0
      %515 = vmatmul.mubr.bf16.gmra.mxu0 %v471
      %v516 = vpop.f32.mrf.mxu0
      %v517 = vadd.f32 %v461, %v516
      %v518 = vpop.f32.mrf.mxu0
      %v519 = vpop.f32.mrf.mxu0
      %v520 = vadd.f32 %v461, %v519
      %v521 = vpop.f32.mrf.mxu0
      %522 = vmatprep.mubr.bf16.mxu0 0
      %523 = vmatmul.mubr.bf16.gmra.mxu0 %v474
      %v524 = vpop.f32.mrf.mxu0
      %v525 = vadd.f32 %v461, %v524
      %v526 = vpop.f32.mrf.mxu0
      %v527 = vpop.f32.mrf.mxu0
      %v528 = vadd.f32 %v461, %v527
      %v529 = vpop.f32.mrf.mxu0
      %530 = vmatprep.mubr.bf16.mxu0 0
      %531 = vmatmul.mubr.bf16.gmra.mxu0 %v477
      %v532 = vpop.f32.mrf.mxu0
      %v533 = vadd.f32 %v461, %v532
      %v534 = vpop.f32.mrf.mxu0
      %v535 = vpop.f32.mrf.mxu0
      %v536 = vadd.f32 %v461, %v535
      %v537 = vpop.f32.mrf.mxu0
      %538 = vmatprep.mubr.bf16.mxu0 0
      %539 = vmatmul.mubr.bf16.gmra.mxu0 %v480
      %v540 = vpop.f32.mrf.mxu0
      %v541 = vadd.f32 %v461, %v540
      %v542 = vpop.f32.mrf.mxu0
      %v543 = vpop.f32.mrf.mxu0
      %v544 = vadd.f32 %v461, %v543
      %v545 = vpop.f32.mrf.mxu0
      %546 = vdwg.mxu0
      %v547 = vpack.c.bf16 %v520, %v517
      %v548 = vpack.c.bf16 %v528, %v525
      %v549 = vpack.c.bf16 %v536, %v533
      %v550 = vpack.c.bf16 %v544, %v541
      %555 = vrot.lane.b32.xlu0 %v547, 112
      %v556 = vpop.permute.xlu0 %555
      %557 = vrot.lane.b32.xlu0 %v548, 112
      %v558 = vpop.permute.xlu0 %557
      %559 = vrot.lane.b32.xlu0 %v549, 112
      %v560 = vpop.permute.xlu0 %559
      %561 = vrot.lane.b32.xlu0 %v550, 112
      %v562 = vpop.permute.xlu0 %561
      %vm563 = vcmask 64512
      %v565 = vsel %vm563, %v547, 0
      %v568 = vsel %vm563, %v548, 0
      %v571 = vsel %vm563, %v549, 0
      %v574 = vsel %vm563, %v550, 0
      %v577 = vsel %vm563, %v556, 0
      %v580 = vsel %vm563, %v558, 0
      %v583 = vsel %vm563, %v560, 0
      %v586 = vsel %vm563, %v562, 0
      %588 = vmatprep.subr.bf16.mxu0 0
      %589 = vmatpush1.bf16.xpose.msra.mxu0 0
      %590 = vmatprep.subr.bf16.mxu0 0
      %591 = vmatpush1.bf16.xpose.msra.mxu0 0
      %592 = vmatprep.subr.bf16.mxu0 0
      %593 = vmatpush1.bf16.xpose.msra.mxu0 0
      %594 = vmatprep.subr.bf16.mxu0 0
      %595 = vmatpush1.bf16.xpose.msra.mxu0 0
      %596 = vmatprep.subr.bf16.mxu0 0
      %597 = vmatpush1.bf16.xpose.msra.mxu0 %v586
      %598 = vmatprep.subr.bf16.mxu0 0
      %599 = vmatpush1.bf16.xpose.msra.mxu0 %v583
      %600 = vmatprep.subr.bf16.mxu0 0
      %601 = vmatpush1.bf16.xpose.msra.mxu0 %v580
      %602 = vmatprep.subr.bf16.mxu0 0
      %603 = vmatpush1.bf16.xpose.msra.mxu0 %v577
      %604 = vmatprep.subr.bf16.mxu0 0
      %605 = vmatpush2.bf16.xpose.msra.mxu0 0
      %606 = vmatprep.subr.bf16.mxu0 0
      %607 = vmatpush2.bf16.xpose.msra.mxu0 0
      %608 = vmatprep.subr.bf16.mxu0 0
      %609 = vmatpush2.bf16.xpose.msra.mxu0 0
      %610 = vmatprep.subr.bf16.mxu0 0
      %611 = vmatpush2.bf16.xpose.msra.mxu0 0
      %612 = vmatprep.subr.bf16.mxu0 0
      %613 = vmatpush2.bf16.xpose.msra.mxu0 0
      %614 = vmatprep.subr.bf16.mxu0 0
      %615 = vmatpush2.bf16.xpose.msra.mxu0 0
      %616 = vmatprep.subr.bf16.mxu0 0
      %617 = vmatpush2.bf16.xpose.msra.mxu0 0
      %618 = vmatprep.subr.bf16.mxu0 0
      %619 = vmatpush2.bf16.xpose.msra.mxu0 0
      %620 = vmatprep.mubr.bf16.mxu0 0
      %621 = vmatmul.mubr.bf16.gmra.mxu0 %v565
      %v622 = vpop.f32.mrf.mxu0
      %v623 = vadd.f32 0.0, %v622
      %v624 = vpop.f32.mrf.mxu0
      %v625 = vpop.f32.mrf.mxu0
      %v626 = vadd.f32 0.0, %v625
      %v627 = vpop.f32.mrf.mxu0
      %628 = vmatprep.mubr.bf16.mxu0 0
      %629 = vmatmul.mubr.bf16.gmra.mxu0 %v568
      %v630 = vpop.f32.mrf.mxu0
      %v631 = vadd.f32 0.0, %v630
      %v632 = vpop.f32.mrf.mxu0
      %v633 = vpop.f32.mrf.mxu0
      %v634 = vadd.f32 0.0, %v633
      %v635 = vpop.f32.mrf.mxu0
      %636 = vmatprep.mubr.bf16.mxu0 0
      %637 = vmatmul.mubr.bf16.gmra.mxu0 %v571
      %v638 = vpop.f32.mrf.mxu0
      %v639 = vadd.f32 0.0, %v638
      %v640 = vpop.f32.mrf.mxu0
      %v641 = vpop.f32.mrf.mxu0
      %v642 = vadd.f32 0.0, %v641
      %v643 = vpop.f32.mrf.mxu0
      %644 = vmatprep.mubr.bf16.mxu0 0
      %645 = vmatmul.mubr.bf16.gmra.mxu0 %v574
      %v646 = vpop.f32.mrf.mxu0
      %v647 = vadd.f32 0.0, %v646
      %v648 = vpop.f32.mrf.mxu0
      %v649 = vpop.f32.mrf.mxu0
      %v650 = vadd.f32 0.0, %v649
      %v651 = vpop.f32.mrf.mxu0
      %652 = vdwg.mxu0
      %v653 = vmul.f32 %v623, 0.35355338
      %v654 = vmul.f32 %v626, 0.35355338
      %v655 = vmul.f32 %v631, 0.35355338
      %v656 = vmul.f32 %v634, 0.35355338
      %v657 = vmul.f32 %v639, 0.35355338
      %v658 = vmul.f32 %v642, 0.35355338
      %v659 = vmul.f32 %v647, 0.35355338
      %v660 = vmul.f32 %v650, 0.35355338
      %vm661 = vcmask 523264
      %v662 = vsel %vm661, %v653, -inf
      %663 = vmax.xlane.f32.xlu0 %v662
      %v664 = vpop.xlane.xlu0 %663
      %v665 = vsel %vm661, %v654, -inf
      %666 = vmax.xlane.f32.xlu0 %v665
      %v667 = vpop.xlane.xlu0 %666
      %v668 = vsel %vm661, %v655, -inf
      %669 = vmax.xlane.f32.xlu0 %v668
      %v670 = vpop.xlane.xlu0 %669
      %v671 = vsel %vm661, %v656, -inf
      %672 = vmax.xlane.f32.xlu0 %v671
      %v673 = vpop.xlane.xlu0 %672
      %v674 = vsel %vm661, %v657, -inf
      %675 = vmax.xlane.f32.xlu0 %v674
      %v676 = vpop.xlane.xlu0 %675
      %v677 = vsel %vm661, %v658, -inf
      %678 = vmax.xlane.f32.xlu0 %v677
      %v679 = vpop.xlane.xlu0 %678
      %v680 = vsel %vm661, %v659, -inf
      %681 = vmax.xlane.f32.xlu0 %v680
      %v682 = vpop.xlane.xlu0 %681
      %v683 = vsel %vm661, %v660, -inf
      %684 = vmax.xlane.f32.xlu0 %v683
      %v685 = vpop.xlane.xlu0 %684
      %v686 = vsub.f32 %v653, %v664
      %v687 = vsub.f32 %v654, %v667
      %v688 = vsub.f32 %v655, %v670
      %v689 = vsub.f32 %v656, %v673
      %v690 = vsub.f32 %v657, %v676
      %v691 = vsub.f32 %v658, %v679
      %v692 = vsub.f32 %v659, %v682
      %v693 = vsub.f32 %v660, %v685
      %v694 = vmul.f32 %v686, 1.442695
      %v695 = vpow.pop %v694
      %v696 = vmul.f32 %v687, 1.442695
      %v697 = vpow.pop %v696
      %v698 = vmul.f32 %v688, 1.442695
      %v699 = vpow.pop %v698
      %v700 = vmul.f32 %v689, 1.442695
      %v701 = vpow.pop %v700
      %v702 = vmul.f32 %v690, 1.442695
      %v703 = vpow.pop %v702
      %v704 = vmul.f32 %v691, 1.442695
      %v705 = vpow.pop %v704
      %v706 = vmul.f32 %v692, 1.442695
      %v707 = vpow.pop %v706
      %v708 = vmul.f32 %v693, 1.442695
      %v709 = vpow.pop %v708
      %v710 = vsel %vm661, %v695, 0.0
      %711 = vadd.xlane.f32.xlu0 %v710
      %v712 = vpop.xlane.xlu0 %711
      %v713 = vsel %vm661, %v697, 0.0
      %714 = vadd.xlane.f32.xlu0 %v713
      %v715 = vpop.xlane.xlu0 %714
      %v716 = vsel %vm661, %v699, 0.0
      %717 = vadd.xlane.f32.xlu0 %v716
      %v718 = vpop.xlane.xlu0 %717
      %v719 = vsel %vm661, %v701, 0.0
      %720 = vadd.xlane.f32.xlu0 %v719
      %v721 = vpop.xlane.xlu0 %720
      %v722 = vsel %vm661, %v703, 0.0
      %723 = vadd.xlane.f32.xlu0 %v722
      %v724 = vpop.xlane.xlu0 %723
      %v725 = vsel %vm661, %v705, 0.0
      %726 = vadd.xlane.f32.xlu0 %v725
      %v727 = vpop.xlane.xlu0 %726
      %v728 = vsel %vm661, %v707, 0.0
      %729 = vadd.xlane.f32.xlu0 %v728
      %v730 = vpop.xlane.xlu0 %729
      %v731 = vsel %vm661, %v709, 0.0
      %732 = vadd.xlane.f32.xlu0 %v731
      %v733 = vpop.xlane.xlu0 %732
      %v734 = vrcp.pop %v712
      %v735 = vrcp.pop %v715
      %v736 = vrcp.pop %v718
      %v737 = vrcp.pop %v721
      %v738 = vrcp.pop %v724
      %v739 = vrcp.pop %v727
      %v740 = vrcp.pop %v730
      %v741 = vrcp.pop %v733
      %v742 = vmul.f32 %v695, %v734
      %v743 = vmul.f32 %v697, %v735
      %v744 = vmul.f32 %v699, %v736
      %v745 = vmul.f32 %v701, %v737
      %v746 = vmul.f32 %v703, %v738
      %v747 = vmul.f32 %v705, %v739
      %v748 = vmul.f32 %v707, %v740
      %v749 = vmul.f32 %v709, %v741
      %v750 = vpack.c.bf16 %v743, %v742
      %v751 = vpack.c.bf16 %v745, %v744
      %v752 = vpack.c.bf16 %v747, %v746
      %v753 = vpack.c.bf16 %v749, %v748
      %754 = vrot.lane.b32.xlu0 %v547, 96
      %v755 = vpop.permute.xlu0 %754
      %756 = vrot.lane.b32.xlu0 %v548, 96
      %v757 = vpop.permute.xlu0 %756
      %758 = vrot.lane.b32.xlu0 %v549, 96
      %v759 = vpop.permute.xlu0 %758
      %760 = vrot.lane.b32.xlu0 %v550, 96
      %v761 = vpop.permute.xlu0 %760
      %v767 = vsel %vm661, %v750, 0
      %v770 = vsel %vm661, %v751, 0
      %v773 = vsel %vm661, %v752, 0
      %v776 = vsel %vm661, %v753, 0
      %778 = vmatprep.subr.bf16.mxu0 0
      %779 = vmatpush1.bf16.msra.mxu0 0
      %780 = vmatprep.subr.bf16.mxu0 0
      %781 = vmatpush1.bf16.msra.mxu0 0
      %782 = vmatprep.subr.bf16.mxu0 0
      %783 = vmatpush1.bf16.msra.mxu0 0
      %784 = vmatprep.subr.bf16.mxu0 0
      %785 = vmatpush1.bf16.msra.mxu0 0
      %786 = vmatprep.subr.bf16.mxu0 0
      %787 = vmatpush1.bf16.msra.mxu0 %v761
      %788 = vmatprep.subr.bf16.mxu0 0
      %789 = vmatpush1.bf16.msra.mxu0 %v759
      %790 = vmatprep.subr.bf16.mxu0 0
      %791 = vmatpush1.bf16.msra.mxu0 %v757
      %792 = vmatprep.subr.bf16.mxu0 0
      %793 = vmatpush1.bf16.msra.mxu0 %v755
      %794 = vmatprep.subr.bf16.mxu0 0
      %795 = vmatpush2.bf16.msra.mxu0 0
      %796 = vmatprep.subr.bf16.mxu0 0
      %797 = vmatpush2.bf16.msra.mxu0 0
      %798 = vmatprep.subr.bf16.mxu0 0
      %799 = vmatpush2.bf16.msra.mxu0 0
      %800 = vmatprep.subr.bf16.mxu0 0
      %801 = vmatpush2.bf16.msra.mxu0 0
      %802 = vmatprep.subr.bf16.mxu0 0
      %803 = vmatpush2.bf16.msra.mxu0 0
      %804 = vmatprep.subr.bf16.mxu0 0
      %805 = vmatpush2.bf16.msra.mxu0 0
      %806 = vmatprep.subr.bf16.mxu0 0
      %807 = vmatpush2.bf16.msra.mxu0 0
      %808 = vmatprep.subr.bf16.mxu0 0
      %809 = vmatpush2.bf16.msra.mxu0 0
      %810 = vmatprep.mubr.bf16.mxu0 0
      %811 = vmatmul.mubr.bf16.gmra.mxu0 %v767
      %v812 = vpop.f32.mrf.mxu0
      %v813 = vadd.f32 0.0, %v812
      %v814 = vpop.f32.mrf.mxu0
      %v815 = vpop.f32.mrf.mxu0
      %v816 = vadd.f32 0.0, %v815
      %v817 = vpop.f32.mrf.mxu0
      %818 = vmatprep.mubr.bf16.mxu0 0
      %819 = vmatmul.mubr.bf16.gmra.mxu0 %v770
      %v820 = vpop.f32.mrf.mxu0
      %v821 = vadd.f32 0.0, %v820
      %v822 = vpop.f32.mrf.mxu0
      %v823 = vpop.f32.mrf.mxu0
      %v824 = vadd.f32 0.0, %v823
      %v825 = vpop.f32.mrf.mxu0
      %826 = vmatprep.mubr.bf16.mxu0 0
      %827 = vmatmul.mubr.bf16.gmra.mxu0 %v773
      %v828 = vpop.f32.mrf.mxu0
      %v829 = vadd.f32 0.0, %v828
      %v830 = vpop.f32.mrf.mxu0
      %v831 = vpop.f32.mrf.mxu0
      %v832 = vadd.f32 0.0, %v831
      %v833 = vpop.f32.mrf.mxu0
      %834 = vmatprep.mubr.bf16.mxu0 0
      %835 = vmatmul.mubr.bf16.gmra.mxu0 %v776
      %v836 = vpop.f32.mrf.mxu0
      %v837 = vadd.f32 0.0, %v836
      %v838 = vpop.f32.mrf.mxu0
      %v839 = vpop.f32.mrf.mxu0
      %v840 = vadd.f32 0.0, %v839
      %v841 = vpop.f32.mrf.mxu0
      %842 = vdwg.mxu0
      %v843 = vpack.c.bf16 %v816, %v813
      %v844 = vpack.c.bf16 %v824, %v821
      %v845 = vpack.c.bf16 %v832, %v829
      %v846 = vpack.c.bf16 %v840, %v837
      %v847 = vld [vmem:[%s3] sm:$0xf]
      %848 = vrot.lane.b32.xlu0 %v547, 120
      %v849 = vpop.permute.xlu0 %848
      %850 = vrot.lane.b32.xlu0 %v548, 120
      %v851 = vpop.permute.xlu0 %850
      %852 = vrot.lane.b32.xlu0 %v549, 120
      %v853 = vpop.permute.xlu0 %852
      %854 = vrot.lane.b32.xlu0 %v550, 120
      %v855 = vpop.permute.xlu0 %854
      %856 = vrot.lane.b32.xlu0 %v547, 104
      %v857 = vpop.permute.xlu0 %856
      %858 = vrot.lane.b32.xlu0 %v548, 104
      %v859 = vpop.permute.xlu0 %858
      %860 = vrot.lane.b32.xlu0 %v549, 104
      %v861 = vpop.permute.xlu0 %860
      %862 = vrot.lane.b32.xlu0 %v550, 104
      %v863 = vpop.permute.xlu0 %862
      %v865 = vsel %vm563, %v849, 0
      %v868 = vsel %vm563, %v851, 0
      %v871 = vsel %vm563, %v853, 0
      %v874 = vsel %vm563, %v855, 0
      %v877 = vsel %vm563, %v857, 0
      %v880 = vsel %vm563, %v859, 0
      %v883 = vsel %vm563, %v861, 0
      %v886 = vsel %vm563, %v863, 0
      %888 = vmatprep.subr.bf16.mxu0 0
      %889 = vmatpush1.bf16.xpose.msra.mxu0 0
      %890 = vmatprep.subr.bf16.mxu0 0
      %891 = vmatpush1.bf16.xpose.msra.mxu0 0
      %892 = vmatprep.subr.bf16.mxu0 0
      %893 = vmatpush1.bf16.xpose.msra.mxu0 0
      %894 = vmatprep.subr.bf16.mxu0 0
      %895 = vmatpush1.bf16.xpose.msra.mxu0 0
      %896 = vmatprep.subr.bf16.mxu0 0
      %897 = vmatpush1.bf16.xpose.msra.mxu0 %v886
      %898 = vmatprep.subr.bf16.mxu0 0
      %899 = vmatpush1.bf16.xpose.msra.mxu0 %v883
      %900 = vmatprep.subr.bf16.mxu0 0
      %901 = vmatpush1.bf16.xpose.msra.mxu0 %v880
      %902 = vmatprep.subr.bf16.mxu0 0
      %903 = vmatpush1.bf16.xpose.msra.mxu0 %v877
      %904 = vmatprep.subr.bf16.mxu0 0
      %905 = vmatpush2.bf16.xpose.msra.mxu0 0
      %906 = vmatprep.subr.bf16.mxu0 0
      %907 = vmatpush2.bf16.xpose.msra.mxu0 0
      %908 = vmatprep.subr.bf16.mxu0 0
      %909 = vmatpush2.bf16.xpose.msra.mxu0 0
      %910 = vmatprep.subr.bf16.mxu0 0
      %911 = vmatpush2.bf16.xpose.msra.mxu0 0
      %912 = vmatprep.subr.bf16.mxu0 0
      %913 = vmatpush2.bf16.xpose.msra.mxu0 0
      %914 = vmatprep.subr.bf16.mxu0 0
      %915 = vmatpush2.bf16.xpose.msra.mxu0 0
      %916 = vmatprep.subr.bf16.mxu0 0
      %917 = vmatpush2.bf16.xpose.msra.mxu0 0
      %918 = vmatprep.subr.bf16.mxu0 0
      %919 = vmatpush2.bf16.xpose.msra.mxu0 0
      %920 = vmatprep.mubr.bf16.mxu0 0
      %921 = vmatmul.mubr.bf16.gmra.mxu0 %v865
      %v922 = vpop.f32.mrf.mxu0
      %v923 = vadd.f32 0.0, %v922
      %v924 = vpop.f32.mrf.mxu0
      %v925 = vpop.f32.mrf.mxu0
      %v926 = vadd.f32 0.0, %v925
      %v927 = vpop.f32.mrf.mxu0
      %928 = vmatprep.mubr.bf16.mxu0 0
      %929 = vmatmul.mubr.bf16.gmra.mxu0 %v868
      %v930 = vpop.f32.mrf.mxu0
      %v931 = vadd.f32 0.0, %v930
      %v932 = vpop.f32.mrf.mxu0
      %v933 = vpop.f32.mrf.mxu0
      %v934 = vadd.f32 0.0, %v933
      %v935 = vpop.f32.mrf.mxu0
      %936 = vmatprep.mubr.bf16.mxu0 0
      %937 = vmatmul.mubr.bf16.gmra.mxu0 %v871
      %v938 = vpop.f32.mrf.mxu0
      %v939 = vadd.f32 0.0, %v938
      %v940 = vpop.f32.mrf.mxu0
      %v941 = vpop.f32.mrf.mxu0
      %v942 = vadd.f32 0.0, %v941
      %v943 = vpop.f32.mrf.mxu0
      %944 = vmatprep.mubr.bf16.mxu0 0
      %945 = vmatmul.mubr.bf16.gmra.mxu0 %v874
      %v946 = vpop.f32.mrf.mxu0
      %v947 = vadd.f32 0.0, %v946
      %v948 = vpop.f32.mrf.mxu0
      %v949 = vpop.f32.mrf.mxu0
      %v950 = vadd.f32 0.0, %v949
      %v951 = vpop.f32.mrf.mxu0
      %952 = vdwg.mxu0
      %v953 = vmul.f32 %v923, 0.35355338
      %v954 = vmul.f32 %v926, 0.35355338
      %v955 = vmul.f32 %v931, 0.35355338
      %v956 = vmul.f32 %v934, 0.35355338
      %v957 = vmul.f32 %v939, 0.35355338
      %v958 = vmul.f32 %v942, 0.35355338
      %v959 = vmul.f32 %v947, 0.35355338
      %v960 = vmul.f32 %v950, 0.35355338
      %v961 = vsel %vm661, %v953, -inf
      %962 = vmax.xlane.f32.xlu0 %v961
      %v963 = vpop.xlane.xlu0 %962
      %v964 = vsel %vm661, %v954, -inf
      %965 = vmax.xlane.f32.xlu0 %v964
      %v966 = vpop.xlane.xlu0 %965
      %v967 = vsel %vm661, %v955, -inf
      %968 = vmax.xlane.f32.xlu0 %v967
      %v969 = vpop.xlane.xlu0 %968
      %v970 = vsel %vm661, %v956, -inf
      %971 = vmax.xlane.f32.xlu0 %v970
      %v972 = vpop.xlane.xlu0 %971
      %v973 = vsel %vm661, %v957, -inf
      %974 = vmax.xlane.f32.xlu0 %v973
      %v975 = vpop.xlane.xlu0 %974
      %v976 = vsel %vm661, %v958, -inf
      %977 = vmax.xlane.f32.xlu0 %v976
      %v978 = vpop.xlane.xlu0 %977
      %v979 = vsel %vm661, %v959, -inf
      %980 = vmax.xlane.f32.xlu0 %v979
      %v981 = vpop.xlane.xlu0 %980
      %v982 = vsel %vm661, %v960, -inf
      %983 = vmax.xlane.f32.xlu0 %v982
      %v984 = vpop.xlane.xlu0 %983
      %v985 = vsub.f32 %v953, %v963
      %v986 = vsub.f32 %v954, %v966
      %v987 = vsub.f32 %v955, %v969
      %v988 = vsub.f32 %v956, %v972
      %v989 = vsub.f32 %v957, %v975
      %v990 = vsub.f32 %v958, %v978
      %v991 = vsub.f32 %v959, %v981
      %v992 = vsub.f32 %v960, %v984
      %v993 = vmul.f32 %v985, 1.442695
      %v994 = vpow.pop %v993
      %v995 = vmul.f32 %v986, 1.442695
      %v996 = vpow.pop %v995
      %v997 = vmul.f32 %v987, 1.442695
      %v998 = vpow.pop %v997
      %v999 = vmul.f32 %v988, 1.442695
      %v1000 = vpow.pop %v999
      %v1001 = vmul.f32 %v989, 1.442695
      %v1002 = vpow.pop %v1001
      %v1003 = vmul.f32 %v990, 1.442695
      %v1004 = vpow.pop %v1003
      %v1005 = vmul.f32 %v991, 1.442695
      %v1006 = vpow.pop %v1005
      %v1007 = vmul.f32 %v992, 1.442695
      %v1008 = vpow.pop %v1007
      %v1009 = vsel %vm661, %v994, 0.0
      %1010 = vadd.xlane.f32.xlu0 %v1009
      %v1011 = vpop.xlane.xlu0 %1010
      %v1012 = vsel %vm661, %v996, 0.0
      %1013 = vadd.xlane.f32.xlu0 %v1012
      %v1014 = vpop.xlane.xlu0 %1013
      %v1015 = vsel %vm661, %v998, 0.0
      %1016 = vadd.xlane.f32.xlu0 %v1015
      %v1017 = vpop.xlane.xlu0 %1016
      %v1018 = vsel %vm661, %v1000, 0.0
      %1019 = vadd.xlane.f32.xlu0 %v1018
      %v1020 = vpop.xlane.xlu0 %1019
      %v1021 = vsel %vm661, %v1002, 0.0
      %1022 = vadd.xlane.f32.xlu0 %v1021
      %v1023 = vpop.xlane.xlu0 %1022
      %v1024 = vsel %vm661, %v1004, 0.0
      %1025 = vadd.xlane.f32.xlu0 %v1024
      %v1026 = vpop.xlane.xlu0 %1025
      %v1027 = vsel %vm661, %v1006, 0.0
      %1028 = vadd.xlane.f32.xlu0 %v1027
      %v1029 = vpop.xlane.xlu0 %1028
      %v1030 = vsel %vm661, %v1008, 0.0
      %1031 = vadd.xlane.f32.xlu0 %v1030
      %v1032 = vpop.xlane.xlu0 %1031
      %v1033 = vrcp.pop %v1011
      %v1034 = vrcp.pop %v1014
      %v1035 = vrcp.pop %v1017
      %v1036 = vrcp.pop %v1020
      %v1037 = vrcp.pop %v1023
      %v1038 = vrcp.pop %v1026
      %v1039 = vrcp.pop %v1029
      %v1040 = vrcp.pop %v1032
      %v1041 = vmul.f32 %v994, %v1033
      %v1042 = vmul.f32 %v996, %v1034
      %v1043 = vmul.f32 %v998, %v1035
      %v1044 = vmul.f32 %v1000, %v1036
      %v1045 = vmul.f32 %v1002, %v1037
      %v1046 = vmul.f32 %v1004, %v1038
      %v1047 = vmul.f32 %v1006, %v1039
      %v1048 = vmul.f32 %v1008, %v1040
      %v1049 = vpack.c.bf16 %v1042, %v1041
      %v1050 = vpack.c.bf16 %v1044, %v1043
      %v1051 = vpack.c.bf16 %v1046, %v1045
      %v1052 = vpack.c.bf16 %v1048, %v1047
      %1053 = vrot.lane.b32.xlu0 %v547, 88
      %v1054 = vpop.permute.xlu0 %1053
      %1055 = vrot.lane.b32.xlu0 %v548, 88
      %v1056 = vpop.permute.xlu0 %1055
      %1057 = vrot.lane.b32.xlu0 %v549, 88
      %v1058 = vpop.permute.xlu0 %1057
      %1059 = vrot.lane.b32.xlu0 %v550, 88
      %v1060 = vpop.permute.xlu0 %1059
      %v1066 = vsel %vm661, %v1049, 0
      %v1069 = vsel %vm661, %v1050, 0
      %v1072 = vsel %vm661, %v1051, 0
      %v1075 = vsel %vm661, %v1052, 0
      %1077 = vmatprep.subr.bf16.mxu0 0
      %1078 = vmatpush1.bf16.msra.mxu0 0
      %1079 = vmatprep.subr.bf16.mxu0 0
      %1080 = vmatpush1.bf16.msra.mxu0 0
      %1081 = vmatprep.subr.bf16.mxu0 0
      %1082 = vmatpush1.bf16.msra.mxu0 0
      %1083 = vmatprep.subr.bf16.mxu0 0
      %1084 = vmatpush1.bf16.msra.mxu0 0
      %1085 = vmatprep.subr.bf16.mxu0 0
      %1086 = vmatpush1.bf16.msra.mxu0 %v1060
      %1087 = vmatprep.subr.bf16.mxu0 0
      %1088 = vmatpush1.bf16.msra.mxu0 %v1058
      %1089 = vmatprep.subr.bf16.mxu0 0
      %1090 = vmatpush1.bf16.msra.mxu0 %v1056
      %1091 = vmatprep.subr.bf16.mxu0 0
      %1092 = vmatpush1.bf16.msra.mxu0 %v1054
      %1093 = vmatprep.subr.bf16.mxu0 0
      %1094 = vmatpush2.bf16.msra.mxu0 0
      %1095 = vmatprep.subr.bf16.mxu0 0
      %1096 = vmatpush2.bf16.msra.mxu0 0
      %1097 = vmatprep.subr.bf16.mxu0 0
      %1098 = vmatpush2.bf16.msra.mxu0 0
      %1099 = vmatprep.subr.bf16.mxu0 0
      %1100 = vmatpush2.bf16.msra.mxu0 0
      %1101 = vmatprep.subr.bf16.mxu0 0
      %1102 = vmatpush2.bf16.msra.mxu0 0
      %1103 = vmatprep.subr.bf16.mxu0 0
      %1104 = vmatpush2.bf16.msra.mxu0 0
      %1105 = vmatprep.subr.bf16.mxu0 0
      %1106 = vmatpush2.bf16.msra.mxu0 0
      %1107 = vmatprep.subr.bf16.mxu0 0
      %1108 = vmatpush2.bf16.msra.mxu0 0
      %1109 = vmatprep.mubr.bf16.mxu0 0
      %1110 = vmatmul.mubr.bf16.gmra.mxu0 %v1066
      %v1111 = vpop.f32.mrf.mxu0
      %v1112 = vadd.f32 0.0, %v1111
      %v1113 = vpop.f32.mrf.mxu0
      %v1114 = vpop.f32.mrf.mxu0
      %v1115 = vadd.f32 0.0, %v1114
      %v1116 = vpop.f32.mrf.mxu0
      %1117 = vmatprep.mubr.bf16.mxu0 0
      %1118 = vmatmul.mubr.bf16.gmra.mxu0 %v1069
      %v1119 = vpop.f32.mrf.mxu0
      %v1120 = vadd.f32 0.0, %v1119
      %v1121 = vpop.f32.mrf.mxu0
      %v1122 = vpop.f32.mrf.mxu0
      %v1123 = vadd.f32 0.0, %v1122
      %v1124 = vpop.f32.mrf.mxu0
      %1125 = vmatprep.mubr.bf16.mxu0 0
      %1126 = vmatmul.mubr.bf16.gmra.mxu0 %v1072
      %v1127 = vpop.f32.mrf.mxu0
      %v1128 = vadd.f32 0.0, %v1127
      %v1129 = vpop.f32.mrf.mxu0
      %v1130 = vpop.f32.mrf.mxu0
      %v1131 = vadd.f32 0.0, %v1130
      %v1132 = vpop.f32.mrf.mxu0
      %1133 = vmatprep.mubr.bf16.mxu0 0
      %1134 = vmatmul.mubr.bf16.gmra.mxu0 %v1075
      %v1135 = vpop.f32.mrf.mxu0
      %v1136 = vadd.f32 0.0, %v1135
      %v1137 = vpop.f32.mrf.mxu0
      %v1138 = vpop.f32.mrf.mxu0
      %v1139 = vadd.f32 0.0, %v1138
      %v1140 = vpop.f32.mrf.mxu0
      %1141 = vdwg.mxu0
      %v1142 = vpack.c.bf16 %v1115, %v1112
      %v1143 = vpack.c.bf16 %v1123, %v1120
      %v1144 = vpack.c.bf16 %v1131, %v1128
      %v1145 = vpack.c.bf16 %v1139, %v1136
      %v1146 = vld [vmem:[%s3 + $0x4] sm:$0xf]
      %v1148 = vsel %vm563, %v1142, 0
      %v1151 = vsel %vm563, %v1143, 0
      %v1154 = vsel %vm563, %v1144, 0
      %v1157 = vsel %vm563, %v1145, 0
      %vm1159 = vcmask 1043456
      %v1161 = vsel %vm1159, %v1146, 0
      %1163 = vmatprep.subr.bf16.mxu0 0
      %1164 = vmatpush1.bf16.msra.mxu0 0
      %1165 = vmatprep.subr.bf16.mxu0 0
      %1166 = vmatpush1.bf16.msra.mxu0 0
      %1167 = vmatprep.subr.bf16.mxu0 0
      %1168 = vmatpush1.bf16.msra.mxu0 0
      %1169 = vmatprep.subr.bf16.mxu0 0
      %1170 = vmatpush1.bf16.msra.mxu0 0
      %1171 = vmatprep.subr.bf16.mxu0 0
      %1172 = vmatpush1.bf16.msra.mxu0 0
      %1173 = vmatprep.subr.bf16.mxu0 0
      %1174 = vmatpush1.bf16.msra.mxu0 0
      %1175 = vmatprep.subr.bf16.mxu0 0
      %1176 = vmatpush1.bf16.msra.mxu0 0
      %1177 = vmatprep.subr.bf16.mxu0 0
      %1178 = vmatpush1.bf16.msra.mxu0 %v1161
      %1179 = vmatprep.subr.bf16.mxu0 0
      %1180 = vmatpush2.bf16.msra.mxu0 0
      %1181 = vmatprep.subr.bf16.mxu0 0
      %1182 = vmatpush2.bf16.msra.mxu0 0
      %1183 = vmatprep.subr.bf16.mxu0 0
      %1184 = vmatpush2.bf16.msra.mxu0 0
      %1185 = vmatprep.subr.bf16.mxu0 0
      %1186 = vmatpush2.bf16.msra.mxu0 0
      %1187 = vmatprep.subr.bf16.mxu0 0
      %1188 = vmatpush2.bf16.msra.mxu0 0
      %1189 = vmatprep.subr.bf16.mxu0 0
      %1190 = vmatpush2.bf16.msra.mxu0 0
      %1191 = vmatprep.subr.bf16.mxu0 0
      %1192 = vmatpush2.bf16.msra.mxu0 0
      %1193 = vmatprep.subr.bf16.mxu0 0
      %1194 = vmatpush2.bf16.msra.mxu0 0
      %1195 = vmatprep.mubr.bf16.mxu0 0
      %1196 = vmatmul.mubr.bf16.gmra.mxu0 %v1148
      %v1197 = vpop.f32.mrf.mxu0
      %v1198 = vadd.f32 0.0, %v1197
      %v1199 = vpop.f32.mrf.mxu0
      %v1200 = vpop.f32.mrf.mxu0
      %v1201 = vadd.f32 0.0, %v1200
      %v1202 = vpop.f32.mrf.mxu0
      %1203 = vmatprep.mubr.bf16.mxu0 0
      %1204 = vmatmul.mubr.bf16.gmra.mxu0 %v1151
      %v1205 = vpop.f32.mrf.mxu0
      %v1206 = vadd.f32 0.0, %v1205
      %v1207 = vpop.f32.mrf.mxu0
      %v1208 = vpop.f32.mrf.mxu0
      %v1209 = vadd.f32 0.0, %v1208
      %v1210 = vpop.f32.mrf.mxu0
      %1211 = vmatprep.mubr.bf16.mxu0 0
      %1212 = vmatmul.mubr.bf16.gmra.mxu0 %v1154
      %v1213 = vpop.f32.mrf.mxu0
      %v1214 = vadd.f32 0.0, %v1213
      %v1215 = vpop.f32.mrf.mxu0
      %v1216 = vpop.f32.mrf.mxu0
      %v1217 = vadd.f32 0.0, %v1216
      %v1218 = vpop.f32.mrf.mxu0
      %1219 = vmatprep.mubr.bf16.mxu0 0
      %1220 = vmatmul.mubr.bf16.gmra.mxu0 %v1157
      %v1221 = vpop.f32.mrf.mxu0
      %v1222 = vadd.f32 0.0, %v1221
      %v1223 = vpop.f32.mrf.mxu0
      %v1224 = vpop.f32.mrf.mxu0
      %v1225 = vadd.f32 0.0, %v1224
      %v1226 = vpop.f32.mrf.mxu0
      %1227 = vdwg.mxu0
      %v1229 = vsel %vm563, %v843, 0
      %v1232 = vsel %vm563, %v844, 0
      %v1235 = vsel %vm563, %v845, 0
      %v1238 = vsel %vm563, %v846, 0
      %v1241 = vsel %vm1159, %v847, 0
      %1243 = vmatprep.subr.bf16.mxu0 0
      %1244 = vmatpush1.bf16.msra.mxu0 0
      %1245 = vmatprep.subr.bf16.mxu0 0
      %1246 = vmatpush1.bf16.msra.mxu0 0
      %1247 = vmatprep.subr.bf16.mxu0 0
      %1248 = vmatpush1.bf16.msra.mxu0 0
      %1249 = vmatprep.subr.bf16.mxu0 0
      %1250 = vmatpush1.bf16.msra.mxu0 0
      %1251 = vmatprep.subr.bf16.mxu0 0
      %1252 = vmatpush1.bf16.msra.mxu0 0
      %1253 = vmatprep.subr.bf16.mxu0 0
      %1254 = vmatpush1.bf16.msra.mxu0 0
      %1255 = vmatprep.subr.bf16.mxu0 0
      %1256 = vmatpush1.bf16.msra.mxu0 0
      %1257 = vmatprep.subr.bf16.mxu0 0
      %1258 = vmatpush1.bf16.msra.mxu0 %v1241
      %1259 = vmatprep.subr.bf16.mxu0 0
      %1260 = vmatpush2.bf16.msra.mxu0 0
      %1261 = vmatprep.subr.bf16.mxu0 0
      %1262 = vmatpush2.bf16.msra.mxu0 0
      %1263 = vmatprep.subr.bf16.mxu0 0
      %1264 = vmatpush2.bf16.msra.mxu0 0
      %1265 = vmatprep.subr.bf16.mxu0 0
      %1266 = vmatpush2.bf16.msra.mxu0 0
      %1267 = vmatprep.subr.bf16.mxu0 0
      %1268 = vmatpush2.bf16.msra.mxu0 0
      %1269 = vmatprep.subr.bf16.mxu0 0
      %1270 = vmatpush2.bf16.msra.mxu0 0
      %1271 = vmatprep.subr.bf16.mxu0 0
      %1272 = vmatpush2.bf16.msra.mxu0 0
      %1273 = vmatprep.subr.bf16.mxu0 0
      %1274 = vmatpush2.bf16.msra.mxu0 0
      %1275 = vmatprep.mubr.bf16.mxu0 0
      %1276 = vmatmul.mubr.bf16.gmra.mxu0 %v1229
      %v1277 = vpop.f32.mrf.mxu0
      %v1278 = vadd.f32 %v1198, %v1277
      %v1279 = vpop.f32.mrf.mxu0
      %v1280 = vpop.f32.mrf.mxu0
      %v1281 = vadd.f32 %v1201, %v1280
      %v1282 = vpop.f32.mrf.mxu0
      %1283 = vmatprep.mubr.bf16.mxu0 0
      %1284 = vmatmul.mubr.bf16.gmra.mxu0 %v1232
      %v1285 = vpop.f32.mrf.mxu0
      %v1286 = vadd.f32 %v1206, %v1285
      %v1287 = vpop.f32.mrf.mxu0
      %v1288 = vpop.f32.mrf.mxu0
      %v1289 = vadd.f32 %v1209, %v1288
      %v1290 = vpop.f32.mrf.mxu0
      %1291 = vmatprep.mubr.bf16.mxu0 0
      %1292 = vmatmul.mubr.bf16.gmra.mxu0 %v1235
      %v1293 = vpop.f32.mrf.mxu0
      %v1294 = vadd.f32 %v1214, %v1293
      %v1295 = vpop.f32.mrf.mxu0
      %v1296 = vpop.f32.mrf.mxu0
      %v1297 = vadd.f32 %v1217, %v1296
      %v1298 = vpop.f32.mrf.mxu0
      %1299 = vmatprep.mubr.bf16.mxu0 0
      %1300 = vmatmul.mubr.bf16.gmra.mxu0 %v1238
      %v1301 = vpop.f32.mrf.mxu0
      %v1302 = vadd.f32 %v1222, %v1301
      %v1303 = vpop.f32.mrf.mxu0
      %v1304 = vpop.f32.mrf.mxu0
      %v1305 = vadd.f32 %v1225, %v1304
      %v1306 = vpop.f32.mrf.mxu0
      %1307 = vdwg.mxu0
      %v1308 = vld [vmem:[%s4] sm:$0x1]
      %v1310 = vlaneseq
      %v1311 = vshrl.u32 %v1310, 7
      %v1312 = vsub.s32 0, %v1311
      %v1313 = vrot.slane %v1308, %v1312
      %v1315 = vadd.f32 %v1278, %v1313
      %v1316 = vadd.f32 %v1281, %v1313
      %v1317 = vadd.f32 %v1286, %v1313
      %v1318 = vadd.f32 %v1289, %v1313
      %v1319 = vadd.f32 %v1294, %v1313
      %v1320 = vadd.f32 %v1297, %v1313
      %v1321 = vadd.f32 %v1302, %v1313
      %v1322 = vadd.f32 %v1305, %v1313
      %v1323 = vadd.f32 %v1315, %v442
      %v1324 = vadd.f32 %v1316, %v443
      %v1325 = vadd.f32 %v1317, %v444
      %v1326 = vadd.f32 %v1318, %v445
      %v1327 = vadd.f32 %v1319, %v446
      %v1328 = vadd.f32 %v1320, %v447
      %v1329 = vadd.f32 %v1321, %v448
      %v1330 = vadd.f32 %v1322, %v449
      %v1331 = vsel %vm469, %v1323, 0.0
      %1332 = vadd.xlane.f32.xlu0 %v1331
      %v1333 = vpop.xlane.xlu0 %1332
      %v1334 = vsel %vm469, %v1324, 0.0
      %1335 = vadd.xlane.f32.xlu0 %v1334
      %v1336 = vpop.xlane.xlu0 %1335
      %v1337 = vsel %vm469, %v1325, 0.0
      %1338 = vadd.xlane.f32.xlu0 %v1337
      %v1339 = vpop.xlane.xlu0 %1338
      %v1340 = vsel %vm469, %v1326, 0.0
      %1341 = vadd.xlane.f32.xlu0 %v1340
      %v1342 = vpop.xlane.xlu0 %1341
      %v1343 = vsel %vm469, %v1327, 0.0
      %1344 = vadd.xlane.f32.xlu0 %v1343
      %v1345 = vpop.xlane.xlu0 %1344
      %v1346 = vsel %vm469, %v1328, 0.0
      %1347 = vadd.xlane.f32.xlu0 %v1346
      %v1348 = vpop.xlane.xlu0 %1347
      %v1349 = vsel %vm469, %v1329, 0.0
      %1350 = vadd.xlane.f32.xlu0 %v1349
      %v1351 = vpop.xlane.xlu0 %1350
      %v1352 = vsel %vm469, %v1330, 0.0
      %1353 = vadd.xlane.f32.xlu0 %v1352
      %v1354 = vpop.xlane.xlu0 %1353
      %v1355 = vrcp.pop 16.0
      %v1356 = vmul.f32 %v1333, %v1355
      %v1357 = vmul.f32 %v1336, %v1355
      %v1358 = vmul.f32 %v1339, %v1355
      %v1359 = vmul.f32 %v1342, %v1355
      %v1360 = vmul.f32 %v1345, %v1355
      %v1361 = vmul.f32 %v1348, %v1355
      %v1362 = vmul.f32 %v1351, %v1355
      %v1363 = vmul.f32 %v1354, %v1355
      %v1364 = vsub.f32 %v1323, %v1356
      %v1365 = vsub.f32 %v1324, %v1357
      %v1366 = vsub.f32 %v1325, %v1358
      %v1367 = vsub.f32 %v1326, %v1359
      %v1368 = vsub.f32 %v1327, %v1360
      %v1369 = vsub.f32 %v1328, %v1361
      %v1370 = vsub.f32 %v1329, %v1362
      %v1371 = vsub.f32 %v1330, %v1363
      %v1372 = vmul.f32 %v1364, %v1364
      %v1373 = vmul.f32 %v1365, %v1365
      %v1374 = vmul.f32 %v1366, %v1366
      %v1375 = vmul.f32 %v1367, %v1367
      %v1376 = vmul.f32 %v1368, %v1368
      %v1377 = vmul.f32 %v1369, %v1369
      %v1378 = vmul.f32 %v1370, %v1370
      %v1379 = vmul.f32 %v1371, %v1371
      %v1380 = vsel %vm469, %v1372, 0.0
      %1381 = vadd.xlane.f32.xlu0 %v1380
      %v1382 = vpop.xlane.xlu0 %1381
      %v1383 = vsel %vm469, %v1373, 0.0
      %1384 = vadd.xlane.f32.xlu0 %v1383
      %v1385 = vpop.xlane.xlu0 %1384
      %v1386 = vsel %vm469, %v1374, 0.0
      %1387 = vadd.xlane.f32.xlu0 %v1386
      %v1388 = vpop.xlane.xlu0 %1387
      %v1389 = vsel %vm469, %v1375, 0.0
      %1390 = vadd.xlane.f32.xlu0 %v1389
      %v1391 = vpop.xlane.xlu0 %1390
      %v1392 = vsel %vm469, %v1376, 0.0
      %1393 = vadd.xlane.f32.xlu0 %v1392
      %v1394 = vpop.xlane.xlu0 %1393
      %v1395 = vsel %vm469, %v1377, 0.0
      %1396 = vadd.xlane.f32.xlu0 %v1395
      %v1397 = vpop.xlane.xlu0 %1396
      %v1398 = vsel %vm469, %v1378, 0.0
      %1399 = vadd.xlane.f32.xlu0 %v1398
      %v1400 = vpop.xlane.xlu0 %1399
      %v1401 = vsel %vm469, %v1379, 0.0
      %1402 = vadd.xlane.f32.xlu0 %v1401
      %v1403 = vpop.xlane.xlu0 %1402
      %v1404 = vmul.f32 %v1382, %v1355
      %v1405 = vmul.f32 %v1385, %v1355
      %v1406 = vmul.f32 %v1388, %v1355
      %v1407 = vmul.f32 %v1391, %v1355
      %v1408 = vmul.f32 %v1394, %v1355
      %v1409 = vmul.f32 %v1397, %v1355
      %v1410 = vmul.f32 %v1400, %v1355
      %v1411 = vmul.f32 %v1403, %v1355
      %v1412 = vadd.f32 %v1404, 1e-05
      %v1413 = vadd.f32 %v1405, 1e-05
      %v1414 = vadd.f32 %v1406, 1e-05
      %v1415 = vadd.f32 %v1407, 1e-05
      %v1416 = vadd.f32 %v1408, 1e-05
      %v1417 = vadd.f32 %v1409, 1e-05
      %v1418 = vadd.f32 %v1410, 1e-05
      %v1419 = vadd.f32 %v1411, 1e-05
      %v1420 = vrsqrt.pop %v1412
      %v1421 = vrsqrt.pop %v1413
      %v1422 = vrsqrt.pop %v1414
      %v1423 = vrsqrt.pop %v1415
      %v1424 = vrsqrt.pop %v1416
      %v1425 = vrsqrt.pop %v1417
      %v1426 = vrsqrt.pop %v1418
      %v1427 = vrsqrt.pop %v1419
      %v1428 = vmul.f32 %v1364, %v1420
      %v1429 = vmul.f32 %v1365, %v1421
      %v1430 = vmul.f32 %v1366, %v1422
      %v1431 = vmul.f32 %v1367, %v1423
      %v1432 = vmul.f32 %v1368, %v1424
      %v1433 = vmul.f32 %v1369, %v1425
      %v1434 = vmul.f32 %v1370, %v1426
      %v1435 = vmul.f32 %v1371, %v1427
      %v1436 = vld [vmem:[%s5] sm:$0x1]
      %v1438 = vlaneseq
      %v1439 = vshrl.u32 %v1438, 7
      %v1440 = vsub.s32 0, %v1439
      %v1441 = vrot.slane %v1436, %v1440
      %v1443 = vmul.f32 %v1428, %v1441
      %v1444 = vmul.f32 %v1429, %v1441
      %v1445 = vmul.f32 %v1430, %v1441
      %v1446 = vmul.f32 %v1431, %v1441
      %v1447 = vmul.f32 %v1432, %v1441
      %v1448 = vmul.f32 %v1433, %v1441
      %v1449 = vmul.f32 %v1434, %v1441
      %v1450 = vmul.f32 %v1435, %v1441
      %v1451 = vld [vmem:[%s6] sm:$0x1]
      %v1453 = vlaneseq
      %v1454 = vshrl.u32 %v1453, 7
      %v1455 = vsub.s32 0, %v1454
      %v1456 = vrot.slane %v1451, %v1455
      %v1458 = vadd.f32 %v1443, %v1456
      %v1459 = vadd.f32 %v1444, %v1456
      %v1460 = vadd.f32 %v1445, %v1456
      %v1461 = vadd.f32 %v1446, %v1456
      %v1462 = vadd.f32 %v1447, %v1456
      %v1463 = vadd.f32 %v1448, %v1456
      %v1464 = vadd.f32 %v1449, %v1456
      %v1465 = vadd.f32 %v1450, %v1456
      %v1466 = vpack.c.bf16 %v1459, %v1458
      %v1467 = vpack.c.bf16 %v1461, %v1460
      %v1468 = vpack.c.bf16 %v1463, %v1462
      %v1469 = vpack.c.bf16 %v1465, %v1464
      %v1470 = vld [vmem:[%s7] sm:$0xf]
      %v1471 = vld [vmem:[%s7 + $0x4] sm:$0xf]
      %v1472 = vld [vmem:[%s8] sm:$0x1]
      %v1474 = vlaneseq
      %v1475 = vshrl.u32 %v1474, 7
      %v1476 = vsub.s32 0, %v1475
      %v1477 = vrot.slane %v1472, %v1476
      %v1481 = vunpack.c.l.b16 %v1470
      %v1482 = vunpack.c.l.b16 %v1471
      %v1483 = vpack.c.b16 %v1482, %v1481
      %v1486 = vsel %vm469, %v1466, 0
      %v1489 = vsel %vm469, %v1467, 0
      %v1492 = vsel %vm469, %v1468, 0
      %v1495 = vsel %vm469, %v1469, 0
      %1497 = vmatprep.subr.bf16.mxu0 0
      %1498 = vmatpush1.bf16.msra.mxu0 0
      %1499 = vmatprep.subr.bf16.mxu0 0
      %1500 = vmatpush1.bf16.msra.mxu0 0
      %1501 = vmatprep.subr.bf16.mxu0 0
      %1502 = vmatpush1.bf16.msra.mxu0 0
      %1503 = vmatprep.subr.bf16.mxu0 0
      %1504 = vmatpush1.bf16.msra.mxu0 0
      %1505 = vmatprep.subr.bf16.mxu0 0
      %1506 = vmatpush1.bf16.msra.mxu0 0
      %1507 = vmatprep.subr.bf16.mxu0 0
      %1508 = vmatpush1.bf16.msra.mxu0 0
      %1509 = vmatprep.subr.bf16.mxu0 0
      %1510 = vmatpush1.bf16.msra.mxu0 0
      %1511 = vmatprep.subr.bf16.mxu0 0
      %1512 = vmatpush1.bf16.msra.mxu0 %v1483
      %1513 = vmatprep.subr.bf16.mxu0 0
      %1514 = vmatpush2.bf16.msra.mxu0 0
      %1515 = vmatprep.subr.bf16.mxu0 0
      %1516 = vmatpush2.bf16.msra.mxu0 0
      %1517 = vmatprep.subr.bf16.mxu0 0
      %1518 = vmatpush2.bf16.msra.mxu0 0
      %1519 = vmatprep.subr.bf16.mxu0 0
      %1520 = vmatpush2.bf16.msra.mxu0 0
      %1521 = vmatprep.subr.bf16.mxu0 0
      %1522 = vmatpush2.bf16.msra.mxu0 0
      %1523 = vmatprep.subr.bf16.mxu0 0
      %1524 = vmatpush2.bf16.msra.mxu0 0
      %1525 = vmatprep.subr.bf16.mxu0 0
      %1526 = vmatpush2.bf16.msra.mxu0 0
      %1527 = vmatprep.subr.bf16.mxu0 0
      %1528 = vmatpush2.bf16.msra.mxu0 0
      %1529 = vmatprep.mubr.bf16.mxu0 0
      %1530 = vmatmul.mubr.bf16.gmra.mxu0 %v1486
      %v1531 = vpop.f32.mrf.mxu0
      %v1532 = vadd.f32 %v1477, %v1531
      %v1533 = vpop.f32.mrf.mxu0
      %v1534 = vpop.f32.mrf.mxu0
      %v1535 = vadd.f32 %v1477, %v1534
      %v1536 = vpop.f32.mrf.mxu0
      %1537 = vmatprep.mubr.bf16.mxu0 0
      %1538 = vmatmul.mubr.bf16.gmra.mxu0 %v1489
      %v1539 = vpop.f32.mrf.mxu0
      %v1540 = vadd.f32 %v1477, %v1539
      %v1541 = vpop.f32.mrf.mxu0
      %v1542 = vpop.f32.mrf.mxu0
      %v1543 = vadd.f32 %v1477, %v1542
      %v1544 = vpop.f32.mrf.mxu0
      %1545 = vmatprep.mubr.bf16.mxu0 0
      %1546 = vmatmul.mubr.bf16.gmra.mxu0 %v1492
      %v1547 = vpop.f32.mrf.mxu0
      %v1548 = vadd.f32 %v1477, %v1547
      %v1549 = vpop.f32.mrf.mxu0
      %v1550 = vpop.f32.mrf.mxu0
      %v1551 = vadd.f32 %v1477, %v1550
      %v1552 = vpop.f32.mrf.mxu0
      %1553 = vmatprep.mubr.bf16.mxu0 0
      %1554 = vmatmul.mubr.bf16.gmra.mxu0 %v1495
      %v1555 = vpop.f32.mrf.mxu0
      %v1556 = vadd.f32 %v1477, %v1555
      %v1557 = vpop.f32.mrf.mxu0
      %v1558 = vpop.f32.mrf.mxu0
      %v1559 = vadd.f32 %v1477, %v1558
      %v1560 = vpop.f32.mrf.mxu0
      %1561 = vdwg.mxu0
      %v1562 = vmax.f32 %v1532, 0.0
      %v1563 = vmax.f32 %v1535, 0.0
      %v1564 = vmax.f32 %v1540, 0.0
      %v1565 = vmax.f32 %v1543, 0.0
      %v1566 = vmax.f32 %v1548, 0.0
      %v1567 = vmax.f32 %v1551, 0.0
      %v1568 = vmax.f32 %v1556, 0.0
      %v1569 = vmax.f32 %v1559, 0.0
      %v1570 = vpack.c.bf16 %v1563, %v1562
      %v1571 = vpack.c.bf16 %v1565, %v1564
      %v1572 = vpack.c.bf16 %v1567, %v1566
      %v1573 = vpack.c.bf16 %v1569, %v1568
      %v1574 = vld [vmem:[%s9] sm:$0xf]
      %v1575 = vld [vmem:[%s9 + $0x4] sm:$0xf]
      %v1576 = vld [vmem:[%s9 + $0x8] sm:$0xf]
      %v1577 = vld [vmem:[%s9 + $0xc] sm:$0xf]
      %v1578 = vld [vmem:[%s10] sm:$0x1]
      %v1580 = vlaneseq
      %v1581 = vshrl.u32 %v1580, 7
      %v1582 = vsub.s32 0, %v1581
      %v1583 = vrot.slane %v1578, %v1582
      %v1589 = vunpack.c.l.b16 %v1574
      %v1590 = vunpack.c.l.b16 %v1575
      %v1591 = vunpack.c.l.b16 %v1576
      %v1592 = vunpack.c.l.b16 %v1577
      %v1593 = vpack.c.b16 %v1590, %v1589
      %v1594 = vpack.c.b16 %v1592, %v1591
      %vm1597 = vcmask 261120
      %v1599 = vsel %vm1597, %v1570, 0
      %v1602 = vsel %vm1597, %v1571, 0
      %v1605 = vsel %vm1597, %v1572, 0
      %v1608 = vsel %vm1597, %v1573, 0
      %1610 = vmatprep.subr.bf16.mxu0 0
      %1611 = vmatpush1.bf16.msra.mxu0 0
      %1612 = vmatprep.subr.bf16.mxu0 0
      %1613 = vmatpush1.bf16.msra.mxu0 0
      %1614 = vmatprep.subr.bf16.mxu0 0
      %1615 = vmatpush1.bf16.msra.mxu0 0
      %1616 = vmatprep.subr.bf16.mxu0 0
      %1617 = vmatpush1.bf16.msra.mxu0 0
      %1618 = vmatprep.subr.bf16.mxu0 0
      %1619 = vmatpush1.bf16.msra.mxu0 0
      %1620 = vmatprep.subr.bf16.mxu0 0
      %1621 = vmatpush1.bf16.msra.mxu0 0
      %1622 = vmatprep.subr.bf16.mxu0 0
      %1623 = vmatpush1.bf16.msra.mxu0 %v1594
      %1624 = vmatprep.subr.bf16.mxu0 0
      %1625 = vmatpush1.bf16.msra.mxu0 %v1593
      %1626 = vmatprep.subr.bf16.mxu0 0
      %1627 = vmatpush2.bf16.msra.mxu0 0
      %1628 = vmatprep.subr.bf16.mxu0 0
      %1629 = vmatpush2.bf16.msra.mxu0 0
      %1630 = vmatprep.subr.bf16.mxu0 0
      %1631 = vmatpush2.bf16.msra.mxu0 0
      %1632 = vmatprep.subr.bf16.mxu0 0
      %1633 = vmatpush2.bf16.msra.mxu0 0
      %1634 = vmatprep.subr.bf16.mxu0 0
      %1635 = vmatpush2.bf16.msra.mxu0 0
      %1636 = vmatprep.subr.bf16.mxu0 0
      %1637 = vmatpush2.bf16.msra.mxu0 0
      %1638 = vmatprep.subr.bf16.mxu0 0
      %1639 = vmatpush2.bf16.msra.mxu0 0
      %1640 = vmatprep.subr.bf16.mxu0 0
      %1641 = vmatpush2.bf16.msra.mxu0 0
      %1642 = vmatprep.mubr.bf16.mxu0 0
      %1643 = vmatmul.mubr.bf16.gmra.mxu0 %v1599
      %v1644 = vpop.f32.mrf.mxu0
      %v1645 = vadd.f32 %v1583, %v1644
      %v1646 = vpop.f32.mrf.mxu0
      %v1647 = vpop.f32.mrf.mxu0
      %v1648 = vadd.f32 %v1583, %v1647
      %v1649 = vpop.f32.mrf.mxu0
      %1650 = vmatprep.mubr.bf16.mxu0 0
      %1651 = vmatmul.mubr.bf16.gmra.mxu0 %v1602
      %v1652 = vpop.f32.mrf.mxu0
      %v1653 = vadd.f32 %v1583, %v1652
      %v1654 = vpop.f32.mrf.mxu0
      %v1655 = vpop.f32.mrf.mxu0
      %v1656 = vadd.f32 %v1583, %v1655
      %v1657 = vpop.f32.mrf.mxu0
      %1658 = vmatprep.mubr.bf16.mxu0 0
      %1659 = vmatmul.mubr.bf16.gmra.mxu0 %v1605
      %v1660 = vpop.f32.mrf.mxu0
      %v1661 = vadd.f32 %v1583, %v1660
      %v1662 = vpop.f32.mrf.mxu0
      %v1663 = vpop.f32.mrf.mxu0
      %v1664 = vadd.f32 %v1583, %v1663
      %v1665 = vpop.f32.mrf.mxu0
      %1666 = vmatprep.mubr.bf16.mxu0 0
      %1667 = vmatmul.mubr.bf16.gmra.mxu0 %v1608
      %v1668 = vpop.f32.mrf.mxu0
      %v1669 = vadd.f32 %v1583, %v1668
      %v1670 = vpop.f32.mrf.mxu0
      %v1671 = vpop.f32.mrf.mxu0
      %v1672 = vadd.f32 %v1583, %v1671
      %v1673 = vpop.f32.mrf.mxu0
      %1674 = vdwg.mxu0
      %v1675 = vadd.f32 %v1645, %v1458
      %v1676 = vadd.f32 %v1648, %v1459
      %v1677 = vadd.f32 %v1653, %v1460
      %v1678 = vadd.f32 %v1656, %v1461
      %v1679 = vadd.f32 %v1661, %v1462
      %v1680 = vadd.f32 %v1664, %v1463
      %v1681 = vadd.f32 %v1669, %v1464
      %v1682 = vadd.f32 %v1672, %v1465
      %v1683 = vsel %vm469, %v1675, 0.0
      %1684 = vadd.xlane.f32.xlu0 %v1683
      %v1685 = vpop.xlane.xlu0 %1684
      %v1686 = vsel %vm469, %v1676, 0.0
      %1687 = vadd.xlane.f32.xlu0 %v1686
      %v1688 = vpop.xlane.xlu0 %1687
      %v1689 = vsel %vm469, %v1677, 0.0
      %1690 = vadd.xlane.f32.xlu0 %v1689
      %v1691 = vpop.xlane.xlu0 %1690
      %v1692 = vsel %vm469, %v1678, 0.0
      %1693 = vadd.xlane.f32.xlu0 %v1692
      %v1694 = vpop.xlane.xlu0 %1693
      %v1695 = vsel %vm469, %v1679, 0.0
      %1696 = vadd.xlane.f32.xlu0 %v1695
      %v1697 = vpop.xlane.xlu0 %1696
      %v1698 = vsel %vm469, %v1680, 0.0
      %1699 = vadd.xlane.f32.xlu0 %v1698
      %v1700 = vpop.xlane.xlu0 %1699
      %v1701 = vsel %vm469, %v1681, 0.0
      %1702 = vadd.xlane.f32.xlu0 %v1701
      %v1703 = vpop.xlane.xlu0 %1702
      %v1704 = vsel %vm469, %v1682, 0.0
      %1705 = vadd.xlane.f32.xlu0 %v1704
      %v1706 = vpop.xlane.xlu0 %1705
      %v1707 = vmul.f32 %v1685, %v1355
      %v1708 = vmul.f32 %v1688, %v1355
      %v1709 = vmul.f32 %v1691, %v1355
      %v1710 = vmul.f32 %v1694, %v1355
      %v1711 = vmul.f32 %v1697, %v1355
      %v1712 = vmul.f32 %v1700, %v1355
      %v1713 = vmul.f32 %v1703, %v1355
      %v1714 = vmul.f32 %v1706, %v1355
      %v1715 = vsub.f32 %v1675, %v1707
      %v1716 = vsub.f32 %v1676, %v1708
      %v1717 = vsub.f32 %v1677, %v1709
      %v1718 = vsub.f32 %v1678, %v1710
      %v1719 = vsub.f32 %v1679, %v1711
      %v1720 = vsub.f32 %v1680, %v1712
      %v1721 = vsub.f32 %v1681, %v1713
      %v1722 = vsub.f32 %v1682, %v1714
      %v1723 = vmul.f32 %v1715, %v1715
      %v1724 = vmul.f32 %v1716, %v1716
      %v1725 = vmul.f32 %v1717, %v1717
      %v1726 = vmul.f32 %v1718, %v1718
      %v1727 = vmul.f32 %v1719, %v1719
      %v1728 = vmul.f32 %v1720, %v1720
      %v1729 = vmul.f32 %v1721, %v1721
      %v1730 = vmul.f32 %v1722, %v1722
      %v1731 = vsel %vm469, %v1723, 0.0
      %1732 = vadd.xlane.f32.xlu0 %v1731
      %v1733 = vpop.xlane.xlu0 %1732
      %v1734 = vsel %vm469, %v1724, 0.0
      %1735 = vadd.xlane.f32.xlu0 %v1734
      %v1736 = vpop.xlane.xlu0 %1735
      %v1737 = vsel %vm469, %v1725, 0.0
      %1738 = vadd.xlane.f32.xlu0 %v1737
      %v1739 = vpop.xlane.xlu0 %1738
      %v1740 = vsel %vm469, %v1726, 0.0
      %1741 = vadd.xlane.f32.xlu0 %v1740
      %v1742 = vpop.xlane.xlu0 %1741
      %v1743 = vsel %vm469, %v1727, 0.0
      %1744 = vadd.xlane.f32.xlu0 %v1743
      %v1745 = vpop.xlane.xlu0 %1744
      %v1746 = vsel %vm469, %v1728, 0.0
      %1747 = vadd.xlane.f32.xlu0 %v1746
      %v1748 = vpop.xlane.xlu0 %1747
      %v1749 = vsel %vm469, %v1729, 0.0
      %1750 = vadd.xlane.f32.xlu0 %v1749
      %v1751 = vpop.xlane.xlu0 %1750
      %v1752 = vsel %vm469, %v1730, 0.0
      %1753 = vadd.xlane.f32.xlu0 %v1752
      %v1754 = vpop.xlane.xlu0 %1753
      %v1755 = vmul.f32 %v1733, %v1355
      %v1756 = vmul.f32 %v1736, %v1355
      %v1757 = vmul.f32 %v1739, %v1355
      %v1758 = vmul.f32 %v1742, %v1355
      %v1759 = vmul.f32 %v1745, %v1355
      %v1760 = vmul.f32 %v1748, %v1355
      %v1761 = vmul.f32 %v1751, %v1355
      %v1762 = vmul.f32 %v1754, %v1355
      %v1763 = vadd.f32 %v1755, 1e-05
      %v1764 = vadd.f32 %v1756, 1e-05
      %v1765 = vadd.f32 %v1757, 1e-05
      %v1766 = vadd.f32 %v1758, 1e-05
      %v1767 = vadd.f32 %v1759, 1e-05
      %v1768 = vadd.f32 %v1760, 1e-05
      %v1769 = vadd.f32 %v1761, 1e-05
      %v1770 = vadd.f32 %v1762, 1e-05
      %v1771 = vrsqrt.pop %v1763
      %v1772 = vrsqrt.pop %v1764
      %v1773 = vrsqrt.pop %v1765
      %v1774 = vrsqrt.pop %v1766
      %v1775 = vrsqrt.pop %v1767
      %v1776 = vrsqrt.pop %v1768
      %v1777 = vrsqrt.pop %v1769
      %v1778 = vrsqrt.pop %v1770
      %v1779 = vmul.f32 %v1715, %v1771
      %v1780 = vmul.f32 %v1716, %v1772
      %v1781 = vmul.f32 %v1717, %v1773
      %v1782 = vmul.f32 %v1718, %v1774
      %v1783 = vmul.f32 %v1719, %v1775
      %v1784 = vmul.f32 %v1720, %v1776
      %v1785 = vmul.f32 %v1721, %v1777
      %v1786 = vmul.f32 %v1722, %v1778
      %v1787 = vld [vmem:[%s11] sm:$0x1]
      %v1789 = vlaneseq
      %v1790 = vshrl.u32 %v1789, 7
      %v1791 = vsub.s32 0, %v1790
      %v1792 = vrot.slane %v1787, %v1791
      %v1794 = vmul.f32 %v1779, %v1792
      %v1795 = vmul.f32 %v1780, %v1792
      %v1796 = vmul.f32 %v1781, %v1792
      %v1797 = vmul.f32 %v1782, %v1792
      %v1798 = vmul.f32 %v1783, %v1792
      %v1799 = vmul.f32 %v1784, %v1792
      %v1800 = vmul.f32 %v1785, %v1792
      %v1801 = vmul.f32 %v1786, %v1792
      %v1802 = vld [vmem:[%s12] sm:$0x1]
      %v1804 = vlaneseq
      %v1805 = vshrl.u32 %v1804, 7
      %v1806 = vsub.s32 0, %v1805
      %v1807 = vrot.slane %v1802, %v1806
      %v1809 = vadd.f32 %v1794, %v1807
      %v1810 = vadd.f32 %v1795, %v1807
      %v1811 = vadd.f32 %v1796, %v1807
      %v1812 = vadd.f32 %v1797, %v1807
      %v1813 = vadd.f32 %v1798, %v1807
      %v1814 = vadd.f32 %v1799, %v1807
      %v1815 = vadd.f32 %v1800, %v1807
      %v1816 = vadd.f32 %v1801, %v1807
      %1817 = vst.msk [vmem:[%s440] sm:$0xff] %vm469, %v1809
      %1818 = vst.msk [vmem:[%s440 + $0x8] sm:$0xff] %vm469, %v1810
      %1819 = vst.msk [vmem:[%s440 + $0x10] sm:$0xff] %vm469, %v1811
      %1820 = vst.msk [vmem:[%s440 + $0x18] sm:$0xff] %vm469, %v1812
      %1821 = vst.msk [vmem:[%s440 + $0x20] sm:$0xff] %vm469, %v1813
      %1822 = vst.msk [vmem:[%s440 + $0x28] sm:$0xff] %vm469, %v1814
      %1823 = vst.msk [vmem:[%s440 + $0x30] sm:$0xff] %vm469, %v1815
      %1824 = vst.msk [vmem:[%s440 + $0x38] sm:$0xff] %vm469, %v1816
      %p1825 = scmp.lt.s32.totalorder %s24, 1
      %s1826 = scalar_select %p1825, %s24, 1
      %s1827 = smul.addr %s1826, 8
      %s1828 = smul.addr %s1827, 8
      %s1829 = scalar_lea.vmem %s13, %s1828
      // Predicated region
      $region73: #{_lambda_.4} parent=71 // pred_check
        %p1830 = pneg %p320
      $region74: #{_lambda_.4} parent=71 // pred_check_branch
        %1832 = sbr.rel (%p1830) target = $region76
      $region75: #{_lambda_.4} parent=71 // pred_region
        _
      $region76: #{_lambda_.4} parent=71 // pred_fallthru
        _
    $region72: #{_lambda_.4} parent=5 // pred_fallthru
      _
    %p1833 = scmp.le.s32.totalorder 2, %s19
    // Predicated region
    $region77: #{_lambda_.4} parent=5 // pred_check
      %p1834 = pneg %p1833
    $region78: #{_lambda_.4} parent=5 // pred_check_branch
      %1836 = sbr.rel (%p1834) target = $region80
    $region79: #{_lambda_.4} parent=5 // pred_region
      %s1837 = ssub.s32 %s19, 2
      // Predicated region
      $region81: #{_lambda_.4} parent=79 // pred_check
        %p1838 = pneg %p326
      $region82: #{_lambda_.4} parent=79 // pred_check_branch
        %1840 = sbr.rel (%p1838) target = $region84
      $region83: #{_lambda_.4} parent=79 // pred_region
        %p1841 = scmp.lt.s32.totalorder %s25, 1
        %s1842 = scalar_select %p1841, %s25, 1
        %s1843 = smul.addr %s1842, 8
        %s1844 = smul.addr %s1843, 8
        %s1845 = scalar_lea.vmem %s13, %s1844
      $region84: #{_lambda_.4} parent=79 // pred_fallthru
        _
    $region80: #{_lambda_.4} parent=5 // pred_fallthru
      _
  $region6: #{_lambda_.4} parent=0 // loop_footer
    %s23 = sadd.s32 1, %s19
  $region7: #{_lambda_.4} parent=0 // loop_footer_branch
    %18 = sbr.rel target = $region3
  $region8: #{_lambda_.4} parent=0 // loop_exit
    _

// kernel: _lambda_.5
$region0: #{_lambda_.5}
  #allocation0 [shape = 'u32[]', space=smem, size = 0x4, offset = 0x4, fixed_abs, tag = 'smem constant byte address 0x4 - core index']
  #allocation1 [shape = 'u32[144,128]{1,0:T(1,128)}', space=vmem, size = 0x12000, scoped, tag = 'internal scratch']
  %s0 = inlined_call_operand.vmem [shape: f32[2,16,9,9], index: 0, kind: input, shape index: {}]
  %s1 = inlined_call_operand.vmem [shape: bf16[9,4,4], index: 1, kind: input, shape index: {}]
  %s2 = inlined_call_operand.vmem [shape: f32[4,1], index: 2, kind: input, shape index: {}]
  %s3 = inlined_call_operand.vmem [shape: f32[2,4,64], index: 3, kind: output, shape index: {}]
  %s4 = sld [smem:[#allocation0]]
  $region45: #{_lambda_.5} parent=0
    _
  %s6 = ssub.s32 1, %s4
  %s7 = scalar_select 0, %s6, %s4
  loop: start=0, step=1, limit=4
  $region2: #{_lambda_.5} parent=0 // loop_pre_header
    _
  $region3: #{_lambda_.5} parent=0 // loop_header
    %s9 = sphi 0, %s13
    %p10 = scmp.ge.s32.totalorder %s9, 4
    %s19 = sphi 0, %s21
    %s22 = sphi 0, %s19
    %s23 = sphi 0, %s22
    %s39 = sphi 0, %s23
    %s43 = sphi 0, %s43
    %s45 = sphi 0, %s43
    %s46 = sphi 0, %s45
    %s60 = sphi 0, %s46
    %s64 = sphi 0, %s64
    %s66 = sphi 0, %s64
    %s67 = sphi 0, %s66
    %s81 = sphi 0, %s67
    %s87 = sphi 0, %s89
    %s90 = sphi 0, %s87
    %s91 = sphi 0, %s90
    %s107 = sphi 0, %s91
  $region4: #{_lambda_.5} parent=0 // loop_header_branch
    %12 = sbr.rel (%p10) target = $region8
  $region5: #{_lambda_.5} parent=0 // loop_body
    %s14 = ssub.s32 %s9, 1
    %s15 = ssub.s32 %s9, 2
    %s16 = sadd.s32 %s9, 1
    %s17 = ssub.s32 %s9, %s16
    %p18 = scmp.eq.s32.totalorder %s17, 0
    %s20 = sadd.s32 %s19, 1
    %s21 = scalar_select %p18, %s19, %s20
    %p24 = pneg %p18
    %p25 = scmp.eq.s32.totalorder %s9, 1
    %p26 = por %p24, %p25
    %p27 = scmp.ne.s32.totalorder %s19, %s22
    %p28 = scmp.eq.s32.totalorder %s9, 0
    %p29 = por %p27, %p28
    %p30 = scmp.ne.s32.totalorder %s19, %s22
    %p31 = scmp.eq.s32.totalorder %s14, 1
    %p32 = por %p30, %p31
    %p33 = scmp.ne.s32.totalorder %s22, %s23
    %p34 = scmp.eq.s32.totalorder %s14, 0
    %p35 = por %p33, %p34
    %p36 = scmp.ne.s32.totalorder %s22, %s23
    %p37 = scmp.eq.s32.totalorder %s15, 1
    %p38 = por %p36, %p37
    %p40 = scmp.ne.s32.totalorder %s23, %s39
    %p41 = scmp.eq.s32.totalorder %s15, 0
    %p42 = por %p40, %p41
    %s44 = sadd.s32 %s43, 1
    %p47 = scmp.eq.s32.totalorder %s9, 1
    %p48 = scmp.ne.s32.totalorder %s43, %s45
    %p49 = scmp.eq.s32.totalorder %s9, 0
    %p50 = por %p48, %p49
    %p51 = scmp.ne.s32.totalorder %s43, %s45
    %p52 = scmp.eq.s32.totalorder %s14, 1
    %p53 = por %p51, %p52
    %p54 = scmp.ne.s32.totalorder %s45, %s46
    %p55 = scmp.eq.s32.totalorder %s14, 0
    %p56 = por %p54, %p55
    %p57 = scmp.ne.s32.totalorder %s45, %s46
    %p58 = scmp.eq.s32.totalorder %s15, 1
    %p59 = por %p57, %p58
    %p61 = scmp.ne.s32.totalorder %s46, %s60
    %p62 = scmp.eq.s32.totalorder %s15, 0
    %p63 = por %p61, %p62
    %s65 = sadd.s32 %s64, 1
    %p68 = scmp.eq.s32.totalorder %s9, 1
    %p69 = scmp.ne.s32.totalorder %s64, %s66
    %p70 = scmp.eq.s32.totalorder %s9, 0
    %p71 = por %p69, %p70
    %p72 = scmp.ne.s32.totalorder %s64, %s66
    %p73 = scmp.eq.s32.totalorder %s14, 1
    %p74 = por %p72, %p73
    %p75 = scmp.ne.s32.totalorder %s66, %s67
    %p76 = scmp.eq.s32.totalorder %s14, 0
    %p77 = por %p75, %p76
    %p78 = scmp.ne.s32.totalorder %s66, %s67
    %p79 = scmp.eq.s32.totalorder %s15, 1
    %p80 = por %p78, %p79
    %p82 = scmp.ne.s32.totalorder %s67, %s81
    %p83 = scmp.eq.s32.totalorder %s15, 0
    %p84 = por %p82, %p83
    %s85 = ssub.s32 %s9, %s16
    %p86 = scmp.eq.s32.totalorder %s85, 0
    %s88 = sadd.s32 %s87, 1
    %s89 = scalar_select %p86, %s87, %s88
    %p92 = pneg %p86
    %p93 = scmp.eq.s32.totalorder %s9, 1
    %p94 = por %p92, %p93
    %p95 = scmp.ne.s32.totalorder %s87, %s90
    %p96 = scmp.eq.s32.totalorder %s9, 0
    %p97 = por %p95, %p96
    %p98 = scmp.ne.s32.totalorder %s87, %s90
    %p99 = scmp.eq.s32.totalorder %s14, 1
    %p100 = por %p98, %p99
    %p101 = scmp.ne.s32.totalorder %s90, %s91
    %p102 = scmp.eq.s32.totalorder %s14, 0
    %p103 = por %p101, %p102
    %p104 = scmp.ne.s32.totalorder %s90, %s91
    %p105 = scmp.eq.s32.totalorder %s15, 1
    %p106 = por %p104, %p105
    %p108 = scmp.ne.s32.totalorder %s91, %s107
    %p109 = scmp.eq.s32.totalorder %s15, 0
    %p110 = por %p108, %p109
    %p111 = scmp.le.s32.totalorder 1, %s9
    %p112 = scmp.lt.s32.totalorder %s9, 3
    %p113 = pnand %p111, %p112
    %p114 = pneg %p113
    // Predicated region
    $region9: #{_lambda_.5} parent=5 // pred_check
      _
    $region10: #{_lambda_.5} parent=5 // pred_check_branch
      %116 = sbr.rel (%p113) target = $region12
    $region11: #{_lambda_.5} parent=5 // pred_region
      %s117 = ssub.s32 %s9, 1
      // Predicated region
      $region13: #{_lambda_.5} parent=11 // pred_check
        %p118 = pneg %p56
      $region14: #{_lambda_.5} parent=11 // pred_check_branch
        %120 = sbr.rel (%p118) target = $region16
      $region15: #{_lambda_.5} parent=11 // pred_region
        _
      $region16: #{_lambda_.5} parent=11 // pred_fallthru
        _
      // Predicated region
      $region17: #{_lambda_.5} parent=11 // pred_check
        %p121 = pneg %p77
      $region18: #{_lambda_.5} parent=11 // pred_check_branch
        %123 = sbr.rel (%p121) target = $region20
      $region19: #{_lambda_.5} parent=11 // pred_region
        _
      $region20: #{_lambda_.5} parent=11 // pred_fallthru
        _
    $region12: #{_lambda_.5} parent=5 // pred_fallthru
      _
    %p124 = scmp.lt.s32.totalorder %s9, 2
    // Predicated region
    $region21: #{_lambda_.5} parent=5 // pred_check
      %p125 = pneg %p124
    $region22: #{_lambda_.5} parent=5 // pred_check_branch
      %127 = sbr.rel (%p125) target = $region24
    $region23: #{_lambda_.5} parent=5 // pred_region
      // Predicated region
      $region25: #{_lambda_.5} parent=23 // pred_check
        %p128 = pneg %p29
      $region26: #{_lambda_.5} parent=23 // pred_check_branch
        %130 = sbr.rel (%p128) target = $region28
      $region27: #{_lambda_.5} parent=23 // pred_region
        %p131 = scmp.lt.s32.totalorder %s9, 1
        %s132 = scalar_select %p131, %s9, 1
        %s133 = smul.addr %s132, 32
        %s134 = smul.addr %s133, 8
        %s135 = scalar_lea.vmem %s0, %s134
      $region28: #{_lambda_.5} parent=23 // pred_fallthru
        _
    $region24: #{_lambda_.5} parent=5 // pred_fallthru
      _
    %p136 = scmp.le.s32.totalorder 1, %s9
    %p137 = scmp.lt.s32.totalorder %s9, 3
    %p138 = pnand %p136, %p137
    %p139 = pneg %p138
    // Predicated region
    $region29: #{_lambda_.5} parent=5 // pred_check
      _
    $region30: #{_lambda_.5} parent=5 // pred_check_branch
      %141 = sbr.rel (%p138) target = $region32
    $region31: #{_lambda_.5} parent=5 // pred_region
      %s142 = ssub.s32 %s9, 1
      %p143 = scmp.lt.s32.totalorder %s14, 1
      %s144 = scalar_select %p143, %s14, 1
      %s145 = smul.addr %s144, 32
      %s146 = smul.addr %s145, 8
      %s147 = scalar_lea.vmem %s0, %s146
      %p148 = pneg %p35
      %p149 = pneg %p32
      %p150 = pneg %p56
      %p151 = pneg %p53
      %p152 = pneg %p77
      %p153 = pneg %p74
      %p154 = pneg %p103
      %p155 = pneg %p100
      %p156 = scmp.lt.s32.totalorder %s14, 1
      %s157 = scalar_select %p156, %s14, 1
      %s158 = smul.addr %s157, 4
      %s159 = scalar_lea.vmem %s3, %s158
      %p160 = scmp.lt.s32.totalorder %s14, 1
      %s161 = scalar_select %p160, %s14, 1
      %s162 = smul.addr %s161, 32
      %s163 = smul.addr %s162, 8
      %s164 = scalar_lea.vmem %s0, %s163
      %p165 = scmp.lt.s32.totalorder %s14, 1
      %s166 = scalar_select %p165, %s14, 1
      %s167 = smul.addr %s166, 4
      %s168 = scalar_lea.vmem %s3, %s167
      %v170 = vld [vmem:[%s164] sm:$0xff]
      %v171 = vld [vmem:[%s164 + $0x10] sm:$0xff]
      %v172 = vld [vmem:[%s164 + $0x20] sm:$0xff]
      %v173 = vld [vmem:[%s164 + $0x30] sm:$0xff]
      %v174 = vcombine.low %v170, %v172
      %v175 = vcombine.high %v170, %v172
      %v177 = vunpack.c.l.s4 1983009808
      %v178 = vunpack.c.0.s8 %v177
      %v179 = vlaneseq
      %v180 = vshrl.u32 %v179, 7
      %v181 = vsub.s32 %v178, %v180
      %v182 = vrot.slane %v174, %v181
      %v184 = vunpack.c.l.s4 1983009808
      %v185 = vunpack.c.0.s8 %v184
      %v186 = vlaneseq
      %v187 = vshrl.u32 %v186, 7
      %v188 = vsub.s32 %v185, %v187
      %v189 = vrot.slane %v175, %v188
      %v190 = vcombine.low %v171, %v173
      %v191 = vcombine.high %v171, %v173
      %v193 = vunpack.c.l.s4 1983009808
      %v194 = vunpack.c.0.s8 %v193
      %v195 = vlaneseq
      %v196 = vshrl.u32 %v195, 7
      %v197 = vsub.s32 %v194, %v196
      %v198 = vrot.slane %v190, %v197
      %v200 = vunpack.c.l.s4 1983009808
      %v201 = vunpack.c.0.s8 %v200
      %v202 = vlaneseq
      %v203 = vshrl.u32 %v202, 7
      %v204 = vsub.s32 %v201, %v203
      %v205 = vrot.slane %v191, %v204
      %v206 = vcombine.low %v182, %v198
      %v207 = vcombine.high %v182, %v198
      %v209 = vunpack.c.l.s4 1934713408
      %v210 = vunpack.c.0.s8 %v209
      %v211 = vlaneseq
      %v212 = vshrl.u32 %v211, 7
      %v213 = vsub.s32 %v210, %v212
      %v214 = vrot.slane %v206, %v213
      %v216 = vunpack.c.l.s4 1934713408
      %v217 = vunpack.c.0.s8 %v216
      %v218 = vlaneseq
      %v219 = vshrl.u32 %v218, 7
      %v220 = vsub.s32 %v217, %v219
      %v221 = vrot.slane %v207, %v220
      %v222 = vcombine.low %v189, %v205
      %v223 = vcombine.high %v189, %v205
      %v225 = vunpack.c.l.s4 1934713408
      %v226 = vunpack.c.0.s8 %v225
      %v227 = vlaneseq
      %v228 = vshrl.u32 %v227, 7
      %v229 = vsub.s32 %v226, %v228
      %v230 = vrot.slane %v222, %v229
      %v232 = vunpack.c.l.s4 1934713408
      %v233 = vunpack.c.0.s8 %v232
      %v234 = vlaneseq
      %v235 = vshrl.u32 %v234, 7
      %v236 = vsub.s32 %v233, %v235
      %v237 = vrot.slane %v223, %v236
      %v238 = vcombine.high %v214, 0.0
      %v239 = vcombine.high %v221, 0.0
      %v240 = vcombine.high %v230, 0.0
      %v241 = vcombine.high %v237, 0.0
      %243 = vrot.lane.b32.xlu0 %v238, 8
      %v244 = vpop.permute.xlu0 %243
      %247 = vrot.lane.b32.xlu0 %v221, 16
      %v248 = vpop.permute.xlu0 %247
      %251 = vrot.lane.b32.xlu0 %v239, 24
      %v252 = vpop.permute.xlu0 %251
      %255 = vrot.lane.b32.xlu0 %v230, 32
      %v256 = vpop.permute.xlu0 %255
      %259 = vrot.lane.b32.xlu0 %v240, 40
      %v260 = vpop.permute.xlu0 %259
      %263 = vrot.lane.b32.xlu0 %v237, 48
      %v264 = vpop.permute.xlu0 %263
      %267 = vrot.lane.b32.xlu0 %v241, 56
      %v268 = vpop.permute.xlu0 %267
      %vm270 = vcmask 64512
      %v271 = vsel %vm270, %v214, %v244
      %vm272 = vcmask 130048
      %v273 = vsel %vm272, %v271, %v248
      %vm274 = vcmask 195584
      %v275 = vsel %vm274, %v273, %v252
      %vm276 = vcmask 261120
      %v277 = vsel %vm276, %v275, %v256
      %vm278 = vcmask 326656
      %v279 = vsel %vm278, %v277, %v260
      %vm280 = vcmask 392192
      %v281 = vsel %vm280, %v279, %v264
      %vm282 = vcmask 457728
      %v283 = vsel %vm282, %v281, %v268
      %v284 = vpack.c.bf16 %v283, %v283
      %v285 = vld [vmem:[%s1] sm:$0x3]
      %s286 = scalar_lea.vmem %s164, 64
      %v287 = vld [vmem:[%s286] sm:$0xff]
      %v288 = vld [vmem:[%s286 + $0x10] sm:$0xff]
      %v289 = vld [vmem:[%s286 + $0x20] sm:$0xff]
      %v290 = vld [vmem:[%s286 + $0x30] sm:$0xff]
      %v291 = vcombine.low %v287, %v289
      %v292 = vcombine.high %v287, %v289
      %v294 = vunpack.c.l.s4 1983009808
      %v295 = vunpack.c.0.s8 %v294
      %v296 = vlaneseq
      %v297 = vshrl.u32 %v296, 7
      %v298 = vsub.s32 %v295, %v297
      %v299 = vrot.slane %v291, %v298
      %v301 = vunpack.c.l.s4 1983009808
      %v302 = vunpack.c.0.s8 %v301
      %v303 = vlaneseq
      %v304 = vshrl.u32 %v303, 7
      %v305 = vsub.s32 %v302, %v304
      %v306 = vrot.slane %v292, %v305
      %v307 = vcombine.low %v288, %v290
      %v308 = vcombine.high %v288, %v290
      %v310 = vunpack.c.l.s4 1983009808
      %v311 = vunpack.c.0.s8 %v310
      %v312 = vlaneseq
      %v313 = vshrl.u32 %v312, 7
      %v314 = vsub.s32 %v311, %v313
      %v315 = vrot.slane %v307, %v314
      %v317 = vunpack.c.l.s4 1983009808
      %v318 = vunpack.c.0.s8 %v317
      %v319 = vlaneseq
      %v320 = vshrl.u32 %v319, 7
      %v321 = vsub.s32 %v318, %v320
      %v322 = vrot.slane %v308, %v321
      %v323 = vcombine.low %v299, %v315
      %v324 = vcombine.high %v299, %v315
      %v326 = vunpack.c.l.s4 1934713408
      %v327 = vunpack.c.0.s8 %v326
      %v328 = vlaneseq
      %v329 = vshrl.u32 %v328, 7
      %v330 = vsub.s32 %v327, %v329
      %v331 = vrot.slane %v323, %v330
      %v333 = vunpack.c.l.s4 1934713408
      %v334 = vunpack.c.0.s8 %v333
      %v335 = vlaneseq
      %v336 = vshrl.u32 %v335, 7
      %v337 = vsub.s32 %v334, %v336
      %v338 = vrot.slane %v324, %v337
      %v339 = vcombine.low %v306, %v322
      %v340 = vcombine.high %v306, %v322
      %v342 = vunpack.c.l.s4 1934713408
      %v343 = vunpack.c.0.s8 %v342
      %v344 = vlaneseq
      %v345 = vshrl.u32 %v344, 7
      %v346 = vsub.s32 %v343, %v345
      %v347 = vrot.slane %v339, %v346
      %v349 = vunpack.c.l.s4 1934713408
      %v350 = vunpack.c.0.s8 %v349
      %v351 = vlaneseq
      %v352 = vshrl.u32 %v351, 7
      %v353 = vsub.s32 %v350, %v352
      %v354 = vrot.slane %v340, %v353
      %v355 = vcombine.high %v331, 0.0
      %v356 = vcombine.high %v338, 0.0
      %v357 = vcombine.high %v347, 0.0
      %v358 = vcombine.high %v354, 0.0
      %360 = vrot.lane.b32.xlu0 %v355, 8
      %v361 = vpop.permute.xlu0 %360
      %364 = vrot.lane.b32.xlu0 %v338, 16
      %v365 = vpop.permute.xlu0 %364
      %368 = vrot.lane.b32.xlu0 %v356, 24
      %v369 = vpop.permute.xlu0 %368
      %372 = vrot.lane.b32.xlu0 %v347, 32
      %v373 = vpop.permute.xlu0 %372
      %376 = vrot.lane.b32.xlu0 %v357, 40
      %v377 = vpop.permute.xlu0 %376
      %380 = vrot.lane.b32.xlu0 %v354, 48
      %v381 = vpop.permute.xlu0 %380
      %384 = vrot.lane.b32.xlu0 %v358, 56
      %v385 = vpop.permute.xlu0 %384
      %v387 = vsel %vm270, %v331, %v361
      %v388 = vsel %vm272, %v387, %v365
      %v389 = vsel %vm274, %v388, %v369
      %v390 = vsel %vm276, %v389, %v373
      %v391 = vsel %vm278, %v390, %v377
      %v392 = vsel %vm280, %v391, %v381
      %v393 = vsel %vm282, %v392, %v385
      %v394 = vpack.c.bf16 %v393, %v393
      %s395 = scalar_lea.vmem %s1, 2
      %v396 = vld [vmem:[%s395] sm:$0x3]
      %vm397 = vcmask 31744
      %v399 = vsel %vm397, %v396, 0
      %vm401 = vcmask 1041408
      %v403 = vsel %vm401, %v394, 0
      %405 = vmatprep.subr.bf16.mxu0 0
      %406 = vmatpush1.bf16.msra.mxu0 0
      %407 = vmatprep.subr.bf16.mxu0 0
      %408 = vmatpush1.bf16.msra.mxu0 0
      %409 = vmatprep.subr.bf16.mxu0 0
      %410 = vmatpush1.bf16.msra.mxu0 0
      %411 = vmatprep.subr.bf16.mxu0 0
      %412 = vmatpush1.bf16.msra.mxu0 0
      %413 = vmatprep.subr.bf16.mxu0 0
      %414 = vmatpush1.bf16.msra.mxu0 0
      %415 = vmatprep.subr.bf16.mxu0 0
      %416 = vmatpush1.bf16.msra.mxu0 0
      %417 = vmatprep.subr.bf16.mxu0 0
      %418 = vmatpush1.bf16.msra.mxu0 0
      %419 = vmatprep.subr.bf16.mxu0 0
      %420 = vmatpush1.bf16.msra.mxu0 %v403
      %421 = vmatprep.subr.bf16.mxu0 0
      %422 = vmatpush2.bf16.msra.mxu0 0
      %423 = vmatprep.subr.bf16.mxu0 0
      %424 = vmatpush2.bf16.msra.mxu0 0
      %425 = vmatprep.subr.bf16.mxu0 0
      %426 = vmatpush2.bf16.msra.mxu0 0
      %427 = vmatprep.subr.bf16.mxu0 0
      %428 = vmatpush2.bf16.msra.mxu0 0
      %429 = vmatprep.subr.bf16.mxu0 0
      %430 = vmatpush2.bf16.msra.mxu0 0
      %431 = vmatprep.subr.bf16.mxu0 0
      %432 = vmatpush2.bf16.msra.mxu0 0
      %433 = vmatprep.subr.bf16.mxu0 0
      %434 = vmatpush2.bf16.msra.mxu0 0
      %435 = vmatprep.subr.bf16.mxu0 0
      %436 = vmatpush2.bf16.msra.mxu0 0
      %437 = vmatprep.mubr.bf16.mxu0 0
      %438 = vmatmul.mubr.bf16.gmra.mxu0 %v399
      %v439 = vpop.f32.mrf.mxu0
      %v440 = vadd.f32 0.0, %v439
      %v441 = vpop.f32.mrf.mxu0
      %v442 = vpop.f32.mrf.mxu0
      %v443 = vpop.f32.mrf.mxu0
      %444 = vdwg.mxu0
      %v446 = vsel %vm397, %v285, 0
      %v449 = vsel %vm401, %v284, 0
      %451 = vmatprep.subr.bf16.mxu0 0
      %452 = vmatpush1.bf16.msra.mxu0 0
      %453 = vmatprep.subr.bf16.mxu0 0
      %454 = vmatpush1.bf16.msra.mxu0 0
      %455 = vmatprep.subr.bf16.mxu0 0
      %456 = vmatpush1.bf16.msra.mxu0 0
      %457 = vmatprep.subr.bf16.mxu0 0
      %458 = vmatpush1.bf16.msra.mxu0 0
      %459 = vmatprep.subr.bf16.mxu0 0
      %460 = vmatpush1.bf16.msra.mxu0 0
      %461 = vmatprep.subr.bf16.mxu0 0
      %462 = vmatpush1.bf16.msra.mxu0 0
      %463 = vmatprep.subr.bf16.mxu0 0
      %464 = vmatpush1.bf16.msra.mxu0 0
      %465 = vmatprep.subr.bf16.mxu0 0
      %466 = vmatpush1.bf16.msra.mxu0 %v449
      %467 = vmatprep.subr.bf16.mxu0 0
      %468 = vmatpush2.bf16.msra.mxu0 0
      %469 = vmatprep.subr.bf16.mxu0 0
      %470 = vmatpush2.bf16.msra.mxu0 0
      %471 = vmatprep.subr.bf16.mxu0 0
      %472 = vmatpush2.bf16.msra.mxu0 0
      %473 = vmatprep.subr.bf16.mxu0 0
      %474 = vmatpush2.bf16.msra.mxu0 0
      %475 = vmatprep.subr.bf16.mxu0 0
      %476 = vmatpush2.bf16.msra.mxu0 0
      %477 = vmatprep.subr.bf16.mxu0 0
      %478 = vmatpush2.bf16.msra.mxu0 0
      %479 = vmatprep.subr.bf16.mxu0 0
      %480 = vmatpush2.bf16.msra.mxu0 0
      %481 = vmatprep.subr.bf16.mxu0 0
      %482 = vmatpush2.bf16.msra.mxu0 0
      %483 = vmatprep.mubr.bf16.mxu0 0
      %484 = vmatmul.mubr.bf16.gmra.mxu0 %v446
      %v485 = vpop.f32.mrf.mxu0
      %v486 = vadd.f32 %v440, %v485
      %v487 = vpop.f32.mrf.mxu0
      %v488 = vpop.f32.mrf.mxu0
      %v489 = vpop.f32.mrf.mxu0
      %490 = vdwg.mxu0
      %v491 = vld [vmem:[%s164] sm:$0xff]
      %v492 = vld [vmem:[%s164 + $0x10] sm:$0xff]
      %v493 = vld [vmem:[%s164 + $0x20] sm:$0xff]
      %v494 = vld [vmem:[%s164 + $0x30] sm:$0xff]
      %499 = vrot.lane.b32.xlu0 %v491, 127
      %v500 = vpop.permute.xlu0 %499
      %501 = vrot.lane.b32.xlu0 %v492, 127
      %v502 = vpop.permute.xlu0 %501
      %503 = vrot.lane.b32.xlu0 %v493, 127
      %v504 = vpop.permute.xlu0 %503
      %505 = vrot.lane.b32.xlu0 %v494, 127
      %v506 = vpop.permute.xlu0 %505
      %v511 = vcombine.low %v500, %v504
      %v512 = vcombine.high %v500, %v504
      %v514 = vunpack.c.l.s4 1983009808
      %v515 = vunpack.c.0.s8 %v514
      %v516 = vlaneseq
      %v517 = vshrl.u32 %v516, 7
      %v518 = vsub.s32 %v515, %v517
      %v519 = vrot.slane %v511, %v518
      %v521 = vunpack.c.l.s4 1983009808
      %v522 = vunpack.c.0.s8 %v521
      %v523 = vlaneseq
      %v524 = vshrl.u32 %v523, 7
      %v525 = vsub.s32 %v522, %v524
      %v526 = vrot.slane %v512, %v525
      %v527 = vcombine.low %v502, %v506
      %v528 = vcombine.high %v502, %v506
      %v530 = vunpack.c.l.s4 1983009808
      %v531 = vunpack.c.0.s8 %v530
      %v532 = vlaneseq
      %v533 = vshrl.u32 %v532, 7
      %v534 = vsub.s32 %v531, %v533
      %v535 = vrot.slane %v527, %v534
      %v537 = vunpack.c.l.s4 1983009808
      %v538 = vunpack.c.0.s8 %v537
      %v539 = vlaneseq
      %v540 = vshrl.u32 %v539, 7
      %v541 = vsub.s32 %v538, %v540
      %v542 = vrot.slane %v528, %v541
      %v543 = vcombine.low %v519, %v535
      %v544 = vcombine.high %v519, %v535
      %v546 = vunpack.c.l.s4 1934713408
      %v547 = vunpack.c.0.s8 %v546
      %v548 = vlaneseq
      %v549 = vshrl.u32 %v548, 7
      %v550 = vsub.s32 %v547, %v549
      %v551 = vrot.slane %v543, %v550
      %v553 = vunpack.c.l.s4 1934713408
      %v554 = vunpack.c.0.s8 %v553
      %v555 = vlaneseq
      %v556 = vshrl.u32 %v555, 7
      %v557 = vsub.s32 %v554, %v556
      %v558 = vrot.slane %v544, %v557
      %v559 = vcombine.low %v526, %v542
      %v560 = vcombine.high %v526, %v542
      %v562 = vunpack.c.l.s4 1934713408
      %v563 = vunpack.c.0.s8 %v562
      %v564 = vlaneseq
      %v565 = vshrl.u32 %v564, 7
      %v566 = vsub.s32 %v563, %v565
      %v567 = vrot.slane %v559, %v566
      %v569 = vunpack.c.l.s4 1934713408
      %v570 = vunpack.c.0.s8 %v569
      %v571 = vlaneseq
      %v572 = vshrl.u32 %v571, 7
      %v573 = vsub.s32 %v570, %v572
      %v574 = vrot.slane %v560, %v573
      %v575 = vcombine.high %v551, 0.0
      %v576 = vcombine.high %v558, 0.0
      %v577 = vcombine.high %v567, 0.0
      %v578 = vcombine.high %v574, 0.0
      %580 = vrot.lane.b32.xlu0 %v575, 8
      %v581 = vpop.permute.xlu0 %580
      %584 = vrot.lane.b32.xlu0 %v558, 16
      %v585 = vpop.permute.xlu0 %584
      %588 = vrot.lane.b32.xlu0 %v576, 24
      %v589 = vpop.permute.xlu0 %588
      %592 = vrot.lane.b32.xlu0 %v567, 32
      %v593 = vpop.permute.xlu0 %592
      %596 = vrot.lane.b32.xlu0 %v577, 40
      %v597 = vpop.permute.xlu0 %596
      %600 = vrot.lane.b32.xlu0 %v574, 48
      %v601 = vpop.permute.xlu0 %600
      %604 = vrot.lane.b32.xlu0 %v578, 56
      %v605 = vpop.permute.xlu0 %604
      %v607 = vsel %vm270, %v551, %v581
      %v608 = vsel %vm272, %v607, %v585
      %v609 = vsel %vm274, %v608, %v589
      %v610 = vsel %vm276, %v609, %v593
      %v611 = vsel %vm278, %v610, %v597
      %v612 = vsel %vm280, %v611, %v601
      %v613 = vsel %vm282, %v612, %v605
      %v614 = vpack.c.bf16 %v613, %v613
      %s615 = scalar_lea.vmem %s1, 4
      %v616 = vld [vmem:[%s615] sm:$0x3]
      %v618 = vsel %vm397, %v616, 0
      %v621 = vsel %vm401, %v614, 0
      %623 = vmatprep.subr.bf16.mxu0 0
      %624 = vmatpush1.bf16.msra.mxu0 0
      %625 = vmatprep.subr.bf16.mxu0 0
      %626 = vmatpush1.bf16.msra.mxu0 0
      %627 = vmatprep.subr.bf16.mxu0 0
      %628 = vmatpush1.bf16.msra.mxu0 0
      %629 = vmatprep.subr.bf16.mxu0 0
      %630 = vmatpush1.bf16.msra.mxu0 0
      %631 = vmatprep.subr.bf16.mxu0 0
      %632 = vmatpush1.bf16.msra.mxu0 0
      %633 = vmatprep.subr.bf16.mxu0 0
      %634 = vmatpush1.bf16.msra.mxu0 0
      %635 = vmatprep.subr.bf16.mxu0 0
      %636 = vmatpush1.bf16.msra.mxu0 0
      %637 = vmatprep.subr.bf16.mxu0 0
      %638 = vmatpush1.bf16.msra.mxu0 %v621
      %639 = vmatprep.subr.bf16.mxu0 0
      %640 = vmatpush2.bf16.msra.mxu0 0
      %641 = vmatprep.subr.bf16.mxu0 0
      %642 = vmatpush2.bf16.msra.mxu0 0
      %643 = vmatprep.subr.bf16.mxu0 0
      %644 = vmatpush2.bf16.msra.mxu0 0
      %645 = vmatprep.subr.bf16.mxu0 0
      %646 = vmatpush2.bf16.msra.mxu0 0
      %647 = vmatprep.subr.bf16.mxu0 0
      %648 = vmatpush2.bf16.msra.mxu0 0
      %649 = vmatprep.subr.bf16.mxu0 0
      %650 = vmatpush2.bf16.msra.mxu0 0
      %651 = vmatprep.subr.bf16.mxu0 0
      %652 = vmatpush2.bf16.msra.mxu0 0
      %653 = vmatprep.subr.bf16.mxu0 0
      %654 = vmatpush2.bf16.msra.mxu0 0
      %655 = vmatprep.mubr.bf16.mxu0 0
      %656 = vmatmul.mubr.bf16.gmra.mxu0 %v618
      %v657 = vpop.f32.mrf.mxu0
      %v658 = vadd.f32 0.0, %v657
      %v659 = vpop.f32.mrf.mxu0
      %v660 = vpop.f32.mrf.mxu0
      %v661 = vpop.f32.mrf.mxu0
      %662 = vdwg.mxu0
      %v663 = vadd.f32 %v486, %v658
      %s664 = scalar_lea.vmem %s164, 128
      %v665 = vld [vmem:[%s664] sm:$0xff]
      %v666 = vld [vmem:[%s664 + $0x10] sm:$0xff]
      %v667 = vld [vmem:[%s664 + $0x20] sm:$0xff]
      %v668 = vld [vmem:[%s664 + $0x30] sm:$0xff]
      %v669 = vcombine.low %v665, %v667
      %v670 = vcombine.high %v665, %v667
      %v672 = vunpack.c.l.s4 1983009808
      %v673 = vunpack.c.0.s8 %v672
      %v674 = vlaneseq
      %v675 = vshrl.u32 %v674, 7
      %v676 = vsub.s32 %v673, %v675
      %v677 = vrot.slane %v669, %v676
      %v679 = vunpack.c.l.s4 1983009808
      %v680 = vunpack.c.0.s8 %v679
      %v681 = vlaneseq
      %v682 = vshrl.u32 %v681, 7
      %v683 = vsub.s32 %v680, %v682
      %v684 = vrot.slane %v670, %v683
      %v685 = vcombine.low %v666, %v668
      %v686 = vcombine.high %v666, %v668
      %v688 = vunpack.c.l.s4 1983009808
      %v689 = vunpack.c.0.s8 %v688
      %v690 = vlaneseq
      %v691 = vshrl.u32 %v690, 7
      %v692 = vsub.s32 %v689, %v691
      %v693 = vrot.slane %v685, %v692
      %v695 = vunpack.c.l.s4 1983009808
      %v696 = vunpack.c.0.s8 %v695
      %v697 = vlaneseq
      %v698 = vshrl.u32 %v697, 7
      %v699 = vsub.s32 %v696, %v698
      %v700 = vrot.slane %v686, %v699
      %v701 = vcombine.low %v677, %v693
      %v702 = vcombine.high %v677, %v693
      %v704 = vunpack.c.l.s4 1934713408
      %v705 = vunpack.c.0.s8 %v704
      %v706 = vlaneseq
      %v707 = vshrl.u32 %v706, 7
      %v708 = vsub.s32 %v705, %v707
      %v709 = vrot.slane %v701, %v708
      %v711 = vunpack.c.l.s4 1934713408
      %v712 = vunpack.c.0.s8 %v711
      %v713 = vlaneseq
      %v714 = vshrl.u32 %v713, 7
      %v715 = vsub.s32 %v712, %v714
      %v716 = vrot.slane %v702, %v715
      %v717 = vcombine.low %v684, %v700
      %v718 = vcombine.high %v684, %v700
      %v720 = vunpack.c.l.s4 1934713408
      %v721 = vunpack.c.0.s8 %v720
      %v722 = vlaneseq
      %v723 = vshrl.u32 %v722, 7
      %v724 = vsub.s32 %v721, %v723
      %v725 = vrot.slane %v717, %v724
      %v727 = vunpack.c.l.s4 1934713408
      %v728 = vunpack.c.0.s8 %v727
      %v729 = vlaneseq
      %v730 = vshrl.u32 %v729, 7
      %v731 = vsub.s32 %v728, %v730
      %v732 = vrot.slane %v718, %v731
      %v733 = vcombine.high %v709, 0.0
      %v734 = vcombine.high %v716, 0.0
      %v735 = vcombine.high %v725, 0.0
      %v736 = vcombine.high %v732, 0.0
      %738 = vrot.lane.b32.xlu0 %v733, 8
      %v739 = vpop.permute.xlu0 %738
      %742 = vrot.lane.b32.xlu0 %v716, 16
      %v743 = vpop.permute.xlu0 %742
      %746 = vrot.lane.b32.xlu0 %v734, 24
      %v747 = vpop.permute.xlu0 %746
      %750 = vrot.lane.b32.xlu0 %v725, 32
      %v751 = vpop.permute.xlu0 %750
      %754 = vrot.lane.b32.xlu0 %v735, 40
      %v755 = vpop.permute.xlu0 %754
      %758 = vrot.lane.b32.xlu0 %v732, 48
      %v759 = vpop.permute.xlu0 %758
      %762 = vrot.lane.b32.xlu0 %v736, 56
      %v763 = vpop.permute.xlu0 %762
      %v765 = vsel %vm270, %v709, %v739
      %v766 = vsel %vm272, %v765, %v743
      %v767 = vsel %vm274, %v766, %v747
      %v768 = vsel %vm276, %v767, %v751
      %v769 = vsel %vm278, %v768, %v755
      %v770 = vsel %vm280, %v769, %v759
      %v771 = vsel %vm282, %v770, %v763
      %v772 = vpack.c.bf16 %v771, %v771
      %s773 = scalar_lea.vmem %s1, 6
      %v774 = vld [vmem:[%s773] sm:$0x3]
      %v776 = vsel %vm397, %v774, 0
      %v779 = vsel %vm401, %v772, 0
      %781 = vmatprep.subr.bf16.mxu0 0
      %782 = vmatpush1.bf16.msra.mxu0 0
      %783 = vmatprep.subr.bf16.mxu0 0
      %784 = vmatpush1.bf16.msra.mxu0 0
      %785 = vmatprep.subr.bf16.mxu0 0
      %786 = vmatpush1.bf16.msra.mxu0 0
      %787 = vmatprep.subr.bf16.mxu0 0
      %788 = vmatpush1.bf16.msra.mxu0 0
      %789 = vmatprep.subr.bf16.mxu0 0
      %790 = vmatpush1.bf16.msra.mxu0 0
      %791 = vmatprep.subr.bf16.mxu0 0
      %792 = vmatpush1.bf16.msra.mxu0 0
      %793 = vmatprep.subr.bf16.mxu0 0
      %794 = vmatpush1.bf16.msra.mxu0 0
      %795 = vmatprep.subr.bf16.mxu0 0
      %796 = vmatpush1.bf16.msra.mxu0 %v779
      %797 = vmatprep.subr.bf16.mxu0 0
      %798 = vmatpush2.bf16.msra.mxu0 0
      %799 = vmatprep.subr.bf16.mxu0 0
      %800 = vmatpush2.bf16.msra.mxu0 0
      %801 = vmatprep.subr.bf16.mxu0 0
      %802 = vmatpush2.bf16.msra.mxu0 0
      %803 = vmatprep.subr.bf16.mxu0 0
      %804 = vmatpush2.bf16.msra.mxu0 0
      %805 = vmatprep.subr.bf16.mxu0 0
      %806 = vmatpush2.bf16.msra.mxu0 0
      %807 = vmatprep.subr.bf16.mxu0 0
      %808 = vmatpush2.bf16.msra.mxu0 0
      %809 = vmatprep.subr.bf16.mxu0 0
      %810 = vmatpush2.bf16.msra.mxu0 0
      %811 = vmatprep.subr.bf16.mxu0 0
      %812 = vmatpush2.bf16.msra.mxu0 0
      %813 = vmatprep.mubr.bf16.mxu0 0
      %814 = vmatmul.mubr.bf16.gmra.mxu0 %v776
      %v815 = vpop.f32.mrf.mxu0
      %v816 = vadd.f32 0.0, %v815
      %v817 = vpop.f32.mrf.mxu0
      %v818 = vpop.f32.mrf.mxu0
      %v819 = vpop.f32.mrf.mxu0
      %820 = vdwg.mxu0
      %v821 = vadd.f32 %v663, %v816
      %s822 = scalar_lea.vmem %s164, 192
      %v823 = vld [vmem:[%s822] sm:$0xff]
      %v824 = vld [vmem:[%s822 + $0x10] sm:$0xff]
      %v825 = vld [vmem:[%s822 + $0x20] sm:$0xff]
      %v826 = vld [vmem:[%s822 + $0x30] sm:$0xff]
      %v827 = vcombine.low %v823, %v825
      %v828 = vcombine.high %v823, %v825
      %v830 = vunpack.c.l.s4 1983009808
      %v831 = vunpack.c.0.s8 %v830
      %v832 = vlaneseq
      %v833 = vshrl.u32 %v832, 7
      %v834 = vsub.s32 %v831, %v833
      %v835 = vrot.slane %v827, %v834
      %v837 = vunpack.c.l.s4 1983009808
      %v838 = vunpack.c.0.s8 %v837
      %v839 = vlaneseq
      %v840 = vshrl.u32 %v839, 7
      %v841 = vsub.s32 %v838, %v840
      %v842 = vrot.slane %v828, %v841
      %v843 = vcombine.low %v824, %v826
      %v844 = vcombine.high %v824, %v826
      %v846 = vunpack.c.l.s4 1983009808
      %v847 = vunpack.c.0.s8 %v846
      %v848 = vlaneseq
      %v849 = vshrl.u32 %v848, 7
      %v850 = vsub.s32 %v847, %v849
      %v851 = vrot.slane %v843, %v850
      %v853 = vunpack.c.l.s4 1983009808
      %v854 = vunpack.c.0.s8 %v853
      %v855 = vlaneseq
      %v856 = vshrl.u32 %v855, 7
      %v857 = vsub.s32 %v854, %v856
      %v858 = vrot.slane %v844, %v857
      %v859 = vcombine.low %v835, %v851
      %v860 = vcombine.high %v835, %v851
      %v862 = vunpack.c.l.s4 1934713408
      %v863 = vunpack.c.0.s8 %v862
      %v864 = vlaneseq
      %v865 = vshrl.u32 %v864, 7
      %v866 = vsub.s32 %v863, %v865
      %v867 = vrot.slane %v859, %v866
      %v869 = vunpack.c.l.s4 1934713408
      %v870 = vunpack.c.0.s8 %v869
      %v871 = vlaneseq
      %v872 = vshrl.u32 %v871, 7
      %v873 = vsub.s32 %v870, %v872
      %v874 = vrot.slane %v860, %v873
      %v875 = vcombine.low %v842, %v858
      %v876 = vcombine.high %v842, %v858
      %v878 = vunpack.c.l.s4 1934713408
      %v879 = vunpack.c.0.s8 %v878
      %v880 = vlaneseq
      %v881 = vshrl.u32 %v880, 7
      %v882 = vsub.s32 %v879, %v881
      %v883 = vrot.slane %v875, %v882
      %v885 = vunpack.c.l.s4 1934713408
      %v886 = vunpack.c.0.s8 %v885
      %v887 = vlaneseq
      %v888 = vshrl.u32 %v887, 7
      %v889 = vsub.s32 %v886, %v888
      %v890 = vrot.slane %v876, %v889
      %v891 = vcombine.high %v867, 0.0
      %v892 = vcombine.high %v874, 0.0
      %v893 = vcombine.high %v883, 0.0
      %v894 = vcombine.high %v890, 0.0
      %896 = vrot.lane.b32.xlu0 %v891, 8
      %v897 = vpop.permute.xlu0 %896
      %900 = vrot.lane.b32.xlu0 %v874, 16
      %v901 = vpop.permute.xlu0 %900
      %904 = vrot.lane.b32.xlu0 %v892, 24
      %v905 = vpop.permute.xlu0 %904
      %908 = vrot.lane.b32.xlu0 %v883, 32
      %v909 = vpop.permute.xlu0 %908
      %912 = vrot.lane.b32.xlu0 %v893, 40
      %v913 = vpop.permute.xlu0 %912
      %916 = vrot.lane.b32.xlu0 %v890, 48
      %v917 = vpop.permute.xlu0 %916
      %920 = vrot.lane.b32.xlu0 %v894, 56
      %v921 = vpop.permute.xlu0 %920
      %v923 = vsel %vm270, %v867, %v897
      %v924 = vsel %vm272, %v923, %v901
      %v925 = vsel %vm274, %v924, %v905
      %v926 = vsel %vm276, %v925, %v909
      %v927 = vsel %vm278, %v926, %v913
      %v928 = vsel %vm280, %v927, %v917
      %v929 = vsel %vm282, %v928, %v921
      %v930 = vpack.c.bf16 %v929, %v929
      %s931 = scalar_lea.vmem %s1, 8
      %v932 = vld [vmem:[%s931] sm:$0x3]
      %v934 = vsel %vm397, %v932, 0
      %v937 = vsel %vm401, %v930, 0
      %939 = vmatprep.subr.bf16.mxu0 0
      %940 = vmatpush1.bf16.msra.mxu0 0
      %941 = vmatprep.subr.bf16.mxu0 0
      %942 = vmatpush1.bf16.msra.mxu0 0
      %943 = vmatprep.subr.bf16.mxu0 0
      %944 = vmatpush1.bf16.msra.mxu0 0
      %945 = vmatprep.subr.bf16.mxu0 0
      %946 = vmatpush1.bf16.msra.mxu0 0
      %947 = vmatprep.subr.bf16.mxu0 0
      %948 = vmatpush1.bf16.msra.mxu0 0
      %949 = vmatprep.subr.bf16.mxu0 0
      %950 = vmatpush1.bf16.msra.mxu0 0
      %951 = vmatprep.subr.bf16.mxu0 0
      %952 = vmatpush1.bf16.msra.mxu0 0
      %953 = vmatprep.subr.bf16.mxu0 0
      %954 = vmatpush1.bf16.msra.mxu0 %v937
      %955 = vmatprep.subr.bf16.mxu0 0
      %956 = vmatpush2.bf16.msra.mxu0 0
      %957 = vmatprep.subr.bf16.mxu0 0
      %958 = vmatpush2.bf16.msra.mxu0 0
      %959 = vmatprep.subr.bf16.mxu0 0
      %960 = vmatpush2.bf16.msra.mxu0 0
      %961 = vmatprep.subr.bf16.mxu0 0
      %962 = vmatpush2.bf16.msra.mxu0 0
      %963 = vmatprep.subr.bf16.mxu0 0
      %964 = vmatpush2.bf16.msra.mxu0 0
      %965 = vmatprep.subr.bf16.mxu0 0
      %966 = vmatpush2.bf16.msra.mxu0 0
      %967 = vmatprep.subr.bf16.mxu0 0
      %968 = vmatpush2.bf16.msra.mxu0 0
      %969 = vmatprep.subr.bf16.mxu0 0
      %970 = vmatpush2.bf16.msra.mxu0 0
      %971 = vmatprep.mubr.bf16.mxu0 0
      %972 = vmatmul.mubr.bf16.gmra.mxu0 %v934
      %v973 = vpop.f32.mrf.mxu0
      %v974 = vadd.f32 0.0, %v973
      %v975 = vpop.f32.mrf.mxu0
      %v976 = vpop.f32.mrf.mxu0
      %v977 = vpop.f32.mrf.mxu0
      %978 = vdwg.mxu0
      %v979 = vadd.f32 %v821, %v974
      %v980 = vld [vmem:[%s664] sm:$0xff]
      %v981 = vld [vmem:[%s664 + $0x10] sm:$0xff]
      %v982 = vld [vmem:[%s664 + $0x20] sm:$0xff]
      %v983 = vld [vmem:[%s664 + $0x30] sm:$0xff]
      %988 = vrot.lane.b32.xlu0 %v980, 127
      %v989 = vpop.permute.xlu0 %988
      %990 = vrot.lane.b32.xlu0 %v981, 127
      %v991 = vpop.permute.xlu0 %990
      %992 = vrot.lane.b32.xlu0 %v982, 127
      %v993 = vpop.permute.xlu0 %992
      %994 = vrot.lane.b32.xlu0 %v983, 127
      %v995 = vpop.permute.xlu0 %994
      %v1000 = vcombine.low %v989, %v993
      %v1001 = vcombine.high %v989, %v993
      %v1003 = vunpack.c.l.s4 1983009808
      %v1004 = vunpack.c.0.s8 %v1003
      %v1005 = vlaneseq
      %v1006 = vshrl.u32 %v1005, 7
      %v1007 = vsub.s32 %v1004, %v1006
      %v1008 = vrot.slane %v1000, %v1007
      %v1010 = vunpack.c.l.s4 1983009808
      %v1011 = vunpack.c.0.s8 %v1010
      %v1012 = vlaneseq
      %v1013 = vshrl.u32 %v1012, 7
      %v1014 = vsub.s32 %v1011, %v1013
      %v1015 = vrot.slane %v1001, %v1014
      %v1016 = vcombine.low %v991, %v995
      %v1017 = vcombine.high %v991, %v995
      %v1019 = vunpack.c.l.s4 1983009808
      %v1020 = vunpack.c.0.s8 %v1019
      %v1021 = vlaneseq
      %v1022 = vshrl.u32 %v1021, 7
      %v1023 = vsub.s32 %v1020, %v1022
      %v1024 = vrot.slane %v1016, %v1023
      %v1026 = vunpack.c.l.s4 1983009808
      %v1027 = vunpack.c.0.s8 %v1026
      %v1028 = vlaneseq
      %v1029 = vshrl.u32 %v1028, 7
      %v1030 = vsub.s32 %v1027, %v1029
      %v1031 = vrot.slane %v1017, %v1030
      %v1032 = vcombine.low %v1008, %v1024
      %v1033 = vcombine.high %v1008, %v1024
      %v1035 = vunpack.c.l.s4 1934713408
      %v1036 = vunpack.c.0.s8 %v1035
      %v1037 = vlaneseq
      %v1038 = vshrl.u32 %v1037, 7
      %v1039 = vsub.s32 %v1036, %v1038
      %v1040 = vrot.slane %v1032, %v1039
      %v1042 = vunpack.c.l.s4 1934713408
      %v1043 = vunpack.c.0.s8 %v1042
      %v1044 = vlaneseq
      %v1045 = vshrl.u32 %v1044, 7
      %v1046 = vsub.s32 %v1043, %v1045
      %v1047 = vrot.slane %v1033, %v1046
      %v1048 = vcombine.low %v1015, %v1031
      %v1049 = vcombine.high %v1015, %v1031
      %v1051 = vunpack.c.l.s4 1934713408
      %v1052 = vunpack.c.0.s8 %v1051
      %v1053 = vlaneseq
      %v1054 = vshrl.u32 %v1053, 7
      %v1055 = vsub.s32 %v1052, %v1054
      %v1056 = vrot.slane %v1048, %v1055
      %v1058 = vunpack.c.l.s4 1934713408
      %v1059 = vunpack.c.0.s8 %v1058
      %v1060 = vlaneseq
      %v1061 = vshrl.u32 %v1060, 7
      %v1062 = vsub.s32 %v1059, %v1061
      %v1063 = vrot.slane %v1049, %v1062
      %v1064 = vcombine.high %v1040, 0.0
      %v1065 = vcombine.high %v1047, 0.0
      %v1066 = vcombine.high %v1056, 0.0
      %v1067 = vcombine.high %v1063, 0.0
      %1069 = vrot.lane.b32.xlu0 %v1064, 8
      %v1070 = vpop.permute.xlu0 %1069
      %1073 = vrot.lane.b32.xlu0 %v1047, 16
      %v1074 = vpop.permute.xlu0 %1073
      %1077 = vrot.lane.b32.xlu0 %v1065, 24
      %v1078 = vpop.permute.xlu0 %1077
      %1081 = vrot.lane.b32.xlu0 %v1056, 32
      %v1082 = vpop.permute.xlu0 %1081
      %1085 = vrot.lane.b32.xlu0 %v1066, 40
      %v1086 = vpop.permute.xlu0 %1085
      %1089 = vrot.lane.b32.xlu0 %v1063, 48
      %v1090 = vpop.permute.xlu0 %1089
      %1093 = vrot.lane.b32.xlu0 %v1067, 56
      %v1094 = vpop.permute.xlu0 %1093
      %v1096 = vsel %vm270, %v1040, %v1070
      %v1097 = vsel %vm272, %v1096, %v1074
      %v1098 = vsel %vm274, %v1097, %v1078
      %v1099 = vsel %vm276, %v1098, %v1082
      %v1100 = vsel %vm278, %v1099, %v1086
      %v1101 = vsel %vm280, %v1100, %v1090
      %v1102 = vsel %vm282, %v1101, %v1094
      %v1103 = vpack.c.bf16 %v1102, %v1102
      %s1104 = scalar_lea.vmem %s1, 10
      %v1105 = vld [vmem:[%s1104] sm:$0x3]
      %v1107 = vsel %vm397, %v1105, 0
      %v1110 = vsel %vm401, %v1103, 0
      %1112 = vmatprep.subr.bf16.mxu0 0
      %1113 = vmatpush1.bf16.msra.mxu0 0
      %1114 = vmatprep.subr.bf16.mxu0 0
      %1115 = vmatpush1.bf16.msra.mxu0 0
      %1116 = vmatprep.subr.bf16.mxu0 0
      %1117 = vmatpush1.bf16.msra.mxu0 0
      %1118 = vmatprep.subr.bf16.mxu0 0
      %1119 = vmatpush1.bf16.msra.mxu0 0
      %1120 = vmatprep.subr.bf16.mxu0 0
      %1121 = vmatpush1.bf16.msra.mxu0 0
      %1122 = vmatprep.subr.bf16.mxu0 0
      %1123 = vmatpush1.bf16.msra.mxu0 0
      %1124 = vmatprep.subr.bf16.mxu0 0
      %1125 = vmatpush1.bf16.msra.mxu0 0
      %1126 = vmatprep.subr.bf16.mxu0 0
      %1127 = vmatpush1.bf16.msra.mxu0 %v1110
      %1128 = vmatprep.subr.bf16.mxu0 0
      %1129 = vmatpush2.bf16.msra.mxu0 0
      %1130 = vmatprep.subr.bf16.mxu0 0
      %1131 = vmatpush2.bf16.msra.mxu0 0
      %1132 = vmatprep.subr.bf16.mxu0 0
      %1133 = vmatpush2.bf16.msra.mxu0 0
      %1134 = vmatprep.subr.bf16.mxu0 0
      %1135 = vmatpush2.bf16.msra.mxu0 0
      %1136 = vmatprep.subr.bf16.mxu0 0
      %1137 = vmatpush2.bf16.msra.mxu0 0
      %1138 = vmatprep.subr.bf16.mxu0 0
      %1139 = vmatpush2.bf16.msra.mxu0 0
      %1140 = vmatprep.subr.bf16.mxu0 0
      %1141 = vmatpush2.bf16.msra.mxu0 0
      %1142 = vmatprep.subr.bf16.mxu0 0
      %1143 = vmatpush2.bf16.msra.mxu0 0
      %1144 = vmatprep.mubr.bf16.mxu0 0
      %1145 = vmatmul.mubr.bf16.gmra.mxu0 %v1107
      %v1146 = vpop.f32.mrf.mxu0
      %v1147 = vadd.f32 0.0, %v1146
      %v1148 = vpop.f32.mrf.mxu0
      %v1149 = vpop.f32.mrf.mxu0
      %v1150 = vpop.f32.mrf.mxu0
      %1151 = vdwg.mxu0
      %v1152 = vadd.f32 %v979, %v1147
      %v1153 = vld [vmem:[%s164 + $0x1] sm:$0xff]
      %v1154 = vld [vmem:[%s164 + $0x11] sm:$0xff]
      %v1155 = vld [vmem:[%s164 + $0x21] sm:$0xff]
      %v1156 = vld [vmem:[%s164 + $0x31] sm:$0xff]
      %v1157 = vcombine.low %v1153, %v1155
      %v1158 = vcombine.high %v1153, %v1155
      %v1160 = vunpack.c.l.s4 1983009808
      %v1161 = vunpack.c.0.s8 %v1160
      %v1162 = vlaneseq
      %v1163 = vshrl.u32 %v1162, 7
      %v1164 = vsub.s32 %v1161, %v1163
      %v1165 = vrot.slane %v1157, %v1164
      %v1167 = vunpack.c.l.s4 1983009808
      %v1168 = vunpack.c.0.s8 %v1167
      %v1169 = vlaneseq
      %v1170 = vshrl.u32 %v1169, 7
      %v1171 = vsub.s32 %v1168, %v1170
      %v1172 = vrot.slane %v1158, %v1171
      %v1173 = vcombine.low %v1154, %v1156
      %v1174 = vcombine.high %v1154, %v1156
      %v1176 = vunpack.c.l.s4 1983009808
      %v1177 = vunpack.c.0.s8 %v1176
      %v1178 = vlaneseq
      %v1179 = vshrl.u32 %v1178, 7
      %v1180 = vsub.s32 %v1177, %v1179
      %v1181 = vrot.slane %v1173, %v1180
      %v1183 = vunpack.c.l.s4 1983009808
      %v1184 = vunpack.c.0.s8 %v1183
      %v1185 = vlaneseq
      %v1186 = vshrl.u32 %v1185, 7
      %v1187 = vsub.s32 %v1184, %v1186
      %v1188 = vrot.slane %v1174, %v1187
      %v1189 = vcombine.low %v1165, %v1181
      %v1190 = vcombine.high %v1165, %v1181
      %v1192 = vunpack.c.l.s4 1934713408
      %v1193 = vunpack.c.0.s8 %v1192
      %v1194 = vlaneseq
      %v1195 = vshrl.u32 %v1194, 7
      %v1196 = vsub.s32 %v1193, %v1195
      %v1197 = vrot.slane %v1189, %v1196
      %v1199 = vunpack.c.l.s4 1934713408
      %v1200 = vunpack.c.0.s8 %v1199
      %v1201 = vlaneseq
      %v1202 = vshrl.u32 %v1201, 7
      %v1203 = vsub.s32 %v1200, %v1202
      %v1204 = vrot.slane %v1190, %v1203
      %v1205 = vcombine.low %v1172, %v1188
      %v1206 = vcombine.high %v1172, %v1188
      %v1208 = vunpack.c.l.s4 1934713408
      %v1209 = vunpack.c.0.s8 %v1208
      %v1210 = vlaneseq
      %v1211 = vshrl.u32 %v1210, 7
      %v1212 = vsub.s32 %v1209, %v1211
      %v1213 = vrot.slane %v1205, %v1212
      %v1215 = vunpack.c.l.s4 1934713408
      %v1216 = vunpack.c.0.s8 %v1215
      %v1217 = vlaneseq
      %v1218 = vshrl.u32 %v1217, 7
      %v1219 = vsub.s32 %v1216, %v1218
      %v1220 = vrot.slane %v1206, %v1219
      %v1221 = vcombine.high %v1197, 0.0
      %v1222 = vcombine.high %v1204, 0.0
      %v1223 = vcombine.high %v1213, 0.0
      %v1224 = vcombine.high %v1220, 0.0
      %1226 = vrot.lane.b32.xlu0 %v1221, 8
      %v1227 = vpop.permute.xlu0 %1226
      %1230 = vrot.lane.b32.xlu0 %v1204, 16
      %v1231 = vpop.permute.xlu0 %1230
      %1234 = vrot.lane.b32.xlu0 %v1222, 24
      %v1235 = vpop.permute.xlu0 %1234
      %1238 = vrot.lane.b32.xlu0 %v1213, 32
      %v1239 = vpop.permute.xlu0 %1238
      %1242 = vrot.lane.b32.xlu0 %v1223, 40
      %v1243 = vpop.permute.xlu0 %1242
      %1246 = vrot.lane.b32.xlu0 %v1220, 48
      %v1247 = vpop.permute.xlu0 %1246
      %1250 = vrot.lane.b32.xlu0 %v1224, 56
      %v1251 = vpop.permute.xlu0 %1250
      %v1253 = vsel %vm270, %v1197, %v1227
      %v1254 = vsel %vm272, %v1253, %v1231
      %v1255 = vsel %vm274, %v1254, %v1235
      %v1256 = vsel %vm276, %v1255, %v1239
      %v1257 = vsel %vm278, %v1256, %v1243
      %v1258 = vsel %vm280, %v1257, %v1247
      %v1259 = vsel %vm282, %v1258, %v1251
      %v1260 = vpack.c.bf16 %v1259, %v1259
      %s1261 = scalar_lea.vmem %s1, 12
      %v1262 = vld [vmem:[%s1261] sm:$0x3]
      %v1264 = vsel %vm397, %v1262, 0
      %v1267 = vsel %vm401, %v1260, 0
      %1269 = vmatprep.subr.bf16.mxu0 0
      %1270 = vmatpush1.bf16.msra.mxu0 0
      %1271 = vmatprep.subr.bf16.mxu0 0
      %1272 = vmatpush1.bf16.msra.mxu0 0
      %1273 = vmatprep.subr.bf16.mxu0 0
      %1274 = vmatpush1.bf16.msra.mxu0 0
      %1275 = vmatprep.subr.bf16.mxu0 0
      %1276 = vmatpush1.bf16.msra.mxu0 0
      %1277 = vmatprep.subr.bf16.mxu0 0
      %1278 = vmatpush1.bf16.msra.mxu0 0
      %1279 = vmatprep.subr.bf16.mxu0 0
      %1280 = vmatpush1.bf16.msra.mxu0 0
      %1281 = vmatprep.subr.bf16.mxu0 0
      %1282 = vmatpush1.bf16.msra.mxu0 0
      %1283 = vmatprep.subr.bf16.mxu0 0
      %1284 = vmatpush1.bf16.msra.mxu0 %v1267
      %1285 = vmatprep.subr.bf16.mxu0 0
      %1286 = vmatpush2.bf16.msra.mxu0 0
      %1287 = vmatprep.subr.bf16.mxu0 0
      %1288 = vmatpush2.bf16.msra.mxu0 0
      %1289 = vmatprep.subr.bf16.mxu0 0
      %1290 = vmatpush2.bf16.msra.mxu0 0
      %1291 = vmatprep.subr.bf16.mxu0 0
      %1292 = vmatpush2.bf16.msra.mxu0 0
      %1293 = vmatprep.subr.bf16.mxu0 0
      %1294 = vmatpush2.bf16.msra.mxu0 0
      %1295 = vmatprep.subr.bf16.mxu0 0
      %1296 = vmatpush2.bf16.msra.mxu0 0
      %1297 = vmatprep.subr.bf16.mxu0 0
      %1298 = vmatpush2.bf16.msra.mxu0 0
      %1299 = vmatprep.subr.bf16.mxu0 0
      %1300 = vmatpush2.bf16.msra.mxu0 0
      %1301 = vmatprep.mubr.bf16.mxu0 0
      %1302 = vmatmul.mubr.bf16.gmra.mxu0 %v1264
      %v1303 = vpop.f32.mrf.mxu0
      %v1304 = vadd.f32 0.0, %v1303
      %v1305 = vpop.f32.mrf.mxu0
      %v1306 = vpop.f32.mrf.mxu0
      %v1307 = vpop.f32.mrf.mxu0
      %1308 = vdwg.mxu0
      %v1309 = vadd.f32 %v1152, %v1304
      %v1310 = vld [vmem:[%s286 + $0x1] sm:$0xff]
      %v1311 = vld [vmem:[%s286 + $0x11] sm:$0xff]
      %v1312 = vld [vmem:[%s286 + $0x21] sm:$0xff]
      %v1313 = vld [vmem:[%s286 + $0x31] sm:$0xff]
      %v1314 = vcombine.low %v1310, %v1312
      %v1315 = vcombine.high %v1310, %v1312
      %v1317 = vunpack.c.l.s4 1983009808
      %v1318 = vunpack.c.0.s8 %v1317
      %v1319 = vlaneseq
      %v1320 = vshrl.u32 %v1319, 7
      %v1321 = vsub.s32 %v1318, %v1320
      %v1322 = vrot.slane %v1314, %v1321
      %v1324 = vunpack.c.l.s4 1983009808
      %v1325 = vunpack.c.0.s8 %v1324
      %v1326 = vlaneseq
      %v1327 = vshrl.u32 %v1326, 7
      %v1328 = vsub.s32 %v1325, %v1327
      %v1329 = vrot.slane %v1315, %v1328
      %v1330 = vcombine.low %v1311, %v1313
      %v1331 = vcombine.high %v1311, %v1313
      %v1333 = vunpack.c.l.s4 1983009808
      %v1334 = vunpack.c.0.s8 %v1333
      %v1335 = vlaneseq
      %v1336 = vshrl.u32 %v1335, 7
      %v1337 = vsub.s32 %v1334, %v1336
      %v1338 = vrot.slane %v1330, %v1337
      %v1340 = vunpack.c.l.s4 1983009808
      %v1341 = vunpack.c.0.s8 %v1340
      %v1342 = vlaneseq
      %v1343 = vshrl.u32 %v1342, 7
      %v1344 = vsub.s32 %v1341, %v1343
      %v1345 = vrot.slane %v1331, %v1344
      %v1346 = vcombine.low %v1322, %v1338
      %v1347 = vcombine.high %v1322, %v1338
      %v1349 = vunpack.c.l.s4 1934713408
      %v1350 = vunpack.c.0.s8 %v1349
      %v1351 = vlaneseq
      %v1352 = vshrl.u32 %v1351, 7
      %v1353 = vsub.s32 %v1350, %v1352
      %v1354 = vrot.slane %v1346, %v1353
      %v1356 = vunpack.c.l.s4 1934713408
      %v1357 = vunpack.c.0.s8 %v1356
      %v1358 = vlaneseq
      %v1359 = vshrl.u32 %v1358, 7
      %v1360 = vsub.s32 %v1357, %v1359
      %v1361 = vrot.slane %v1347, %v1360
      %v1362 = vcombine.low %v1329, %v1345
      %v1363 = vcombine.high %v1329, %v1345
      %v1365 = vunpack.c.l.s4 1934713408
      %v1366 = vunpack.c.0.s8 %v1365
      %v1367 = vlaneseq
      %v1368 = vshrl.u32 %v1367, 7
      %v1369 = vsub.s32 %v1366, %v1368
      %v1370 = vrot.slane %v1362, %v1369
      %v1372 = vunpack.c.l.s4 1934713408
      %v1373 = vunpack.c.0.s8 %v1372
      %v1374 = vlaneseq
      %v1375 = vshrl.u32 %v1374, 7
      %v1376 = vsub.s32 %v1373, %v1375
      %v1377 = vrot.slane %v1363, %v1376
      %v1378 = vcombine.high %v1354, 0.0
      %v1379 = vcombine.high %v1361, 0.0
      %v1380 = vcombine.high %v1370, 0.0
      %v1381 = vcombine.high %v1377, 0.0
      %1383 = vrot.lane.b32.xlu0 %v1378, 8
      %v1384 = vpop.permute.xlu0 %1383
      %1387 = vrot.lane.b32.xlu0 %v1361, 16
      %v1388 = vpop.permute.xlu0 %1387
      %1391 = vrot.lane.b32.xlu0 %v1379, 24
      %v1392 = vpop.permute.xlu0 %1391
      %1395 = vrot.lane.b32.xlu0 %v1370, 32
      %v1396 = vpop.permute.xlu0 %1395
      %1399 = vrot.lane.b32.xlu0 %v1380, 40
      %v1400 = vpop.permute.xlu0 %1399
      %1403 = vrot.lane.b32.xlu0 %v1377, 48
      %v1404 = vpop.permute.xlu0 %1403
      %1407 = vrot.lane.b32.xlu0 %v1381, 56
      %v1408 = vpop.permute.xlu0 %1407
      %v1410 = vsel %vm270, %v1354, %v1384
      %v1411 = vsel %vm272, %v1410, %v1388
      %v1412 = vsel %vm274, %v1411, %v1392
      %v1413 = vsel %vm276, %v1412, %v1396
      %v1414 = vsel %vm278, %v1413, %v1400
      %v1415 = vsel %vm280, %v1414, %v1404
      %v1416 = vsel %vm282, %v1415, %v1408
      %v1417 = vpack.c.bf16 %v1416, %v1416
      %s1418 = scalar_lea.vmem %s1, 14
      %v1419 = vld [vmem:[%s1418] sm:$0x3]
      %v1421 = vsel %vm397, %v1419, 0
      %v1424 = vsel %vm401, %v1417, 0
      %1426 = vmatprep.subr.bf16.mxu0 0
      %1427 = vmatpush1.bf16.msra.mxu0 0
      %1428 = vmatprep.subr.bf16.mxu0 0
      %1429 = vmatpush1.bf16.msra.mxu0 0
      %1430 = vmatprep.subr.bf16.mxu0 0
      %1431 = vmatpush1.bf16.msra.mxu0 0
      %1432 = vmatprep.subr.bf16.mxu0 0
      %1433 = vmatpush1.bf16.msra.mxu0 0
      %1434 = vmatprep.subr.bf16.mxu0 0
      %1435 = vmatpush1.bf16.msra.mxu0 0
      %1436 = vmatprep.subr.bf16.mxu0 0
      %1437 = vmatpush1.bf16.msra.mxu0 0
      %1438 = vmatprep.subr.bf16.mxu0 0
      %1439 = vmatpush1.bf16.msra.mxu0 0
      %1440 = vmatprep.subr.bf16.mxu0 0
      %1441 = vmatpush1.bf16.msra.mxu0 %v1424
      %1442 = vmatprep.subr.bf16.mxu0 0
      %1443 = vmatpush2.bf16.msra.mxu0 0
      %1444 = vmatprep.subr.bf16.mxu0 0
      %1445 = vmatpush2.bf16.msra.mxu0 0
      %1446 = vmatprep.subr.bf16.mxu0 0
      %1447 = vmatpush2.bf16.msra.mxu0 0
      %1448 = vmatprep.subr.bf16.mxu0 0
      %1449 = vmatpush2.bf16.msra.mxu0 0
      %1450 = vmatprep.subr.bf16.mxu0 0
      %1451 = vmatpush2.bf16.msra.mxu0 0
      %1452 = vmatprep.subr.bf16.mxu0 0
      %1453 = vmatpush2.bf16.msra.mxu0 0
      %1454 = vmatprep.subr.bf16.mxu0 0
      %1455 = vmatpush2.bf16.msra.mxu0 0
      %1456 = vmatprep.subr.bf16.mxu0 0
      %1457 = vmatpush2.bf16.msra.mxu0 0
      %1458 = vmatprep.mubr.bf16.mxu0 0
      %1459 = vmatmul.mubr.bf16.gmra.mxu0 %v1421
      %v1460 = vpop.f32.mrf.mxu0
      %v1461 = vadd.f32 0.0, %v1460
      %v1462 = vpop.f32.mrf.mxu0
      %v1463 = vpop.f32.mrf.mxu0
      %v1464 = vpop.f32.mrf.mxu0
      %1465 = vdwg.mxu0
      %v1466 = vadd.f32 %v1309, %v1461
      %v1467 = vld [vmem:[%s164 + $0x1] sm:$0xff]
      %v1468 = vld [vmem:[%s164 + $0x11] sm:$0xff]
      %v1469 = vld [vmem:[%s164 + $0x21] sm:$0xff]
      %v1470 = vld [vmem:[%s164 + $0x31] sm:$0xff]
      %1475 = vrot.lane.b32.xlu0 %v1467, 127
      %v1476 = vpop.permute.xlu0 %1475
      %1477 = vrot.lane.b32.xlu0 %v1468, 127
      %v1478 = vpop.permute.xlu0 %1477
      %1479 = vrot.lane.b32.xlu0 %v1469, 127
      %v1480 = vpop.permute.xlu0 %1479
      %1481 = vrot.lane.b32.xlu0 %v1470, 127
      %v1482 = vpop.permute.xlu0 %1481
      %v1487 = vcombine.low %v1476, %v1480
      %v1488 = vcombine.high %v1476, %v1480
      %v1490 = vunpack.c.l.s4 1983009808
      %v1491 = vunpack.c.0.s8 %v1490
      %v1492 = vlaneseq
      %v1493 = vshrl.u32 %v1492, 7
      %v1494 = vsub.s32 %v1491, %v1493
      %v1495 = vrot.slane %v1487, %v1494
      %v1497 = vunpack.c.l.s4 1983009808
      %v1498 = vunpack.c.0.s8 %v1497
      %v1499 = vlaneseq
      %v1500 = vshrl.u32 %v1499, 7
      %v1501 = vsub.s32 %v1498, %v1500
      %v1502 = vrot.slane %v1488, %v1501
      %v1503 = vcombine.low %v1478, %v1482
      %v1504 = vcombine.high %v1478, %v1482
      %v1506 = vunpack.c.l.s4 1983009808
      %v1507 = vunpack.c.0.s8 %v1506
      %v1508 = vlaneseq
      %v1509 = vshrl.u32 %v1508, 7
      %v1510 = vsub.s32 %v1507, %v1509
      %v1511 = vrot.slane %v1503, %v1510
      %v1513 = vunpack.c.l.s4 1983009808
      %v1514 = vunpack.c.0.s8 %v1513
      %v1515 = vlaneseq
      %v1516 = vshrl.u32 %v1515, 7
      %v1517 = vsub.s32 %v1514, %v1516
      %v1518 = vrot.slane %v1504, %v1517
      %v1519 = vcombine.low %v1495, %v1511
      %v1520 = vcombine.high %v1495, %v1511
      %v1522 = vunpack.c.l.s4 1934713408
      %v1523 = vunpack.c.0.s8 %v1522
      %v1524 = vlaneseq
      %v1525 = vshrl.u32 %v1524, 7
      %v1526 = vsub.s32 %v1523, %v1525
      %v1527 = vrot.slane %v1519, %v1526
      %v1529 = vunpack.c.l.s4 1934713408
      %v1530 = vunpack.c.0.s8 %v1529
      %v1531 = vlaneseq
      %v1532 = vshrl.u32 %v1531, 7
      %v1533 = vsub.s32 %v1530, %v1532
      %v1534 = vrot.slane %v1520, %v1533
      %v1535 = vcombine.low %v1502, %v1518
      %v1536 = vcombine.high %v1502, %v1518
      %v1538 = vunpack.c.l.s4 1934713408
      %v1539 = vunpack.c.0.s8 %v1538
      %v1540 = vlaneseq
      %v1541 = vshrl.u32 %v1540, 7
      %v1542 = vsub.s32 %v1539, %v1541
      %v1543 = vrot.slane %v1535, %v1542
      %v1545 = vunpack.c.l.s4 1934713408
      %v1546 = vunpack.c.0.s8 %v1545
      %v1547 = vlaneseq
      %v1548 = vshrl.u32 %v1547, 7
      %v1549 = vsub.s32 %v1546, %v1548
      %v1550 = vrot.slane %v1536, %v1549
      %v1551 = vcombine.high %v1527, 0.0
      %v1552 = vcombine.high %v1534, 0.0
      %v1553 = vcombine.high %v1543, 0.0
      %v1554 = vcombine.high %v1550, 0.0
      %1556 = vrot.lane.b32.xlu0 %v1551, 8
      %v1557 = vpop.permute.xlu0 %1556
      %1560 = vrot.lane.b32.xlu0 %v1534, 16
      %v1561 = vpop.permute.xlu0 %1560
      %1564 = vrot.lane.b32.xlu0 %v1552, 24
      %v1565 = vpop.permute.xlu0 %1564
      %1568 = vrot.lane.b32.xlu0 %v1543, 32
      %v1569 = vpop.permute.xlu0 %1568
      %1572 = vrot.lane.b32.xlu0 %v1553, 40
      %v1573 = vpop.permute.xlu0 %1572
      %1576 = vrot.lane.b32.xlu0 %v1550, 48
      %v1577 = vpop.permute.xlu0 %1576
      %1580 = vrot.lane.b32.xlu0 %v1554, 56
      %v1581 = vpop.permute.xlu0 %1580
      %v1583 = vsel %vm270, %v1527, %v1557
      %v1584 = vsel %vm272, %v1583, %v1561
      %v1585 = vsel %vm274, %v1584, %v1565
      %v1586 = vsel %vm276, %v1585, %v1569
      %v1587 = vsel %vm278, %v1586, %v1573
      %v1588 = vsel %vm280, %v1587, %v1577
      %v1589 = vsel %vm282, %v1588, %v1581
      %v1590 = vpack.c.bf16 %v1589, %v1589
      %s1591 = scalar_lea.vmem %s1, 16
      %v1592 = vld [vmem:[%s1591] sm:$0x3]
      %v1594 = vsel %vm397, %v1592, 0
      %v1597 = vsel %vm401, %v1590, 0
      %1599 = vmatprep.subr.bf16.mxu0 0
      %1600 = vmatpush1.bf16.msra.mxu0 0
      %1601 = vmatprep.subr.bf16.mxu0 0
      %1602 = vmatpush1.bf16.msra.mxu0 0
      %1603 = vmatprep.subr.bf16.mxu0 0
      %1604 = vmatpush1.bf16.msra.mxu0 0
      %1605 = vmatprep.subr.bf16.mxu0 0
      %1606 = vmatpush1.bf16.msra.mxu0 0
      %1607 = vmatprep.subr.bf16.mxu0 0
      %1608 = vmatpush1.bf16.msra.mxu0 0
      %1609 = vmatprep.subr.bf16.mxu0 0
      %1610 = vmatpush1.bf16.msra.mxu0 0
      %1611 = vmatprep.subr.bf16.mxu0 0
      %1612 = vmatpush1.bf16.msra.mxu0 0
      %1613 = vmatprep.subr.bf16.mxu0 0
      %1614 = vmatpush1.bf16.msra.mxu0 %v1597
      %1615 = vmatprep.subr.bf16.mxu0 0
      %1616 = vmatpush2.bf16.msra.mxu0 0
      %1617 = vmatprep.subr.bf16.mxu0 0
      %1618 = vmatpush2.bf16.msra.mxu0 0
      %1619 = vmatprep.subr.bf16.mxu0 0
      %1620 = vmatpush2.bf16.msra.mxu0 0
      %1621 = vmatprep.subr.bf16.mxu0 0
      %1622 = vmatpush2.bf16.msra.mxu0 0
      %1623 = vmatprep.subr.bf16.mxu0 0
      %1624 = vmatpush2.bf16.msra.mxu0 0
      %1625 = vmatprep.subr.bf16.mxu0 0
      %1626 = vmatpush2.bf16.msra.mxu0 0
      %1627 = vmatprep.subr.bf16.mxu0 0
      %1628 = vmatpush2.bf16.msra.mxu0 0
      %1629 = vmatprep.subr.bf16.mxu0 0
      %1630 = vmatpush2.bf16.msra.mxu0 0
      %1631 = vmatprep.mubr.bf16.mxu0 0
      %1632 = vmatmul.mubr.bf16.gmra.mxu0 %v1594
      %v1633 = vpop.f32.mrf.mxu0
      %v1634 = vadd.f32 0.0, %v1633
      %v1635 = vpop.f32.mrf.mxu0
      %v1636 = vpop.f32.mrf.mxu0
      %v1637 = vpop.f32.mrf.mxu0
      %1638 = vdwg.mxu0
      %v1639 = vadd.f32 %v1466, %v1634
      %v1640 = vld [vmem:[%s2] sm:$0xf]
      %1642 = vset.pattern.permute.xlu0 0
      %1643 = vperm.xlu0 %1642, %v1640
      %v1644 = vpop.permute.xlu0 %1643
      %v1646 = vadd.f32 %v1639, %v1644
      %vm1647 = vcmask 519168
      %1648 = vst.msk [vmem:[%s168] sm:$0xf] %vm1647, %v1646
      %p1649 = scmp.lt.s32.totalorder %s14, 1
      %s1650 = scalar_select %p1649, %s14, 1
      %s1651 = smul.addr %s1650, 4
      %s1652 = scalar_lea.vmem %s3, %s1651
      // Predicated region
      $region33: #{_lambda_.5} parent=31 // pred_check
        %p1653 = pneg %p100
      $region34: #{_lambda_.5} parent=31 // pred_check_branch
        %1655 = sbr.rel (%p1653) target = $region36
      $region35: #{_lambda_.5} parent=31 // pred_region
        _
      $region36: #{_lambda_.5} parent=31 // pred_fallthru
        _
    $region32: #{_lambda_.5} parent=5 // pred_fallthru
      _
    %p1656 = scmp.le.s32.totalorder 2, %s9
    // Predicated region
    $region37: #{_lambda_.5} parent=5 // pred_check
      %p1657 = pneg %p1656
    $region38: #{_lambda_.5} parent=5 // pred_check_branch
      %1659 = sbr.rel (%p1657) target = $region40
    $region39: #{_lambda_.5} parent=5 // pred_region
      %s1660 = ssub.s32 %s9, 2
      // Predicated region
      $region41: #{_lambda_.5} parent=39 // pred_check
        %p1661 = pneg %p106
      $region42: #{_lambda_.5} parent=39 // pred_check_branch
        %1663 = sbr.rel (%p1661) target = $region44
      $region43: #{_lambda_.5} parent=39 // pred_region
        %p1664 = scmp.lt.s32.totalorder %s15, 1
        %s1665 = scalar_select %p1664, %s15, 1
        %s1666 = smul.addr %s1665, 4
        %s1667 = scalar_lea.vmem %s3, %s1666
      $region44: #{_lambda_.5} parent=39 // pred_fallthru
        _
    $region40: #{_lambda_.5} parent=5 // pred_fallthru
      _
  $region6: #{_lambda_.5} parent=0 // loop_footer
    %s13 = sadd.s32 1, %s9
  $region7: #{_lambda_.5} parent=0 // loop_footer_branch
    %8 = sbr.rel target = $region3
  $region8: #{_lambda_.5} parent=0 // loop_exit
    _

// kernel: _lambda_.3
$region0: #{_lambda_.3}
  #allocation0 [shape = 'u32[]', space=smem, size = 0x4, offset = 0x4, fixed_abs, tag = 'smem constant byte address 0x4 - core index']
  #allocation1 [shape = 'u32[144,128]{1,0:T(1,128)}', space=vmem, size = 0x12000, scoped, tag = 'internal scratch']
  #allocation2 [shape = 'f32[4,18,18]{2,1,0:T(8,128)}', space=vmem, size = 0xc000, scoped, tag = 'scratch operand']
  %s0 = inlined_call_operand.vmem [shape: f32[2,4,18,18], index: 0, kind: input, shape index: {}]
  %s1 = inlined_call_operand.vmem [shape: bf16[9,4,4], index: 1, kind: input, shape index: {}]
  %s2 = inlined_call_operand.vmem [shape: f32[4,1], index: 2, kind: input, shape index: {}]
  %s3 = inlined_call_operand.vmem [shape: bf16[9,4,4], index: 3, kind: input, shape index: {}]
  %s4 = inlined_call_operand.vmem [shape: f32[4,1], index: 4, kind: input, shape index: {}]
  %s5 = inlined_call_operand.vmem [shape: f32[2,4,256], index: 5, kind: output, shape index: {}]
  %s6 = sld [smem:[#allocation0]]
  $region53: #{_lambda_.3} parent=0
    _
  %s8 = ssub.s32 1, %s6
  %s9 = scalar_select 0, %s8, %s6
  loop: start=0, step=1, limit=4
  $region2: #{_lambda_.3} parent=0 // loop_pre_header
    _
  $region3: #{_lambda_.3} parent=0 // loop_header
    %s11 = sphi 0, %s15
    %p12 = scmp.ge.s32.totalorder %s11, 4
    %s21 = sphi 0, %s23
    %s24 = sphi 0, %s21
    %s25 = sphi 0, %s24
    %s41 = sphi 0, %s25
    %s45 = sphi 0, %s45
    %s47 = sphi 0, %s45
    %s48 = sphi 0, %s47
    %s62 = sphi 0, %s48
    %s66 = sphi 0, %s66
    %s68 = sphi 0, %s66
    %s69 = sphi 0, %s68
    %s83 = sphi 0, %s69
    %s87 = sphi 0, %s87
    %s89 = sphi 0, %s87
    %s90 = sphi 0, %s89
    %s104 = sphi 0, %s90
    %s108 = sphi 0, %s108
    %s110 = sphi 0, %s108
    %s111 = sphi 0, %s110
    %s125 = sphi 0, %s111
    %s131 = sphi 0, %s133
    %s134 = sphi 0, %s131
    %s135 = sphi 0, %s134
    %s151 = sphi 0, %s135
  $region4: #{_lambda_.3} parent=0 // loop_header_branch
    %14 = sbr.rel (%p12) target = $region8
  $region5: #{_lambda_.3} parent=0 // loop_body
    %s16 = ssub.s32 %s11, 1
    %s17 = ssub.s32 %s11, 2
    %s18 = sadd.s32 %s11, 1
    %s19 = ssub.s32 %s11, %s18
    %p20 = scmp.eq.s32.totalorder %s19, 0
    %s22 = sadd.s32 %s21, 1
    %s23 = scalar_select %p20, %s21, %s22
    %p26 = pneg %p20
    %p27 = scmp.eq.s32.totalorder %s11, 1
    %p28 = por %p26, %p27
    %p29 = scmp.ne.s32.totalorder %s21, %s24
    %p30 = scmp.eq.s32.totalorder %s11, 0
    %p31 = por %p29, %p30
    %p32 = scmp.ne.s32.totalorder %s21, %s24
    %p33 = scmp.eq.s32.totalorder %s16, 1
    %p34 = por %p32, %p33
    %p35 = scmp.ne.s32.totalorder %s24, %s25
    %p36 = scmp.eq.s32.totalorder %s16, 0
    %p37 = por %p35, %p36
    %p38 = scmp.ne.s32.totalorder %s24, %s25
    %p39 = scmp.eq.s32.totalorder %s17, 1
    %p40 = por %p38, %p39
    %p42 = scmp.ne.s32.totalorder %s25, %s41
    %p43 = scmp.eq.s32.totalorder %s17, 0
    %p44 = por %p42, %p43
    %s46 = sadd.s32 %s45, 1
    %p49 = scmp.eq.s32.totalorder %s11, 1
    %p50 = scmp.ne.s32.totalorder %s45, %s47
    %p51 = scmp.eq.s32.totalorder %s11, 0
    %p52 = por %p50, %p51
    %p53 = scmp.ne.s32.totalorder %s45, %s47
    %p54 = scmp.eq.s32.totalorder %s16, 1
    %p55 = por %p53, %p54
    %p56 = scmp.ne.s32.totalorder %s47, %s48
    %p57 = scmp.eq.s32.totalorder %s16, 0
    %p58 = por %p56, %p57
    %p59 = scmp.ne.s32.totalorder %s47, %s48
    %p60 = scmp.eq.s32.totalorder %s17, 1
    %p61 = por %p59, %p60
    %p63 = scmp.ne.s32.totalorder %s48, %s62
    %p64 = scmp.eq.s32.totalorder %s17, 0
    %p65 = por %p63, %p64
    %s67 = sadd.s32 %s66, 1
    %p70 = scmp.eq.s32.totalorder %s11, 1
    %p71 = scmp.ne.s32.totalorder %s66, %s68
    %p72 = scmp.eq.s32.totalorder %s11, 0
    %p73 = por %p71, %p72
    %p74 = scmp.ne.s32.totalorder %s66, %s68
    %p75 = scmp.eq.s32.totalorder %s16, 1
    %p76 = por %p74, %p75
    %p77 = scmp.ne.s32.totalorder %s68, %s69
    %p78 = scmp.eq.s32.totalorder %s16, 0
    %p79 = por %p77, %p78
    %p80 = scmp.ne.s32.totalorder %s68, %s69
    %p81 = scmp.eq.s32.totalorder %s17, 1
    %p82 = por %p80, %p81
    %p84 = scmp.ne.s32.totalorder %s69, %s83
    %p85 = scmp.eq.s32.totalorder %s17, 0
    %p86 = por %p84, %p85
    %s88 = sadd.s32 %s87, 1
    %p91 = scmp.eq.s32.totalorder %s11, 1
    %p92 = scmp.ne.s32.totalorder %s87, %s89
    %p93 = scmp.eq.s32.totalorder %s11, 0
    %p94 = por %p92, %p93
    %p95 = scmp.ne.s32.totalorder %s87, %s89
    %p96 = scmp.eq.s32.totalorder %s16, 1
    %p97 = por %p95, %p96
    %p98 = scmp.ne.s32.totalorder %s89, %s90
    %p99 = scmp.eq.s32.totalorder %s16, 0
    %p100 = por %p98, %p99
    %p101 = scmp.ne.s32.totalorder %s89, %s90
    %p102 = scmp.eq.s32.totalorder %s17, 1
    %p103 = por %p101, %p102
    %p105 = scmp.ne.s32.totalorder %s90, %s104
    %p106 = scmp.eq.s32.totalorder %s17, 0
    %p107 = por %p105, %p106
    %s109 = sadd.s32 %s108, 1
    %p112 = scmp.eq.s32.totalorder %s11, 1
    %p113 = scmp.ne.s32.totalorder %s108, %s110
    %p114 = scmp.eq.s32.totalorder %s11, 0
    %p115 = por %p113, %p114
    %p116 = scmp.ne.s32.totalorder %s108, %s110
    %p117 = scmp.eq.s32.totalorder %s16, 1
    %p118 = por %p116, %p117
    %p119 = scmp.ne.s32.totalorder %s110, %s111
    %p120 = scmp.eq.s32.totalorder %s16, 0
    %p121 = por %p119, %p120
    %p122 = scmp.ne.s32.totalorder %s110, %s111
    %p123 = scmp.eq.s32.totalorder %s17, 1
    %p124 = por %p122, %p123
    %p126 = scmp.ne.s32.totalorder %s111, %s125
    %p127 = scmp.eq.s32.totalorder %s17, 0
    %p128 = por %p126, %p127
    %s129 = ssub.s32 %s11, %s18
    %p130 = scmp.eq.s32.totalorder %s129, 0
    %s132 = sadd.s32 %s131, 1
    %s133 = scalar_select %p130, %s131, %s132
    %p136 = pneg %p130
    %p137 = scmp.eq.s32.totalorder %s11, 1
    %p138 = por %p136, %p137
    %p139 = scmp.ne.s32.totalorder %s131, %s134
    %p140 = scmp.eq.s32.totalorder %s11, 0
    %p141 = por %p139, %p140
    %p142 = scmp.ne.s32.totalorder %s131, %s134
    %p143 = scmp.eq.s32.totalorder %s16, 1
    %p144 = por %p142, %p143
    %p145 = scmp.ne.s32.totalorder %s134, %s135
    %p146 = scmp.eq.s32.totalorder %s16, 0
    %p147 = por %p145, %p146
    %p148 = scmp.ne.s32.totalorder %s134, %s135
    %p149 = scmp.eq.s32.totalorder %s17, 1
    %p150 = por %p148, %p149
    %p152 = scmp.ne.s32.totalorder %s135, %s151
    %p153 = scmp.eq.s32.totalorder %s17, 0
    %p154 = por %p152, %p153
    %p155 = scmp.le.s32.totalorder 1, %s11
    %p156 = scmp.lt.s32.totalorder %s11, 3
    %p157 = pnand %p155, %p156
    %p158 = pneg %p157
    // Predicated region
    $region9: #{_lambda_.3} parent=5 // pred_check
      _
    $region10: #{_lambda_.3} parent=5 // pred_check_branch
      %160 = sbr.rel (%p157) target = $region12
    $region11: #{_lambda_.3} parent=5 // pred_region
      %s161 = ssub.s32 %s11, 1
      // Predicated region
      $region13: #{_lambda_.3} parent=11 // pred_check
        %p162 = pneg %p58
      $region14: #{_lambda_.3} parent=11 // pred_check_branch
        %164 = sbr.rel (%p162) target = $region16
      $region15: #{_lambda_.3} parent=11 // pred_region
        _
      $region16: #{_lambda_.3} parent=11 // pred_fallthru
        _
      // Predicated region
      $region17: #{_lambda_.3} parent=11 // pred_check
        %p165 = pneg %p79
      $region18: #{_lambda_.3} parent=11 // pred_check_branch
        %167 = sbr.rel (%p165) target = $region20
      $region19: #{_lambda_.3} parent=11 // pred_region
        _
      $region20: #{_lambda_.3} parent=11 // pred_fallthru
        _
      // Predicated region
      $region21: #{_lambda_.3} parent=11 // pred_check
        %p168 = pneg %p100
      $region22: #{_lambda_.3} parent=11 // pred_check_branch
        %170 = sbr.rel (%p168) target = $region24
      $region23: #{_lambda_.3} parent=11 // pred_region
        _
      $region24: #{_lambda_.3} parent=11 // pred_fallthru
        _
      // Predicated region
      $region25: #{_lambda_.3} parent=11 // pred_check
        %p171 = pneg %p121
      $region26: #{_lambda_.3} parent=11 // pred_check_branch
        %173 = sbr.rel (%p171) target = $region28
      $region27: #{_lambda_.3} parent=11 // pred_region
        _
      $region28: #{_lambda_.3} parent=11 // pred_fallthru
        _
    $region12: #{_lambda_.3} parent=5 // pred_fallthru
      _
    %p174 = scmp.lt.s32.totalorder %s11, 2
    // Predicated region
    $region29: #{_lambda_.3} parent=5 // pred_check
      %p175 = pneg %p174
    $region30: #{_lambda_.3} parent=5 // pred_check_branch
      %177 = sbr.rel (%p175) target = $region32
    $region31: #{_lambda_.3} parent=5 // pred_region
      // Predicated region
      $region33: #{_lambda_.3} parent=31 // pred_check
        %p178 = pneg %p31
      $region34: #{_lambda_.3} parent=31 // pred_check_branch
        %180 = sbr.rel (%p178) target = $region36
      $region35: #{_lambda_.3} parent=31 // pred_region
        %p181 = scmp.lt.s32.totalorder %s11, 1
        %s182 = scalar_select %p181, %s11, 1
        %s183 = smul.addr %s182, 12
        %s184 = smul.addr %s183, 8
        %s185 = scalar_lea.vmem %s0, %s184
      $region36: #{_lambda_.3} parent=31 // pred_fallthru
        _
    $region32: #{_lambda_.3} parent=5 // pred_fallthru
      _
    %p186 = scmp.le.s32.totalorder 1, %s11
    %p187 = scmp.lt.s32.totalorder %s11, 3
    %p188 = pnand %p186, %p187
    %p189 = pneg %p188
    // Predicated region
    $region37: #{_lambda_.3} parent=5 // pred_check
      _
    $region38: #{_lambda_.3} parent=5 // pred_check_branch
      %191 = sbr.rel (%p188) target = $region40
    $region39: #{_lambda_.3} parent=5 // pred_region
      %s192 = ssub.s32 %s11, 1
      %p193 = scmp.lt.s32.totalorder %s16, 1
      %s194 = scalar_select %p193, %s16, 1
      %s195 = smul.addr %s194, 12
      %s196 = smul.addr %s195, 8
      %s197 = scalar_lea.vmem %s0, %s196
      %p198 = pneg %p37
      %p199 = pneg %p34
      %p200 = pneg %p58
      %p201 = pneg %p55
      %p202 = pneg %p79
      %p203 = pneg %p76
      %p204 = pneg %p100
      %p205 = pneg %p97
      %p206 = pneg %p121
      %p207 = pneg %p118
      %p208 = pneg %p147
      %p209 = pneg %p144
      %p210 = scmp.lt.s32.totalorder %s16, 1
      %s211 = scalar_select %p210, %s16, 1
      %s212 = smul.addr %s211, 2
      %s213 = smul.addr %s212, 4
      %s214 = scalar_lea.vmem %s5, %s213
      %p215 = scmp.lt.s32.totalorder %s16, 1
      %s216 = scalar_select %p215, %s16, 1
      %s217 = smul.addr %s216, 12
      %s218 = smul.addr %s217, 8
      %s219 = scalar_lea.vmem %s0, %s218
      %p220 = scmp.lt.s32.totalorder %s16, 1
      %s221 = scalar_select %p220, %s16, 1
      %s222 = smul.addr %s221, 2
      %s223 = smul.addr %s222, 4
      %s224 = scalar_lea.vmem %s5, %s223
      %v226 = vld [vmem:[%s219] sm:$0xff]
      %v227 = vld [vmem:[%s219 + $0x8] sm:$0xff]
      %v228 = vld [vmem:[%s219 + $0x18] sm:$0xff]
      %v229 = vld [vmem:[%s219 + $0x20] sm:$0xff]
      %v230 = vld [vmem:[%s219 + $0x30] sm:$0xff]
      %v231 = vld [vmem:[%s219 + $0x38] sm:$0xff]
      %v232 = vld [vmem:[%s219 + $0x48] sm:$0xff]
      %v233 = vld [vmem:[%s219 + $0x50] sm:$0xff]
      %v234 = vcombine.low %v226, %v230
      %v235 = vcombine.high %v226, %v230
      %v237 = vunpack.c.l.s4 1983009808
      %v238 = vunpack.c.0.s8 %v237
      %v239 = vlaneseq
      %v240 = vshrl.u32 %v239, 7
      %v241 = vsub.s32 %v238, %v240
      %v242 = vrot.slane %v234, %v241
      %v244 = vunpack.c.l.s4 1983009808
      %v245 = vunpack.c.0.s8 %v244
      %v246 = vlaneseq
      %v247 = vshrl.u32 %v246, 7
      %v248 = vsub.s32 %v245, %v247
      %v249 = vrot.slane %v235, %v248
      %v250 = vcombine.low %v228, %v232
      %v251 = vcombine.high %v228, %v232
      %v253 = vunpack.c.l.s4 1983009808
      %v254 = vunpack.c.0.s8 %v253
      %v255 = vlaneseq
      %v256 = vshrl.u32 %v255, 7
      %v257 = vsub.s32 %v254, %v256
      %v258 = vrot.slane %v250, %v257
      %v260 = vunpack.c.l.s4 1983009808
      %v261 = vunpack.c.0.s8 %v260
      %v262 = vlaneseq
      %v263 = vshrl.u32 %v262, 7
      %v264 = vsub.s32 %v261, %v263
      %v265 = vrot.slane %v251, %v264
      %v266 = vcombine.low %v242, %v258
      %v267 = vcombine.high %v242, %v258
      %v269 = vunpack.c.l.s4 1934713408
      %v270 = vunpack.c.0.s8 %v269
      %v271 = vlaneseq
      %v272 = vshrl.u32 %v271, 7
      %v273 = vsub.s32 %v270, %v272
      %v274 = vrot.slane %v266, %v273
      %v276 = vunpack.c.l.s4 1934713408
      %v277 = vunpack.c.0.s8 %v276
      %v278 = vlaneseq
      %v279 = vshrl.u32 %v278, 7
      %v280 = vsub.s32 %v277, %v279
      %v281 = vrot.slane %v267, %v280
      %v282 = vcombine.low %v249, %v265
      %v283 = vcombine.high %v249, %v265
      %v285 = vunpack.c.l.s4 1934713408
      %v286 = vunpack.c.0.s8 %v285
      %v287 = vlaneseq
      %v288 = vshrl.u32 %v287, 7
      %v289 = vsub.s32 %v286, %v288
      %v290 = vrot.slane %v282, %v289
      %v292 = vunpack.c.l.s4 1934713408
      %v293 = vunpack.c.0.s8 %v292
      %v294 = vlaneseq
      %v295 = vshrl.u32 %v294, 7
      %v296 = vsub.s32 %v293, %v295
      %v297 = vrot.slane %v283, %v296
      %v298 = vcombine.high %v274, 0.0
      %v299 = vcombine.high %v281, 0.0
      %v300 = vcombine.high %v290, 0.0
      %v301 = vcombine.high %v297, 0.0
      %v302 = vcombine.low %v227, %v231
      %v303 = vcombine.high %v227, %v231
      %v305 = vunpack.c.l.s4 1983009808
      %v306 = vunpack.c.0.s8 %v305
      %v307 = vlaneseq
      %v308 = vshrl.u32 %v307, 7
      %v309 = vsub.s32 %v306, %v308
      %v310 = vrot.slane %v302, %v309
      %v312 = vunpack.c.l.s4 1983009808
      %v313 = vunpack.c.0.s8 %v312
      %v314 = vlaneseq
      %v315 = vshrl.u32 %v314, 7
      %v316 = vsub.s32 %v313, %v315
      %v317 = vrot.slane %v303, %v316
      %v318 = vcombine.low %v229, %v233
      %v319 = vcombine.high %v229, %v233
      %v321 = vunpack.c.l.s4 1983009808
      %v322 = vunpack.c.0.s8 %v321
      %v323 = vlaneseq
      %v324 = vshrl.u32 %v323, 7
      %v325 = vsub.s32 %v322, %v324
      %v326 = vrot.slane %v318, %v325
      %v328 = vunpack.c.l.s4 1983009808
      %v329 = vunpack.c.0.s8 %v328
      %v330 = vlaneseq
      %v331 = vshrl.u32 %v330, 7
      %v332 = vsub.s32 %v329, %v331
      %v333 = vrot.slane %v319, %v332
      %v334 = vcombine.low %v310, %v326
      %v335 = vcombine.high %v310, %v326
      %v337 = vunpack.c.l.s4 1934713408
      %v338 = vunpack.c.0.s8 %v337
      %v339 = vlaneseq
      %v340 = vshrl.u32 %v339, 7
      %v341 = vsub.s32 %v338, %v340
      %v342 = vrot.slane %v334, %v341
      %v344 = vunpack.c.l.s4 1934713408
      %v345 = vunpack.c.0.s8 %v344
      %v346 = vlaneseq
      %v347 = vshrl.u32 %v346, 7
      %v348 = vsub.s32 %v345, %v347
      %v349 = vrot.slane %v335, %v348
      %v350 = vcombine.low %v317, %v333
      %v351 = vcombine.high %v317, %v333
      %v353 = vunpack.c.l.s4 1934713408
      %v354 = vunpack.c.0.s8 %v353
      %v355 = vlaneseq
      %v356 = vshrl.u32 %v355, 7
      %v357 = vsub.s32 %v354, %v356
      %v358 = vrot.slane %v350, %v357
      %v360 = vunpack.c.l.s4 1934713408
      %v361 = vunpack.c.0.s8 %v360
      %v362 = vlaneseq
      %v363 = vshrl.u32 %v362, 7
      %v364 = vsub.s32 %v361, %v363
      %v365 = vrot.slane %v351, %v364
      %v366 = vcombine.high %v342, 0.0
      %v367 = vcombine.high %v349, 0.0
      %v368 = vcombine.high %v358, 0.0
      %v369 = vcombine.high %v365, 0.0
      %371 = vrot.lane.b32.xlu0 %v298, 16
      %v372 = vpop.permute.xlu0 %371
      %375 = vrot.lane.b32.xlu0 %v281, 32
      %v376 = vpop.permute.xlu0 %375
      %379 = vrot.lane.b32.xlu0 %v299, 48
      %v380 = vpop.permute.xlu0 %379
      %383 = vrot.lane.b32.xlu0 %v290, 64
      %v384 = vpop.permute.xlu0 %383
      %387 = vrot.lane.b32.xlu0 %v300, 80
      %v388 = vpop.permute.xlu0 %387
      %391 = vrot.lane.b32.xlu0 %v297, 96
      %v392 = vpop.permute.xlu0 %391
      %395 = vrot.lane.b32.xlu0 %v301, 112
      %v396 = vpop.permute.xlu0 %395
      %399 = vrot.lane.b32.xlu0 %v366, 16
      %v400 = vpop.permute.xlu0 %399
      %403 = vrot.lane.b32.xlu0 %v349, 32
      %v404 = vpop.permute.xlu0 %403
      %407 = vrot.lane.b32.xlu0 %v367, 48
      %v408 = vpop.permute.xlu0 %407
      %411 = vrot.lane.b32.xlu0 %v358, 64
      %v412 = vpop.permute.xlu0 %411
      %415 = vrot.lane.b32.xlu0 %v368, 80
      %v416 = vpop.permute.xlu0 %415
      %419 = vrot.lane.b32.xlu0 %v365, 96
      %v420 = vpop.permute.xlu0 %419
      %423 = vrot.lane.b32.xlu0 %v369, 112
      %v424 = vpop.permute.xlu0 %423
      %vm426 = vcmask 130048
      %v427 = vsel %vm426, %v274, %v372
      %vm428 = vcmask 261120
      %v429 = vsel %vm428, %v427, %v376
      %vm430 = vcmask 392192
      %v431 = vsel %vm430, %v429, %v380
      %vm432 = vcmask 523264
      %v433 = vsel %vm432, %v431, %v384
      %vm434 = vcmask 654336
      %v435 = vsel %vm434, %v433, %v388
      %vm436 = vcmask 785408
      %v437 = vsel %vm436, %v435, %v392
      %vm438 = vcmask 916480
      %v439 = vsel %vm438, %v437, %v396
      %v440 = vsel %vm426, %v342, %v400
      %v441 = vsel %vm428, %v440, %v404
      %v442 = vsel %vm430, %v441, %v408
      %v443 = vsel %vm432, %v442, %v412
      %v444 = vsel %vm434, %v443, %v416
      %v445 = vsel %vm436, %v444, %v420
      %v446 = vsel %vm438, %v445, %v424
      %v447 = vpack.c.bf16 %v439, %v439
      %v448 = vpack.c.bf16 %v446, %v446
      %v449 = vld [vmem:[%s1] sm:$0x3]
      %458 = vrot.lane.b32.xlu0 %v226, 127
      %v459 = vpop.permute.xlu0 %458
      %460 = vrot.lane.b32.xlu0 %v227, 127
      %v461 = vpop.permute.xlu0 %460
      %462 = vrot.lane.b32.xlu0 %v228, 127
      %v463 = vpop.permute.xlu0 %462
      %464 = vrot.lane.b32.xlu0 %v229, 127
      %v465 = vpop.permute.xlu0 %464
      %466 = vrot.lane.b32.xlu0 %v230, 127
      %v467 = vpop.permute.xlu0 %466
      %468 = vrot.lane.b32.xlu0 %v231, 127
      %v469 = vpop.permute.xlu0 %468
      %470 = vrot.lane.b32.xlu0 %v232, 127
      %v471 = vpop.permute.xlu0 %470
      %472 = vrot.lane.b32.xlu0 %v233, 127
      %v473 = vpop.permute.xlu0 %472
      %v482 = vcombine.low %v459, %v467
      %v483 = vcombine.high %v459, %v467
      %v485 = vunpack.c.l.s4 1983009808
      %v486 = vunpack.c.0.s8 %v485
      %v487 = vlaneseq
      %v488 = vshrl.u32 %v487, 7
      %v489 = vsub.s32 %v486, %v488
      %v490 = vrot.slane %v482, %v489
      %v492 = vunpack.c.l.s4 1983009808
      %v493 = vunpack.c.0.s8 %v492
      %v494 = vlaneseq
      %v495 = vshrl.u32 %v494, 7
      %v496 = vsub.s32 %v493, %v495
      %v497 = vrot.slane %v483, %v496
      %v498 = vcombine.low %v463, %v471
      %v499 = vcombine.high %v463, %v471
      %v501 = vunpack.c.l.s4 1983009808
      %v502 = vunpack.c.0.s8 %v501
      %v503 = vlaneseq
      %v504 = vshrl.u32 %v503, 7
      %v505 = vsub.s32 %v502, %v504
      %v506 = vrot.slane %v498, %v505
      %v508 = vunpack.c.l.s4 1983009808
      %v509 = vunpack.c.0.s8 %v508
      %v510 = vlaneseq
      %v511 = vshrl.u32 %v510, 7
      %v512 = vsub.s32 %v509, %v511
      %v513 = vrot.slane %v499, %v512
      %v514 = vcombine.low %v490, %v506
      %v515 = vcombine.high %v490, %v506
      %v517 = vunpack.c.l.s4 1934713408
      %v518 = vunpack.c.0.s8 %v517
      %v519 = vlaneseq
      %v520 = vshrl.u32 %v519, 7
      %v521 = vsub.s32 %v518, %v520
      %v522 = vrot.slane %v514, %v521
      %v524 = vunpack.c.l.s4 1934713408
      %v525 = vunpack.c.0.s8 %v524
      %v526 = vlaneseq
      %v527 = vshrl.u32 %v526, 7
      %v528 = vsub.s32 %v525, %v527
      %v529 = vrot.slane %v515, %v528
      %v530 = vcombine.low %v497, %v513
      %v531 = vcombine.high %v497, %v513
      %v533 = vunpack.c.l.s4 1934713408
      %v534 = vunpack.c.0.s8 %v533
      %v535 = vlaneseq
      %v536 = vshrl.u32 %v535, 7
      %v537 = vsub.s32 %v534, %v536
      %v538 = vrot.slane %v530, %v537
      %v540 = vunpack.c.l.s4 1934713408
      %v541 = vunpack.c.0.s8 %v540
      %v542 = vlaneseq
      %v543 = vshrl.u32 %v542, 7
      %v544 = vsub.s32 %v541, %v543
      %v545 = vrot.slane %v531, %v544
      %v546 = vcombine.high %v522, 0.0
      %v547 = vcombine.high %v529, 0.0
      %v548 = vcombine.high %v538, 0.0
      %v549 = vcombine.high %v545, 0.0
      %v550 = vcombine.low %v461, %v469
      %v551 = vcombine.high %v461, %v469
      %v553 = vunpack.c.l.s4 1983009808
      %v554 = vunpack.c.0.s8 %v553
      %v555 = vlaneseq
      %v556 = vshrl.u32 %v555, 7
      %v557 = vsub.s32 %v554, %v556
      %v558 = vrot.slane %v550, %v557
      %v560 = vunpack.c.l.s4 1983009808
      %v561 = vunpack.c.0.s8 %v560
      %v562 = vlaneseq
      %v563 = vshrl.u32 %v562, 7
      %v564 = vsub.s32 %v561, %v563
      %v565 = vrot.slane %v551, %v564
      %v566 = vcombine.low %v465, %v473
      %v567 = vcombine.high %v465, %v473
      %v569 = vunpack.c.l.s4 1983009808
      %v570 = vunpack.c.0.s8 %v569
      %v571 = vlaneseq
      %v572 = vshrl.u32 %v571, 7
      %v573 = vsub.s32 %v570, %v572
      %v574 = vrot.slane %v566, %v573
      %v576 = vunpack.c.l.s4 1983009808
      %v577 = vunpack.c.0.s8 %v576
      %v578 = vlaneseq
      %v579 = vshrl.u32 %v578, 7
      %v580 = vsub.s32 %v577, %v579
      %v581 = vrot.slane %v567, %v580
      %v582 = vcombine.low %v558, %v574
      %v583 = vcombine.high %v558, %v574
      %v585 = vunpack.c.l.s4 1934713408
      %v586 = vunpack.c.0.s8 %v585
      %v587 = vlaneseq
      %v588 = vshrl.u32 %v587, 7
      %v589 = vsub.s32 %v586, %v588
      %v590 = vrot.slane %v582, %v589
      %v592 = vunpack.c.l.s4 1934713408
      %v593 = vunpack.c.0.s8 %v592
      %v594 = vlaneseq
      %v595 = vshrl.u32 %v594, 7
      %v596 = vsub.s32 %v593, %v595
      %v597 = vrot.slane %v583, %v596
      %v598 = vcombine.low %v565, %v581
      %v599 = vcombine.high %v565, %v581
      %v601 = vunpack.c.l.s4 1934713408
      %v602 = vunpack.c.0.s8 %v601
      %v603 = vlaneseq
      %v604 = vshrl.u32 %v603, 7
      %v605 = vsub.s32 %v602, %v604
      %v606 = vrot.slane %v598, %v605
      %v608 = vunpack.c.l.s4 1934713408
      %v609 = vunpack.c.0.s8 %v608
      %v610 = vlaneseq
      %v611 = vshrl.u32 %v610, 7
      %v612 = vsub.s32 %v609, %v611
      %v613 = vrot.slane %v599, %v612
      %v614 = vcombine.high %v590, 0.0
      %v615 = vcombine.high %v597, 0.0
      %v616 = vcombine.high %v606, 0.0
      %v617 = vcombine.high %v613, 0.0
      %619 = vrot.lane.b32.xlu0 %v546, 16
      %v620 = vpop.permute.xlu0 %619
      %623 = vrot.lane.b32.xlu0 %v529, 32
      %v624 = vpop.permute.xlu0 %623
      %627 = vrot.lane.b32.xlu0 %v547, 48
      %v628 = vpop.permute.xlu0 %627
      %631 = vrot.lane.b32.xlu0 %v538, 64
      %v632 = vpop.permute.xlu0 %631
      %635 = vrot.lane.b32.xlu0 %v548, 80
      %v636 = vpop.permute.xlu0 %635
      %639 = vrot.lane.b32.xlu0 %v545, 96
      %v640 = vpop.permute.xlu0 %639
      %643 = vrot.lane.b32.xlu0 %v549, 112
      %v644 = vpop.permute.xlu0 %643
      %647 = vrot.lane.b32.xlu0 %v614, 16
      %v648 = vpop.permute.xlu0 %647
      %651 = vrot.lane.b32.xlu0 %v597, 32
      %v652 = vpop.permute.xlu0 %651
      %655 = vrot.lane.b32.xlu0 %v615, 48
      %v656 = vpop.permute.xlu0 %655
      %659 = vrot.lane.b32.xlu0 %v606, 64
      %v660 = vpop.permute.xlu0 %659
      %663 = vrot.lane.b32.xlu0 %v616, 80
      %v664 = vpop.permute.xlu0 %663
      %667 = vrot.lane.b32.xlu0 %v613, 96
      %v668 = vpop.permute.xlu0 %667
      %671 = vrot.lane.b32.xlu0 %v617, 112
      %v672 = vpop.permute.xlu0 %671
      %v674 = vsel %vm426, %v522, %v620
      %v675 = vsel %vm428, %v674, %v624
      %v676 = vsel %vm430, %v675, %v628
      %v677 = vsel %vm432, %v676, %v632
      %v678 = vsel %vm434, %v677, %v636
      %v679 = vsel %vm436, %v678, %v640
      %v680 = vsel %vm438, %v679, %v644
      %v681 = vsel %vm426, %v590, %v648
      %v682 = vsel %vm428, %v681, %v652
      %v683 = vsel %vm430, %v682, %v656
      %v684 = vsel %vm432, %v683, %v660
      %v685 = vsel %vm434, %v684, %v664
      %v686 = vsel %vm436, %v685, %v668
      %v687 = vsel %vm438, %v686, %v672
      %v688 = vpack.c.bf16 %v680, %v680
      %v689 = vpack.c.bf16 %v687, %v687
      %s690 = scalar_lea.vmem %s1, 2
      %v691 = vld [vmem:[%s690] sm:$0x3]
      %vm692 = vcmask 31744
      %v694 = vsel %vm692, %v691, 0
      %vm696 = vcmask 1041408
      %v698 = vsel %vm696, %v688, 0
      %v701 = vsel %vm696, %v689, 0
      %703 = vmatprep.subr.bf16.mxu0 0
      %704 = vmatpush1.bf16.msra.mxu0 0
      %705 = vmatprep.subr.bf16.mxu0 0
      %706 = vmatpush1.bf16.msra.mxu0 0
      %707 = vmatprep.subr.bf16.mxu0 0
      %708 = vmatpush1.bf16.msra.mxu0 0
      %709 = vmatprep.subr.bf16.mxu0 0
      %710 = vmatpush1.bf16.msra.mxu0 0
      %711 = vmatprep.subr.bf16.mxu0 0
      %712 = vmatpush1.bf16.msra.mxu0 0
      %713 = vmatprep.subr.bf16.mxu0 0
      %714 = vmatpush1.bf16.msra.mxu0 0
      %715 = vmatprep.subr.bf16.mxu0 0
      %716 = vmatpush1.bf16.msra.mxu0 0
      %717 = vmatprep.subr.bf16.mxu0 %v701
      %718 = vmatpush1.bf16.msra.mxu0 %v698
      %719 = vmatprep.subr.bf16.mxu0 0
      %720 = vmatpush2.bf16.msra.mxu0 0
      %721 = vmatprep.subr.bf16.mxu0 0
      %722 = vmatpush2.bf16.msra.mxu0 0
      %723 = vmatprep.subr.bf16.mxu0 0
      %724 = vmatpush2.bf16.msra.mxu0 0
      %725 = vmatprep.subr.bf16.mxu0 0
      %726 = vmatpush2.bf16.msra.mxu0 0
      %727 = vmatprep.subr.bf16.mxu0 0
      %728 = vmatpush2.bf16.msra.mxu0 0
      %729 = vmatprep.subr.bf16.mxu0 0
      %730 = vmatpush2.bf16.msra.mxu0 0
      %731 = vmatprep.subr.bf16.mxu0 0
      %732 = vmatpush2.bf16.msra.mxu0 0
      %733 = vmatprep.subr.bf16.mxu0 0
      %734 = vmatpush2.bf16.msra.mxu0 0
      %735 = vmatprep.mubr.bf16.mxu0 0
      %736 = vmatmul.mubr.bf16.gmra.mxu0 %v694
      %v737 = vpop.f32.mrf.mxu0
      %v738 = vadd.f32 0.0, %v737
      %v739 = vpop.f32.mrf.mxu0
      %v740 = vadd.f32 0.0, %v739
      %v741 = vpop.f32.mrf.mxu0
      %v742 = vpop.f32.mrf.mxu0
      %743 = vdwg.mxu0
      %v745 = vsel %vm692, %v449, 0
      %v748 = vsel %vm696, %v447, 0
      %v751 = vsel %vm696, %v448, 0
      %753 = vmatprep.subr.bf16.mxu0 0
      %754 = vmatpush1.bf16.msra.mxu0 0
      %755 = vmatprep.subr.bf16.mxu0 0
      %756 = vmatpush1.bf16.msra.mxu0 0
      %757 = vmatprep.subr.bf16.mxu0 0
      %758 = vmatpush1.bf16.msra.mxu0 0
      %759 = vmatprep.subr.bf16.mxu0 0
      %760 = vmatpush1.bf16.msra.mxu0 0
      %761 = vmatprep.subr.bf16.mxu0 0
      %762 = vmatpush1.bf16.msra.mxu0 0
      %763 = vmatprep.subr.bf16.mxu0 0
      %764 = vmatpush1.bf16.msra.mxu0 0
      %765 = vmatprep.subr.bf16.mxu0 0
      %766 = vmatpush1.bf16.msra.mxu0 0
      %767 = vmatprep.subr.bf16.mxu0 %v751
      %768 = vmatpush1.bf16.msra.mxu0 %v748
      %769 = vmatprep.subr.bf16.mxu0 0
      %770 = vmatpush2.bf16.msra.mxu0 0
      %771 = vmatprep.subr.bf16.mxu0 0
      %772 = vmatpush2.bf16.msra.mxu0 0
      %773 = vmatprep.subr.bf16.mxu0 0
      %774 = vmatpush2.bf16.msra.mxu0 0
      %775 = vmatprep.subr.bf16.mxu0 0
      %776 = vmatpush2.bf16.msra.mxu0 0
      %777 = vmatprep.subr.bf16.mxu0 0
      %778 = vmatpush2.bf16.msra.mxu0 0
      %779 = vmatprep.subr.bf16.mxu0 0
      %780 = vmatpush2.bf16.msra.mxu0 0
      %781 = vmatprep.subr.bf16.mxu0 0
      %782 = vmatpush2.bf16.msra.mxu0 0
      %783 = vmatprep.subr.bf16.mxu0 0
      %784 = vmatpush2.bf16.msra.mxu0 0
      %785 = vmatprep.mubr.bf16.mxu0 0
      %786 = vmatmul.mubr.bf16.gmra.mxu0 %v745
      %v787 = vpop.f32.mrf.mxu0
      %v788 = vadd.f32 %v738, %v787
      %v789 = vpop.f32.mrf.mxu0
      %v790 = vadd.f32 %v740, %v789
      %v791 = vpop.f32.mrf.mxu0
      %v792 = vpop.f32.mrf.mxu0
      %793 = vdwg.mxu0
      %v794 = vld [vmem:[%s219] sm:$0xff]
      %v795 = vld [vmem:[%s219 + $0x8] sm:$0xff]
      %v796 = vld [vmem:[%s219 + $0x18] sm:$0xff]
      %v797 = vld [vmem:[%s219 + $0x20] sm:$0xff]
      %v798 = vld [vmem:[%s219 + $0x30] sm:$0xff]
      %v799 = vld [vmem:[%s219 + $0x38] sm:$0xff]
      %v800 = vld [vmem:[%s219 + $0x48] sm:$0xff]
      %v801 = vld [vmem:[%s219 + $0x50] sm:$0xff]
      %810 = vrot.lane.b32.xlu0 %v794, 126
      %v811 = vpop.permute.xlu0 %810
      %812 = vrot.lane.b32.xlu0 %v795, 126
      %v813 = vpop.permute.xlu0 %812
      %814 = vrot.lane.b32.xlu0 %v796, 126
      %v815 = vpop.permute.xlu0 %814
      %816 = vrot.lane.b32.xlu0 %v797, 126
      %v817 = vpop.permute.xlu0 %816
      %818 = vrot.lane.b32.xlu0 %v798, 126
      %v819 = vpop.permute.xlu0 %818
      %820 = vrot.lane.b32.xlu0 %v799, 126
      %v821 = vpop.permute.xlu0 %820
      %822 = vrot.lane.b32.xlu0 %v800, 126
      %v823 = vpop.permute.xlu0 %822
      %824 = vrot.lane.b32.xlu0 %v801, 126
      %v825 = vpop.permute.xlu0 %824
      %v834 = vcombine.low %v811, %v819
      %v835 = vcombine.high %v811, %v819
      %v837 = vunpack.c.l.s4 1983009808
      %v838 = vunpack.c.0.s8 %v837
      %v839 = vlaneseq
      %v840 = vshrl.u32 %v839, 7
      %v841 = vsub.s32 %v838, %v840
      %v842 = vrot.slane %v834, %v841
      %v844 = vunpack.c.l.s4 1983009808
      %v845 = vunpack.c.0.s8 %v844
      %v846 = vlaneseq
      %v847 = vshrl.u32 %v846, 7
      %v848 = vsub.s32 %v845, %v847
      %v849 = vrot.slane %v835, %v848
      %v850 = vcombine.low %v815, %v823
      %v851 = vcombine.high %v815, %v823
      %v853 = vunpack.c.l.s4 1983009808
      %v854 = vunpack.c.0.s8 %v853
      %v855 = vlaneseq
      %v856 = vshrl.u32 %v855, 7
      %v857 = vsub.s32 %v854, %v856
      %v858 = vrot.slane %v850, %v857
      %v860 = vunpack.c.l.s4 1983009808
      %v861 = vunpack.c.0.s8 %v860
      %v862 = vlaneseq
      %v863 = vshrl.u32 %v862, 7
      %v864 = vsub.s32 %v861, %v863
      %v865 = vrot.slane %v851, %v864
      %v866 = vcombine.low %v842, %v858
      %v867 = vcombine.high %v842, %v858
      %v869 = vunpack.c.l.s4 1934713408
      %v870 = vunpack.c.0.s8 %v869
      %v871 = vlaneseq
      %v872 = vshrl.u32 %v871, 7
      %v873 = vsub.s32 %v870, %v872
      %v874 = vrot.slane %v866, %v873
      %v876 = vunpack.c.l.s4 1934713408
      %v877 = vunpack.c.0.s8 %v876
      %v878 = vlaneseq
      %v879 = vshrl.u32 %v878, 7
      %v880 = vsub.s32 %v877, %v879
      %v881 = vrot.slane %v867, %v880
      %v882 = vcombine.low %v849, %v865
      %v883 = vcombine.high %v849, %v865
      %v885 = vunpack.c.l.s4 1934713408
      %v886 = vunpack.c.0.s8 %v885
      %v887 = vlaneseq
      %v888 = vshrl.u32 %v887, 7
      %v889 = vsub.s32 %v886, %v888
      %v890 = vrot.slane %v882, %v889
      %v892 = vunpack.c.l.s4 1934713408
      %v893 = vunpack.c.0.s8 %v892
      %v894 = vlaneseq
      %v895 = vshrl.u32 %v894, 7
      %v896 = vsub.s32 %v893, %v895
      %v897 = vrot.slane %v883, %v896
      %v898 = vcombine.high %v874, 0.0
      %v899 = vcombine.high %v881, 0.0
      %v900 = vcombine.high %v890, 0.0
      %v901 = vcombine.high %v897, 0.0
      %v902 = vcombine.low %v813, %v821
      %v903 = vcombine.high %v813, %v821
      %v905 = vunpack.c.l.s4 1983009808
      %v906 = vunpack.c.0.s8 %v905
      %v907 = vlaneseq
      %v908 = vshrl.u32 %v907, 7
      %v909 = vsub.s32 %v906, %v908
      %v910 = vrot.slane %v902, %v909
      %v912 = vunpack.c.l.s4 1983009808
      %v913 = vunpack.c.0.s8 %v912
      %v914 = vlaneseq
      %v915 = vshrl.u32 %v914, 7
      %v916 = vsub.s32 %v913, %v915
      %v917 = vrot.slane %v903, %v916
      %v918 = vcombine.low %v817, %v825
      %v919 = vcombine.high %v817, %v825
      %v921 = vunpack.c.l.s4 1983009808
      %v922 = vunpack.c.0.s8 %v921
      %v923 = vlaneseq
      %v924 = vshrl.u32 %v923, 7
      %v925 = vsub.s32 %v922, %v924
      %v926 = vrot.slane %v918, %v925
      %v928 = vunpack.c.l.s4 1983009808
      %v929 = vunpack.c.0.s8 %v928
      %v930 = vlaneseq
      %v931 = vshrl.u32 %v930, 7
      %v932 = vsub.s32 %v929, %v931
      %v933 = vrot.slane %v919, %v932
      %v934 = vcombine.low %v910, %v926
      %v935 = vcombine.high %v910, %v926
      %v937 = vunpack.c.l.s4 1934713408
      %v938 = vunpack.c.0.s8 %v937
      %v939 = vlaneseq
      %v940 = vshrl.u32 %v939, 7
      %v941 = vsub.s32 %v938, %v940
      %v942 = vrot.slane %v934, %v941
      %v944 = vunpack.c.l.s4 1934713408
      %v945 = vunpack.c.0.s8 %v944
      %v946 = vlaneseq
      %v947 = vshrl.u32 %v946, 7
      %v948 = vsub.s32 %v945, %v947
      %v949 = vrot.slane %v935, %v948
      %v950 = vcombine.low %v917, %v933
      %v951 = vcombine.high %v917, %v933
      %v953 = vunpack.c.l.s4 1934713408
      %v954 = vunpack.c.0.s8 %v953
      %v955 = vlaneseq
      %v956 = vshrl.u32 %v955, 7
      %v957 = vsub.s32 %v954, %v956
      %v958 = vrot.slane %v950, %v957
      %v960 = vunpack.c.l.s4 1934713408
      %v961 = vunpack.c.0.s8 %v960
      %v962 = vlaneseq
      %v963 = vshrl.u32 %v962, 7
      %v964 = vsub.s32 %v961, %v963
      %v965 = vrot.slane %v951, %v964
      %v966 = vcombine.high %v942, 0.0
      %v967 = vcombine.high %v949, 0.0
      %v968 = vcombine.high %v958, 0.0
      %v969 = vcombine.high %v965, 0.0
      %971 = vrot.lane.b32.xlu0 %v898, 16
      %v972 = vpop.permute.xlu0 %971
      %975 = vrot.lane.b32.xlu0 %v881, 32
      %v976 = vpop.permute.xlu0 %975
      %979 = vrot.lane.b32.xlu0 %v899, 48
      %v980 = vpop.permute.xlu0 %979
      %983 = vrot.lane.b32.xlu0 %v890, 64
      %v984 = vpop.permute.xlu0 %983
      %987 = vrot.lane.b32.xlu0 %v900, 80
      %v988 = vpop.permute.xlu0 %987
      %991 = vrot.lane.b32.xlu0 %v897, 96
      %v992 = vpop.permute.xlu0 %991
      %995 = vrot.lane.b32.xlu0 %v901, 112
      %v996 = vpop.permute.xlu0 %995
      %999 = vrot.lane.b32.xlu0 %v966, 16
      %v1000 = vpop.permute.xlu0 %999
      %1003 = vrot.lane.b32.xlu0 %v949, 32
      %v1004 = vpop.permute.xlu0 %1003
      %1007 = vrot.lane.b32.xlu0 %v967, 48
      %v1008 = vpop.permute.xlu0 %1007
      %1011 = vrot.lane.b32.xlu0 %v958, 64
      %v1012 = vpop.permute.xlu0 %1011
      %1015 = vrot.lane.b32.xlu0 %v968, 80
      %v1016 = vpop.permute.xlu0 %1015
      %1019 = vrot.lane.b32.xlu0 %v965, 96
      %v1020 = vpop.permute.xlu0 %1019
      %1023 = vrot.lane.b32.xlu0 %v969, 112
      %v1024 = vpop.permute.xlu0 %1023
      %v1026 = vsel %vm426, %v874, %v972
      %v1027 = vsel %vm428, %v1026, %v976
      %v1028 = vsel %vm430, %v1027, %v980
      %v1029 = vsel %vm432, %v1028, %v984
      %v1030 = vsel %vm434, %v1029, %v988
      %v1031 = vsel %vm436, %v1030, %v992
      %v1032 = vsel %vm438, %v1031, %v996
      %v1033 = vsel %vm426, %v942, %v1000
      %v1034 = vsel %vm428, %v1033, %v1004
      %v1035 = vsel %vm430, %v1034, %v1008
      %v1036 = vsel %vm432, %v1035, %v1012
      %v1037 = vsel %vm434, %v1036, %v1016
      %v1038 = vsel %vm436, %v1037, %v1020
      %v1039 = vsel %vm438, %v1038, %v1024
      %v1040 = vpack.c.bf16 %v1032, %v1032
      %v1041 = vpack.c.bf16 %v1039, %v1039
      %s1042 = scalar_lea.vmem %s1, 4
      %v1043 = vld [vmem:[%s1042] sm:$0x3]
      %v1045 = vsel %vm692, %v1043, 0
      %v1048 = vsel %vm696, %v1040, 0
      %v1051 = vsel %vm696, %v1041, 0
      %1053 = vmatprep.subr.bf16.mxu0 0
      %1054 = vmatpush1.bf16.msra.mxu0 0
      %1055 = vmatprep.subr.bf16.mxu0 0
      %1056 = vmatpush1.bf16.msra.mxu0 0
      %1057 = vmatprep.subr.bf16.mxu0 0
      %1058 = vmatpush1.bf16.msra.mxu0 0
      %1059 = vmatprep.subr.bf16.mxu0 0
      %1060 = vmatpush1.bf16.msra.mxu0 0
      %1061 = vmatprep.subr.bf16.mxu0 0
      %1062 = vmatpush1.bf16.msra.mxu0 0
      %1063 = vmatprep.subr.bf16.mxu0 0
      %1064 = vmatpush1.bf16.msra.mxu0 0
      %1065 = vmatprep.subr.bf16.mxu0 0
      %1066 = vmatpush1.bf16.msra.mxu0 0
      %1067 = vmatprep.subr.bf16.mxu0 %v1051
      %1068 = vmatpush1.bf16.msra.mxu0 %v1048
      %1069 = vmatprep.subr.bf16.mxu0 0
      %1070 = vmatpush2.bf16.msra.mxu0 0
      %1071 = vmatprep.subr.bf16.mxu0 0
      %1072 = vmatpush2.bf16.msra.mxu0 0
      %1073 = vmatprep.subr.bf16.mxu0 0
      %1074 = vmatpush2.bf16.msra.mxu0 0
      %1075 = vmatprep.subr.bf16.mxu0 0
      %1076 = vmatpush2.bf16.msra.mxu0 0
      %1077 = vmatprep.subr.bf16.mxu0 0
      %1078 = vmatpush2.bf16.msra.mxu0 0
      %1079 = vmatprep.subr.bf16.mxu0 0
      %1080 = vmatpush2.bf16.msra.mxu0 0
      %1081 = vmatprep.subr.bf16.mxu0 0
      %1082 = vmatpush2.bf16.msra.mxu0 0
      %1083 = vmatprep.subr.bf16.mxu0 0
      %1084 = vmatpush2.bf16.msra.mxu0 0
      %1085 = vmatprep.mubr.bf16.mxu0 0
      %1086 = vmatmul.mubr.bf16.gmra.mxu0 %v1045
      %v1087 = vpop.f32.mrf.mxu0
      %v1088 = vadd.f32 0.0, %v1087
      %v1089 = vpop.f32.mrf.mxu0
      %v1090 = vadd.f32 0.0, %v1089
      %v1091 = vpop.f32.mrf.mxu0
      %v1092 = vpop.f32.mrf.mxu0
      %1093 = vdwg.mxu0
      %v1094 = vadd.f32 %v788, %v1088
      %v1095 = vadd.f32 %v790, %v1090
      %v1096 = vld [vmem:[%s219 + $0x1] sm:$0xff]
      %v1097 = vld [vmem:[%s219 + $0x9] sm:$0xff]
      %v1098 = vld [vmem:[%s219 + $0x19] sm:$0xff]
      %v1099 = vld [vmem:[%s219 + $0x21] sm:$0xff]
      %v1100 = vld [vmem:[%s219 + $0x31] sm:$0xff]
      %v1101 = vld [vmem:[%s219 + $0x39] sm:$0xff]
      %v1102 = vld [vmem:[%s219 + $0x49] sm:$0xff]
      %v1103 = vld [vmem:[%s219 + $0x51] sm:$0xff]
      %v1104 = vcombine.low %v1096, %v1100
      %v1105 = vcombine.high %v1096, %v1100
      %v1107 = vunpack.c.l.s4 1983009808
      %v1108 = vunpack.c.0.s8 %v1107
      %v1109 = vlaneseq
      %v1110 = vshrl.u32 %v1109, 7
      %v1111 = vsub.s32 %v1108, %v1110
      %v1112 = vrot.slane %v1104, %v1111
      %v1114 = vunpack.c.l.s4 1983009808
      %v1115 = vunpack.c.0.s8 %v1114
      %v1116 = vlaneseq
      %v1117 = vshrl.u32 %v1116, 7
      %v1118 = vsub.s32 %v1115, %v1117
      %v1119 = vrot.slane %v1105, %v1118
      %v1120 = vcombine.low %v1098, %v1102
      %v1121 = vcombine.high %v1098, %v1102
      %v1123 = vunpack.c.l.s4 1983009808
      %v1124 = vunpack.c.0.s8 %v1123
      %v1125 = vlaneseq
      %v1126 = vshrl.u32 %v1125, 7
      %v1127 = vsub.s32 %v1124, %v1126
      %v1128 = vrot.slane %v1120, %v1127
      %v1130 = vunpack.c.l.s4 1983009808
      %v1131 = vunpack.c.0.s8 %v1130
      %v1132 = vlaneseq
      %v1133 = vshrl.u32 %v1132, 7
      %v1134 = vsub.s32 %v1131, %v1133
      %v1135 = vrot.slane %v1121, %v1134
      %v1136 = vcombine.low %v1112, %v1128
      %v1137 = vcombine.high %v1112, %v1128
      %v1139 = vunpack.c.l.s4 1934713408
      %v1140 = vunpack.c.0.s8 %v1139
      %v1141 = vlaneseq
      %v1142 = vshrl.u32 %v1141, 7
      %v1143 = vsub.s32 %v1140, %v1142
      %v1144 = vrot.slane %v1136, %v1143
      %v1146 = vunpack.c.l.s4 1934713408
      %v1147 = vunpack.c.0.s8 %v1146
      %v1148 = vlaneseq
      %v1149 = vshrl.u32 %v1148, 7
      %v1150 = vsub.s32 %v1147, %v1149
      %v1151 = vrot.slane %v1137, %v1150
      %v1152 = vcombine.low %v1119, %v1135
      %v1153 = vcombine.high %v1119, %v1135
      %v1155 = vunpack.c.l.s4 1934713408
      %v1156 = vunpack.c.0.s8 %v1155
      %v1157 = vlaneseq
      %v1158 = vshrl.u32 %v1157, 7
      %v1159 = vsub.s32 %v1156, %v1158
      %v1160 = vrot.slane %v1152, %v1159
      %v1162 = vunpack.c.l.s4 1934713408
      %v1163 = vunpack.c.0.s8 %v1162
      %v1164 = vlaneseq
      %v1165 = vshrl.u32 %v1164, 7
      %v1166 = vsub.s32 %v1163, %v1165
      %v1167 = vrot.slane %v1153, %v1166
      %v1168 = vcombine.high %v1144, 0.0
      %v1169 = vcombine.high %v1151, 0.0
      %v1170 = vcombine.high %v1160, 0.0
      %v1171 = vcombine.high %v1167, 0.0
      %v1172 = vcombine.low %v1097, %v1101
      %v1173 = vcombine.high %v1097, %v1101
      %v1175 = vunpack.c.l.s4 1983009808
      %v1176 = vunpack.c.0.s8 %v1175
      %v1177 = vlaneseq
      %v1178 = vshrl.u32 %v1177, 7
      %v1179 = vsub.s32 %v1176, %v1178
      %v1180 = vrot.slane %v1172, %v1179
      %v1182 = vunpack.c.l.s4 1983009808
      %v1183 = vunpack.c.0.s8 %v1182
      %v1184 = vlaneseq
      %v1185 = vshrl.u32 %v1184, 7
      %v1186 = vsub.s32 %v1183, %v1185
      %v1187 = vrot.slane %v1173, %v1186
      %v1188 = vcombine.low %v1099, %v1103
      %v1189 = vcombine.high %v1099, %v1103
      %v1191 = vunpack.c.l.s4 1983009808
      %v1192 = vunpack.c.0.s8 %v1191
      %v1193 = vlaneseq
      %v1194 = vshrl.u32 %v1193, 7
      %v1195 = vsub.s32 %v1192, %v1194
      %v1196 = vrot.slane %v1188, %v1195
      %v1198 = vunpack.c.l.s4 1983009808
      %v1199 = vunpack.c.0.s8 %v1198
      %v1200 = vlaneseq
      %v1201 = vshrl.u32 %v1200, 7
      %v1202 = vsub.s32 %v1199, %v1201
      %v1203 = vrot.slane %v1189, %v1202
      %v1204 = vcombine.low %v1180, %v1196
      %v1205 = vcombine.high %v1180, %v1196
      %v1207 = vunpack.c.l.s4 1934713408
      %v1208 = vunpack.c.0.s8 %v1207
      %v1209 = vlaneseq
      %v1210 = vshrl.u32 %v1209, 7
      %v1211 = vsub.s32 %v1208, %v1210
      %v1212 = vrot.slane %v1204, %v1211
      %v1214 = vunpack.c.l.s4 1934713408
      %v1215 = vunpack.c.0.s8 %v1214
      %v1216 = vlaneseq
      %v1217 = vshrl.u32 %v1216, 7
      %v1218 = vsub.s32 %v1215, %v1217
      %v1219 = vrot.slane %v1205, %v1218
      %v1220 = vcombine.low %v1187, %v1203
      %v1221 = vcombine.high %v1187, %v1203
      %v1223 = vunpack.c.l.s4 1934713408
      %v1224 = vunpack.c.0.s8 %v1223
      %v1225 = vlaneseq
      %v1226 = vshrl.u32 %v1225, 7
      %v1227 = vsub.s32 %v1224, %v1226
      %v1228 = vrot.slane %v1220, %v1227
      %v1230 = vunpack.c.l.s4 1934713408
      %v1231 = vunpack.c.0.s8 %v1230
      %v1232 = vlaneseq
      %v1233 = vshrl.u32 %v1232, 7
      %v1234 = vsub.s32 %v1231, %v1233
      %v1235 = vrot.slane %v1221, %v1234
      %v1236 = vcombine.high %v1212, 0.0
      %v1237 = vcombine.high %v1219, 0.0
      %v1238 = vcombine.high %v1228, 0.0
      %v1239 = vcombine.high %v1235, 0.0
      %1241 = vrot.lane.b32.xlu0 %v1168, 16
      %v1242 = vpop.permute.xlu0 %1241
      %1245 = vrot.lane.b32.xlu0 %v1151, 32
      %v1246 = vpop.permute.xlu0 %1245
      %1249 = vrot.lane.b32.xlu0 %v1169, 48
      %v1250 = vpop.permute.xlu0 %1249
      %1253 = vrot.lane.b32.xlu0 %v1160, 64
      %v1254 = vpop.permute.xlu0 %1253
      %1257 = vrot.lane.b32.xlu0 %v1170, 80
      %v1258 = vpop.permute.xlu0 %1257
      %1261 = vrot.lane.b32.xlu0 %v1167, 96
      %v1262 = vpop.permute.xlu0 %1261
      %1265 = vrot.lane.b32.xlu0 %v1171, 112
      %v1266 = vpop.permute.xlu0 %1265
      %1269 = vrot.lane.b32.xlu0 %v1236, 16
      %v1270 = vpop.permute.xlu0 %1269
      %1273 = vrot.lane.b32.xlu0 %v1219, 32
      %v1274 = vpop.permute.xlu0 %1273
      %1277 = vrot.lane.b32.xlu0 %v1237, 48
      %v1278 = vpop.permute.xlu0 %1277
      %1281 = vrot.lane.b32.xlu0 %v1228, 64
      %v1282 = vpop.permute.xlu0 %1281
      %1285 = vrot.lane.b32.xlu0 %v1238, 80
      %v1286 = vpop.permute.xlu0 %1285
      %1289 = vrot.lane.b32.xlu0 %v1235, 96
      %v1290 = vpop.permute.xlu0 %1289
      %1293 = vrot.lane.b32.xlu0 %v1239, 112
      %v1294 = vpop.permute.xlu0 %1293
      %v1296 = vsel %vm426, %v1144, %v1242
      %v1297 = vsel %vm428, %v1296, %v1246
      %v1298 = vsel %vm430, %v1297, %v1250
      %v1299 = vsel %vm432, %v1298, %v1254
      %v1300 = vsel %vm434, %v1299, %v1258
      %v1301 = vsel %vm436, %v1300, %v1262
      %v1302 = vsel %vm438, %v1301, %v1266
      %v1303 = vsel %vm426, %v1212, %v1270
      %v1304 = vsel %vm428, %v1303, %v1274
      %v1305 = vsel %vm430, %v1304, %v1278
      %v1306 = vsel %vm432, %v1305, %v1282
      %v1307 = vsel %vm434, %v1306, %v1286
      %v1308 = vsel %vm436, %v1307, %v1290
      %v1309 = vsel %vm438, %v1308, %v1294
      %v1310 = vpack.c.bf16 %v1302, %v1302
      %v1311 = vpack.c.bf16 %v1309, %v1309
      %s1312 = scalar_lea.vmem %s1, 6
      %v1313 = vld [vmem:[%s1312] sm:$0x3]
      %v1315 = vsel %vm692, %v1313, 0
      %v1318 = vsel %vm696, %v1310, 0
      %v1321 = vsel %vm696, %v1311, 0
      %1323 = vmatprep.subr.bf16.mxu0 0
      %1324 = vmatpush1.bf16.msra.mxu0 0
      %1325 = vmatprep.subr.bf16.mxu0 0
      %1326 = vmatpush1.bf16.msra.mxu0 0
      %1327 = vmatprep.subr.bf16.mxu0 0
      %1328 = vmatpush1.bf16.msra.mxu0 0
      %1329 = vmatprep.subr.bf16.mxu0 0
      %1330 = vmatpush1.bf16.msra.mxu0 0
      %1331 = vmatprep.subr.bf16.mxu0 0
      %1332 = vmatpush1.bf16.msra.mxu0 0
      %1333 = vmatprep.subr.bf16.mxu0 0
      %1334 = vmatpush1.bf16.msra.mxu0 0
      %1335 = vmatprep.subr.bf16.mxu0 0
      %1336 = vmatpush1.bf16.msra.mxu0 0
      %1337 = vmatprep.subr.bf16.mxu0 %v1321
      %1338 = vmatpush1.bf16.msra.mxu0 %v1318
      %1339 = vmatprep.subr.bf16.mxu0 0
      %1340 = vmatpush2.bf16.msra.mxu0 0
      %1341 = vmatprep.subr.bf16.mxu0 0
      %1342 = vmatpush2.bf16.msra.mxu0 0
      %1343 = vmatprep.subr.bf16.mxu0 0
      %1344 = vmatpush2.bf16.msra.mxu0 0
      %1345 = vmatprep.subr.bf16.mxu0 0
      %1346 = vmatpush2.bf16.msra.mxu0 0
      %1347 = vmatprep.subr.bf16.mxu0 0
      %1348 = vmatpush2.bf16.msra.mxu0 0
      %1349 = vmatprep.subr.bf16.mxu0 0
      %1350 = vmatpush2.bf16.msra.mxu0 0
      %1351 = vmatprep.subr.bf16.mxu0 0
      %1352 = vmatpush2.bf16.msra.mxu0 0
      %1353 = vmatprep.subr.bf16.mxu0 0
      %1354 = vmatpush2.bf16.msra.mxu0 0
      %1355 = vmatprep.mubr.bf16.mxu0 0
      %1356 = vmatmul.mubr.bf16.gmra.mxu0 %v1315
      %v1357 = vpop.f32.mrf.mxu0
      %v1358 = vadd.f32 0.0, %v1357
      %v1359 = vpop.f32.mrf.mxu0
      %v1360 = vadd.f32 0.0, %v1359
      %v1361 = vpop.f32.mrf.mxu0
      %v1362 = vpop.f32.mrf.mxu0
      %1363 = vdwg.mxu0
      %v1364 = vadd.f32 %v1094, %v1358
      %v1365 = vadd.f32 %v1095, %v1360
      %v1366 = vld [vmem:[%s219 + $0x1] sm:$0xff]
      %v1367 = vld [vmem:[%s219 + $0x9] sm:$0xff]
      %v1368 = vld [vmem:[%s219 + $0x19] sm:$0xff]
      %v1369 = vld [vmem:[%s219 + $0x21] sm:$0xff]
      %v1370 = vld [vmem:[%s219 + $0x31] sm:$0xff]
      %v1371 = vld [vmem:[%s219 + $0x39] sm:$0xff]
      %v1372 = vld [vmem:[%s219 + $0x49] sm:$0xff]
      %v1373 = vld [vmem:[%s219 + $0x51] sm:$0xff]
      %1382 = vrot.lane.b32.xlu0 %v1366, 127
      %v1383 = vpop.permute.xlu0 %1382
      %1384 = vrot.lane.b32.xlu0 %v1367, 127
      %v1385 = vpop.permute.xlu0 %1384
      %1386 = vrot.lane.b32.xlu0 %v1368, 127
      %v1387 = vpop.permute.xlu0 %1386
      %1388 = vrot.lane.b32.xlu0 %v1369, 127
      %v1389 = vpop.permute.xlu0 %1388
      %1390 = vrot.lane.b32.xlu0 %v1370, 127
      %v1391 = vpop.permute.xlu0 %1390
      %1392 = vrot.lane.b32.xlu0 %v1371, 127
      %v1393 = vpop.permute.xlu0 %1392
      %1394 = vrot.lane.b32.xlu0 %v1372, 127
      %v1395 = vpop.permute.xlu0 %1394
      %1396 = vrot.lane.b32.xlu0 %v1373, 127
      %v1397 = vpop.permute.xlu0 %1396
      %v1406 = vcombine.low %v1383, %v1391
      %v1407 = vcombine.high %v1383, %v1391
      %v1409 = vunpack.c.l.s4 1983009808
      %v1410 = vunpack.c.0.s8 %v1409
      %v1411 = vlaneseq
      %v1412 = vshrl.u32 %v1411, 7
      %v1413 = vsub.s32 %v1410, %v1412
      %v1414 = vrot.slane %v1406, %v1413
      %v1416 = vunpack.c.l.s4 1983009808
      %v1417 = vunpack.c.0.s8 %v1416
      %v1418 = vlaneseq
      %v1419 = vshrl.u32 %v1418, 7
      %v1420 = vsub.s32 %v1417, %v1419
      %v1421 = vrot.slane %v1407, %v1420
      %v1422 = vcombine.low %v1387, %v1395
      %v1423 = vcombine.high %v1387, %v1395
      %v1425 = vunpack.c.l.s4 1983009808
      %v1426 = vunpack.c.0.s8 %v1425
      %v1427 = vlaneseq
      %v1428 = vshrl.u32 %v1427, 7
      %v1429 = vsub.s32 %v1426, %v1428
      %v1430 = vrot.slane %v1422, %v1429
      %v1432 = vunpack.c.l.s4 1983009808
      %v1433 = vunpack.c.0.s8 %v1432
      %v1434 = vlaneseq
      %v1435 = vshrl.u32 %v1434, 7
      %v1436 = vsub.s32 %v1433, %v1435
      %v1437 = vrot.slane %v1423, %v1436
      %v1438 = vcombine.low %v1414, %v1430
      %v1439 = vcombine.high %v1414, %v1430
      %v1441 = vunpack.c.l.s4 1934713408
      %v1442 = vunpack.c.0.s8 %v1441
      %v1443 = vlaneseq
      %v1444 = vshrl.u32 %v1443, 7
      %v1445 = vsub.s32 %v1442, %v1444
      %v1446 = vrot.slane %v1438, %v1445
      %v1448 = vunpack.c.l.s4 1934713408
      %v1449 = vunpack.c.0.s8 %v1448
      %v1450 = vlaneseq
      %v1451 = vshrl.u32 %v1450, 7
      %v1452 = vsub.s32 %v1449, %v1451
      %v1453 = vrot.slane %v1439, %v1452
      %v1454 = vcombine.low %v1421, %v1437
      %v1455 = vcombine.high %v1421, %v1437
      %v1457 = vunpack.c.l.s4 1934713408
      %v1458 = vunpack.c.0.s8 %v1457
      %v1459 = vlaneseq
      %v1460 = vshrl.u32 %v1459, 7
      %v1461 = vsub.s32 %v1458, %v1460
      %v1462 = vrot.slane %v1454, %v1461
      %v1464 = vunpack.c.l.s4 1934713408
      %v1465 = vunpack.c.0.s8 %v1464
      %v1466 = vlaneseq
      %v1467 = vshrl.u32 %v1466, 7
      %v1468 = vsub.s32 %v1465, %v1467
      %v1469 = vrot.slane %v1455, %v1468
      %v1470 = vcombine.high %v1446, 0.0
      %v1471 = vcombine.high %v1453, 0.0
      %v1472 = vcombine.high %v1462, 0.0
      %v1473 = vcombine.high %v1469, 0.0
      %v1474 = vcombine.low %v1385, %v1393
      %v1475 = vcombine.high %v1385, %v1393
      %v1477 = vunpack.c.l.s4 1983009808
      %v1478 = vunpack.c.0.s8 %v1477
      %v1479 = vlaneseq
      %v1480 = vshrl.u32 %v1479, 7
      %v1481 = vsub.s32 %v1478, %v1480
      %v1482 = vrot.slane %v1474, %v1481
      %v1484 = vunpack.c.l.s4 1983009808
      %v1485 = vunpack.c.0.s8 %v1484
      %v1486 = vlaneseq
      %v1487 = vshrl.u32 %v1486, 7
      %v1488 = vsub.s32 %v1485, %v1487
      %v1489 = vrot.slane %v1475, %v1488
      %v1490 = vcombine.low %v1389, %v1397
      %v1491 = vcombine.high %v1389, %v1397
      %v1493 = vunpack.c.l.s4 1983009808
      %v1494 = vunpack.c.0.s8 %v1493
      %v1495 = vlaneseq
      %v1496 = vshrl.u32 %v1495, 7
      %v1497 = vsub.s32 %v1494, %v1496
      %v1498 = vrot.slane %v1490, %v1497
      %v1500 = vunpack.c.l.s4 1983009808
      %v1501 = vunpack.c.0.s8 %v1500
      %v1502 = vlaneseq
      %v1503 = vshrl.u32 %v1502, 7
      %v1504 = vsub.s32 %v1501, %v1503
      %v1505 = vrot.slane %v1491, %v1504
      %v1506 = vcombine.low %v1482, %v1498
      %v1507 = vcombine.high %v1482, %v1498
      %v1509 = vunpack.c.l.s4 1934713408
      %v1510 = vunpack.c.0.s8 %v1509
      %v1511 = vlaneseq
      %v1512 = vshrl.u32 %v1511, 7
      %v1513 = vsub.s32 %v1510, %v1512
      %v1514 = vrot.slane %v1506, %v1513
      %v1516 = vunpack.c.l.s4 1934713408
      %v1517 = vunpack.c.0.s8 %v1516
      %v1518 = vlaneseq
      %v1519 = vshrl.u32 %v1518, 7
      %v1520 = vsub.s32 %v1517, %v1519
      %v1521 = vrot.slane %v1507, %v1520
      %v1522 = vcombine.low %v1489, %v1505
      %v1523 = vcombine.high %v1489, %v1505
      %v1525 = vunpack.c.l.s4 1934713408
      %v1526 = vunpack.c.0.s8 %v1525
      %v1527 = vlaneseq
      %v1528 = vshrl.u32 %v1527, 7
      %v1529 = vsub.s32 %v1526, %v1528
      %v1530 = vrot.slane %v1522, %v1529
      %v1532 = vunpack.c.l.s4 1934713408
      %v1533 = vunpack.c.0.s8 %v1532
      %v1534 = vlaneseq
      %v1535 = vshrl.u32 %v1534, 7
      %v1536 = vsub.s32 %v1533, %v1535
      %v1537 = vrot.slane %v1523, %v1536
      %v1538 = vcombine.high %v1514, 0.0
      %v1539 = vcombine.high %v1521, 0.0
      %v1540 = vcombine.high %v1530, 0.0
      %v1541 = vcombine.high %v1537, 0.0
      %1543 = vrot.lane.b32.xlu0 %v1470, 16
      %v1544 = vpop.permute.xlu0 %1543
      %1547 = vrot.lane.b32.xlu0 %v1453, 32
      %v1548 = vpop.permute.xlu0 %1547
      %1551 = vrot.lane.b32.xlu0 %v1471, 48
      %v1552 = vpop.permute.xlu0 %1551
      %1555 = vrot.lane.b32.xlu0 %v1462, 64
      %v1556 = vpop.permute.xlu0 %1555
      %1559 = vrot.lane.b32.xlu0 %v1472, 80
      %v1560 = vpop.permute.xlu0 %1559
      %1563 = vrot.lane.b32.xlu0 %v1469, 96
      %v1564 = vpop.permute.xlu0 %1563
      %1567 = vrot.lane.b32.xlu0 %v1473, 112
      %v1568 = vpop.permute.xlu0 %1567
      %1571 = vrot.lane.b32.xlu0 %v1538, 16
      %v1572 = vpop.permute.xlu0 %1571
      %1575 = vrot.lane.b32.xlu0 %v1521, 32
      %v1576 = vpop.permute.xlu0 %1575
      %1579 = vrot.lane.b32.xlu0 %v1539, 48
      %v1580 = vpop.permute.xlu0 %1579
      %1583 = vrot.lane.b32.xlu0 %v1530, 64
      %v1584 = vpop.permute.xlu0 %1583
      %1587 = vrot.lane.b32.xlu0 %v1540, 80
      %v1588 = vpop.permute.xlu0 %1587
      %1591 = vrot.lane.b32.xlu0 %v1537, 96
      %v1592 = vpop.permute.xlu0 %1591
      %1595 = vrot.lane.b32.xlu0 %v1541, 112
      %v1596 = vpop.permute.xlu0 %1595
      %v1598 = vsel %vm426, %v1446, %v1544
      %v1599 = vsel %vm428, %v1598, %v1548
      %v1600 = vsel %vm430, %v1599, %v1552
      %v1601 = vsel %vm432, %v1600, %v1556
      %v1602 = vsel %vm434, %v1601, %v1560
      %v1603 = vsel %vm436, %v1602, %v1564
      %v1604 = vsel %vm438, %v1603, %v1568
      %v1605 = vsel %vm426, %v1514, %v1572
      %v1606 = vsel %vm428, %v1605, %v1576
      %v1607 = vsel %vm430, %v1606, %v1580
      %v1608 = vsel %vm432, %v1607, %v1584
      %v1609 = vsel %vm434, %v1608, %v1588
      %v1610 = vsel %vm436, %v1609, %v1592
      %v1611 = vsel %vm438, %v1610, %v1596
      %v1612 = vpack.c.bf16 %v1604, %v1604
      %v1613 = vpack.c.bf16 %v1611, %v1611
      %s1614 = scalar_lea.vmem %s1, 8
      %v1615 = vld [vmem:[%s1614] sm:$0x3]
      %v1617 = vsel %vm692, %v1615, 0
      %v1620 = vsel %vm696, %v1612, 0
      %v1623 = vsel %vm696, %v1613, 0
      %1625 = vmatprep.subr.bf16.mxu0 0
      %1626 = vmatpush1.bf16.msra.mxu0 0
      %1627 = vmatprep.subr.bf16.mxu0 0
      %1628 = vmatpush1.bf16.msra.mxu0 0
      %1629 = vmatprep.subr.bf16.mxu0 0
      %1630 = vmatpush1.bf16.msra.mxu0 0
      %1631 = vmatprep.subr.bf16.mxu0 0
      %1632 = vmatpush1.bf16.msra.mxu0 0
      %1633 = vmatprep.subr.bf16.mxu0 0
      %1634 = vmatpush1.bf16.msra.mxu0 0
      %1635 = vmatprep.subr.bf16.mxu0 0
      %1636 = vmatpush1.bf16.msra.mxu0 0
      %1637 = vmatprep.subr.bf16.mxu0 0
      %1638 = vmatpush1.bf16.msra.mxu0 0
      %1639 = vmatprep.subr.bf16.mxu0 %v1623
      %1640 = vmatpush1.bf16.msra.mxu0 %v1620
      %1641 = vmatprep.subr.bf16.mxu0 0
      %1642 = vmatpush2.bf16.msra.mxu0 0
      %1643 = vmatprep.subr.bf16.mxu0 0
      %1644 = vmatpush2.bf16.msra.mxu0 0
      %1645 = vmatprep.subr.bf16.mxu0 0
      %1646 = vmatpush2.bf16.msra.mxu0 0
      %1647 = vmatprep.subr.bf16.mxu0 0
      %1648 = vmatpush2.bf16.msra.mxu0 0
      %1649 = vmatprep.subr.bf16.mxu0 0
      %1650 = vmatpush2.bf16.msra.mxu0 0
      %1651 = vmatprep.subr.bf16.mxu0 0
      %1652 = vmatpush2.bf16.msra.mxu0 0
      %1653 = vmatprep.subr.bf16.mxu0 0
      %1654 = vmatpush2.bf16.msra.mxu0 0
      %1655 = vmatprep.subr.bf16.mxu0 0
      %1656 = vmatpush2.bf16.msra.mxu0 0
      %1657 = vmatprep.mubr.bf16.mxu0 0
      %1658 = vmatmul.mubr.bf16.gmra.mxu0 %v1617
      %v1659 = vpop.f32.mrf.mxu0
      %v1660 = vadd.f32 0.0, %v1659
      %v1661 = vpop.f32.mrf.mxu0
      %v1662 = vadd.f32 0.0, %v1661
      %v1663 = vpop.f32.mrf.mxu0
      %v1664 = vpop.f32.mrf.mxu0
      %1665 = vdwg.mxu0
      %v1666 = vadd.f32 %v1364, %v1660
      %v1667 = vadd.f32 %v1365, %v1662
      %v1668 = vld [vmem:[%s219 + $0x1] sm:$0xff]
      %v1669 = vld [vmem:[%s219 + $0x9] sm:$0xff]
      %v1670 = vld [vmem:[%s219 + $0x19] sm:$0xff]
      %v1671 = vld [vmem:[%s219 + $0x21] sm:$0xff]
      %v1672 = vld [vmem:[%s219 + $0x31] sm:$0xff]
      %v1673 = vld [vmem:[%s219 + $0x39] sm:$0xff]
      %v1674 = vld [vmem:[%s219 + $0x49] sm:$0xff]
      %v1675 = vld [vmem:[%s219 + $0x51] sm:$0xff]
      %1684 = vrot.lane.b32.xlu0 %v1668, 126
      %v1685 = vpop.permute.xlu0 %1684
      %1686 = vrot.lane.b32.xlu0 %v1669, 126
      %v1687 = vpop.permute.xlu0 %1686
      %1688 = vrot.lane.b32.xlu0 %v1670, 126
      %v1689 = vpop.permute.xlu0 %1688
      %1690 = vrot.lane.b32.xlu0 %v1671, 126
      %v1691 = vpop.permute.xlu0 %1690
      %1692 = vrot.lane.b32.xlu0 %v1672, 126
      %v1693 = vpop.permute.xlu0 %1692
      %1694 = vrot.lane.b32.xlu0 %v1673, 126
      %v1695 = vpop.permute.xlu0 %1694
      %1696 = vrot.lane.b32.xlu0 %v1674, 126
      %v1697 = vpop.permute.xlu0 %1696
      %1698 = vrot.lane.b32.xlu0 %v1675, 126
      %v1699 = vpop.permute.xlu0 %1698
      %v1708 = vcombine.low %v1685, %v1693
      %v1709 = vcombine.high %v1685, %v1693
      %v1711 = vunpack.c.l.s4 1983009808
      %v1712 = vunpack.c.0.s8 %v1711
      %v1713 = vlaneseq
      %v1714 = vshrl.u32 %v1713, 7
      %v1715 = vsub.s32 %v1712, %v1714
      %v1716 = vrot.slane %v1708, %v1715
      %v1718 = vunpack.c.l.s4 1983009808
      %v1719 = vunpack.c.0.s8 %v1718
      %v1720 = vlaneseq
      %v1721 = vshrl.u32 %v1720, 7
      %v1722 = vsub.s32 %v1719, %v1721
      %v1723 = vrot.slane %v1709, %v1722
      %v1724 = vcombine.low %v1689, %v1697
      %v1725 = vcombine.high %v1689, %v1697
      %v1727 = vunpack.c.l.s4 1983009808
      %v1728 = vunpack.c.0.s8 %v1727
      %v1729 = vlaneseq
      %v1730 = vshrl.u32 %v1729, 7
      %v1731 = vsub.s32 %v1728, %v1730
      %v1732 = vrot.slane %v1724, %v1731
      %v1734 = vunpack.c.l.s4 1983009808
      %v1735 = vunpack.c.0.s8 %v1734
      %v1736 = vlaneseq
      %v1737 = vshrl.u32 %v1736, 7
      %v1738 = vsub.s32 %v1735, %v1737
      %v1739 = vrot.slane %v1725, %v1738
      %v1740 = vcombine.low %v1716, %v1732
      %v1741 = vcombine.high %v1716, %v1732
      %v1743 = vunpack.c.l.s4 1934713408
      %v1744 = vunpack.c.0.s8 %v1743
      %v1745 = vlaneseq
      %v1746 = vshrl.u32 %v1745, 7
      %v1747 = vsub.s32 %v1744, %v1746
      %v1748 = vrot.slane %v1740, %v1747
      %v1750 = vunpack.c.l.s4 1934713408
      %v1751 = vunpack.c.0.s8 %v1750
      %v1752 = vlaneseq
      %v1753 = vshrl.u32 %v1752, 7
      %v1754 = vsub.s32 %v1751, %v1753
      %v1755 = vrot.slane %v1741, %v1754
      %v1756 = vcombine.low %v1723, %v1739
      %v1757 = vcombine.high %v1723, %v1739
      %v1759 = vunpack.c.l.s4 1934713408
      %v1760 = vunpack.c.0.s8 %v1759
      %v1761 = vlaneseq
      %v1762 = vshrl.u32 %v1761, 7
      %v1763 = vsub.s32 %v1760, %v1762
      %v1764 = vrot.slane %v1756, %v1763
      %v1766 = vunpack.c.l.s4 1934713408
      %v1767 = vunpack.c.0.s8 %v1766
      %v1768 = vlaneseq
      %v1769 = vshrl.u32 %v1768, 7
      %v1770 = vsub.s32 %v1767, %v1769
      %v1771 = vrot.slane %v1757, %v1770
      %v1772 = vcombine.high %v1748, 0.0
      %v1773 = vcombine.high %v1755, 0.0
      %v1774 = vcombine.high %v1764, 0.0
      %v1775 = vcombine.high %v1771, 0.0
      %v1776 = vcombine.low %v1687, %v1695
      %v1777 = vcombine.high %v1687, %v1695
      %v1779 = vunpack.c.l.s4 1983009808
      %v1780 = vunpack.c.0.s8 %v1779
      %v1781 = vlaneseq
      %v1782 = vshrl.u32 %v1781, 7
      %v1783 = vsub.s32 %v1780, %v1782
      %v1784 = vrot.slane %v1776, %v1783
      %v1786 = vunpack.c.l.s4 1983009808
      %v1787 = vunpack.c.0.s8 %v1786
      %v1788 = vlaneseq
      %v1789 = vshrl.u32 %v1788, 7
      %v1790 = vsub.s32 %v1787, %v1789
      %v1791 = vrot.slane %v1777, %v1790
      %v1792 = vcombine.low %v1691, %v1699
      %v1793 = vcombine.high %v1691, %v1699
      %v1795 = vunpack.c.l.s4 1983009808
      %v1796 = vunpack.c.0.s8 %v1795
      %v1797 = vlaneseq
      %v1798 = vshrl.u32 %v1797, 7
      %v1799 = vsub.s32 %v1796, %v1798
      %v1800 = vrot.slane %v1792, %v1799
      %v1802 = vunpack.c.l.s4 1983009808
      %v1803 = vunpack.c.0.s8 %v1802
      %v1804 = vlaneseq
      %v1805 = vshrl.u32 %v1804, 7
      %v1806 = vsub.s32 %v1803, %v1805
      %v1807 = vrot.slane %v1793, %v1806
      %v1808 = vcombine.low %v1784, %v1800
      %v1809 = vcombine.high %v1784, %v1800
      %v1811 = vunpack.c.l.s4 1934713408
      %v1812 = vunpack.c.0.s8 %v1811
      %v1813 = vlaneseq
      %v1814 = vshrl.u32 %v1813, 7
      %v1815 = vsub.s32 %v1812, %v1814
      %v1816 = vrot.slane %v1808, %v1815
      %v1818 = vunpack.c.l.s4 1934713408
      %v1819 = vunpack.c.0.s8 %v1818
      %v1820 = vlaneseq
      %v1821 = vshrl.u32 %v1820, 7
      %v1822 = vsub.s32 %v1819, %v1821
      %v1823 = vrot.slane %v1809, %v1822
      %v1824 = vcombine.low %v1791, %v1807
      %v1825 = vcombine.high %v1791, %v1807
      %v1827 = vunpack.c.l.s4 1934713408
      %v1828 = vunpack.c.0.s8 %v1827
      %v1829 = vlaneseq
      %v1830 = vshrl.u32 %v1829, 7
      %v1831 = vsub.s32 %v1828, %v1830
      %v1832 = vrot.slane %v1824, %v1831
      %v1834 = vunpack.c.l.s4 1934713408
      %v1835 = vunpack.c.0.s8 %v1834
      %v1836 = vlaneseq
      %v1837 = vshrl.u32 %v1836, 7
      %v1838 = vsub.s32 %v1835, %v1837
      %v1839 = vrot.slane %v1825, %v1838
      %v1840 = vcombine.high %v1816, 0.0
      %v1841 = vcombine.high %v1823, 0.0
      %v1842 = vcombine.high %v1832, 0.0
      %v1843 = vcombine.high %v1839, 0.0
      %1845 = vrot.lane.b32.xlu0 %v1772, 16
      %v1846 = vpop.permute.xlu0 %1845
      %1849 = vrot.lane.b32.xlu0 %v1755, 32
      %v1850 = vpop.permute.xlu0 %1849
      %1853 = vrot.lane.b32.xlu0 %v1773, 48
      %v1854 = vpop.permute.xlu0 %1853
      %1857 = vrot.lane.b32.xlu0 %v1764, 64
      %v1858 = vpop.permute.xlu0 %1857
      %1861 = vrot.lane.b32.xlu0 %v1774, 80
      %v1862 = vpop.permute.xlu0 %1861
      %1865 = vrot.lane.b32.xlu0 %v1771, 96
      %v1866 = vpop.permute.xlu0 %1865
      %1869 = vrot.lane.b32.xlu0 %v1775, 112
      %v1870 = vpop.permute.xlu0 %1869
      %1873 = vrot.lane.b32.xlu0 %v1840, 16
      %v1874 = vpop.permute.xlu0 %1873
      %1877 = vrot.lane.b32.xlu0 %v1823, 32
      %v1878 = vpop.permute.xlu0 %1877
      %1881 = vrot.lane.b32.xlu0 %v1841, 48
      %v1882 = vpop.permute.xlu0 %1881
      %1885 = vrot.lane.b32.xlu0 %v1832, 64
      %v1886 = vpop.permute.xlu0 %1885
      %1889 = vrot.lane.b32.xlu0 %v1842, 80
      %v1890 = vpop.permute.xlu0 %1889
      %1893 = vrot.lane.b32.xlu0 %v1839, 96
      %v1894 = vpop.permute.xlu0 %1893
      %1897 = vrot.lane.b32.xlu0 %v1843, 112
      %v1898 = vpop.permute.xlu0 %1897
      %v1900 = vsel %vm426, %v1748, %v1846
      %v1901 = vsel %vm428, %v1900, %v1850
      %v1902 = vsel %vm430, %v1901, %v1854
      %v1903 = vsel %vm432, %v1902, %v1858
      %v1904 = vsel %vm434, %v1903, %v1862
      %v1905 = vsel %vm436, %v1904, %v1866
      %v1906 = vsel %vm438, %v1905, %v1870
      %v1907 = vsel %vm426, %v1816, %v1874
      %v1908 = vsel %vm428, %v1907, %v1878
      %v1909 = vsel %vm430, %v1908, %v1882
      %v1910 = vsel %vm432, %v1909, %v1886
      %v1911 = vsel %vm434, %v1910, %v1890
      %v1912 = vsel %vm436, %v1911, %v1894
      %v1913 = vsel %vm438, %v1912, %v1898
      %v1914 = vpack.c.bf16 %v1906, %v1906
      %v1915 = vpack.c.bf16 %v1913, %v1913
      %s1916 = scalar_lea.vmem %s1, 10
      %v1917 = vld [vmem:[%s1916] sm:$0x3]
      %v1919 = vsel %vm692, %v1917, 0
      %v1922 = vsel %vm696, %v1914, 0
      %v1925 = vsel %vm696, %v1915, 0
      %1927 = vmatprep.subr.bf16.mxu0 0
      %1928 = vmatpush1.bf16.msra.mxu0 0
      %1929 = vmatprep.subr.bf16.mxu0 0
      %1930 = vmatpush1.bf16.msra.mxu0 0
      %1931 = vmatprep.subr.bf16.mxu0 0
      %1932 = vmatpush1.bf16.msra.mxu0 0
      %1933 = vmatprep.subr.bf16.mxu0 0
      %1934 = vmatpush1.bf16.msra.mxu0 0
      %1935 = vmatprep.subr.bf16.mxu0 0
      %1936 = vmatpush1.bf16.msra.mxu0 0
      %1937 = vmatprep.subr.bf16.mxu0 0
      %1938 = vmatpush1.bf16.msra.mxu0 0
      %1939 = vmatprep.subr.bf16.mxu0 0
      %1940 = vmatpush1.bf16.msra.mxu0 0
      %1941 = vmatprep.subr.bf16.mxu0 %v1925
      %1942 = vmatpush1.bf16.msra.mxu0 %v1922
      %1943 = vmatprep.subr.bf16.mxu0 0
      %1944 = vmatpush2.bf16.msra.mxu0 0
      %1945 = vmatprep.subr.bf16.mxu0 0
      %1946 = vmatpush2.bf16.msra.mxu0 0
      %1947 = vmatprep.subr.bf16.mxu0 0
      %1948 = vmatpush2.bf16.msra.mxu0 0
      %1949 = vmatprep.subr.bf16.mxu0 0
      %1950 = vmatpush2.bf16.msra.mxu0 0
      %1951 = vmatprep.subr.bf16.mxu0 0
      %1952 = vmatpush2.bf16.msra.mxu0 0
      %1953 = vmatprep.subr.bf16.mxu0 0
      %1954 = vmatpush2.bf16.msra.mxu0 0
      %1955 = vmatprep.subr.bf16.mxu0 0
      %1956 = vmatpush2.bf16.msra.mxu0 0
      %1957 = vmatprep.subr.bf16.mxu0 0
      %1958 = vmatpush2.bf16.msra.mxu0 0
      %1959 = vmatprep.mubr.bf16.mxu0 0
      %1960 = vmatmul.mubr.bf16.gmra.mxu0 %v1919
      %v1961 = vpop.f32.mrf.mxu0
      %v1962 = vadd.f32 0.0, %v1961
      %v1963 = vpop.f32.mrf.mxu0
      %v1964 = vadd.f32 0.0, %v1963
      %v1965 = vpop.f32.mrf.mxu0
      %v1966 = vpop.f32.mrf.mxu0
      %1967 = vdwg.mxu0
      %v1968 = vadd.f32 %v1666, %v1962
      %v1969 = vadd.f32 %v1667, %v1964
      %v1970 = vld [vmem:[%s219 + $0x2] sm:$0xff]
      %v1971 = vld [vmem:[%s219 + $0xa] sm:$0xff]
      %v1972 = vld [vmem:[%s219 + $0x1a] sm:$0xff]
      %v1973 = vld [vmem:[%s219 + $0x22] sm:$0xff]
      %v1974 = vld [vmem:[%s219 + $0x32] sm:$0xff]
      %v1975 = vld [vmem:[%s219 + $0x3a] sm:$0xff]
      %v1976 = vld [vmem:[%s219 + $0x4a] sm:$0xff]
      %v1977 = vld [vmem:[%s219 + $0x52] sm:$0xff]
      %v1978 = vcombine.low %v1970, %v1974
      %v1979 = vcombine.high %v1970, %v1974
      %v1981 = vunpack.c.l.s4 1983009808
      %v1982 = vunpack.c.0.s8 %v1981
      %v1983 = vlaneseq
      %v1984 = vshrl.u32 %v1983, 7
      %v1985 = vsub.s32 %v1982, %v1984
      %v1986 = vrot.slane %v1978, %v1985
      %v1988 = vunpack.c.l.s4 1983009808
      %v1989 = vunpack.c.0.s8 %v1988
      %v1990 = vlaneseq
      %v1991 = vshrl.u32 %v1990, 7
      %v1992 = vsub.s32 %v1989, %v1991
      %v1993 = vrot.slane %v1979, %v1992
      %v1994 = vcombine.low %v1972, %v1976
      %v1995 = vcombine.high %v1972, %v1976
      %v1997 = vunpack.c.l.s4 1983009808
      %v1998 = vunpack.c.0.s8 %v1997
      %v1999 = vlaneseq
      %v2000 = vshrl.u32 %v1999, 7
      %v2001 = vsub.s32 %v1998, %v2000
      %v2002 = vrot.slane %v1994, %v2001
      %v2004 = vunpack.c.l.s4 1983009808
      %v2005 = vunpack.c.0.s8 %v2004
      %v2006 = vlaneseq
      %v2007 = vshrl.u32 %v2006, 7
      %v2008 = vsub.s32 %v2005, %v2007
      %v2009 = vrot.slane %v1995, %v2008
      %v2010 = vcombine.low %v1986, %v2002
      %v2011 = vcombine.high %v1986, %v2002
      %v2013 = vunpack.c.l.s4 1934713408
      %v2014 = vunpack.c.0.s8 %v2013
      %v2015 = vlaneseq
      %v2016 = vshrl.u32 %v2015, 7
      %v2017 = vsub.s32 %v2014, %v2016
      %v2018 = vrot.slane %v2010, %v2017
      %v2020 = vunpack.c.l.s4 1934713408
      %v2021 = vunpack.c.0.s8 %v2020
      %v2022 = vlaneseq
      %v2023 = vshrl.u32 %v2022, 7
      %v2024 = vsub.s32 %v2021, %v2023
      %v2025 = vrot.slane %v2011, %v2024
      %v2026 = vcombine.low %v1993, %v2009
      %v2027 = vcombine.high %v1993, %v2009
      %v2029 = vunpack.c.l.s4 1934713408
      %v2030 = vunpack.c.0.s8 %v2029
      %v2031 = vlaneseq
      %v2032 = vshrl.u32 %v2031, 7
      %v2033 = vsub.s32 %v2030, %v2032
      %v2034 = vrot.slane %v2026, %v2033
      %v2036 = vunpack.c.l.s4 1934713408
      %v2037 = vunpack.c.0.s8 %v2036
      %v2038 = vlaneseq
      %v2039 = vshrl.u32 %v2038, 7
      %v2040 = vsub.s32 %v2037, %v2039
      %v2041 = vrot.slane %v2027, %v2040
      %v2042 = vcombine.high %v2018, 0.0
      %v2043 = vcombine.high %v2025, 0.0
      %v2044 = vcombine.high %v2034, 0.0
      %v2045 = vcombine.high %v2041, 0.0
      %v2046 = vcombine.low %v1971, %v1975
      %v2047 = vcombine.high %v1971, %v1975
      %v2049 = vunpack.c.l.s4 1983009808
      %v2050 = vunpack.c.0.s8 %v2049
      %v2051 = vlaneseq
      %v2052 = vshrl.u32 %v2051, 7
      %v2053 = vsub.s32 %v2050, %v2052
      %v2054 = vrot.slane %v2046, %v2053
      %v2056 = vunpack.c.l.s4 1983009808
      %v2057 = vunpack.c.0.s8 %v2056
      %v2058 = vlaneseq
      %v2059 = vshrl.u32 %v2058, 7
      %v2060 = vsub.s32 %v2057, %v2059
      %v2061 = vrot.slane %v2047, %v2060
      %v2062 = vcombine.low %v1973, %v1977
      %v2063 = vcombine.high %v1973, %v1977
      %v2065 = vunpack.c.l.s4 1983009808
      %v2066 = vunpack.c.0.s8 %v2065
      %v2067 = vlaneseq
      %v2068 = vshrl.u32 %v2067, 7
      %v2069 = vsub.s32 %v2066, %v2068
      %v2070 = vrot.slane %v2062, %v2069
      %v2072 = vunpack.c.l.s4 1983009808
      %v2073 = vunpack.c.0.s8 %v2072
      %v2074 = vlaneseq
      %v2075 = vshrl.u32 %v2074, 7
      %v2076 = vsub.s32 %v2073, %v2075
      %v2077 = vrot.slane %v2063, %v2076
      %v2078 = vcombine.low %v2054, %v2070
      %v2079 = vcombine.high %v2054, %v2070
      %v2081 = vunpack.c.l.s4 1934713408
      %v2082 = vunpack.c.0.s8 %v2081
      %v2083 = vlaneseq
      %v2084 = vshrl.u32 %v2083, 7
      %v2085 = vsub.s32 %v2082, %v2084
      %v2086 = vrot.slane %v2078, %v2085
      %v2088 = vunpack.c.l.s4 1934713408
      %v2089 = vunpack.c.0.s8 %v2088
      %v2090 = vlaneseq
      %v2091 = vshrl.u32 %v2090, 7
      %v2092 = vsub.s32 %v2089, %v2091
      %v2093 = vrot.slane %v2079, %v2092
      %v2094 = vcombine.low %v2061, %v2077
      %v2095 = vcombine.high %v2061, %v2077
      %v2097 = vunpack.c.l.s4 1934713408
      %v2098 = vunpack.c.0.s8 %v2097
      %v2099 = vlaneseq
      %v2100 = vshrl.u32 %v2099, 7
      %v2101 = vsub.s32 %v2098, %v2100
      %v2102 = vrot.slane %v2094, %v2101
      %v2104 = vunpack.c.l.s4 1934713408
      %v2105 = vunpack.c.0.s8 %v2104
      %v2106 = vlaneseq
      %v2107 = vshrl.u32 %v2106, 7
      %v2108 = vsub.s32 %v2105, %v2107
      %v2109 = vrot.slane %v2095, %v2108
      %v2110 = vcombine.high %v2086, 0.0
      %v2111 = vcombine.high %v2093, 0.0
      %v2112 = vcombine.high %v2102, 0.0
      %v2113 = vcombine.high %v2109, 0.0
      %2115 = vrot.lane.b32.xlu0 %v2042, 16
      %v2116 = vpop.permute.xlu0 %2115
      %2119 = vrot.lane.b32.xlu0 %v2025, 32
      %v2120 = vpop.permute.xlu0 %2119
      %2123 = vrot.lane.b32.xlu0 %v2043, 48
      %v2124 = vpop.permute.xlu0 %2123
      %2127 = vrot.lane.b32.xlu0 %v2034, 64
      %v2128 = vpop.permute.xlu0 %2127
      %2131 = vrot.lane.b32.xlu0 %v2044, 80
      %v2132 = vpop.permute.xlu0 %2131
      %2135 = vrot.lane.b32.xlu0 %v2041, 96
      %v2136 = vpop.permute.xlu0 %2135
      %2139 = vrot.lane.b32.xlu0 %v2045, 112
      %v2140 = vpop.permute.xlu0 %2139
      %2143 = vrot.lane.b32.xlu0 %v2110, 16
      %v2144 = vpop.permute.xlu0 %2143
      %2147 = vrot.lane.b32.xlu0 %v2093, 32
      %v2148 = vpop.permute.xlu0 %2147
      %2151 = vrot.lane.b32.xlu0 %v2111, 48
      %v2152 = vpop.permute.xlu0 %2151
      %2155 = vrot.lane.b32.xlu0 %v2102, 64
      %v2156 = vpop.permute.xlu0 %2155
      %2159 = vrot.lane.b32.xlu0 %v2112, 80
      %v2160 = vpop.permute.xlu0 %2159
      %2163 = vrot.lane.b32.xlu0 %v2109, 96
      %v2164 = vpop.permute.xlu0 %2163
      %2167 = vrot.lane.b32.xlu0 %v2113, 112
      %v2168 = vpop.permute.xlu0 %2167
      %v2170 = vsel %vm426, %v2018, %v2116
      %v2171 = vsel %vm428, %v2170, %v2120
      %v2172 = vsel %vm430, %v2171, %v2124
      %v2173 = vsel %vm432, %v2172, %v2128
      %v2174 = vsel %vm434, %v2173, %v2132
      %v2175 = vsel %vm436, %v2174, %v2136
      %v2176 = vsel %vm438, %v2175, %v2140
      %v2177 = vsel %vm426, %v2086, %v2144
      %v2178 = vsel %vm428, %v2177, %v2148
      %v2179 = vsel %vm430, %v2178, %v2152
      %v2180 = vsel %vm432, %v2179, %v2156
      %v2181 = vsel %vm434, %v2180, %v2160
      %v2182 = vsel %vm436, %v2181, %v2164
      %v2183 = vsel %vm438, %v2182, %v2168
      %v2184 = vpack.c.bf16 %v2176, %v2176
      %v2185 = vpack.c.bf16 %v2183, %v2183
      %s2186 = scalar_lea.vmem %s1, 12
      %v2187 = vld [vmem:[%s2186] sm:$0x3]
      %v2189 = vsel %vm692, %v2187, 0
      %v2192 = vsel %vm696, %v2184, 0
      %v2195 = vsel %vm696, %v2185, 0
      %2197 = vmatprep.subr.bf16.mxu0 0
      %2198 = vmatpush1.bf16.msra.mxu0 0
      %2199 = vmatprep.subr.bf16.mxu0 0
      %2200 = vmatpush1.bf16.msra.mxu0 0
      %2201 = vmatprep.subr.bf16.mxu0 0
      %2202 = vmatpush1.bf16.msra.mxu0 0
      %2203 = vmatprep.subr.bf16.mxu0 0
      %2204 = vmatpush1.bf16.msra.mxu0 0
      %2205 = vmatprep.subr.bf16.mxu0 0
      %2206 = vmatpush1.bf16.msra.mxu0 0
      %2207 = vmatprep.subr.bf16.mxu0 0
      %2208 = vmatpush1.bf16.msra.mxu0 0
      %2209 = vmatprep.subr.bf16.mxu0 0
      %2210 = vmatpush1.bf16.msra.mxu0 0
      %2211 = vmatprep.subr.bf16.mxu0 %v2195
      %2212 = vmatpush1.bf16.msra.mxu0 %v2192
      %2213 = vmatprep.subr.bf16.mxu0 0
      %2214 = vmatpush2.bf16.msra.mxu0 0
      %2215 = vmatprep.subr.bf16.mxu0 0
      %2216 = vmatpush2.bf16.msra.mxu0 0
      %2217 = vmatprep.subr.bf16.mxu0 0
      %2218 = vmatpush2.bf16.msra.mxu0 0
      %2219 = vmatprep.subr.bf16.mxu0 0
      %2220 = vmatpush2.bf16.msra.mxu0 0
      %2221 = vmatprep.subr.bf16.mxu0 0
      %2222 = vmatpush2.bf16.msra.mxu0 0
      %2223 = vmatprep.subr.bf16.mxu0 0
      %2224 = vmatpush2.bf16.msra.mxu0 0
      %2225 = vmatprep.subr.bf16.mxu0 0
      %2226 = vmatpush2.bf16.msra.mxu0 0
      %2227 = vmatprep.subr.bf16.mxu0 0
      %2228 = vmatpush2.bf16.msra.mxu0 0
      %2229 = vmatprep.mubr.bf16.mxu0 0
      %2230 = vmatmul.mubr.bf16.gmra.mxu0 %v2189
      %v2231 = vpop.f32.mrf.mxu0
      %v2232 = vadd.f32 0.0, %v2231
      %v2233 = vpop.f32.mrf.mxu0
      %v2234 = vadd.f32 0.0, %v2233
      %v2235 = vpop.f32.mrf.mxu0
      %v2236 = vpop.f32.mrf.mxu0
      %2237 = vdwg.mxu0
      %v2238 = vadd.f32 %v1968, %v2232
      %v2239 = vadd.f32 %v1969, %v2234
      %v2240 = vld [vmem:[%s219 + $0x2] sm:$0xff]
      %v2241 = vld [vmem:[%s219 + $0xa] sm:$0xff]
      %v2242 = vld [vmem:[%s219 + $0x1a] sm:$0xff]
      %v2243 = vld [vmem:[%s219 + $0x22] sm:$0xff]
      %v2244 = vld [vmem:[%s219 + $0x32] sm:$0xff]
      %v2245 = vld [vmem:[%s219 + $0x3a] sm:$0xff]
      %v2246 = vld [vmem:[%s219 + $0x4a] sm:$0xff]
      %v2247 = vld [vmem:[%s219 + $0x52] sm:$0xff]
      %2256 = vrot.lane.b32.xlu0 %v2240, 127
      %v2257 = vpop.permute.xlu0 %2256
      %2258 = vrot.lane.b32.xlu0 %v2241, 127
      %v2259 = vpop.permute.xlu0 %2258
      %2260 = vrot.lane.b32.xlu0 %v2242, 127
      %v2261 = vpop.permute.xlu0 %2260
      %2262 = vrot.lane.b32.xlu0 %v2243, 127
      %v2263 = vpop.permute.xlu0 %2262
      %2264 = vrot.lane.b32.xlu0 %v2244, 127
      %v2265 = vpop.permute.xlu0 %2264
      %2266 = vrot.lane.b32.xlu0 %v2245, 127
      %v2267 = vpop.permute.xlu0 %2266
      %2268 = vrot.lane.b32.xlu0 %v2246, 127
      %v2269 = vpop.permute.xlu0 %2268
      %2270 = vrot.lane.b32.xlu0 %v2247, 127
      %v2271 = vpop.permute.xlu0 %2270
      %v2280 = vcombine.low %v2257, %v2265
      %v2281 = vcombine.high %v2257, %v2265
      %v2283 = vunpack.c.l.s4 1983009808
      %v2284 = vunpack.c.0.s8 %v2283
      %v2285 = vlaneseq
      %v2286 = vshrl.u32 %v2285, 7
      %v2287 = vsub.s32 %v2284, %v2286
      %v2288 = vrot.slane %v2280, %v2287
      %v2290 = vunpack.c.l.s4 1983009808
      %v2291 = vunpack.c.0.s8 %v2290
      %v2292 = vlaneseq
      %v2293 = vshrl.u32 %v2292, 7
      %v2294 = vsub.s32 %v2291, %v2293
      %v2295 = vrot.slane %v2281, %v2294
      %v2296 = vcombine.low %v2261, %v2269
      %v2297 = vcombine.high %v2261, %v2269
      %v2299 = vunpack.c.l.s4 1983009808
      %v2300 = vunpack.c.0.s8 %v2299
      %v2301 = vlaneseq
      %v2302 = vshrl.u32 %v2301, 7
      %v2303 = vsub.s32 %v2300, %v2302
      %v2304 = vrot.slane %v2296, %v2303
      %v2306 = vunpack.c.l.s4 1983009808
      %v2307 = vunpack.c.0.s8 %v2306
      %v2308 = vlaneseq
      %v2309 = vshrl.u32 %v2308, 7
      %v2310 = vsub.s32 %v2307, %v2309
      %v2311 = vrot.slane %v2297, %v2310
      %v2312 = vcombine.low %v2288, %v2304
      %v2313 = vcombine.high %v2288, %v2304
      %v2315 = vunpack.c.l.s4 1934713408
      %v2316 = vunpack.c.0.s8 %v2315
      %v2317 = vlaneseq
      %v2318 = vshrl.u32 %v2317, 7
      %v2319 = vsub.s32 %v2316, %v2318
      %v2320 = vrot.slane %v2312, %v2319
      %v2322 = vunpack.c.l.s4 1934713408
      %v2323 = vunpack.c.0.s8 %v2322
      %v2324 = vlaneseq
      %v2325 = vshrl.u32 %v2324, 7
      %v2326 = vsub.s32 %v2323, %v2325
      %v2327 = vrot.slane %v2313, %v2326
      %v2328 = vcombine.low %v2295, %v2311
      %v2329 = vcombine.high %v2295, %v2311
      %v2331 = vunpack.c.l.s4 1934713408
      %v2332 = vunpack.c.0.s8 %v2331
      %v2333 = vlaneseq
      %v2334 = vshrl.u32 %v2333, 7
      %v2335 = vsub.s32 %v2332, %v2334
      %v2336 = vrot.slane %v2328, %v2335
      %v2338 = vunpack.c.l.s4 1934713408
      %v2339 = vunpack.c.0.s8 %v2338
      %v2340 = vlaneseq
      %v2341 = vshrl.u32 %v2340, 7
      %v2342 = vsub.s32 %v2339, %v2341
      %v2343 = vrot.slane %v2329, %v2342
      %v2344 = vcombine.high %v2320, 0.0
      %v2345 = vcombine.high %v2327, 0.0
      %v2346 = vcombine.high %v2336, 0.0
      %v2347 = vcombine.high %v2343, 0.0
      %v2348 = vcombine.low %v2259, %v2267
      %v2349 = vcombine.high %v2259, %v2267
      %v2351 = vunpack.c.l.s4 1983009808
      %v2352 = vunpack.c.0.s8 %v2351
      %v2353 = vlaneseq
      %v2354 = vshrl.u32 %v2353, 7
      %v2355 = vsub.s32 %v2352, %v2354
      %v2356 = vrot.slane %v2348, %v2355
      %v2358 = vunpack.c.l.s4 1983009808
      %v2359 = vunpack.c.0.s8 %v2358
      %v2360 = vlaneseq
      %v2361 = vshrl.u32 %v2360, 7
      %v2362 = vsub.s32 %v2359, %v2361
      %v2363 = vrot.slane %v2349, %v2362
      %v2364 = vcombine.low %v2263, %v2271
      %v2365 = vcombine.high %v2263, %v2271
      %v2367 = vunpack.c.l.s4 1983009808
      %v2368 = vunpack.c.0.s8 %v2367
      %v2369 = vlaneseq
      %v2370 = vshrl.u32 %v2369, 7
      %v2371 = vsub.s32 %v2368, %v2370
      %v2372 = vrot.slane %v2364, %v2371
      %v2374 = vunpack.c.l.s4 1983009808
      %v2375 = vunpack.c.0.s8 %v2374
      %v2376 = vlaneseq
      %v2377 = vshrl.u32 %v2376, 7
      %v2378 = vsub.s32 %v2375, %v2377
      %v2379 = vrot.slane %v2365, %v2378
      %v2380 = vcombine.low %v2356, %v2372
      %v2381 = vcombine.high %v2356, %v2372
      %v2383 = vunpack.c.l.s4 1934713408
      %v2384 = vunpack.c.0.s8 %v2383
      %v2385 = vlaneseq
      %v2386 = vshrl.u32 %v2385, 7
      %v2387 = vsub.s32 %v2384, %v2386
      %v2388 = vrot.slane %v2380, %v2387
      %v2390 = vunpack.c.l.s4 1934713408
      %v2391 = vunpack.c.0.s8 %v2390
      %v2392 = vlaneseq
      %v2393 = vshrl.u32 %v2392, 7
      %v2394 = vsub.s32 %v2391, %v2393
      %v2395 = vrot.slane %v2381, %v2394
      %v2396 = vcombine.low %v2363, %v2379
      %v2397 = vcombine.high %v2363, %v2379
      %v2399 = vunpack.c.l.s4 1934713408
      %v2400 = vunpack.c.0.s8 %v2399
      %v2401 = vlaneseq
      %v2402 = vshrl.u32 %v2401, 7
      %v2403 = vsub.s32 %v2400, %v2402
      %v2404 = vrot.slane %v2396, %v2403
      %v2406 = vunpack.c.l.s4 1934713408
      %v2407 = vunpack.c.0.s8 %v2406
      %v2408 = vlaneseq
      %v2409 = vshrl.u32 %v2408, 7
      %v2410 = vsub.s32 %v2407, %v2409
      %v2411 = vrot.slane %v2397, %v2410
      %v2412 = vcombine.high %v2388, 0.0
      %v2413 = vcombine.high %v2395, 0.0
      %v2414 = vcombine.high %v2404, 0.0
      %v2415 = vcombine.high %v2411, 0.0
      %2417 = vrot.lane.b32.xlu0 %v2344, 16
      %v2418 = vpop.permute.xlu0 %2417
      %2421 = vrot.lane.b32.xlu0 %v2327, 32
      %v2422 = vpop.permute.xlu0 %2421
      %2425 = vrot.lane.b32.xlu0 %v2345, 48
      %v2426 = vpop.permute.xlu0 %2425
      %2429 = vrot.lane.b32.xlu0 %v2336, 64
      %v2430 = vpop.permute.xlu0 %2429
      %2433 = vrot.lane.b32.xlu0 %v2346, 80
      %v2434 = vpop.permute.xlu0 %2433
      %2437 = vrot.lane.b32.xlu0 %v2343, 96
      %v2438 = vpop.permute.xlu0 %2437
      %2441 = vrot.lane.b32.xlu0 %v2347, 112
      %v2442 = vpop.permute.xlu0 %2441
      %2445 = vrot.lane.b32.xlu0 %v2412, 16
      %v2446 = vpop.permute.xlu0 %2445
      %2449 = vrot.lane.b32.xlu0 %v2395, 32
      %v2450 = vpop.permute.xlu0 %2449
      %2453 = vrot.lane.b32.xlu0 %v2413, 48
      %v2454 = vpop.permute.xlu0 %2453
      %2457 = vrot.lane.b32.xlu0 %v2404, 64
      %v2458 = vpop.permute.xlu0 %2457
      %2461 = vrot.lane.b32.xlu0 %v2414, 80
      %v2462 = vpop.permute.xlu0 %2461
      %2465 = vrot.lane.b32.xlu0 %v2411, 96
      %v2466 = vpop.permute.xlu0 %2465
      %2469 = vrot.lane.b32.xlu0 %v2415, 112
      %v2470 = vpop.permute.xlu0 %2469
      %v2472 = vsel %vm426, %v2320, %v2418
      %v2473 = vsel %vm428, %v2472, %v2422
      %v2474 = vsel %vm430, %v2473, %v2426
      %v2475 = vsel %vm432, %v2474, %v2430
      %v2476 = vsel %vm434, %v2475, %v2434
      %v2477 = vsel %vm436, %v2476, %v2438
      %v2478 = vsel %vm438, %v2477, %v2442
      %v2479 = vsel %vm426, %v2388, %v2446
      %v2480 = vsel %vm428, %v2479, %v2450
      %v2481 = vsel %vm430, %v2480, %v2454
      %v2482 = vsel %vm432, %v2481, %v2458
      %v2483 = vsel %vm434, %v2482, %v2462
      %v2484 = vsel %vm436, %v2483, %v2466
      %v2485 = vsel %vm438, %v2484, %v2470
      %v2486 = vpack.c.bf16 %v2478, %v2478
      %v2487 = vpack.c.bf16 %v2485, %v2485
      %s2488 = scalar_lea.vmem %s1, 14
      %v2489 = vld [vmem:[%s2488] sm:$0x3]
      %v2491 = vsel %vm692, %v2489, 0
      %v2494 = vsel %vm696, %v2486, 0
      %v2497 = vsel %vm696, %v2487, 0
      %2499 = vmatprep.subr.bf16.mxu0 0
      %2500 = vmatpush1.bf16.msra.mxu0 0
      %2501 = vmatprep.subr.bf16.mxu0 0
      %2502 = vmatpush1.bf16.msra.mxu0 0
      %2503 = vmatprep.subr.bf16.mxu0 0
      %2504 = vmatpush1.bf16.msra.mxu0 0
      %2505 = vmatprep.subr.bf16.mxu0 0
      %2506 = vmatpush1.bf16.msra.mxu0 0
      %2507 = vmatprep.subr.bf16.mxu0 0
      %2508 = vmatpush1.bf16.msra.mxu0 0
      %2509 = vmatprep.subr.bf16.mxu0 0
      %2510 = vmatpush1.bf16.msra.mxu0 0
      %2511 = vmatprep.subr.bf16.mxu0 0
      %2512 = vmatpush1.bf16.msra.mxu0 0
      %2513 = vmatprep.subr.bf16.mxu0 %v2497
      %2514 = vmatpush1.bf16.msra.mxu0 %v2494
      %2515 = vmatprep.subr.bf16.mxu0 0
      %2516 = vmatpush2.bf16.msra.mxu0 0
      %2517 = vmatprep.subr.bf16.mxu0 0
      %2518 = vmatpush2.bf16.msra.mxu0 0
      %2519 = vmatprep.subr.bf16.mxu0 0
      %2520 = vmatpush2.bf16.msra.mxu0 0
      %2521 = vmatprep.subr.bf16.mxu0 0
      %2522 = vmatpush2.bf16.msra.mxu0 0
      %2523 = vmatprep.subr.bf16.mxu0 0
      %2524 = vmatpush2.bf16.msra.mxu0 0
      %2525 = vmatprep.subr.bf16.mxu0 0
      %2526 = vmatpush2.bf16.msra.mxu0 0
      %2527 = vmatprep.subr.bf16.mxu0 0
      %2528 = vmatpush2.bf16.msra.mxu0 0
      %2529 = vmatprep.subr.bf16.mxu0 0
      %2530 = vmatpush2.bf16.msra.mxu0 0
      %2531 = vmatprep.mubr.bf16.mxu0 0
      %2532 = vmatmul.mubr.bf16.gmra.mxu0 %v2491
      %v2533 = vpop.f32.mrf.mxu0
      %v2534 = vadd.f32 0.0, %v2533
      %v2535 = vpop.f32.mrf.mxu0
      %v2536 = vadd.f32 0.0, %v2535
      %v2537 = vpop.f32.mrf.mxu0
      %v2538 = vpop.f32.mrf.mxu0
      %2539 = vdwg.mxu0
      %v2540 = vadd.f32 %v2238, %v2534
      %v2541 = vadd.f32 %v2239, %v2536
      %v2542 = vld [vmem:[%s219 + $0x2] sm:$0xff]
      %v2543 = vld [vmem:[%s219 + $0xa] sm:$0xff]
      %v2544 = vld [vmem:[%s219 + $0x1a] sm:$0xff]
      %v2545 = vld [vmem:[%s219 + $0x22] sm:$0xff]
      %v2546 = vld [vmem:[%s219 + $0x32] sm:$0xff]
      %v2547 = vld [vmem:[%s219 + $0x3a] sm:$0xff]
      %v2548 = vld [vmem:[%s219 + $0x4a] sm:$0xff]
      %v2549 = vld [vmem:[%s219 + $0x52] sm:$0xff]
      %2558 = vrot.lane.b32.xlu0 %v2542, 126
      %v2559 = vpop.permute.xlu0 %2558
      %2560 = vrot.lane.b32.xlu0 %v2543, 126
      %v2561 = vpop.permute.xlu0 %2560
      %2562 = vrot.lane.b32.xlu0 %v2544, 126
      %v2563 = vpop.permute.xlu0 %2562
      %2564 = vrot.lane.b32.xlu0 %v2545, 126
      %v2565 = vpop.permute.xlu0 %2564
      %2566 = vrot.lane.b32.xlu0 %v2546, 126
      %v2567 = vpop.permute.xlu0 %2566
      %2568 = vrot.lane.b32.xlu0 %v2547, 126
      %v2569 = vpop.permute.xlu0 %2568
      %2570 = vrot.lane.b32.xlu0 %v2548, 126
      %v2571 = vpop.permute.xlu0 %2570
      %2572 = vrot.lane.b32.xlu0 %v2549, 126
      %v2573 = vpop.permute.xlu0 %2572
      %v2582 = vcombine.low %v2559, %v2567
      %v2583 = vcombine.high %v2559, %v2567
      %v2585 = vunpack.c.l.s4 1983009808
      %v2586 = vunpack.c.0.s8 %v2585
      %v2587 = vlaneseq
      %v2588 = vshrl.u32 %v2587, 7
      %v2589 = vsub.s32 %v2586, %v2588
      %v2590 = vrot.slane %v2582, %v2589
      %v2592 = vunpack.c.l.s4 1983009808
      %v2593 = vunpack.c.0.s8 %v2592
      %v2594 = vlaneseq
      %v2595 = vshrl.u32 %v2594, 7
      %v2596 = vsub.s32 %v2593, %v2595
      %v2597 = vrot.slane %v2583, %v2596
      %v2598 = vcombine.low %v2563, %v2571
      %v2599 = vcombine.high %v2563, %v2571
      %v2601 = vunpack.c.l.s4 1983009808
      %v2602 = vunpack.c.0.s8 %v2601
      %v2603 = vlaneseq
      %v2604 = vshrl.u32 %v2603, 7
      %v2605 = vsub.s32 %v2602, %v2604
      %v2606 = vrot.slane %v2598, %v2605
      %v2608 = vunpack.c.l.s4 1983009808
      %v2609 = vunpack.c.0.s8 %v2608
      %v2610 = vlaneseq
      %v2611 = vshrl.u32 %v2610, 7
      %v2612 = vsub.s32 %v2609, %v2611
      %v2613 = vrot.slane %v2599, %v2612
      %v2614 = vcombine.low %v2590, %v2606
      %v2615 = vcombine.high %v2590, %v2606
      %v2617 = vunpack.c.l.s4 1934713408
      %v2618 = vunpack.c.0.s8 %v2617
      %v2619 = vlaneseq
      %v2620 = vshrl.u32 %v2619, 7
      %v2621 = vsub.s32 %v2618, %v2620
      %v2622 = vrot.slane %v2614, %v2621
      %v2624 = vunpack.c.l.s4 1934713408
      %v2625 = vunpack.c.0.s8 %v2624
      %v2626 = vlaneseq
      %v2627 = vshrl.u32 %v2626, 7
      %v2628 = vsub.s32 %v2625, %v2627
      %v2629 = vrot.slane %v2615, %v2628
      %v2630 = vcombine.low %v2597, %v2613
      %v2631 = vcombine.high %v2597, %v2613
      %v2633 = vunpack.c.l.s4 1934713408
      %v2634 = vunpack.c.0.s8 %v2633
      %v2635 = vlaneseq
      %v2636 = vshrl.u32 %v2635, 7
      %v2637 = vsub.s32 %v2634, %v2636
      %v2638 = vrot.slane %v2630, %v2637
      %v2640 = vunpack.c.l.s4 1934713408
      %v2641 = vunpack.c.0.s8 %v2640
      %v2642 = vlaneseq
      %v2643 = vshrl.u32 %v2642, 7
      %v2644 = vsub.s32 %v2641, %v2643
      %v2645 = vrot.slane %v2631, %v2644
      %v2646 = vcombine.high %v2622, 0.0
      %v2647 = vcombine.high %v2629, 0.0
      %v2648 = vcombine.high %v2638, 0.0
      %v2649 = vcombine.high %v2645, 0.0
      %v2650 = vcombine.low %v2561, %v2569
      %v2651 = vcombine.high %v2561, %v2569
      %v2653 = vunpack.c.l.s4 1983009808
      %v2654 = vunpack.c.0.s8 %v2653
      %v2655 = vlaneseq
      %v2656 = vshrl.u32 %v2655, 7
      %v2657 = vsub.s32 %v2654, %v2656
      %v2658 = vrot.slane %v2650, %v2657
      %v2660 = vunpack.c.l.s4 1983009808
      %v2661 = vunpack.c.0.s8 %v2660
      %v2662 = vlaneseq
      %v2663 = vshrl.u32 %v2662, 7
      %v2664 = vsub.s32 %v2661, %v2663
      %v2665 = vrot.slane %v2651, %v2664
      %v2666 = vcombine.low %v2565, %v2573
      %v2667 = vcombine.high %v2565, %v2573
      %v2669 = vunpack.c.l.s4 1983009808
      %v2670 = vunpack.c.0.s8 %v2669
      %v2671 = vlaneseq
      %v2672 = vshrl.u32 %v2671, 7
      %v2673 = vsub.s32 %v2670, %v2672
      %v2674 = vrot.slane %v2666, %v2673
      %v2676 = vunpack.c.l.s4 1983009808
      %v2677 = vunpack.c.0.s8 %v2676
      %v2678 = vlaneseq
      %v2679 = vshrl.u32 %v2678, 7
      %v2680 = vsub.s32 %v2677, %v2679
      %v2681 = vrot.slane %v2667, %v2680
      %v2682 = vcombine.low %v2658, %v2674
      %v2683 = vcombine.high %v2658, %v2674
      %v2685 = vunpack.c.l.s4 1934713408
      %v2686 = vunpack.c.0.s8 %v2685
      %v2687 = vlaneseq
      %v2688 = vshrl.u32 %v2687, 7
      %v2689 = vsub.s32 %v2686, %v2688
      %v2690 = vrot.slane %v2682, %v2689
      %v2692 = vunpack.c.l.s4 1934713408
      %v2693 = vunpack.c.0.s8 %v2692
      %v2694 = vlaneseq
      %v2695 = vshrl.u32 %v2694, 7
      %v2696 = vsub.s32 %v2693, %v2695
      %v2697 = vrot.slane %v2683, %v2696
      %v2698 = vcombine.low %v2665, %v2681
      %v2699 = vcombine.high %v2665, %v2681
      %v2701 = vunpack.c.l.s4 1934713408
      %v2702 = vunpack.c.0.s8 %v2701
      %v2703 = vlaneseq
      %v2704 = vshrl.u32 %v2703, 7
      %v2705 = vsub.s32 %v2702, %v2704
      %v2706 = vrot.slane %v2698, %v2705
      %v2708 = vunpack.c.l.s4 1934713408
      %v2709 = vunpack.c.0.s8 %v2708
      %v2710 = vlaneseq
      %v2711 = vshrl.u32 %v2710, 7
      %v2712 = vsub.s32 %v2709, %v2711
      %v2713 = vrot.slane %v2699, %v2712
      %v2714 = vcombine.high %v2690, 0.0
      %v2715 = vcombine.high %v2697, 0.0
      %v2716 = vcombine.high %v2706, 0.0
      %v2717 = vcombine.high %v2713, 0.0
      %2719 = vrot.lane.b32.xlu0 %v2646, 16
      %v2720 = vpop.permute.xlu0 %2719
      %2723 = vrot.lane.b32.xlu0 %v2629, 32
      %v2724 = vpop.permute.xlu0 %2723
      %2727 = vrot.lane.b32.xlu0 %v2647, 48
      %v2728 = vpop.permute.xlu0 %2727
      %2731 = vrot.lane.b32.xlu0 %v2638, 64
      %v2732 = vpop.permute.xlu0 %2731
      %2735 = vrot.lane.b32.xlu0 %v2648, 80
      %v2736 = vpop.permute.xlu0 %2735
      %2739 = vrot.lane.b32.xlu0 %v2645, 96
      %v2740 = vpop.permute.xlu0 %2739
      %2743 = vrot.lane.b32.xlu0 %v2649, 112
      %v2744 = vpop.permute.xlu0 %2743
      %2747 = vrot.lane.b32.xlu0 %v2714, 16
      %v2748 = vpop.permute.xlu0 %2747
      %2751 = vrot.lane.b32.xlu0 %v2697, 32
      %v2752 = vpop.permute.xlu0 %2751
      %2755 = vrot.lane.b32.xlu0 %v2715, 48
      %v2756 = vpop.permute.xlu0 %2755
      %2759 = vrot.lane.b32.xlu0 %v2706, 64
      %v2760 = vpop.permute.xlu0 %2759
      %2763 = vrot.lane.b32.xlu0 %v2716, 80
      %v2764 = vpop.permute.xlu0 %2763
      %2767 = vrot.lane.b32.xlu0 %v2713, 96
      %v2768 = vpop.permute.xlu0 %2767
      %2771 = vrot.lane.b32.xlu0 %v2717, 112
      %v2772 = vpop.permute.xlu0 %2771
      %v2774 = vsel %vm426, %v2622, %v2720
      %v2775 = vsel %vm428, %v2774, %v2724
      %v2776 = vsel %vm430, %v2775, %v2728
      %v2777 = vsel %vm432, %v2776, %v2732
      %v2778 = vsel %vm434, %v2777, %v2736
      %v2779 = vsel %vm436, %v2778, %v2740
      %v2780 = vsel %vm438, %v2779, %v2744
      %v2781 = vsel %vm426, %v2690, %v2748
      %v2782 = vsel %vm428, %v2781, %v2752
      %v2783 = vsel %vm430, %v2782, %v2756
      %v2784 = vsel %vm432, %v2783, %v2760
      %v2785 = vsel %vm434, %v2784, %v2764
      %v2786 = vsel %vm436, %v2785, %v2768
      %v2787 = vsel %vm438, %v2786, %v2772
      %v2788 = vpack.c.bf16 %v2780, %v2780
      %v2789 = vpack.c.bf16 %v2787, %v2787
      %s2790 = scalar_lea.vmem %s1, 16
      %v2791 = vld [vmem:[%s2790] sm:$0x3]
      %v2793 = vsel %vm692, %v2791, 0
      %v2796 = vsel %vm696, %v2788, 0
      %v2799 = vsel %vm696, %v2789, 0
      %2801 = vmatprep.subr.bf16.mxu0 0
      %2802 = vmatpush1.bf16.msra.mxu0 0
      %2803 = vmatprep.subr.bf16.mxu0 0
      %2804 = vmatpush1.bf16.msra.mxu0 0
      %2805 = vmatprep.subr.bf16.mxu0 0
      %2806 = vmatpush1.bf16.msra.mxu0 0
      %2807 = vmatprep.subr.bf16.mxu0 0
      %2808 = vmatpush1.bf16.msra.mxu0 0
      %2809 = vmatprep.subr.bf16.mxu0 0
      %2810 = vmatpush1.bf16.msra.mxu0 0
      %2811 = vmatprep.subr.bf16.mxu0 0
      %2812 = vmatpush1.bf16.msra.mxu0 0
      %2813 = vmatprep.subr.bf16.mxu0 0
      %2814 = vmatpush1.bf16.msra.mxu0 0
      %2815 = vmatprep.subr.bf16.mxu0 %v2799
      %2816 = vmatpush1.bf16.msra.mxu0 %v2796
      %2817 = vmatprep.subr.bf16.mxu0 0
      %2818 = vmatpush2.bf16.msra.mxu0 0
      %2819 = vmatprep.subr.bf16.mxu0 0
      %2820 = vmatpush2.bf16.msra.mxu0 0
      %2821 = vmatprep.subr.bf16.mxu0 0
      %2822 = vmatpush2.bf16.msra.mxu0 0
      %2823 = vmatprep.subr.bf16.mxu0 0
      %2824 = vmatpush2.bf16.msra.mxu0 0
      %2825 = vmatprep.subr.bf16.mxu0 0
      %2826 = vmatpush2.bf16.msra.mxu0 0
      %2827 = vmatprep.subr.bf16.mxu0 0
      %2828 = vmatpush2.bf16.msra.mxu0 0
      %2829 = vmatprep.subr.bf16.mxu0 0
      %2830 = vmatpush2.bf16.msra.mxu0 0
      %2831 = vmatprep.subr.bf16.mxu0 0
      %2832 = vmatpush2.bf16.msra.mxu0 0
      %2833 = vmatprep.mubr.bf16.mxu0 0
      %2834 = vmatmul.mubr.bf16.gmra.mxu0 %v2793
      %v2835 = vpop.f32.mrf.mxu0
      %v2836 = vadd.f32 0.0, %v2835
      %v2837 = vpop.f32.mrf.mxu0
      %v2838 = vadd.f32 0.0, %v2837
      %v2839 = vpop.f32.mrf.mxu0
      %v2840 = vpop.f32.mrf.mxu0
      %2841 = vdwg.mxu0
      %v2842 = vadd.f32 %v2540, %v2836
      %v2843 = vadd.f32 %v2541, %v2838
      %v2844 = vld [vmem:[%s2] sm:$0xf]
      %2846 = vset.pattern.permute.xlu0 0
      %2847 = vperm.xlu0 %2846, %v2844
      %v2848 = vpop.permute.xlu0 %2847
      %v2850 = vadd.f32 %v2842, %v2848
      %v2851 = vadd.f32 %v2843, %v2848
      %v2852 = vmax.f32 %v2850, 0.0
      %v2853 = vmax.f32 %v2851, 0.0
      %vm2854 = vcmask 146432
      %2855 = vst.msk [vmem:[#allocation2] sm:$0xff] %vm2854, 0.0
      %2856 = vst.msk [vmem:[#allocation2 + $0x8] sm:$0xff] %vm2854, 0.0
      %vm2857 = vcmask 140288
      %2858 = vst.msk [vmem:[#allocation2 + $0x10] sm:$0x3] %vm2857, 0.0
      %2859 = vst.msk [vmem:[#allocation2 + $0x18] sm:$0xff] %vm2854, 0.0
      %2860 = vst.msk [vmem:[#allocation2 + $0x20] sm:$0xff] %vm2854, 0.0
      %2861 = vst.msk [vmem:[#allocation2 + $0x28] sm:$0x3] %vm2857, 0.0
      %2862 = vst.msk [vmem:[#allocation2 + $0x30] sm:$0xff] %vm2854, 0.0
      %2863 = vst.msk [vmem:[#allocation2 + $0x38] sm:$0xff] %vm2854, 0.0
      %2864 = vst.msk [vmem:[#allocation2 + $0x40] sm:$0x3] %vm2857, 0.0
      %2865 = vst.msk [vmem:[#allocation2 + $0x48] sm:$0xff] %vm2854, 0.0
      %2866 = vst.msk [vmem:[#allocation2 + $0x50] sm:$0xff] %vm2854, 0.0
      %2867 = vst.msk [vmem:[#allocation2 + $0x58] sm:$0x3] %vm2857, 0.0
      %2869 = vrot.lane.b32.xlu0 %v2852, 112
      %v2870 = vpop.permute.xlu0 %2869
      %2872 = vrot.lane.b32.xlu0 %v2852, 96
      %v2873 = vpop.permute.xlu0 %2872
      %2875 = vrot.lane.b32.xlu0 %v2852, 80
      %v2876 = vpop.permute.xlu0 %2875
      %2878 = vrot.lane.b32.xlu0 %v2852, 64
      %v2879 = vpop.permute.xlu0 %2878
      %2881 = vrot.lane.b32.xlu0 %v2852, 48
      %v2882 = vpop.permute.xlu0 %2881
      %2884 = vrot.lane.b32.xlu0 %v2852, 32
      %v2885 = vpop.permute.xlu0 %2884
      %2887 = vrot.lane.b32.xlu0 %v2852, 16
      %v2888 = vpop.permute.xlu0 %2887
      %2891 = vrot.lane.b32.xlu0 %v2853, 112
      %v2892 = vpop.permute.xlu0 %2891
      %2894 = vrot.lane.b32.xlu0 %v2853, 96
      %v2895 = vpop.permute.xlu0 %2894
      %2897 = vrot.lane.b32.xlu0 %v2853, 80
      %v2898 = vpop.permute.xlu0 %2897
      %2900 = vrot.lane.b32.xlu0 %v2853, 64
      %v2901 = vpop.permute.xlu0 %2900
      %2903 = vrot.lane.b32.xlu0 %v2853, 48
      %v2904 = vpop.permute.xlu0 %2903
      %2906 = vrot.lane.b32.xlu0 %v2853, 32
      %v2907 = vpop.permute.xlu0 %2906
      %2909 = vrot.lane.b32.xlu0 %v2853, 16
      %v2910 = vpop.permute.xlu0 %2909
      %v2912 = vcombine.low %v2852, %v2873
      %v2914 = vunpack.c.l.s4 1983009808
      %v2915 = vunpack.c.0.s8 %v2914
      %v2916 = vlaneseq
      %v2917 = vshrl.u32 %v2916, 7
      %v2918 = vsub.s32 %v2915, %v2917
      %v2919 = vrot.slane %v2912, %v2918
      %v2920 = vcombine.low %v2870, %v2876
      %v2922 = vunpack.c.l.s4 1983009808
      %v2923 = vunpack.c.0.s8 %v2922
      %v2924 = vlaneseq
      %v2925 = vshrl.u32 %v2924, 7
      %v2926 = vsub.s32 %v2923, %v2925
      %v2927 = vrot.slane %v2920, %v2926
      %v2928 = vcombine.low %v2879, %v2885
      %v2930 = vunpack.c.l.s4 1983009808
      %v2931 = vunpack.c.0.s8 %v2930
      %v2932 = vlaneseq
      %v2933 = vshrl.u32 %v2932, 7
      %v2934 = vsub.s32 %v2931, %v2933
      %v2935 = vrot.slane %v2928, %v2934
      %v2936 = vcombine.low %v2882, %v2888
      %v2938 = vunpack.c.l.s4 1983009808
      %v2939 = vunpack.c.0.s8 %v2938
      %v2940 = vlaneseq
      %v2941 = vshrl.u32 %v2940, 7
      %v2942 = vsub.s32 %v2939, %v2941
      %v2943 = vrot.slane %v2936, %v2942
      %v2944 = vcombine.low %v2919, %v2927
      %v2945 = vcombine.high %v2919, %v2927
      %v2947 = vunpack.c.l.s4 1934713408
      %v2948 = vunpack.c.0.s8 %v2947
      %v2949 = vlaneseq
      %v2950 = vshrl.u32 %v2949, 7
      %v2951 = vsub.s32 %v2948, %v2950
      %v2952 = vrot.slane %v2944, %v2951
      %v2954 = vunpack.c.l.s4 1934713408
      %v2955 = vunpack.c.0.s8 %v2954
      %v2956 = vlaneseq
      %v2957 = vshrl.u32 %v2956, 7
      %v2958 = vsub.s32 %v2955, %v2957
      %v2959 = vrot.slane %v2945, %v2958
      %v2960 = vcombine.low %v2935, %v2943
      %v2961 = vcombine.high %v2935, %v2943
      %v2963 = vunpack.c.l.s4 1934713408
      %v2964 = vunpack.c.0.s8 %v2963
      %v2965 = vlaneseq
      %v2966 = vshrl.u32 %v2965, 7
      %v2967 = vsub.s32 %v2964, %v2966
      %v2968 = vrot.slane %v2960, %v2967
      %v2970 = vunpack.c.l.s4 1934713408
      %v2971 = vunpack.c.0.s8 %v2970
      %v2972 = vlaneseq
      %v2973 = vshrl.u32 %v2972, 7
      %v2974 = vsub.s32 %v2971, %v2973
      %v2975 = vrot.slane %v2961, %v2974
      %v2976 = vcombine.low %v2952, %v2968
      %v2977 = vcombine.high %v2952, %v2968
      %v2978 = vcombine.low %v2959, %v2975
      %v2979 = vcombine.high %v2959, %v2975
      %v2980 = vcombine.low %v2853, %v2895
      %v2982 = vunpack.c.l.s4 1983009808
      %v2983 = vunpack.c.0.s8 %v2982
      %v2984 = vlaneseq
      %v2985 = vshrl.u32 %v2984, 7
      %v2986 = vsub.s32 %v2983, %v2985
      %v2987 = vrot.slane %v2980, %v2986
      %v2988 = vcombine.low %v2892, %v2898
      %v2990 = vunpack.c.l.s4 1983009808
      %v2991 = vunpack.c.0.s8 %v2990
      %v2992 = vlaneseq
      %v2993 = vshrl.u32 %v2992, 7
      %v2994 = vsub.s32 %v2991, %v2993
      %v2995 = vrot.slane %v2988, %v2994
      %v2996 = vcombine.low %v2901, %v2907
      %v2998 = vunpack.c.l.s4 1983009808
      %v2999 = vunpack.c.0.s8 %v2998
      %v3000 = vlaneseq
      %v3001 = vshrl.u32 %v3000, 7
      %v3002 = vsub.s32 %v2999, %v3001
      %v3003 = vrot.slane %v2996, %v3002
      %v3004 = vcombine.low %v2904, %v2910
      %v3006 = vunpack.c.l.s4 1983009808
      %v3007 = vunpack.c.0.s8 %v3006
      %v3008 = vlaneseq
      %v3009 = vshrl.u32 %v3008, 7
      %v3010 = vsub.s32 %v3007, %v3009
      %v3011 = vrot.slane %v3004, %v3010
      %v3012 = vcombine.low %v2987, %v2995
      %v3013 = vcombine.high %v2987, %v2995
      %v3015 = vunpack.c.l.s4 1934713408
      %v3016 = vunpack.c.0.s8 %v3015
      %v3017 = vlaneseq
      %v3018 = vshrl.u32 %v3017, 7
      %v3019 = vsub.s32 %v3016, %v3018
      %v3020 = vrot.slane %v3012, %v3019
      %v3022 = vunpack.c.l.s4 1934713408
      %v3023 = vunpack.c.0.s8 %v3022
      %v3024 = vlaneseq
      %v3025 = vshrl.u32 %v3024, 7
      %v3026 = vsub.s32 %v3023, %v3025
      %v3027 = vrot.slane %v3013, %v3026
      %v3028 = vcombine.low %v3003, %v3011
      %v3029 = vcombine.high %v3003, %v3011
      %v3031 = vunpack.c.l.s4 1934713408
      %v3032 = vunpack.c.0.s8 %v3031
      %v3033 = vlaneseq
      %v3034 = vshrl.u32 %v3033, 7
      %v3035 = vsub.s32 %v3032, %v3034
      %v3036 = vrot.slane %v3028, %v3035
      %v3038 = vunpack.c.l.s4 1934713408
      %v3039 = vunpack.c.0.s8 %v3038
      %v3040 = vlaneseq
      %v3041 = vshrl.u32 %v3040, 7
      %v3042 = vsub.s32 %v3039, %v3041
      %v3043 = vrot.slane %v3029, %v3042
      %v3044 = vcombine.low %v3020, %v3036
      %v3045 = vcombine.high %v3020, %v3036
      %v3046 = vcombine.low %v3027, %v3043
      %v3047 = vcombine.high %v3027, %v3043
      %3056 = vrot.lane.b32.xlu0 %v2976, 1
      %v3057 = vpop.permute.xlu0 %3056
      %3058 = vrot.lane.b32.xlu0 %v3044, 1
      %v3059 = vpop.permute.xlu0 %3058
      %3060 = vrot.lane.b32.xlu0 %v2977, 1
      %v3061 = vpop.permute.xlu0 %3060
      %3062 = vrot.lane.b32.xlu0 %v3045, 1
      %v3063 = vpop.permute.xlu0 %3062
      %3064 = vrot.lane.b32.xlu0 %v2978, 1
      %v3065 = vpop.permute.xlu0 %3064
      %3066 = vrot.lane.b32.xlu0 %v3046, 1
      %v3067 = vpop.permute.xlu0 %3066
      %3068 = vrot.lane.b32.xlu0 %v2979, 1
      %v3069 = vpop.permute.xlu0 %3068
      %3070 = vrot.lane.b32.xlu0 %v3047, 1
      %v3071 = vpop.permute.xlu0 %3070
      %vm3080 = vcmask 138248
      %3081 = vst.msk [vmem:[#allocation2 + $0x1] sm:$0xff] %vm3080, %v3057
      %3082 = vst.msk [vmem:[#allocation2 + $0x9] sm:$0xff] %vm3080, %v3059
      %3083 = vst.msk [vmem:[#allocation2 + $0x19] sm:$0xff] %vm3080, %v3061
      %3084 = vst.msk [vmem:[#allocation2 + $0x21] sm:$0xff] %vm3080, %v3063
      %3085 = vst.msk [vmem:[#allocation2 + $0x31] sm:$0xff] %vm3080, %v3065
      %3086 = vst.msk [vmem:[#allocation2 + $0x39] sm:$0xff] %vm3080, %v3067
      %3087 = vst.msk [vmem:[#allocation2 + $0x49] sm:$0xff] %vm3080, %v3069
      %3088 = vst.msk [vmem:[#allocation2 + $0x51] sm:$0xff] %vm3080, %v3071
      %v3089 = vld [vmem:[#allocation2] sm:$0xff]
      %v3090 = vld [vmem:[#allocation2 + $0x8] sm:$0xff]
      %v3091 = vld [vmem:[#allocation2 + $0x18] sm:$0xff]
      %v3092 = vld [vmem:[#allocation2 + $0x20] sm:$0xff]
      %v3093 = vld [vmem:[#allocation2 + $0x30] sm:$0xff]
      %v3094 = vld [vmem:[#allocation2 + $0x38] sm:$0xff]
      %v3095 = vld [vmem:[#allocation2 + $0x48] sm:$0xff]
      %v3096 = vld [vmem:[#allocation2 + $0x50] sm:$0xff]
      %v3097 = vcombine.low %v3089, %v3093
      %v3098 = vcombine.high %v3089, %v3093
      %v3100 = vunpack.c.l.s4 1983009808
      %v3101 = vunpack.c.0.s8 %v3100
      %v3102 = vlaneseq
      %v3103 = vshrl.u32 %v3102, 7
      %v3104 = vsub.s32 %v3101, %v3103
      %v3105 = vrot.slane %v3097, %v3104
      %v3107 = vunpack.c.l.s4 1983009808
      %v3108 = vunpack.c.0.s8 %v3107
      %v3109 = vlaneseq
      %v3110 = vshrl.u32 %v3109, 7
      %v3111 = vsub.s32 %v3108, %v3110
      %v3112 = vrot.slane %v3098, %v3111
      %v3113 = vcombine.low %v3091, %v3095
      %v3114 = vcombine.high %v3091, %v3095
      %v3116 = vunpack.c.l.s4 1983009808
      %v3117 = vunpack.c.0.s8 %v3116
      %v3118 = vlaneseq
      %v3119 = vshrl.u32 %v3118, 7
      %v3120 = vsub.s32 %v3117, %v3119
      %v3121 = vrot.slane %v3113, %v3120
      %v3123 = vunpack.c.l.s4 1983009808
      %v3124 = vunpack.c.0.s8 %v3123
      %v3125 = vlaneseq
      %v3126 = vshrl.u32 %v3125, 7
      %v3127 = vsub.s32 %v3124, %v3126
      %v3128 = vrot.slane %v3114, %v3127
      %v3129 = vcombine.low %v3105, %v3121
      %v3130 = vcombine.high %v3105, %v3121
      %v3132 = vunpack.c.l.s4 1934713408
      %v3133 = vunpack.c.0.s8 %v3132
      %v3134 = vlaneseq
      %v3135 = vshrl.u32 %v3134, 7
      %v3136 = vsub.s32 %v3133, %v3135
      %v3137 = vrot.slane %v3129, %v3136
      %v3139 = vunpack.c.l.s4 1934713408
      %v3140 = vunpack.c.0.s8 %v3139
      %v3141 = vlaneseq
      %v3142 = vshrl.u32 %v3141, 7
      %v3143 = vsub.s32 %v3140, %v3142
      %v3144 = vrot.slane %v3130, %v3143
      %v3145 = vcombine.low %v3112, %v3128
      %v3146 = vcombine.high %v3112, %v3128
      %v3148 = vunpack.c.l.s4 1934713408
      %v3149 = vunpack.c.0.s8 %v3148
      %v3150 = vlaneseq
      %v3151 = vshrl.u32 %v3150, 7
      %v3152 = vsub.s32 %v3149, %v3151
      %v3153 = vrot.slane %v3145, %v3152
      %v3155 = vunpack.c.l.s4 1934713408
      %v3156 = vunpack.c.0.s8 %v3155
      %v3157 = vlaneseq
      %v3158 = vshrl.u32 %v3157, 7
      %v3159 = vsub.s32 %v3156, %v3158
      %v3160 = vrot.slane %v3146, %v3159
      %v3161 = vcombine.high %v3137, 0.0
      %v3162 = vcombine.high %v3144, 0.0
      %v3163 = vcombine.high %v3153, 0.0
      %v3164 = vcombine.high %v3160, 0.0
      %v3165 = vcombine.low %v3090, %v3094
      %v3166 = vcombine.high %v3090, %v3094
      %v3168 = vunpack.c.l.s4 1983009808
      %v3169 = vunpack.c.0.s8 %v3168
      %v3170 = vlaneseq
      %v3171 = vshrl.u32 %v3170, 7
      %v3172 = vsub.s32 %v3169, %v3171
      %v3173 = vrot.slane %v3165, %v3172
      %v3175 = vunpack.c.l.s4 1983009808
      %v3176 = vunpack.c.0.s8 %v3175
      %v3177 = vlaneseq
      %v3178 = vshrl.u32 %v3177, 7
      %v3179 = vsub.s32 %v3176, %v3178
      %v3180 = vrot.slane %v3166, %v3179
      %v3181 = vcombine.low %v3092, %v3096
      %v3182 = vcombine.high %v3092, %v3096
      %v3184 = vunpack.c.l.s4 1983009808
      %v3185 = vunpack.c.0.s8 %v3184
      %v3186 = vlaneseq
      %v3187 = vshrl.u32 %v3186, 7
      %v3188 = vsub.s32 %v3185, %v3187
      %v3189 = vrot.slane %v3181, %v3188
      %v3191 = vunpack.c.l.s4 1983009808
      %v3192 = vunpack.c.0.s8 %v3191
      %v3193 = vlaneseq
      %v3194 = vshrl.u32 %v3193, 7
      %v3195 = vsub.s32 %v3192, %v3194
      %v3196 = vrot.slane %v3182, %v3195
      %v3197 = vcombine.low %v3173, %v3189
      %v3198 = vcombine.high %v3173, %v3189
      %v3200 = vunpack.c.l.s4 1934713408
      %v3201 = vunpack.c.0.s8 %v3200
      %v3202 = vlaneseq
      %v3203 = vshrl.u32 %v3202, 7
      %v3204 = vsub.s32 %v3201, %v3203
      %v3205 = vrot.slane %v3197, %v3204
      %v3207 = vunpack.c.l.s4 1934713408
      %v3208 = vunpack.c.0.s8 %v3207
      %v3209 = vlaneseq
      %v3210 = vshrl.u32 %v3209, 7
      %v3211 = vsub.s32 %v3208, %v3210
      %v3212 = vrot.slane %v3198, %v3211
      %v3213 = vcombine.low %v3180, %v3196
      %v3214 = vcombine.high %v3180, %v3196
      %v3216 = vunpack.c.l.s4 1934713408
      %v3217 = vunpack.c.0.s8 %v3216
      %v3218 = vlaneseq
      %v3219 = vshrl.u32 %v3218, 7
      %v3220 = vsub.s32 %v3217, %v3219
      %v3221 = vrot.slane %v3213, %v3220
      %v3223 = vunpack.c.l.s4 1934713408
      %v3224 = vunpack.c.0.s8 %v3223
      %v3225 = vlaneseq
      %v3226 = vshrl.u32 %v3225, 7
      %v3227 = vsub.s32 %v3224, %v3226
      %v3228 = vrot.slane %v3214, %v3227
      %v3229 = vcombine.high %v3205, 0.0
      %v3230 = vcombine.high %v3212, 0.0
      %v3231 = vcombine.high %v3221, 0.0
      %v3232 = vcombine.high %v3228, 0.0
      %3234 = vrot.lane.b32.xlu0 %v3161, 16
      %v3235 = vpop.permute.xlu0 %3234
      %3238 = vrot.lane.b32.xlu0 %v3144, 32
      %v3239 = vpop.permute.xlu0 %3238
      %3242 = vrot.lane.b32.xlu0 %v3162, 48
      %v3243 = vpop.permute.xlu0 %3242
      %3246 = vrot.lane.b32.xlu0 %v3153, 64
      %v3247 = vpop.permute.xlu0 %3246
      %3250 = vrot.lane.b32.xlu0 %v3163, 80
      %v3251 = vpop.permute.xlu0 %3250
      %3254 = vrot.lane.b32.xlu0 %v3160, 96
      %v3255 = vpop.permute.xlu0 %3254
      %3258 = vrot.lane.b32.xlu0 %v3164, 112
      %v3259 = vpop.permute.xlu0 %3258
      %3262 = vrot.lane.b32.xlu0 %v3229, 16
      %v3263 = vpop.permute.xlu0 %3262
      %3266 = vrot.lane.b32.xlu0 %v3212, 32
      %v3267 = vpop.permute.xlu0 %3266
      %3270 = vrot.lane.b32.xlu0 %v3230, 48
      %v3271 = vpop.permute.xlu0 %3270
      %3274 = vrot.lane.b32.xlu0 %v3221, 64
      %v3275 = vpop.permute.xlu0 %3274
      %3278 = vrot.lane.b32.xlu0 %v3231, 80
      %v3279 = vpop.permute.xlu0 %3278
      %3282 = vrot.lane.b32.xlu0 %v3228, 96
      %v3283 = vpop.permute.xlu0 %3282
      %3286 = vrot.lane.b32.xlu0 %v3232, 112
      %v3287 = vpop.permute.xlu0 %3286
      %v3289 = vsel %vm426, %v3137, %v3235
      %v3290 = vsel %vm428, %v3289, %v3239
      %v3291 = vsel %vm430, %v3290, %v3243
      %v3292 = vsel %vm432, %v3291, %v3247
      %v3293 = vsel %vm434, %v3292, %v3251
      %v3294 = vsel %vm436, %v3293, %v3255
      %v3295 = vsel %vm438, %v3294, %v3259
      %v3296 = vsel %vm426, %v3205, %v3263
      %v3297 = vsel %vm428, %v3296, %v3267
      %v3298 = vsel %vm430, %v3297, %v3271
      %v3299 = vsel %vm432, %v3298, %v3275
      %v3300 = vsel %vm434, %v3299, %v3279
      %v3301 = vsel %vm436, %v3300, %v3283
      %v3302 = vsel %vm438, %v3301, %v3287
      %v3303 = vpack.c.bf16 %v3295, %v3295
      %v3304 = vpack.c.bf16 %v3302, %v3302
      %v3305 = vld [vmem:[%s3] sm:$0x3]
      %3314 = vrot.lane.b32.xlu0 %v3089, 127
      %v3315 = vpop.permute.xlu0 %3314
      %3316 = vrot.lane.b32.xlu0 %v3090, 127
      %v3317 = vpop.permute.xlu0 %3316
      %3318 = vrot.lane.b32.xlu0 %v3091, 127
      %v3319 = vpop.permute.xlu0 %3318
      %3320 = vrot.lane.b32.xlu0 %v3092, 127
      %v3321 = vpop.permute.xlu0 %3320
      %3322 = vrot.lane.b32.xlu0 %v3093, 127
      %v3323 = vpop.permute.xlu0 %3322
      %3324 = vrot.lane.b32.xlu0 %v3094, 127
      %v3325 = vpop.permute.xlu0 %3324
      %3326 = vrot.lane.b32.xlu0 %v3095, 127
      %v3327 = vpop.permute.xlu0 %3326
      %3328 = vrot.lane.b32.xlu0 %v3096, 127
      %v3329 = vpop.permute.xlu0 %3328
      %v3338 = vcombine.low %v3315, %v3323
      %v3339 = vcombine.high %v3315, %v3323
      %v3341 = vunpack.c.l.s4 1983009808
      %v3342 = vunpack.c.0.s8 %v3341
      %v3343 = vlaneseq
      %v3344 = vshrl.u32 %v3343, 7
      %v3345 = vsub.s32 %v3342, %v3344
      %v3346 = vrot.slane %v3338, %v3345
      %v3348 = vunpack.c.l.s4 1983009808
      %v3349 = vunpack.c.0.s8 %v3348
      %v3350 = vlaneseq
      %v3351 = vshrl.u32 %v3350, 7
      %v3352 = vsub.s32 %v3349, %v3351
      %v3353 = vrot.slane %v3339, %v3352
      %v3354 = vcombine.low %v3319, %v3327
      %v3355 = vcombine.high %v3319, %v3327
      %v3357 = vunpack.c.l.s4 1983009808
      %v3358 = vunpack.c.0.s8 %v3357
      %v3359 = vlaneseq
      %v3360 = vshrl.u32 %v3359, 7
      %v3361 = vsub.s32 %v3358, %v3360
      %v3362 = vrot.slane %v3354, %v3361
      %v3364 = vunpack.c.l.s4 1983009808
      %v3365 = vunpack.c.0.s8 %v3364
      %v3366 = vlaneseq
      %v3367 = vshrl.u32 %v3366, 7
      %v3368 = vsub.s32 %v3365, %v3367
      %v3369 = vrot.slane %v3355, %v3368
      %v3370 = vcombine.low %v3346, %v3362
      %v3371 = vcombine.high %v3346, %v3362
      %v3373 = vunpack.c.l.s4 1934713408
      %v3374 = vunpack.c.0.s8 %v3373
      %v3375 = vlaneseq
      %v3376 = vshrl.u32 %v3375, 7
      %v3377 = vsub.s32 %v3374, %v3376
      %v3378 = vrot.slane %v3370, %v3377
      %v3380 = vunpack.c.l.s4 1934713408
      %v3381 = vunpack.c.0.s8 %v3380
      %v3382 = vlaneseq
      %v3383 = vshrl.u32 %v3382, 7
      %v3384 = vsub.s32 %v3381, %v3383
      %v3385 = vrot.slane %v3371, %v3384
      %v3386 = vcombine.low %v3353, %v3369
      %v3387 = vcombine.high %v3353, %v3369
      %v3389 = vunpack.c.l.s4 1934713408
      %v3390 = vunpack.c.0.s8 %v3389
      %v3391 = vlaneseq
      %v3392 = vshrl.u32 %v3391, 7
      %v3393 = vsub.s32 %v3390, %v3392
      %v3394 = vrot.slane %v3386, %v3393
      %v3396 = vunpack.c.l.s4 1934713408
      %v3397 = vunpack.c.0.s8 %v3396
      %v3398 = vlaneseq
      %v3399 = vshrl.u32 %v3398, 7
      %v3400 = vsub.s32 %v3397, %v3399
      %v3401 = vrot.slane %v3387, %v3400
      %v3402 = vcombine.high %v3378, 0.0
      %v3403 = vcombine.high %v3385, 0.0
      %v3404 = vcombine.high %v3394, 0.0
      %v3405 = vcombine.high %v3401, 0.0
      %v3406 = vcombine.low %v3317, %v3325
      %v3407 = vcombine.high %v3317, %v3325
      %v3409 = vunpack.c.l.s4 1983009808
      %v3410 = vunpack.c.0.s8 %v3409
      %v3411 = vlaneseq
      %v3412 = vshrl.u32 %v3411, 7
      %v3413 = vsub.s32 %v3410, %v3412
      %v3414 = vrot.slane %v3406, %v3413
      %v3416 = vunpack.c.l.s4 1983009808
      %v3417 = vunpack.c.0.s8 %v3416
      %v3418 = vlaneseq
      %v3419 = vshrl.u32 %v3418, 7
      %v3420 = vsub.s32 %v3417, %v3419
      %v3421 = vrot.slane %v3407, %v3420
      %v3422 = vcombine.low %v3321, %v3329
      %v3423 = vcombine.high %v3321, %v3329
      %v3425 = vunpack.c.l.s4 1983009808
      %v3426 = vunpack.c.0.s8 %v3425
      %v3427 = vlaneseq
      %v3428 = vshrl.u32 %v3427, 7
      %v3429 = vsub.s32 %v3426, %v3428
      %v3430 = vrot.slane %v3422, %v3429
      %v3432 = vunpack.c.l.s4 1983009808
      %v3433 = vunpack.c.0.s8 %v3432
      %v3434 = vlaneseq
      %v3435 = vshrl.u32 %v3434, 7
      %v3436 = vsub.s32 %v3433, %v3435
      %v3437 = vrot.slane %v3423, %v3436
      %v3438 = vcombine.low %v3414, %v3430
      %v3439 = vcombine.high %v3414, %v3430
      %v3441 = vunpack.c.l.s4 1934713408
      %v3442 = vunpack.c.0.s8 %v3441
      %v3443 = vlaneseq
      %v3444 = vshrl.u32 %v3443, 7
      %v3445 = vsub.s32 %v3442, %v3444
      %v3446 = vrot.slane %v3438, %v3445
      %v3448 = vunpack.c.l.s4 1934713408
      %v3449 = vunpack.c.0.s8 %v3448
      %v3450 = vlaneseq
      %v3451 = vshrl.u32 %v3450, 7
      %v3452 = vsub.s32 %v3449, %v3451
      %v3453 = vrot.slane %v3439, %v3452
      %v3454 = vcombine.low %v3421, %v3437
      %v3455 = vcombine.high %v3421, %v3437
      %v3457 = vunpack.c.l.s4 1934713408
      %v3458 = vunpack.c.0.s8 %v3457
      %v3459 = vlaneseq
      %v3460 = vshrl.u32 %v3459, 7
      %v3461 = vsub.s32 %v3458, %v3460
      %v3462 = vrot.slane %v3454, %v3461
      %v3464 = vunpack.c.l.s4 1934713408
      %v3465 = vunpack.c.0.s8 %v3464
      %v3466 = vlaneseq
      %v3467 = vshrl.u32 %v3466, 7
      %v3468 = vsub.s32 %v3465, %v3467
      %v3469 = vrot.slane %v3455, %v3468
      %v3470 = vcombine.high %v3446, 0.0
      %v3471 = vcombine.high %v3453, 0.0
      %v3472 = vcombine.high %v3462, 0.0
      %v3473 = vcombine.high %v3469, 0.0
      %3475 = vrot.lane.b32.xlu0 %v3402, 16
      %v3476 = vpop.permute.xlu0 %3475
      %3479 = vrot.lane.b32.xlu0 %v3385, 32
      %v3480 = vpop.permute.xlu0 %3479
      %3483 = vrot.lane.b32.xlu0 %v3403, 48
      %v3484 = vpop.permute.xlu0 %3483
      %3487 = vrot.lane.b32.xlu0 %v3394, 64
      %v3488 = vpop.permute.xlu0 %3487
      %3491 = vrot.lane.b32.xlu0 %v3404, 80
      %v3492 = vpop.permute.xlu0 %3491
      %3495 = vrot.lane.b32.xlu0 %v3401, 96
      %v3496 = vpop.permute.xlu0 %3495
      %3499 = vrot.lane.b32.xlu0 %v3405, 112
      %v3500 = vpop.permute.xlu0 %3499
      %3503 = vrot.lane.b32.xlu0 %v3470, 16
      %v3504 = vpop.permute.xlu0 %3503
      %3507 = vrot.lane.b32.xlu0 %v3453, 32
      %v3508 = vpop.permute.xlu0 %3507
      %3511 = vrot.lane.b32.xlu0 %v3471, 48
      %v3512 = vpop.permute.xlu0 %3511
      %3515 = vrot.lane.b32.xlu0 %v3462, 64
      %v3516 = vpop.permute.xlu0 %3515
      %3519 = vrot.lane.b32.xlu0 %v3472, 80
      %v3520 = vpop.permute.xlu0 %3519
      %3523 = vrot.lane.b32.xlu0 %v3469, 96
      %v3524 = vpop.permute.xlu0 %3523
      %3527 = vrot.lane.b32.xlu0 %v3473, 112
      %v3528 = vpop.permute.xlu0 %3527
      %v3530 = vsel %vm426, %v3378, %v3476
      %v3531 = vsel %vm428, %v3530, %v3480
      %v3532 = vsel %vm430, %v3531, %v3484
      %v3533 = vsel %vm432, %v3532, %v3488
      %v3534 = vsel %vm434, %v3533, %v3492
      %v3535 = vsel %vm436, %v3534, %v3496
      %v3536 = vsel %vm438, %v3535, %v3500
      %v3537 = vsel %vm426, %v3446, %v3504
      %v3538 = vsel %vm428, %v3537, %v3508
      %v3539 = vsel %vm430, %v3538, %v3512
      %v3540 = vsel %vm432, %v3539, %v3516
      %v3541 = vsel %vm434, %v3540, %v3520
      %v3542 = vsel %vm436, %v3541, %v3524
      %v3543 = vsel %vm438, %v3542, %v3528
      %v3544 = vpack.c.bf16 %v3536, %v3536
      %v3545 = vpack.c.bf16 %v3543, %v3543
      %s3546 = scalar_lea.vmem %s3, 2
      %v3547 = vld [vmem:[%s3546] sm:$0x3]
      %v3549 = vsel %vm692, %v3547, 0
      %v3552 = vsel %vm696, %v3544, 0
      %v3555 = vsel %vm696, %v3545, 0
      %3557 = vmatprep.subr.bf16.mxu0 0
      %3558 = vmatpush1.bf16.msra.mxu0 0
      %3559 = vmatprep.subr.bf16.mxu0 0
      %3560 = vmatpush1.bf16.msra.mxu0 0
      %3561 = vmatprep.subr.bf16.mxu0 0
      %3562 = vmatpush1.bf16.msra.mxu0 0
      %3563 = vmatprep.subr.bf16.mxu0 0
      %3564 = vmatpush1.bf16.msra.mxu0 0
      %3565 = vmatprep.subr.bf16.mxu0 0
      %3566 = vmatpush1.bf16.msra.mxu0 0
      %3567 = vmatprep.subr.bf16.mxu0 0
      %3568 = vmatpush1.bf16.msra.mxu0 0
      %3569 = vmatprep.subr.bf16.mxu0 0
      %3570 = vmatpush1.bf16.msra.mxu0 0
      %3571 = vmatprep.subr.bf16.mxu0 %v3555
      %3572 = vmatpush1.bf16.msra.mxu0 %v3552
      %3573 = vmatprep.subr.bf16.mxu0 0
      %3574 = vmatpush2.bf16.msra.mxu0 0
      %3575 = vmatprep.subr.bf16.mxu0 0
      %3576 = vmatpush2.bf16.msra.mxu0 0
      %3577 = vmatprep.subr.bf16.mxu0 0
      %3578 = vmatpush2.bf16.msra.mxu0 0
      %3579 = vmatprep.subr.bf16.mxu0 0
      %3580 = vmatpush2.bf16.msra.mxu0 0
      %3581 = vmatprep.subr.bf16.mxu0 0
      %3582 = vmatpush2.bf16.msra.mxu0 0
      %3583 = vmatprep.subr.bf16.mxu0 0
      %3584 = vmatpush2.bf16.msra.mxu0 0
      %3585 = vmatprep.subr.bf16.mxu0 0
      %3586 = vmatpush2.bf16.msra.mxu0 0
      %3587 = vmatprep.subr.bf16.mxu0 0
      %3588 = vmatpush2.bf16.msra.mxu0 0
      %3589 = vmatprep.mubr.bf16.mxu0 0
      %3590 = vmatmul.mubr.bf16.gmra.mxu0 %v3549
      %v3591 = vpop.f32.mrf.mxu0
      %v3592 = vadd.f32 0.0, %v3591
      %v3593 = vpop.f32.mrf.mxu0
      %v3594 = vadd.f32 0.0, %v3593
      %v3595 = vpop.f32.mrf.mxu0
      %v3596 = vpop.f32.mrf.mxu0
      %3597 = vdwg.mxu0
      %v3599 = vsel %vm692, %v3305, 0
      %v3602 = vsel %vm696, %v3303, 0
      %v3605 = vsel %vm696, %v3304, 0
      %3607 = vmatprep.subr.bf16.mxu0 0
      %3608 = vmatpush1.bf16.msra.mxu0 0
      %3609 = vmatprep.subr.bf16.mxu0 0
      %3610 = vmatpush1.bf16.msra.mxu0 0
      %3611 = vmatprep.subr.bf16.mxu0 0
      %3612 = vmatpush1.bf16.msra.mxu0 0
      %3613 = vmatprep.subr.bf16.mxu0 0
      %3614 = vmatpush1.bf16.msra.mxu0 0
      %3615 = vmatprep.subr.bf16.mxu0 0
      %3616 = vmatpush1.bf16.msra.mxu0 0
      %3617 = vmatprep.subr.bf16.mxu0 0
      %3618 = vmatpush1.bf16.msra.mxu0 0
      %3619 = vmatprep.subr.bf16.mxu0 0
      %3620 = vmatpush1.bf16.msra.mxu0 0
      %3621 = vmatprep.subr.bf16.mxu0 %v3605
      %3622 = vmatpush1.bf16.msra.mxu0 %v3602
      %3623 = vmatprep.subr.bf16.mxu0 0
      %3624 = vmatpush2.bf16.msra.mxu0 0
      %3625 = vmatprep.subr.bf16.mxu0 0
      %3626 = vmatpush2.bf16.msra.mxu0 0
      %3627 = vmatprep.subr.bf16.mxu0 0
      %3628 = vmatpush2.bf16.msra.mxu0 0
      %3629 = vmatprep.subr.bf16.mxu0 0
      %3630 = vmatpush2.bf16.msra.mxu0 0
      %3631 = vmatprep.subr.bf16.mxu0 0
      %3632 = vmatpush2.bf16.msra.mxu0 0
      %3633 = vmatprep.subr.bf16.mxu0 0
      %3634 = vmatpush2.bf16.msra.mxu0 0
      %3635 = vmatprep.subr.bf16.mxu0 0
      %3636 = vmatpush2.bf16.msra.mxu0 0
      %3637 = vmatprep.subr.bf16.mxu0 0
      %3638 = vmatpush2.bf16.msra.mxu0 0
      %3639 = vmatprep.mubr.bf16.mxu0 0
      %3640 = vmatmul.mubr.bf16.gmra.mxu0 %v3599
      %v3641 = vpop.f32.mrf.mxu0
      %v3642 = vadd.f32 %v3592, %v3641
      %v3643 = vpop.f32.mrf.mxu0
      %v3644 = vadd.f32 %v3594, %v3643
      %v3645 = vpop.f32.mrf.mxu0
      %v3646 = vpop.f32.mrf.mxu0
      %3647 = vdwg.mxu0
      %v3648 = vld [vmem:[#allocation2] sm:$0xff]
      %v3649 = vld [vmem:[#allocation2 + $0x8] sm:$0xff]
      %v3650 = vld [vmem:[#allocation2 + $0x18] sm:$0xff]
      %v3651 = vld [vmem:[#allocation2 + $0x20] sm:$0xff]
      %v3652 = vld [vmem:[#allocation2 + $0x30] sm:$0xff]
      %v3653 = vld [vmem:[#allocation2 + $0x38] sm:$0xff]
      %v3654 = vld [vmem:[#allocation2 + $0x48] sm:$0xff]
      %v3655 = vld [vmem:[#allocation2 + $0x50] sm:$0xff]
      %3664 = vrot.lane.b32.xlu0 %v3648, 126
      %v3665 = vpop.permute.xlu0 %3664
      %3666 = vrot.lane.b32.xlu0 %v3649, 126
      %v3667 = vpop.permute.xlu0 %3666
      %3668 = vrot.lane.b32.xlu0 %v3650, 126
      %v3669 = vpop.permute.xlu0 %3668
      %3670 = vrot.lane.b32.xlu0 %v3651, 126
      %v3671 = vpop.permute.xlu0 %3670
      %3672 = vrot.lane.b32.xlu0 %v3652, 126
      %v3673 = vpop.permute.xlu0 %3672
      %3674 = vrot.lane.b32.xlu0 %v3653, 126
      %v3675 = vpop.permute.xlu0 %3674
      %3676 = vrot.lane.b32.xlu0 %v3654, 126
      %v3677 = vpop.permute.xlu0 %3676
      %3678 = vrot.lane.b32.xlu0 %v3655, 126
      %v3679 = vpop.permute.xlu0 %3678
      %v3688 = vcombine.low %v3665, %v3673
      %v3689 = vcombine.high %v3665, %v3673
      %v3691 = vunpack.c.l.s4 1983009808
      %v3692 = vunpack.c.0.s8 %v3691
      %v3693 = vlaneseq
      %v3694 = vshrl.u32 %v3693, 7
      %v3695 = vsub.s32 %v3692, %v3694
      %v3696 = vrot.slane %v3688, %v3695
      %v3698 = vunpack.c.l.s4 1983009808
      %v3699 = vunpack.c.0.s8 %v3698
      %v3700 = vlaneseq
      %v3701 = vshrl.u32 %v3700, 7
      %v3702 = vsub.s32 %v3699, %v3701
      %v3703 = vrot.slane %v3689, %v3702
      %v3704 = vcombine.low %v3669, %v3677
      %v3705 = vcombine.high %v3669, %v3677
      %v3707 = vunpack.c.l.s4 1983009808
      %v3708 = vunpack.c.0.s8 %v3707
      %v3709 = vlaneseq
      %v3710 = vshrl.u32 %v3709, 7
      %v3711 = vsub.s32 %v3708, %v3710
      %v3712 = vrot.slane %v3704, %v3711
      %v3714 = vunpack.c.l.s4 1983009808
      %v3715 = vunpack.c.0.s8 %v3714
      %v3716 = vlaneseq
      %v3717 = vshrl.u32 %v3716, 7
      %v3718 = vsub.s32 %v3715, %v3717
      %v3719 = vrot.slane %v3705, %v3718
      %v3720 = vcombine.low %v3696, %v3712
      %v3721 = vcombine.high %v3696, %v3712
      %v3723 = vunpack.c.l.s4 1934713408
      %v3724 = vunpack.c.0.s8 %v3723
      %v3725 = vlaneseq
      %v3726 = vshrl.u32 %v3725, 7
      %v3727 = vsub.s32 %v3724, %v3726
      %v3728 = vrot.slane %v3720, %v3727
      %v3730 = vunpack.c.l.s4 1934713408
      %v3731 = vunpack.c.0.s8 %v3730
      %v3732 = vlaneseq
      %v3733 = vshrl.u32 %v3732, 7
      %v3734 = vsub.s32 %v3731, %v3733
      %v3735 = vrot.slane %v3721, %v3734
      %v3736 = vcombine.low %v3703, %v3719
      %v3737 = vcombine.high %v3703, %v3719
      %v3739 = vunpack.c.l.s4 1934713408
      %v3740 = vunpack.c.0.s8 %v3739
      %v3741 = vlaneseq
      %v3742 = vshrl.u32 %v3741, 7
      %v3743 = vsub.s32 %v3740, %v3742
      %v3744 = vrot.slane %v3736, %v3743
      %v3746 = vunpack.c.l.s4 1934713408
      %v3747 = vunpack.c.0.s8 %v3746
      %v3748 = vlaneseq
      %v3749 = vshrl.u32 %v3748, 7
      %v3750 = vsub.s32 %v3747, %v3749
      %v3751 = vrot.slane %v3737, %v3750
      %v3752 = vcombine.high %v3728, 0.0
      %v3753 = vcombine.high %v3735, 0.0
      %v3754 = vcombine.high %v3744, 0.0
      %v3755 = vcombine.high %v3751, 0.0
      %v3756 = vcombine.low %v3667, %v3675
      %v3757 = vcombine.high %v3667, %v3675
      %v3759 = vunpack.c.l.s4 1983009808
      %v3760 = vunpack.c.0.s8 %v3759
      %v3761 = vlaneseq
      %v3762 = vshrl.u32 %v3761, 7
      %v3763 = vsub.s32 %v3760, %v3762
      %v3764 = vrot.slane %v3756, %v3763
      %v3766 = vunpack.c.l.s4 1983009808
      %v3767 = vunpack.c.0.s8 %v3766
      %v3768 = vlaneseq
      %v3769 = vshrl.u32 %v3768, 7
      %v3770 = vsub.s32 %v3767, %v3769
      %v3771 = vrot.slane %v3757, %v3770
      %v3772 = vcombine.low %v3671, %v3679
      %v3773 = vcombine.high %v3671, %v3679
      %v3775 = vunpack.c.l.s4 1983009808
      %v3776 = vunpack.c.0.s8 %v3775
      %v3777 = vlaneseq
      %v3778 = vshrl.u32 %v3777, 7
      %v3779 = vsub.s32 %v3776, %v3778
      %v3780 = vrot.slane %v3772, %v3779
      %v3782 = vunpack.c.l.s4 1983009808
      %v3783 = vunpack.c.0.s8 %v3782
      %v3784 = vlaneseq
      %v3785 = vshrl.u32 %v3784, 7
      %v3786 = vsub.s32 %v3783, %v3785
      %v3787 = vrot.slane %v3773, %v3786
      %v3788 = vcombine.low %v3764, %v3780
      %v3789 = vcombine.high %v3764, %v3780
      %v3791 = vunpack.c.l.s4 1934713408
      %v3792 = vunpack.c.0.s8 %v3791
      %v3793 = vlaneseq
      %v3794 = vshrl.u32 %v3793, 7
      %v3795 = vsub.s32 %v3792, %v3794
      %v3796 = vrot.slane %v3788, %v3795
      %v3798 = vunpack.c.l.s4 1934713408
      %v3799 = vunpack.c.0.s8 %v3798
      %v3800 = vlaneseq
      %v3801 = vshrl.u32 %v3800, 7
      %v3802 = vsub.s32 %v3799, %v3801
      %v3803 = vrot.slane %v3789, %v3802
      %v3804 = vcombine.low %v3771, %v3787
      %v3805 = vcombine.high %v3771, %v3787
      %v3807 = vunpack.c.l.s4 1934713408
      %v3808 = vunpack.c.0.s8 %v3807
      %v3809 = vlaneseq
      %v3810 = vshrl.u32 %v3809, 7
      %v3811 = vsub.s32 %v3808, %v3810
      %v3812 = vrot.slane %v3804, %v3811
      %v3814 = vunpack.c.l.s4 1934713408
      %v3815 = vunpack.c.0.s8 %v3814
      %v3816 = vlaneseq
      %v3817 = vshrl.u32 %v3816, 7
      %v3818 = vsub.s32 %v3815, %v3817
      %v3819 = vrot.slane %v3805, %v3818
      %v3820 = vcombine.high %v3796, 0.0
      %v3821 = vcombine.high %v3803, 0.0
      %v3822 = vcombine.high %v3812, 0.0
      %v3823 = vcombine.high %v3819, 0.0
      %3825 = vrot.lane.b32.xlu0 %v3752, 16
      %v3826 = vpop.permute.xlu0 %3825
      %3829 = vrot.lane.b32.xlu0 %v3735, 32
      %v3830 = vpop.permute.xlu0 %3829
      %3833 = vrot.lane.b32.xlu0 %v3753, 48
      %v3834 = vpop.permute.xlu0 %3833
      %3837 = vrot.lane.b32.xlu0 %v3744, 64
      %v3838 = vpop.permute.xlu0 %3837
      %3841 = vrot.lane.b32.xlu0 %v3754, 80
      %v3842 = vpop.permute.xlu0 %3841
      %3845 = vrot.lane.b32.xlu0 %v3751, 96
      %v3846 = vpop.permute.xlu0 %3845
      %3849 = vrot.lane.b32.xlu0 %v3755, 112
      %v3850 = vpop.permute.xlu0 %3849
      %3853 = vrot.lane.b32.xlu0 %v3820, 16
      %v3854 = vpop.permute.xlu0 %3853
      %3857 = vrot.lane.b32.xlu0 %v3803, 32
      %v3858 = vpop.permute.xlu0 %3857
      %3861 = vrot.lane.b32.xlu0 %v3821, 48
      %v3862 = vpop.permute.xlu0 %3861
      %3865 = vrot.lane.b32.xlu0 %v3812, 64
      %v3866 = vpop.permute.xlu0 %3865
      %3869 = vrot.lane.b32.xlu0 %v3822, 80
      %v3870 = vpop.permute.xlu0 %3869
      %3873 = vrot.lane.b32.xlu0 %v3819, 96
      %v3874 = vpop.permute.xlu0 %3873
      %3877 = vrot.lane.b32.xlu0 %v3823, 112
      %v3878 = vpop.permute.xlu0 %3877
      %v3880 = vsel %vm426, %v3728, %v3826
      %v3881 = vsel %vm428, %v3880, %v3830
      %v3882 = vsel %vm430, %v3881, %v3834
      %v3883 = vsel %vm432, %v3882, %v3838
      %v3884 = vsel %vm434, %v3883, %v3842
      %v3885 = vsel %vm436, %v3884, %v3846
      %v3886 = vsel %vm438, %v3885, %v3850
      %v3887 = vsel %vm426, %v3796, %v3854
      %v3888 = vsel %vm428, %v3887, %v3858
      %v3889 = vsel %vm430, %v3888, %v3862
      %v3890 = vsel %vm432, %v3889, %v3866
      %v3891 = vsel %vm434, %v3890, %v3870
      %v3892 = vsel %vm436, %v3891, %v3874
      %v3893 = vsel %vm438, %v3892, %v3878
      %v3894 = vpack.c.bf16 %v3886, %v3886
      %v3895 = vpack.c.bf16 %v3893, %v3893
      %s3896 = scalar_lea.vmem %s3, 4
      %v3897 = vld [vmem:[%s3896] sm:$0x3]
      %v3899 = vsel %vm692, %v3897, 0
      %v3902 = vsel %vm696, %v3894, 0
      %v3905 = vsel %vm696, %v3895, 0
      %3907 = vmatprep.subr.bf16.mxu0 0
      %3908 = vmatpush1.bf16.msra.mxu0 0
      %3909 = vmatprep.subr.bf16.mxu0 0
      %3910 = vmatpush1.bf16.msra.mxu0 0
      %3911 = vmatprep.subr.bf16.mxu0 0
      %3912 = vmatpush1.bf16.msra.mxu0 0
      %3913 = vmatprep.subr.bf16.mxu0 0
      %3914 = vmatpush1.bf16.msra.mxu0 0
      %3915 = vmatprep.subr.bf16.mxu0 0
      %3916 = vmatpush1.bf16.msra.mxu0 0
      %3917 = vmatprep.subr.bf16.mxu0 0
      %3918 = vmatpush1.bf16.msra.mxu0 0
      %3919 = vmatprep.subr.bf16.mxu0 0
      %3920 = vmatpush1.bf16.msra.mxu0 0
      %3921 = vmatprep.subr.bf16.mxu0 %v3905
      %3922 = vmatpush1.bf16.msra.mxu0 %v3902
      %3923 = vmatprep.subr.bf16.mxu0 0
      %3924 = vmatpush2.bf16.msra.mxu0 0
      %3925 = vmatprep.subr.bf16.mxu0 0
      %3926 = vmatpush2.bf16.msra.mxu0 0
      %3927 = vmatprep.subr.bf16.mxu0 0
      %3928 = vmatpush2.bf16.msra.mxu0 0
      %3929 = vmatprep.subr.bf16.mxu0 0
      %3930 = vmatpush2.bf16.msra.mxu0 0
      %3931 = vmatprep.subr.bf16.mxu0 0
      %3932 = vmatpush2.bf16.msra.mxu0 0
      %3933 = vmatprep.subr.bf16.mxu0 0
      %3934 = vmatpush2.bf16.msra.mxu0 0
      %3935 = vmatprep.subr.bf16.mxu0 0
      %3936 = vmatpush2.bf16.msra.mxu0 0
      %3937 = vmatprep.subr.bf16.mxu0 0
      %3938 = vmatpush2.bf16.msra.mxu0 0
      %3939 = vmatprep.mubr.bf16.mxu0 0
      %3940 = vmatmul.mubr.bf16.gmra.mxu0 %v3899
      %v3941 = vpop.f32.mrf.mxu0
      %v3942 = vadd.f32 0.0, %v3941
      %v3943 = vpop.f32.mrf.mxu0
      %v3944 = vadd.f32 0.0, %v3943
      %v3945 = vpop.f32.mrf.mxu0
      %v3946 = vpop.f32.mrf.mxu0
      %3947 = vdwg.mxu0
      %v3948 = vadd.f32 %v3642, %v3942
      %v3949 = vadd.f32 %v3644, %v3944
      %v3950 = vld [vmem:[#allocation2 + $0x1] sm:$0xff]
      %v3951 = vld [vmem:[#allocation2 + $0x9] sm:$0xff]
      %v3952 = vld [vmem:[#allocation2 + $0x19] sm:$0xff]
      %v3953 = vld [vmem:[#allocation2 + $0x21] sm:$0xff]
      %v3954 = vld [vmem:[#allocation2 + $0x31] sm:$0xff]
      %v3955 = vld [vmem:[#allocation2 + $0x39] sm:$0xff]
      %v3956 = vld [vmem:[#allocation2 + $0x49] sm:$0xff]
      %v3957 = vld [vmem:[#allocation2 + $0x51] sm:$0xff]
      %v3958 = vcombine.low %v3950, %v3954
      %v3959 = vcombine.high %v3950, %v3954
      %v3961 = vunpack.c.l.s4 1983009808
      %v3962 = vunpack.c.0.s8 %v3961
      %v3963 = vlaneseq
      %v3964 = vshrl.u32 %v3963, 7
      %v3965 = vsub.s32 %v3962, %v3964
      %v3966 = vrot.slane %v3958, %v3965
      %v3968 = vunpack.c.l.s4 1983009808
      %v3969 = vunpack.c.0.s8 %v3968
      %v3970 = vlaneseq
      %v3971 = vshrl.u32 %v3970, 7
      %v3972 = vsub.s32 %v3969, %v3971
      %v3973 = vrot.slane %v3959, %v3972
      %v3974 = vcombine.low %v3952, %v3956
      %v3975 = vcombine.high %v3952, %v3956
      %v3977 = vunpack.c.l.s4 1983009808
      %v3978 = vunpack.c.0.s8 %v3977
      %v3979 = vlaneseq
      %v3980 = vshrl.u32 %v3979, 7
      %v3981 = vsub.s32 %v3978, %v3980
      %v3982 = vrot.slane %v3974, %v3981
      %v3984 = vunpack.c.l.s4 1983009808
      %v3985 = vunpack.c.0.s8 %v3984
      %v3986 = vlaneseq
      %v3987 = vshrl.u32 %v3986, 7
      %v3988 = vsub.s32 %v3985, %v3987
      %v3989 = vrot.slane %v3975, %v3988
      %v3990 = vcombine.low %v3966, %v3982
      %v3991 = vcombine.high %v3966, %v3982
      %v3993 = vunpack.c.l.s4 1934713408
      %v3994 = vunpack.c.0.s8 %v3993
      %v3995 = vlaneseq
      %v3996 = vshrl.u32 %v3995, 7
      %v3997 = vsub.s32 %v3994, %v3996
      %v3998 = vrot.slane %v3990, %v3997
      %v4000 = vunpack.c.l.s4 1934713408
      %v4001 = vunpack.c.0.s8 %v4000
      %v4002 = vlaneseq
      %v4003 = vshrl.u32 %v4002, 7
      %v4004 = vsub.s32 %v4001, %v4003
      %v4005 = vrot.slane %v3991, %v4004
      %v4006 = vcombine.low %v3973, %v3989
      %v4007 = vcombine.high %v3973, %v3989
      %v4009 = vunpack.c.l.s4 1934713408
      %v4010 = vunpack.c.0.s8 %v4009
      %v4011 = vlaneseq
      %v4012 = vshrl.u32 %v4011, 7
      %v4013 = vsub.s32 %v4010, %v4012
      %v4014 = vrot.slane %v4006, %v4013
      %v4016 = vunpack.c.l.s4 1934713408
      %v4017 = vunpack.c.0.s8 %v4016
      %v4018 = vlaneseq
      %v4019 = vshrl.u32 %v4018, 7
      %v4020 = vsub.s32 %v4017, %v4019
      %v4021 = vrot.slane %v4007, %v4020
      %v4022 = vcombine.high %v3998, 0.0
      %v4023 = vcombine.high %v4005, 0.0
      %v4024 = vcombine.high %v4014, 0.0
      %v4025 = vcombine.high %v4021, 0.0
      %v4026 = vcombine.low %v3951, %v3955
      %v4027 = vcombine.high %v3951, %v3955
      %v4029 = vunpack.c.l.s4 1983009808
      %v4030 = vunpack.c.0.s8 %v4029
      %v4031 = vlaneseq
      %v4032 = vshrl.u32 %v4031, 7
      %v4033 = vsub.s32 %v4030, %v4032
      %v4034 = vrot.slane %v4026, %v4033
      %v4036 = vunpack.c.l.s4 1983009808
      %v4037 = vunpack.c.0.s8 %v4036
      %v4038 = vlaneseq
      %v4039 = vshrl.u32 %v4038, 7
      %v4040 = vsub.s32 %v4037, %v4039
      %v4041 = vrot.slane %v4027, %v4040
      %v4042 = vcombine.low %v3953, %v3957
      %v4043 = vcombine.high %v3953, %v3957
      %v4045 = vunpack.c.l.s4 1983009808
      %v4046 = vunpack.c.0.s8 %v4045
      %v4047 = vlaneseq
      %v4048 = vshrl.u32 %v4047, 7
      %v4049 = vsub.s32 %v4046, %v4048
      %v4050 = vrot.slane %v4042, %v4049
      %v4052 = vunpack.c.l.s4 1983009808
      %v4053 = vunpack.c.0.s8 %v4052
      %v4054 = vlaneseq
      %v4055 = vshrl.u32 %v4054, 7
      %v4056 = vsub.s32 %v4053, %v4055
      %v4057 = vrot.slane %v4043, %v4056
      %v4058 = vcombine.low %v4034, %v4050
      %v4059 = vcombine.high %v4034, %v4050
      %v4061 = vunpack.c.l.s4 1934713408
      %v4062 = vunpack.c.0.s8 %v4061
      %v4063 = vlaneseq
      %v4064 = vshrl.u32 %v4063, 7
      %v4065 = vsub.s32 %v4062, %v4064
      %v4066 = vrot.slane %v4058, %v4065
      %v4068 = vunpack.c.l.s4 1934713408
      %v4069 = vunpack.c.0.s8 %v4068
      %v4070 = vlaneseq
      %v4071 = vshrl.u32 %v4070, 7
      %v4072 = vsub.s32 %v4069, %v4071
      %v4073 = vrot.slane %v4059, %v4072
      %v4074 = vcombine.low %v4041, %v4057
      %v4075 = vcombine.high %v4041, %v4057
      %v4077 = vunpack.c.l.s4 1934713408
      %v4078 = vunpack.c.0.s8 %v4077
      %v4079 = vlaneseq
      %v4080 = vshrl.u32 %v4079, 7
      %v4081 = vsub.s32 %v4078, %v4080
      %v4082 = vrot.slane %v4074, %v4081
      %v4084 = vunpack.c.l.s4 1934713408
      %v4085 = vunpack.c.0.s8 %v4084
      %v4086 = vlaneseq
      %v4087 = vshrl.u32 %v4086, 7
      %v4088 = vsub.s32 %v4085, %v4087
      %v4089 = vrot.slane %v4075, %v4088
      %v4090 = vcombine.high %v4066, 0.0
      %v4091 = vcombine.high %v4073, 0.0
      %v4092 = vcombine.high %v4082, 0.0
      %v4093 = vcombine.high %v4089, 0.0
      %4095 = vrot.lane.b32.xlu0 %v4022, 16
      %v4096 = vpop.permute.xlu0 %4095
      %4099 = vrot.lane.b32.xlu0 %v4005, 32
      %v4100 = vpop.permute.xlu0 %4099
      %4103 = vrot.lane.b32.xlu0 %v4023, 48
      %v4104 = vpop.permute.xlu0 %4103
      %4107 = vrot.lane.b32.xlu0 %v4014, 64
      %v4108 = vpop.permute.xlu0 %4107
      %4111 = vrot.lane.b32.xlu0 %v4024, 80
      %v4112 = vpop.permute.xlu0 %4111
      %4115 = vrot.lane.b32.xlu0 %v4021, 96
      %v4116 = vpop.permute.xlu0 %4115
      %4119 = vrot.lane.b32.xlu0 %v4025, 112
      %v4120 = vpop.permute.xlu0 %4119
      %4123 = vrot.lane.b32.xlu0 %v4090, 16
      %v4124 = vpop.permute.xlu0 %4123
      %4127 = vrot.lane.b32.xlu0 %v4073, 32
      %v4128 = vpop.permute.xlu0 %4127
      %4131 = vrot.lane.b32.xlu0 %v4091, 48
      %v4132 = vpop.permute.xlu0 %4131
      %4135 = vrot.lane.b32.xlu0 %v4082, 64
      %v4136 = vpop.permute.xlu0 %4135
      %4139 = vrot.lane.b32.xlu0 %v4092, 80
      %v4140 = vpop.permute.xlu0 %4139
      %4143 = vrot.lane.b32.xlu0 %v4089, 96
      %v4144 = vpop.permute.xlu0 %4143
      %4147 = vrot.lane.b32.xlu0 %v4093, 112
      %v4148 = vpop.permute.xlu0 %4147
      %v4150 = vsel %vm426, %v3998, %v4096
      %v4151 = vsel %vm428, %v4150, %v4100
      %v4152 = vsel %vm430, %v4151, %v4104
      %v4153 = vsel %vm432, %v4152, %v4108
      %v4154 = vsel %vm434, %v4153, %v4112
      %v4155 = vsel %vm436, %v4154, %v4116
      %v4156 = vsel %vm438, %v4155, %v4120
      %v4157 = vsel %vm426, %v4066, %v4124
      %v4158 = vsel %vm428, %v4157, %v4128
      %v4159 = vsel %vm430, %v4158, %v4132
      %v4160 = vsel %vm432, %v4159, %v4136
      %v4161 = vsel %vm434, %v4160, %v4140
      %v4162 = vsel %vm436, %v4161, %v4144
      %v4163 = vsel %vm438, %v4162, %v4148
      %v4164 = vpack.c.bf16 %v4156, %v4156
      %v4165 = vpack.c.bf16 %v4163, %v4163
      %s4166 = scalar_lea.vmem %s3, 6
      %v4167 = vld [vmem:[%s4166] sm:$0x3]
      %v4169 = vsel %vm692, %v4167, 0
      %v4172 = vsel %vm696, %v4164, 0
      %v4175 = vsel %vm696, %v4165, 0
      %4177 = vmatprep.subr.bf16.mxu0 0
      %4178 = vmatpush1.bf16.msra.mxu0 0
      %4179 = vmatprep.subr.bf16.mxu0 0
      %4180 = vmatpush1.bf16.msra.mxu0 0
      %4181 = vmatprep.subr.bf16.mxu0 0
      %4182 = vmatpush1.bf16.msra.mxu0 0
      %4183 = vmatprep.subr.bf16.mxu0 0
      %4184 = vmatpush1.bf16.msra.mxu0 0
      %4185 = vmatprep.subr.bf16.mxu0 0
      %4186 = vmatpush1.bf16.msra.mxu0 0
      %4187 = vmatprep.subr.bf16.mxu0 0
      %4188 = vmatpush1.bf16.msra.mxu0 0
      %4189 = vmatprep.subr.bf16.mxu0 0
      %4190 = vmatpush1.bf16.msra.mxu0 0
      %4191 = vmatprep.subr.bf16.mxu0 %v4175
      %4192 = vmatpush1.bf16.msra.mxu0 %v4172
      %4193 = vmatprep.subr.bf16.mxu0 0
      %4194 = vmatpush2.bf16.msra.mxu0 0
      %4195 = vmatprep.subr.bf16.mxu0 0
      %4196 = vmatpush2.bf16.msra.mxu0 0
      %4197 = vmatprep.subr.bf16.mxu0 0
      %4198 = vmatpush2.bf16.msra.mxu0 0
      %4199 = vmatprep.subr.bf16.mxu0 0
      %4200 = vmatpush2.bf16.msra.mxu0 0
      %4201 = vmatprep.subr.bf16.mxu0 0
      %4202 = vmatpush2.bf16.msra.mxu0 0
      %4203 = vmatprep.subr.bf16.mxu0 0
      %4204 = vmatpush2.bf16.msra.mxu0 0
      %4205 = vmatprep.subr.bf16.mxu0 0
      %4206 = vmatpush2.bf16.msra.mxu0 0
      %4207 = vmatprep.subr.bf16.mxu0 0
      %4208 = vmatpush2.bf16.msra.mxu0 0
      %4209 = vmatprep.mubr.bf16.mxu0 0
      %4210 = vmatmul.mubr.bf16.gmra.mxu0 %v4169
      %v4211 = vpop.f32.mrf.mxu0
      %v4212 = vadd.f32 0.0, %v4211
      %v4213 = vpop.f32.mrf.mxu0
      %v4214 = vadd.f32 0.0, %v4213
      %v4215 = vpop.f32.mrf.mxu0
      %v4216 = vpop.f32.mrf.mxu0
      %4217 = vdwg.mxu0
      %v4218 = vadd.f32 %v3948, %v4212
      %v4219 = vadd.f32 %v3949, %v4214
      %v4220 = vld [vmem:[#allocation2 + $0x1] sm:$0xff]
      %v4221 = vld [vmem:[#allocation2 + $0x9] sm:$0xff]
      %v4222 = vld [vmem:[#allocation2 + $0x19] sm:$0xff]
      %v4223 = vld [vmem:[#allocation2 + $0x21] sm:$0xff]
      %v4224 = vld [vmem:[#allocation2 + $0x31] sm:$0xff]
      %v4225 = vld [vmem:[#allocation2 + $0x39] sm:$0xff]
      %v4226 = vld [vmem:[#allocation2 + $0x49] sm:$0xff]
      %v4227 = vld [vmem:[#allocation2 + $0x51] sm:$0xff]
      %4236 = vrot.lane.b32.xlu0 %v4220, 127
      %v4237 = vpop.permute.xlu0 %4236
      %4238 = vrot.lane.b32.xlu0 %v4221, 127
      %v4239 = vpop.permute.xlu0 %4238
      %4240 = vrot.lane.b32.xlu0 %v4222, 127
      %v4241 = vpop.permute.xlu0 %4240
      %4242 = vrot.lane.b32.xlu0 %v4223, 127
      %v4243 = vpop.permute.xlu0 %4242
      %4244 = vrot.lane.b32.xlu0 %v4224, 127
      %v4245 = vpop.permute.xlu0 %4244
      %4246 = vrot.lane.b32.xlu0 %v4225, 127
      %v4247 = vpop.permute.xlu0 %4246
      %4248 = vrot.lane.b32.xlu0 %v4226, 127
      %v4249 = vpop.permute.xlu0 %4248
      %4250 = vrot.lane.b32.xlu0 %v4227, 127
      %v4251 = vpop.permute.xlu0 %4250
      %v4260 = vcombine.low %v4237, %v4245
      %v4261 = vcombine.high %v4237, %v4245
      %v4263 = vunpack.c.l.s4 1983009808
      %v4264 = vunpack.c.0.s8 %v4263
      %v4265 = vlaneseq
      %v4266 = vshrl.u32 %v4265, 7
      %v4267 = vsub.s32 %v4264, %v4266
      %v4268 = vrot.slane %v4260, %v4267
      %v4270 = vunpack.c.l.s4 1983009808
      %v4271 = vunpack.c.0.s8 %v4270
      %v4272 = vlaneseq
      %v4273 = vshrl.u32 %v4272, 7
      %v4274 = vsub.s32 %v4271, %v4273
      %v4275 = vrot.slane %v4261, %v4274
      %v4276 = vcombine.low %v4241, %v4249
      %v4277 = vcombine.high %v4241, %v4249
      %v4279 = vunpack.c.l.s4 1983009808
      %v4280 = vunpack.c.0.s8 %v4279
      %v4281 = vlaneseq
      %v4282 = vshrl.u32 %v4281, 7
      %v4283 = vsub.s32 %v4280, %v4282
      %v4284 = vrot.slane %v4276, %v4283
      %v4286 = vunpack.c.l.s4 1983009808
      %v4287 = vunpack.c.0.s8 %v4286
      %v4288 = vlaneseq
      %v4289 = vshrl.u32 %v4288, 7
      %v4290 = vsub.s32 %v4287, %v4289
      %v4291 = vrot.slane %v4277, %v4290
      %v4292 = vcombine.low %v4268, %v4284
      %v4293 = vcombine.high %v4268, %v4284
      %v4295 = vunpack.c.l.s4 1934713408
      %v4296 = vunpack.c.0.s8 %v4295
      %v4297 = vlaneseq
      %v4298 = vshrl.u32 %v4297, 7
      %v4299 = vsub.s32 %v4296, %v4298
      %v4300 = vrot.slane %v4292, %v4299
      %v4302 = vunpack.c.l.s4 1934713408
      %v4303 = vunpack.c.0.s8 %v4302
      %v4304 = vlaneseq
      %v4305 = vshrl.u32 %v4304, 7
      %v4306 = vsub.s32 %v4303, %v4305
      %v4307 = vrot.slane %v4293, %v4306
      %v4308 = vcombine.low %v4275, %v4291
      %v4309 = vcombine.high %v4275, %v4291
      %v4311 = vunpack.c.l.s4 1934713408
      %v4312 = vunpack.c.0.s8 %v4311
      %v4313 = vlaneseq
      %v4314 = vshrl.u32 %v4313, 7
      %v4315 = vsub.s32 %v4312, %v4314
      %v4316 = vrot.slane %v4308, %v4315
      %v4318 = vunpack.c.l.s4 1934713408
      %v4319 = vunpack.c.0.s8 %v4318
      %v4320 = vlaneseq
      %v4321 = vshrl.u32 %v4320, 7
      %v4322 = vsub.s32 %v4319, %v4321
      %v4323 = vrot.slane %v4309, %v4322
      %v4324 = vcombine.high %v4300, 0.0
      %v4325 = vcombine.high %v4307, 0.0
      %v4326 = vcombine.high %v4316, 0.0
      %v4327 = vcombine.high %v4323, 0.0
      %v4328 = vcombine.low %v4239, %v4247
      %v4329 = vcombine.high %v4239, %v4247
      %v4331 = vunpack.c.l.s4 1983009808
      %v4332 = vunpack.c.0.s8 %v4331
      %v4333 = vlaneseq
      %v4334 = vshrl.u32 %v4333, 7
      %v4335 = vsub.s32 %v4332, %v4334
      %v4336 = vrot.slane %v4328, %v4335
      %v4338 = vunpack.c.l.s4 1983009808
      %v4339 = vunpack.c.0.s8 %v4338
      %v4340 = vlaneseq
      %v4341 = vshrl.u32 %v4340, 7
      %v4342 = vsub.s32 %v4339, %v4341
      %v4343 = vrot.slane %v4329, %v4342
      %v4344 = vcombine.low %v4243, %v4251
      %v4345 = vcombine.high %v4243, %v4251
      %v4347 = vunpack.c.l.s4 1983009808
      %v4348 = vunpack.c.0.s8 %v4347
      %v4349 = vlaneseq
      %v4350 = vshrl.u32 %v4349, 7
      %v4351 = vsub.s32 %v4348, %v4350
      %v4352 = vrot.slane %v4344, %v4351
      %v4354 = vunpack.c.l.s4 1983009808
      %v4355 = vunpack.c.0.s8 %v4354
      %v4356 = vlaneseq
      %v4357 = vshrl.u32 %v4356, 7
      %v4358 = vsub.s32 %v4355, %v4357
      %v4359 = vrot.slane %v4345, %v4358
      %v4360 = vcombine.low %v4336, %v4352
      %v4361 = vcombine.high %v4336, %v4352
      %v4363 = vunpack.c.l.s4 1934713408
      %v4364 = vunpack.c.0.s8 %v4363
      %v4365 = vlaneseq
      %v4366 = vshrl.u32 %v4365, 7
      %v4367 = vsub.s32 %v4364, %v4366
      %v4368 = vrot.slane %v4360, %v4367
      %v4370 = vunpack.c.l.s4 1934713408
      %v4371 = vunpack.c.0.s8 %v4370
      %v4372 = vlaneseq
      %v4373 = vshrl.u32 %v4372, 7
      %v4374 = vsub.s32 %v4371, %v4373
      %v4375 = vrot.slane %v4361, %v4374
      %v4376 = vcombine.low %v4343, %v4359
      %v4377 = vcombine.high %v4343, %v4359
      %v4379 = vunpack.c.l.s4 1934713408
      %v4380 = vunpack.c.0.s8 %v4379
      %v4381 = vlaneseq
      %v4382 = vshrl.u32 %v4381, 7
      %v4383 = vsub.s32 %v4380, %v4382
      %v4384 = vrot.slane %v4376, %v4383
      %v4386 = vunpack.c.l.s4 1934713408
      %v4387 = vunpack.c.0.s8 %v4386
      %v4388 = vlaneseq
      %v4389 = vshrl.u32 %v4388, 7
      %v4390 = vsub.s32 %v4387, %v4389
      %v4391 = vrot.slane %v4377, %v4390
      %v4392 = vcombine.high %v4368, 0.0
      %v4393 = vcombine.high %v4375, 0.0
      %v4394 = vcombine.high %v4384, 0.0
      %v4395 = vcombine.high %v4391, 0.0
      %4397 = vrot.lane.b32.xlu0 %v4324, 16
      %v4398 = vpop.permute.xlu0 %4397
      %4401 = vrot.lane.b32.xlu0 %v4307, 32
      %v4402 = vpop.permute.xlu0 %4401
      %4405 = vrot.lane.b32.xlu0 %v4325, 48
      %v4406 = vpop.permute.xlu0 %4405
      %4409 = vrot.lane.b32.xlu0 %v4316, 64
      %v4410 = vpop.permute.xlu0 %4409
      %4413 = vrot.lane.b32.xlu0 %v4326, 80
      %v4414 = vpop.permute.xlu0 %4413
      %4417 = vrot.lane.b32.xlu0 %v4323, 96
      %v4418 = vpop.permute.xlu0 %4417
      %4421 = vrot.lane.b32.xlu0 %v4327, 112
      %v4422 = vpop.permute.xlu0 %4421
      %4425 = vrot.lane.b32.xlu0 %v4392, 16
      %v4426 = vpop.permute.xlu0 %4425
      %4429 = vrot.lane.b32.xlu0 %v4375, 32
      %v4430 = vpop.permute.xlu0 %4429
      %4433 = vrot.lane.b32.xlu0 %v4393, 48
      %v4434 = vpop.permute.xlu0 %4433
      %4437 = vrot.lane.b32.xlu0 %v4384, 64
      %v4438 = vpop.permute.xlu0 %4437
      %4441 = vrot.lane.b32.xlu0 %v4394, 80
      %v4442 = vpop.permute.xlu0 %4441
      %4445 = vrot.lane.b32.xlu0 %v4391, 96
      %v4446 = vpop.permute.xlu0 %4445
      %4449 = vrot.lane.b32.xlu0 %v4395, 112
      %v4450 = vpop.permute.xlu0 %4449
      %v4452 = vsel %vm426, %v4300, %v4398
      %v4453 = vsel %vm428, %v4452, %v4402
      %v4454 = vsel %vm430, %v4453, %v4406
      %v4455 = vsel %vm432, %v4454, %v4410
      %v4456 = vsel %vm434, %v4455, %v4414
      %v4457 = vsel %vm436, %v4456, %v4418
      %v4458 = vsel %vm438, %v4457, %v4422
      %v4459 = vsel %vm426, %v4368, %v4426
      %v4460 = vsel %vm428, %v4459, %v4430
      %v4461 = vsel %vm430, %v4460, %v4434
      %v4462 = vsel %vm432, %v4461, %v4438
      %v4463 = vsel %vm434, %v4462, %v4442
      %v4464 = vsel %vm436, %v4463, %v4446
      %v4465 = vsel %vm438, %v4464, %v4450
      %v4466 = vpack.c.bf16 %v4458, %v4458
      %v4467 = vpack.c.bf16 %v4465, %v4465
      %s4468 = scalar_lea.vmem %s3, 8
      %v4469 = vld [vmem:[%s4468] sm:$0x3]
      %v4471 = vsel %vm692, %v4469, 0
      %v4474 = vsel %vm696, %v4466, 0
      %v4477 = vsel %vm696, %v4467, 0
      %4479 = vmatprep.subr.bf16.mxu0 0
      %4480 = vmatpush1.bf16.msra.mxu0 0
      %4481 = vmatprep.subr.bf16.mxu0 0
      %4482 = vmatpush1.bf16.msra.mxu0 0
      %4483 = vmatprep.subr.bf16.mxu0 0
      %4484 = vmatpush1.bf16.msra.mxu0 0
      %4485 = vmatprep.subr.bf16.mxu0 0
      %4486 = vmatpush1.bf16.msra.mxu0 0
      %4487 = vmatprep.subr.bf16.mxu0 0
      %4488 = vmatpush1.bf16.msra.mxu0 0
      %4489 = vmatprep.subr.bf16.mxu0 0
      %4490 = vmatpush1.bf16.msra.mxu0 0
      %4491 = vmatprep.subr.bf16.mxu0 0
      %4492 = vmatpush1.bf16.msra.mxu0 0
      %4493 = vmatprep.subr.bf16.mxu0 %v4477
      %4494 = vmatpush1.bf16.msra.mxu0 %v4474
      %4495 = vmatprep.subr.bf16.mxu0 0
      %4496 = vmatpush2.bf16.msra.mxu0 0
      %4497 = vmatprep.subr.bf16.mxu0 0
      %4498 = vmatpush2.bf16.msra.mxu0 0
      %4499 = vmatprep.subr.bf16.mxu0 0
      %4500 = vmatpush2.bf16.msra.mxu0 0
      %4501 = vmatprep.subr.bf16.mxu0 0
      %4502 = vmatpush2.bf16.msra.mxu0 0
      %4503 = vmatprep.subr.bf16.mxu0 0
      %4504 = vmatpush2.bf16.msra.mxu0 0
      %4505 = vmatprep.subr.bf16.mxu0 0
      %4506 = vmatpush2.bf16.msra.mxu0 0
      %4507 = vmatprep.subr.bf16.mxu0 0
      %4508 = vmatpush2.bf16.msra.mxu0 0
      %4509 = vmatprep.subr.bf16.mxu0 0
      %4510 = vmatpush2.bf16.msra.mxu0 0
      %4511 = vmatprep.mubr.bf16.mxu0 0
      %4512 = vmatmul.mubr.bf16.gmra.mxu0 %v4471
      %v4513 = vpop.f32.mrf.mxu0
      %v4514 = vadd.f32 0.0, %v4513
      %v4515 = vpop.f32.mrf.mxu0
      %v4516 = vadd.f32 0.0, %v4515
      %v4517 = vpop.f32.mrf.mxu0
      %v4518 = vpop.f32.mrf.mxu0
      %4519 = vdwg.mxu0
      %v4520 = vadd.f32 %v4218, %v4514
      %v4521 = vadd.f32 %v4219, %v4516
      %v4522 = vld [vmem:[#allocation2 + $0x1] sm:$0xff]
      %v4523 = vld [vmem:[#allocation2 + $0x9] sm:$0xff]
      %v4524 = vld [vmem:[#allocation2 + $0x19] sm:$0xff]
      %v4525 = vld [vmem:[#allocation2 + $0x21] sm:$0xff]
      %v4526 = vld [vmem:[#allocation2 + $0x31] sm:$0xff]
      %v4527 = vld [vmem:[#allocation2 + $0x39] sm:$0xff]
      %v4528 = vld [vmem:[#allocation2 + $0x49] sm:$0xff]
      %v4529 = vld [vmem:[#allocation2 + $0x51] sm:$0xff]
      %4538 = vrot.lane.b32.xlu0 %v4522, 126
      %v4539 = vpop.permute.xlu0 %4538
      %4540 = vrot.lane.b32.xlu0 %v4523, 126
      %v4541 = vpop.permute.xlu0 %4540
      %4542 = vrot.lane.b32.xlu0 %v4524, 126
      %v4543 = vpop.permute.xlu0 %4542
      %4544 = vrot.lane.b32.xlu0 %v4525, 126
      %v4545 = vpop.permute.xlu0 %4544
      %4546 = vrot.lane.b32.xlu0 %v4526, 126
      %v4547 = vpop.permute.xlu0 %4546
      %4548 = vrot.lane.b32.xlu0 %v4527, 126
      %v4549 = vpop.permute.xlu0 %4548
      %4550 = vrot.lane.b32.xlu0 %v4528, 126
      %v4551 = vpop.permute.xlu0 %4550
      %4552 = vrot.lane.b32.xlu0 %v4529, 126
      %v4553 = vpop.permute.xlu0 %4552
      %v4562 = vcombine.low %v4539, %v4547
      %v4563 = vcombine.high %v4539, %v4547
      %v4565 = vunpack.c.l.s4 1983009808
      %v4566 = vunpack.c.0.s8 %v4565
      %v4567 = vlaneseq
      %v4568 = vshrl.u32 %v4567, 7
      %v4569 = vsub.s32 %v4566, %v4568
      %v4570 = vrot.slane %v4562, %v4569
      %v4572 = vunpack.c.l.s4 1983009808
      %v4573 = vunpack.c.0.s8 %v4572
      %v4574 = vlaneseq
      %v4575 = vshrl.u32 %v4574, 7
      %v4576 = vsub.s32 %v4573, %v4575
      %v4577 = vrot.slane %v4563, %v4576
      %v4578 = vcombine.low %v4543, %v4551
      %v4579 = vcombine.high %v4543, %v4551
      %v4581 = vunpack.c.l.s4 1983009808
      %v4582 = vunpack.c.0.s8 %v4581
      %v4583 = vlaneseq
      %v4584 = vshrl.u32 %v4583, 7
      %v4585 = vsub.s32 %v4582, %v4584
      %v4586 = vrot.slane %v4578, %v4585
      %v4588 = vunpack.c.l.s4 1983009808
      %v4589 = vunpack.c.0.s8 %v4588
      %v4590 = vlaneseq
      %v4591 = vshrl.u32 %v4590, 7
      %v4592 = vsub.s32 %v4589, %v4591
      %v4593 = vrot.slane %v4579, %v4592
      %v4594 = vcombine.low %v4570, %v4586
      %v4595 = vcombine.high %v4570, %v4586
      %v4597 = vunpack.c.l.s4 1934713408
      %v4598 = vunpack.c.0.s8 %v4597
      %v4599 = vlaneseq
      %v4600 = vshrl.u32 %v4599, 7
      %v4601 = vsub.s32 %v4598, %v4600
      %v4602 = vrot.slane %v4594, %v4601
      %v4604 = vunpack.c.l.s4 1934713408
      %v4605 = vunpack.c.0.s8 %v4604
      %v4606 = vlaneseq
      %v4607 = vshrl.u32 %v4606, 7
      %v4608 = vsub.s32 %v4605, %v4607
      %v4609 = vrot.slane %v4595, %v4608
      %v4610 = vcombine.low %v4577, %v4593
      %v4611 = vcombine.high %v4577, %v4593
      %v4613 = vunpack.c.l.s4 1934713408
      %v4614 = vunpack.c.0.s8 %v4613
      %v4615 = vlaneseq
      %v4616 = vshrl.u32 %v4615, 7
      %v4617 = vsub.s32 %v4614, %v4616
      %v4618 = vrot.slane %v4610, %v4617
      %v4620 = vunpack.c.l.s4 1934713408
      %v4621 = vunpack.c.0.s8 %v4620
      %v4622 = vlaneseq
      %v4623 = vshrl.u32 %v4622, 7
      %v4624 = vsub.s32 %v4621, %v4623
      %v4625 = vrot.slane %v4611, %v4624
      %v4626 = vcombine.high %v4602, 0.0
      %v4627 = vcombine.high %v4609, 0.0
      %v4628 = vcombine.high %v4618, 0.0
      %v4629 = vcombine.high %v4625, 0.0
      %v4630 = vcombine.low %v4541, %v4549
      %v4631 = vcombine.high %v4541, %v4549
      %v4633 = vunpack.c.l.s4 1983009808
      %v4634 = vunpack.c.0.s8 %v4633
      %v4635 = vlaneseq
      %v4636 = vshrl.u32 %v4635, 7
      %v4637 = vsub.s32 %v4634, %v4636
      %v4638 = vrot.slane %v4630, %v4637
      %v4640 = vunpack.c.l.s4 1983009808
      %v4641 = vunpack.c.0.s8 %v4640
      %v4642 = vlaneseq
      %v4643 = vshrl.u32 %v4642, 7
      %v4644 = vsub.s32 %v4641, %v4643
      %v4645 = vrot.slane %v4631, %v4644
      %v4646 = vcombine.low %v4545, %v4553
      %v4647 = vcombine.high %v4545, %v4553
      %v4649 = vunpack.c.l.s4 1983009808
      %v4650 = vunpack.c.0.s8 %v4649
      %v4651 = vlaneseq
      %v4652 = vshrl.u32 %v4651, 7
      %v4653 = vsub.s32 %v4650, %v4652
      %v4654 = vrot.slane %v4646, %v4653
      %v4656 = vunpack.c.l.s4 1983009808
      %v4657 = vunpack.c.0.s8 %v4656
      %v4658 = vlaneseq
      %v4659 = vshrl.u32 %v4658, 7
      %v4660 = vsub.s32 %v4657, %v4659
      %v4661 = vrot.slane %v4647, %v4660
      %v4662 = vcombine.low %v4638, %v4654
      %v4663 = vcombine.high %v4638, %v4654
      %v4665 = vunpack.c.l.s4 1934713408
      %v4666 = vunpack.c.0.s8 %v4665
      %v4667 = vlaneseq
      %v4668 = vshrl.u32 %v4667, 7
      %v4669 = vsub.s32 %v4666, %v4668
      %v4670 = vrot.slane %v4662, %v4669
      %v4672 = vunpack.c.l.s4 1934713408
      %v4673 = vunpack.c.0.s8 %v4672
      %v4674 = vlaneseq
      %v4675 = vshrl.u32 %v4674, 7
      %v4676 = vsub.s32 %v4673, %v4675
      %v4677 = vrot.slane %v4663, %v4676
      %v4678 = vcombine.low %v4645, %v4661
      %v4679 = vcombine.high %v4645, %v4661
      %v4681 = vunpack.c.l.s4 1934713408
      %v4682 = vunpack.c.0.s8 %v4681
      %v4683 = vlaneseq
      %v4684 = vshrl.u32 %v4683, 7
      %v4685 = vsub.s32 %v4682, %v4684
      %v4686 = vrot.slane %v4678, %v4685
      %v4688 = vunpack.c.l.s4 1934713408
      %v4689 = vunpack.c.0.s8 %v4688
      %v4690 = vlaneseq
      %v4691 = vshrl.u32 %v4690, 7
      %v4692 = vsub.s32 %v4689, %v4691
      %v4693 = vrot.slane %v4679, %v4692
      %v4694 = vcombine.high %v4670, 0.0
      %v4695 = vcombine.high %v4677, 0.0
      %v4696 = vcombine.high %v4686, 0.0
      %v4697 = vcombine.high %v4693, 0.0
      %4699 = vrot.lane.b32.xlu0 %v4626, 16
      %v4700 = vpop.permute.xlu0 %4699
      %4703 = vrot.lane.b32.xlu0 %v4609, 32
      %v4704 = vpop.permute.xlu0 %4703
      %4707 = vrot.lane.b32.xlu0 %v4627, 48
      %v4708 = vpop.permute.xlu0 %4707
      %4711 = vrot.lane.b32.xlu0 %v4618, 64
      %v4712 = vpop.permute.xlu0 %4711
      %4715 = vrot.lane.b32.xlu0 %v4628, 80
      %v4716 = vpop.permute.xlu0 %4715
      %4719 = vrot.lane.b32.xlu0 %v4625, 96
      %v4720 = vpop.permute.xlu0 %4719
      %4723 = vrot.lane.b32.xlu0 %v4629, 112
      %v4724 = vpop.permute.xlu0 %4723
      %4727 = vrot.lane.b32.xlu0 %v4694, 16
      %v4728 = vpop.permute.xlu0 %4727
      %4731 = vrot.lane.b32.xlu0 %v4677, 32
      %v4732 = vpop.permute.xlu0 %4731
      %4735 = vrot.lane.b32.xlu0 %v4695, 48
      %v4736 = vpop.permute.xlu0 %4735
      %4739 = vrot.lane.b32.xlu0 %v4686, 64
      %v4740 = vpop.permute.xlu0 %4739
      %4743 = vrot.lane.b32.xlu0 %v4696, 80
      %v4744 = vpop.permute.xlu0 %4743
      %4747 = vrot.lane.b32.xlu0 %v4693, 96
      %v4748 = vpop.permute.xlu0 %4747
      %4751 = vrot.lane.b32.xlu0 %v4697, 112
      %v4752 = vpop.permute.xlu0 %4751
      %v4754 = vsel %vm426, %v4602, %v4700
      %v4755 = vsel %vm428, %v4754, %v4704
      %v4756 = vsel %vm430, %v4755, %v4708
      %v4757 = vsel %vm432, %v4756, %v4712
      %v4758 = vsel %vm434, %v4757, %v4716
      %v4759 = vsel %vm436, %v4758, %v4720
      %v4760 = vsel %vm438, %v4759, %v4724
      %v4761 = vsel %vm426, %v4670, %v4728
      %v4762 = vsel %vm428, %v4761, %v4732
      %v4763 = vsel %vm430, %v4762, %v4736
      %v4764 = vsel %vm432, %v4763, %v4740
      %v4765 = vsel %vm434, %v4764, %v4744
      %v4766 = vsel %vm436, %v4765, %v4748
      %v4767 = vsel %vm438, %v4766, %v4752
      %v4768 = vpack.c.bf16 %v4760, %v4760
      %v4769 = vpack.c.bf16 %v4767, %v4767
      %s4770 = scalar_lea.vmem %s3, 10
      %v4771 = vld [vmem:[%s4770] sm:$0x3]
      %v4773 = vsel %vm692, %v4771, 0
      %v4776 = vsel %vm696, %v4768, 0
      %v4779 = vsel %vm696, %v4769, 0
      %4781 = vmatprep.subr.bf16.mxu0 0
      %4782 = vmatpush1.bf16.msra.mxu0 0
      %4783 = vmatprep.subr.bf16.mxu0 0
      %4784 = vmatpush1.bf16.msra.mxu0 0
      %4785 = vmatprep.subr.bf16.mxu0 0
      %4786 = vmatpush1.bf16.msra.mxu0 0
      %4787 = vmatprep.subr.bf16.mxu0 0
      %4788 = vmatpush1.bf16.msra.mxu0 0
      %4789 = vmatprep.subr.bf16.mxu0 0
      %4790 = vmatpush1.bf16.msra.mxu0 0
      %4791 = vmatprep.subr.bf16.mxu0 0
      %4792 = vmatpush1.bf16.msra.mxu0 0
      %4793 = vmatprep.subr.bf16.mxu0 0
      %4794 = vmatpush1.bf16.msra.mxu0 0
      %4795 = vmatprep.subr.bf16.mxu0 %v4779
      %4796 = vmatpush1.bf16.msra.mxu0 %v4776
      %4797 = vmatprep.subr.bf16.mxu0 0
      %4798 = vmatpush2.bf16.msra.mxu0 0
      %4799 = vmatprep.subr.bf16.mxu0 0
      %4800 = vmatpush2.bf16.msra.mxu0 0
      %4801 = vmatprep.subr.bf16.mxu0 0
      %4802 = vmatpush2.bf16.msra.mxu0 0
      %4803 = vmatprep.subr.bf16.mxu0 0
      %4804 = vmatpush2.bf16.msra.mxu0 0
      %4805 = vmatprep.subr.bf16.mxu0 0
      %4806 = vmatpush2.bf16.msra.mxu0 0
      %4807 = vmatprep.subr.bf16.mxu0 0
      %4808 = vmatpush2.bf16.msra.mxu0 0
      %4809 = vmatprep.subr.bf16.mxu0 0
      %4810 = vmatpush2.bf16.msra.mxu0 0
      %4811 = vmatprep.subr.bf16.mxu0 0
      %4812 = vmatpush2.bf16.msra.mxu0 0
      %4813 = vmatprep.mubr.bf16.mxu0 0
      %4814 = vmatmul.mubr.bf16.gmra.mxu0 %v4773
      %v4815 = vpop.f32.mrf.mxu0
      %v4816 = vadd.f32 0.0, %v4815
      %v4817 = vpop.f32.mrf.mxu0
      %v4818 = vadd.f32 0.0, %v4817
      %v4819 = vpop.f32.mrf.mxu0
      %v4820 = vpop.f32.mrf.mxu0
      %4821 = vdwg.mxu0
      %v4822 = vadd.f32 %v4520, %v4816
      %v4823 = vadd.f32 %v4521, %v4818
      %v4824 = vld [vmem:[#allocation2 + $0x2] sm:$0xff]
      %v4825 = vld [vmem:[#allocation2 + $0xa] sm:$0xff]
      %v4826 = vld [vmem:[#allocation2 + $0x1a] sm:$0xff]
      %v4827 = vld [vmem:[#allocation2 + $0x22] sm:$0xff]
      %v4828 = vld [vmem:[#allocation2 + $0x32] sm:$0xff]
      %v4829 = vld [vmem:[#allocation2 + $0x3a] sm:$0xff]
      %v4830 = vld [vmem:[#allocation2 + $0x4a] sm:$0xff]
      %v4831 = vld [vmem:[#allocation2 + $0x52] sm:$0xff]
      %v4832 = vcombine.low %v4824, %v4828
      %v4833 = vcombine.high %v4824, %v4828
      %v4835 = vunpack.c.l.s4 1983009808
      %v4836 = vunpack.c.0.s8 %v4835
      %v4837 = vlaneseq
      %v4838 = vshrl.u32 %v4837, 7
      %v4839 = vsub.s32 %v4836, %v4838
      %v4840 = vrot.slane %v4832, %v4839
      %v4842 = vunpack.c.l.s4 1983009808
      %v4843 = vunpack.c.0.s8 %v4842
      %v4844 = vlaneseq
      %v4845 = vshrl.u32 %v4844, 7
      %v4846 = vsub.s32 %v4843, %v4845
      %v4847 = vrot.slane %v4833, %v4846
      %v4848 = vcombine.low %v4826, %v4830
      %v4849 = vcombine.high %v4826, %v4830
      %v4851 = vunpack.c.l.s4 1983009808
      %v4852 = vunpack.c.0.s8 %v4851
      %v4853 = vlaneseq
      %v4854 = vshrl.u32 %v4853, 7
      %v4855 = vsub.s32 %v4852, %v4854
      %v4856 = vrot.slane %v4848, %v4855
      %v4858 = vunpack.c.l.s4 1983009808
      %v4859 = vunpack.c.0.s8 %v4858
      %v4860 = vlaneseq
      %v4861 = vshrl.u32 %v4860, 7
      %v4862 = vsub.s32 %v4859, %v4861
      %v4863 = vrot.slane %v4849, %v4862
      %v4864 = vcombine.low %v4840, %v4856
      %v4865 = vcombine.high %v4840, %v4856
      %v4867 = vunpack.c.l.s4 1934713408
      %v4868 = vunpack.c.0.s8 %v4867
      %v4869 = vlaneseq
      %v4870 = vshrl.u32 %v4869, 7
      %v4871 = vsub.s32 %v4868, %v4870
      %v4872 = vrot.slane %v4864, %v4871
      %v4874 = vunpack.c.l.s4 1934713408
      %v4875 = vunpack.c.0.s8 %v4874
      %v4876 = vlaneseq
      %v4877 = vshrl.u32 %v4876, 7
      %v4878 = vsub.s32 %v4875, %v4877
      %v4879 = vrot.slane %v4865, %v4878
      %v4880 = vcombine.low %v4847, %v4863
      %v4881 = vcombine.high %v4847, %v4863
      %v4883 = vunpack.c.l.s4 1934713408
      %v4884 = vunpack.c.0.s8 %v4883
      %v4885 = vlaneseq
      %v4886 = vshrl.u32 %v4885, 7
      %v4887 = vsub.s32 %v4884, %v4886
      %v4888 = vrot.slane %v4880, %v4887
      %v4890 = vunpack.c.l.s4 1934713408
      %v4891 = vunpack.c.0.s8 %v4890
      %v4892 = vlaneseq
      %v4893 = vshrl.u32 %v4892, 7
      %v4894 = vsub.s32 %v4891, %v4893
      %v4895 = vrot.slane %v4881, %v4894
      %v4896 = vcombine.high %v4872, 0.0
      %v4897 = vcombine.high %v4879, 0.0
      %v4898 = vcombine.high %v4888, 0.0
      %v4899 = vcombine.high %v4895, 0.0
      %v4900 = vcombine.low %v4825, %v4829
      %v4901 = vcombine.high %v4825, %v4829
      %v4903 = vunpack.c.l.s4 1983009808
      %v4904 = vunpack.c.0.s8 %v4903
      %v4905 = vlaneseq
      %v4906 = vshrl.u32 %v4905, 7
      %v4907 = vsub.s32 %v4904, %v4906
      %v4908 = vrot.slane %v4900, %v4907
      %v4910 = vunpack.c.l.s4 1983009808
      %v4911 = vunpack.c.0.s8 %v4910
      %v4912 = vlaneseq
      %v4913 = vshrl.u32 %v4912, 7
      %v4914 = vsub.s32 %v4911, %v4913
      %v4915 = vrot.slane %v4901, %v4914
      %v4916 = vcombine.low %v4827, %v4831
      %v4917 = vcombine.high %v4827, %v4831
      %v4919 = vunpack.c.l.s4 1983009808
      %v4920 = vunpack.c.0.s8 %v4919
      %v4921 = vlaneseq
      %v4922 = vshrl.u32 %v4921, 7
      %v4923 = vsub.s32 %v4920, %v4922
      %v4924 = vrot.slane %v4916, %v4923
      %v4926 = vunpack.c.l.s4 1983009808
      %v4927 = vunpack.c.0.s8 %v4926
      %v4928 = vlaneseq
      %v4929 = vshrl.u32 %v4928, 7
      %v4930 = vsub.s32 %v4927, %v4929
      %v4931 = vrot.slane %v4917, %v4930
      %v4932 = vcombine.low %v4908, %v4924
      %v4933 = vcombine.high %v4908, %v4924
      %v4935 = vunpack.c.l.s4 1934713408
      %v4936 = vunpack.c.0.s8 %v4935
      %v4937 = vlaneseq
      %v4938 = vshrl.u32 %v4937, 7
      %v4939 = vsub.s32 %v4936, %v4938
      %v4940 = vrot.slane %v4932, %v4939
      %v4942 = vunpack.c.l.s4 1934713408
      %v4943 = vunpack.c.0.s8 %v4942
      %v4944 = vlaneseq
      %v4945 = vshrl.u32 %v4944, 7
      %v4946 = vsub.s32 %v4943, %v4945
      %v4947 = vrot.slane %v4933, %v4946
      %v4948 = vcombine.low %v4915, %v4931
      %v4949 = vcombine.high %v4915, %v4931
      %v4951 = vunpack.c.l.s4 1934713408
      %v4952 = vunpack.c.0.s8 %v4951
      %v4953 = vlaneseq
      %v4954 = vshrl.u32 %v4953, 7
      %v4955 = vsub.s32 %v4952, %v4954
      %v4956 = vrot.slane %v4948, %v4955
      %v4958 = vunpack.c.l.s4 1934713408
      %v4959 = vunpack.c.0.s8 %v4958
      %v4960 = vlaneseq
      %v4961 = vshrl.u32 %v4960, 7
      %v4962 = vsub.s32 %v4959, %v4961
      %v4963 = vrot.slane %v4949, %v4962
      %v4964 = vcombine.high %v4940, 0.0
      %v4965 = vcombine.high %v4947, 0.0
      %v4966 = vcombine.high %v4956, 0.0
      %v4967 = vcombine.high %v4963, 0.0
      %4969 = vrot.lane.b32.xlu0 %v4896, 16
      %v4970 = vpop.permute.xlu0 %4969
      %4973 = vrot.lane.b32.xlu0 %v4879, 32
      %v4974 = vpop.permute.xlu0 %4973
      %4977 = vrot.lane.b32.xlu0 %v4897, 48
      %v4978 = vpop.permute.xlu0 %4977
      %4981 = vrot.lane.b32.xlu0 %v4888, 64
      %v4982 = vpop.permute.xlu0 %4981
      %4985 = vrot.lane.b32.xlu0 %v4898, 80
      %v4986 = vpop.permute.xlu0 %4985
      %4989 = vrot.lane.b32.xlu0 %v4895, 96
      %v4990 = vpop.permute.xlu0 %4989
      %4993 = vrot.lane.b32.xlu0 %v4899, 112
      %v4994 = vpop.permute.xlu0 %4993
      %4997 = vrot.lane.b32.xlu0 %v4964, 16
      %v4998 = vpop.permute.xlu0 %4997
      %5001 = vrot.lane.b32.xlu0 %v4947, 32
      %v5002 = vpop.permute.xlu0 %5001
      %5005 = vrot.lane.b32.xlu0 %v4965, 48
      %v5006 = vpop.permute.xlu0 %5005
      %5009 = vrot.lane.b32.xlu0 %v4956, 64
      %v5010 = vpop.permute.xlu0 %5009
      %5013 = vrot.lane.b32.xlu0 %v4966, 80
      %v5014 = vpop.permute.xlu0 %5013
      %5017 = vrot.lane.b32.xlu0 %v4963, 96
      %v5018 = vpop.permute.xlu0 %5017
      %5021 = vrot.lane.b32.xlu0 %v4967, 112
      %v5022 = vpop.permute.xlu0 %5021
      %v5024 = vsel %vm426, %v4872, %v4970
      %v5025 = vsel %vm428, %v5024, %v4974
      %v5026 = vsel %vm430, %v5025, %v4978
      %v5027 = vsel %vm432, %v5026, %v4982
      %v5028 = vsel %vm434, %v5027, %v4986
      %v5029 = vsel %vm436, %v5028, %v4990
      %v5030 = vsel %vm438, %v5029, %v4994
      %v5031 = vsel %vm426, %v4940, %v4998
      %v5032 = vsel %vm428, %v5031, %v5002
      %v5033 = vsel %vm430, %v5032, %v5006
      %v5034 = vsel %vm432, %v5033, %v5010
      %v5035 = vsel %vm434, %v5034, %v5014
      %v5036 = vsel %vm436, %v5035, %v5018
      %v5037 = vsel %vm438, %v5036, %v5022
      %v5038 = vpack.c.bf16 %v5030, %v5030
      %v5039 = vpack.c.bf16 %v5037, %v5037
      %s5040 = scalar_lea.vmem %s3, 12
      %v5041 = vld [vmem:[%s5040] sm:$0x3]
      %v5043 = vsel %vm692, %v5041, 0
      %v5046 = vsel %vm696, %v5038, 0
      %v5049 = vsel %vm696, %v5039, 0
      %5051 = vmatprep.subr.bf16.mxu0 0
      %5052 = vmatpush1.bf16.msra.mxu0 0
      %5053 = vmatprep.subr.bf16.mxu0 0
      %5054 = vmatpush1.bf16.msra.mxu0 0
      %5055 = vmatprep.subr.bf16.mxu0 0
      %5056 = vmatpush1.bf16.msra.mxu0 0
      %5057 = vmatprep.subr.bf16.mxu0 0
      %5058 = vmatpush1.bf16.msra.mxu0 0
      %5059 = vmatprep.subr.bf16.mxu0 0
      %5060 = vmatpush1.bf16.msra.mxu0 0
      %5061 = vmatprep.subr.bf16.mxu0 0
      %5062 = vmatpush1.bf16.msra.mxu0 0
      %5063 = vmatprep.subr.bf16.mxu0 0
      %5064 = vmatpush1.bf16.msra.mxu0 0
      %5065 = vmatprep.subr.bf16.mxu0 %v5049
      %5066 = vmatpush1.bf16.msra.mxu0 %v5046
      %5067 = vmatprep.subr.bf16.mxu0 0
      %5068 = vmatpush2.bf16.msra.mxu0 0
      %5069 = vmatprep.subr.bf16.mxu0 0
      %5070 = vmatpush2.bf16.msra.mxu0 0
      %5071 = vmatprep.subr.bf16.mxu0 0
      %5072 = vmatpush2.bf16.msra.mxu0 0
      %5073 = vmatprep.subr.bf16.mxu0 0
      %5074 = vmatpush2.bf16.msra.mxu0 0
      %5075 = vmatprep.subr.bf16.mxu0 0
      %5076 = vmatpush2.bf16.msra.mxu0 0
      %5077 = vmatprep.subr.bf16.mxu0 0
      %5078 = vmatpush2.bf16.msra.mxu0 0
      %5079 = vmatprep.subr.bf16.mxu0 0
      %5080 = vmatpush2.bf16.msra.mxu0 0
      %5081 = vmatprep.subr.bf16.mxu0 0
      %5082 = vmatpush2.bf16.msra.mxu0 0
      %5083 = vmatprep.mubr.bf16.mxu0 0
      %5084 = vmatmul.mubr.bf16.gmra.mxu0 %v5043
      %v5085 = vpop.f32.mrf.mxu0
      %v5086 = vadd.f32 0.0, %v5085
      %v5087 = vpop.f32.mrf.mxu0
      %v5088 = vadd.f32 0.0, %v5087
      %v5089 = vpop.f32.mrf.mxu0
      %v5090 = vpop.f32.mrf.mxu0
      %5091 = vdwg.mxu0
      %v5092 = vadd.f32 %v4822, %v5086
      %v5093 = vadd.f32 %v4823, %v5088
      %v5094 = vld [vmem:[#allocation2 + $0x2] sm:$0xff]
      %v5095 = vld [vmem:[#allocation2 + $0xa] sm:$0xff]
      %v5096 = vld [vmem:[#allocation2 + $0x1a] sm:$0xff]
      %v5097 = vld [vmem:[#allocation2 + $0x22] sm:$0xff]
      %v5098 = vld [vmem:[#allocation2 + $0x32] sm:$0xff]
      %v5099 = vld [vmem:[#allocation2 + $0x3a] sm:$0xff]
      %v5100 = vld [vmem:[#allocation2 + $0x4a] sm:$0xff]
      %v5101 = vld [vmem:[#allocation2 + $0x52] sm:$0xff]
      %5110 = vrot.lane.b32.xlu0 %v5094, 127
      %v5111 = vpop.permute.xlu0 %5110
      %5112 = vrot.lane.b32.xlu0 %v5095, 127
      %v5113 = vpop.permute.xlu0 %5112
      %5114 = vrot.lane.b32.xlu0 %v5096, 127
      %v5115 = vpop.permute.xlu0 %5114
      %5116 = vrot.lane.b32.xlu0 %v5097, 127
      %v5117 = vpop.permute.xlu0 %5116
      %5118 = vrot.lane.b32.xlu0 %v5098, 127
      %v5119 = vpop.permute.xlu0 %5118
      %5120 = vrot.lane.b32.xlu0 %v5099, 127
      %v5121 = vpop.permute.xlu0 %5120
      %5122 = vrot.lane.b32.xlu0 %v5100, 127
      %v5123 = vpop.permute.xlu0 %5122
      %5124 = vrot.lane.b32.xlu0 %v5101, 127
      %v5125 = vpop.permute.xlu0 %5124
      %v5134 = vcombine.low %v5111, %v5119
      %v5135 = vcombine.high %v5111, %v5119
      %v5137 = vunpack.c.l.s4 1983009808
      %v5138 = vunpack.c.0.s8 %v5137
      %v5139 = vlaneseq
      %v5140 = vshrl.u32 %v5139, 7
      %v5141 = vsub.s32 %v5138, %v5140
      %v5142 = vrot.slane %v5134, %v5141
      %v5144 = vunpack.c.l.s4 1983009808
      %v5145 = vunpack.c.0.s8 %v5144
      %v5146 = vlaneseq
      %v5147 = vshrl.u32 %v5146, 7
      %v5148 = vsub.s32 %v5145, %v5147
      %v5149 = vrot.slane %v5135, %v5148
      %v5150 = vcombine.low %v5115, %v5123
      %v5151 = vcombine.high %v5115, %v5123
      %v5153 = vunpack.c.l.s4 1983009808
      %v5154 = vunpack.c.0.s8 %v5153
      %v5155 = vlaneseq
      %v5156 = vshrl.u32 %v5155, 7
      %v5157 = vsub.s32 %v5154, %v5156
      %v5158 = vrot.slane %v5150, %v5157
      %v5160 = vunpack.c.l.s4 1983009808
      %v5161 = vunpack.c.0.s8 %v5160
      %v5162 = vlaneseq
      %v5163 = vshrl.u32 %v5162, 7
      %v5164 = vsub.s32 %v5161, %v5163
      %v5165 = vrot.slane %v5151, %v5164
      %v5166 = vcombine.low %v5142, %v5158
      %v5167 = vcombine.high %v5142, %v5158
      %v5169 = vunpack.c.l.s4 1934713408
      %v5170 = vunpack.c.0.s8 %v5169
      %v5171 = vlaneseq
      %v5172 = vshrl.u32 %v5171, 7
      %v5173 = vsub.s32 %v5170, %v5172
      %v5174 = vrot.slane %v5166, %v5173
      %v5176 = vunpack.c.l.s4 1934713408
      %v5177 = vunpack.c.0.s8 %v5176
      %v5178 = vlaneseq
      %v5179 = vshrl.u32 %v5178, 7
      %v5180 = vsub.s32 %v5177, %v5179
      %v5181 = vrot.slane %v5167, %v5180
      %v5182 = vcombine.low %v5149, %v5165
      %v5183 = vcombine.high %v5149, %v5165
      %v5185 = vunpack.c.l.s4 1934713408
      %v5186 = vunpack.c.0.s8 %v5185
      %v5187 = vlaneseq
      %v5188 = vshrl.u32 %v5187, 7
      %v5189 = vsub.s32 %v5186, %v5188
      %v5190 = vrot.slane %v5182, %v5189
      %v5192 = vunpack.c.l.s4 1934713408
      %v5193 = vunpack.c.0.s8 %v5192
      %v5194 = vlaneseq
      %v5195 = vshrl.u32 %v5194, 7
      %v5196 = vsub.s32 %v5193, %v5195
      %v5197 = vrot.slane %v5183, %v5196
      %v5198 = vcombine.high %v5174, 0.0
      %v5199 = vcombine.high %v5181, 0.0
      %v5200 = vcombine.high %v5190, 0.0
      %v5201 = vcombine.high %v5197, 0.0
      %v5202 = vcombine.low %v5113, %v5121
      %v5203 = vcombine.high %v5113, %v5121
      %v5205 = vunpack.c.l.s4 1983009808
      %v5206 = vunpack.c.0.s8 %v5205
      %v5207 = vlaneseq
      %v5208 = vshrl.u32 %v5207, 7
      %v5209 = vsub.s32 %v5206, %v5208
      %v5210 = vrot.slane %v5202, %v5209
      %v5212 = vunpack.c.l.s4 1983009808
      %v5213 = vunpack.c.0.s8 %v5212
      %v5214 = vlaneseq
      %v5215 = vshrl.u32 %v5214, 7
      %v5216 = vsub.s32 %v5213, %v5215
      %v5217 = vrot.slane %v5203, %v5216
      %v5218 = vcombine.low %v5117, %v5125
      %v5219 = vcombine.high %v5117, %v5125
      %v5221 = vunpack.c.l.s4 1983009808
      %v5222 = vunpack.c.0.s8 %v5221
      %v5223 = vlaneseq
      %v5224 = vshrl.u32 %v5223, 7
      %v5225 = vsub.s32 %v5222, %v5224
      %v5226 = vrot.slane %v5218, %v5225
      %v5228 = vunpack.c.l.s4 1983009808
      %v5229 = vunpack.c.0.s8 %v5228
      %v5230 = vlaneseq
      %v5231 = vshrl.u32 %v5230, 7
      %v5232 = vsub.s32 %v5229, %v5231
      %v5233 = vrot.slane %v5219, %v5232
      %v5234 = vcombine.low %v5210, %v5226
      %v5235 = vcombine.high %v5210, %v5226
      %v5237 = vunpack.c.l.s4 1934713408
      %v5238 = vunpack.c.0.s8 %v5237
      %v5239 = vlaneseq
      %v5240 = vshrl.u32 %v5239, 7
      %v5241 = vsub.s32 %v5238, %v5240
      %v5242 = vrot.slane %v5234, %v5241
      %v5244 = vunpack.c.l.s4 1934713408
      %v5245 = vunpack.c.0.s8 %v5244
      %v5246 = vlaneseq
      %v5247 = vshrl.u32 %v5246, 7
      %v5248 = vsub.s32 %v5245, %v5247
      %v5249 = vrot.slane %v5235, %v5248
      %v5250 = vcombine.low %v5217, %v5233
      %v5251 = vcombine.high %v5217, %v5233
      %v5253 = vunpack.c.l.s4 1934713408
      %v5254 = vunpack.c.0.s8 %v5253
      %v5255 = vlaneseq
      %v5256 = vshrl.u32 %v5255, 7
      %v5257 = vsub.s32 %v5254, %v5256
      %v5258 = vrot.slane %v5250, %v5257
      %v5260 = vunpack.c.l.s4 1934713408
      %v5261 = vunpack.c.0.s8 %v5260
      %v5262 = vlaneseq
      %v5263 = vshrl.u32 %v5262, 7
      %v5264 = vsub.s32 %v5261, %v5263
      %v5265 = vrot.slane %v5251, %v5264
      %v5266 = vcombine.high %v5242, 0.0
      %v5267 = vcombine.high %v5249, 0.0
      %v5268 = vcombine.high %v5258, 0.0
      %v5269 = vcombine.high %v5265, 0.0
      %5271 = vrot.lane.b32.xlu0 %v5198, 16
      %v5272 = vpop.permute.xlu0 %5271
      %5275 = vrot.lane.b32.xlu0 %v5181, 32
      %v5276 = vpop.permute.xlu0 %5275
      %5279 = vrot.lane.b32.xlu0 %v5199, 48
      %v5280 = vpop.permute.xlu0 %5279
      %5283 = vrot.lane.b32.xlu0 %v5190, 64
      %v5284 = vpop.permute.xlu0 %5283
      %5287 = vrot.lane.b32.xlu0 %v5200, 80
      %v5288 = vpop.permute.xlu0 %5287
      %5291 = vrot.lane.b32.xlu0 %v5197, 96
      %v5292 = vpop.permute.xlu0 %5291
      %5295 = vrot.lane.b32.xlu0 %v5201, 112
      %v5296 = vpop.permute.xlu0 %5295
      %5299 = vrot.lane.b32.xlu0 %v5266, 16
      %v5300 = vpop.permute.xlu0 %5299
      %5303 = vrot.lane.b32.xlu0 %v5249, 32
      %v5304 = vpop.permute.xlu0 %5303
      %5307 = vrot.lane.b32.xlu0 %v5267, 48
      %v5308 = vpop.permute.xlu0 %5307
      %5311 = vrot.lane.b32.xlu0 %v5258, 64
      %v5312 = vpop.permute.xlu0 %5311
      %5315 = vrot.lane.b32.xlu0 %v5268, 80
      %v5316 = vpop.permute.xlu0 %5315
      %5319 = vrot.lane.b32.xlu0 %v5265, 96
      %v5320 = vpop.permute.xlu0 %5319
      %5323 = vrot.lane.b32.xlu0 %v5269, 112
      %v5324 = vpop.permute.xlu0 %5323
      %v5326 = vsel %vm426, %v5174, %v5272
      %v5327 = vsel %vm428, %v5326, %v5276
      %v5328 = vsel %vm430, %v5327, %v5280
      %v5329 = vsel %vm432, %v5328, %v5284
      %v5330 = vsel %vm434, %v5329, %v5288
      %v5331 = vsel %vm436, %v5330, %v5292
      %v5332 = vsel %vm438, %v5331, %v5296
      %v5333 = vsel %vm426, %v5242, %v5300
      %v5334 = vsel %vm428, %v5333, %v5304
      %v5335 = vsel %vm430, %v5334, %v5308
      %v5336 = vsel %vm432, %v5335, %v5312
      %v5337 = vsel %vm434, %v5336, %v5316
      %v5338 = vsel %vm436, %v5337, %v5320
      %v5339 = vsel %vm438, %v5338, %v5324
      %v5340 = vpack.c.bf16 %v5332, %v5332
      %v5341 = vpack.c.bf16 %v5339, %v5339
      %s5342 = scalar_lea.vmem %s3, 14
      %v5343 = vld [vmem:[%s5342] sm:$0x3]
      %v5345 = vsel %vm692, %v5343, 0
      %v5348 = vsel %vm696, %v5340, 0
      %v5351 = vsel %vm696, %v5341, 0
      %5353 = vmatprep.subr.bf16.mxu0 0
      %5354 = vmatpush1.bf16.msra.mxu0 0
      %5355 = vmatprep.subr.bf16.mxu0 0
      %5356 = vmatpush1.bf16.msra.mxu0 0
      %5357 = vmatprep.subr.bf16.mxu0 0
      %5358 = vmatpush1.bf16.msra.mxu0 0
      %5359 = vmatprep.subr.bf16.mxu0 0
      %5360 = vmatpush1.bf16.msra.mxu0 0
      %5361 = vmatprep.subr.bf16.mxu0 0
      %5362 = vmatpush1.bf16.msra.mxu0 0
      %5363 = vmatprep.subr.bf16.mxu0 0
      %5364 = vmatpush1.bf16.msra.mxu0 0
      %5365 = vmatprep.subr.bf16.mxu0 0
      %5366 = vmatpush1.bf16.msra.mxu0 0
      %5367 = vmatprep.subr.bf16.mxu0 %v5351
      %5368 = vmatpush1.bf16.msra.mxu0 %v5348
      %5369 = vmatprep.subr.bf16.mxu0 0
      %5370 = vmatpush2.bf16.msra.mxu0 0
      %5371 = vmatprep.subr.bf16.mxu0 0
      %5372 = vmatpush2.bf16.msra.mxu0 0
      %5373 = vmatprep.subr.bf16.mxu0 0
      %5374 = vmatpush2.bf16.msra.mxu0 0
      %5375 = vmatprep.subr.bf16.mxu0 0
      %5376 = vmatpush2.bf16.msra.mxu0 0
      %5377 = vmatprep.subr.bf16.mxu0 0
      %5378 = vmatpush2.bf16.msra.mxu0 0
      %5379 = vmatprep.subr.bf16.mxu0 0
      %5380 = vmatpush2.bf16.msra.mxu0 0
      %5381 = vmatprep.subr.bf16.mxu0 0
      %5382 = vmatpush2.bf16.msra.mxu0 0
      %5383 = vmatprep.subr.bf16.mxu0 0
      %5384 = vmatpush2.bf16.msra.mxu0 0
      %5385 = vmatprep.mubr.bf16.mxu0 0
      %5386 = vmatmul.mubr.bf16.gmra.mxu0 %v5345
      %v5387 = vpop.f32.mrf.mxu0
      %v5388 = vadd.f32 0.0, %v5387
      %v5389 = vpop.f32.mrf.mxu0
      %v5390 = vadd.f32 0.0, %v5389
      %v5391 = vpop.f32.mrf.mxu0
      %v5392 = vpop.f32.mrf.mxu0
      %5393 = vdwg.mxu0
      %v5394 = vadd.f32 %v5092, %v5388
      %v5395 = vadd.f32 %v5093, %v5390
      %v5396 = vld [vmem:[#allocation2 + $0x2] sm:$0xff]
      %v5397 = vld [vmem:[#allocation2 + $0xa] sm:$0xff]
      %v5398 = vld [vmem:[#allocation2 + $0x1a] sm:$0xff]
      %v5399 = vld [vmem:[#allocation2 + $0x22] sm:$0xff]
      %v5400 = vld [vmem:[#allocation2 + $0x32] sm:$0xff]
      %v5401 = vld [vmem:[#allocation2 + $0x3a] sm:$0xff]
      %v5402 = vld [vmem:[#allocation2 + $0x4a] sm:$0xff]
      %v5403 = vld [vmem:[#allocation2 + $0x52] sm:$0xff]
      %5412 = vrot.lane.b32.xlu0 %v5396, 126
      %v5413 = vpop.permute.xlu0 %5412
      %5414 = vrot.lane.b32.xlu0 %v5397, 126
      %v5415 = vpop.permute.xlu0 %5414
      %5416 = vrot.lane.b32.xlu0 %v5398, 126
      %v5417 = vpop.permute.xlu0 %5416
      %5418 = vrot.lane.b32.xlu0 %v5399, 126
      %v5419 = vpop.permute.xlu0 %5418
      %5420 = vrot.lane.b32.xlu0 %v5400, 126
      %v5421 = vpop.permute.xlu0 %5420
      %5422 = vrot.lane.b32.xlu0 %v5401, 126
      %v5423 = vpop.permute.xlu0 %5422
      %5424 = vrot.lane.b32.xlu0 %v5402, 126
      %v5425 = vpop.permute.xlu0 %5424
      %5426 = vrot.lane.b32.xlu0 %v5403, 126
      %v5427 = vpop.permute.xlu0 %5426
      %v5436 = vcombine.low %v5413, %v5421
      %v5437 = vcombine.high %v5413, %v5421
      %v5439 = vunpack.c.l.s4 1983009808
      %v5440 = vunpack.c.0.s8 %v5439
      %v5441 = vlaneseq
      %v5442 = vshrl.u32 %v5441, 7
      %v5443 = vsub.s32 %v5440, %v5442
      %v5444 = vrot.slane %v5436, %v5443
      %v5446 = vunpack.c.l.s4 1983009808
      %v5447 = vunpack.c.0.s8 %v5446
      %v5448 = vlaneseq
      %v5449 = vshrl.u32 %v5448, 7
      %v5450 = vsub.s32 %v5447, %v5449
      %v5451 = vrot.slane %v5437, %v5450
      %v5452 = vcombine.low %v5417, %v5425
      %v5453 = vcombine.high %v5417, %v5425
      %v5455 = vunpack.c.l.s4 1983009808
      %v5456 = vunpack.c.0.s8 %v5455
      %v5457 = vlaneseq
      %v5458 = vshrl.u32 %v5457, 7
      %v5459 = vsub.s32 %v5456, %v5458
      %v5460 = vrot.slane %v5452, %v5459
      %v5462 = vunpack.c.l.s4 1983009808
      %v5463 = vunpack.c.0.s8 %v5462
      %v5464 = vlaneseq
      %v5465 = vshrl.u32 %v5464, 7
      %v5466 = vsub.s32 %v5463, %v5465
      %v5467 = vrot.slane %v5453, %v5466
      %v5468 = vcombine.low %v5444, %v5460
      %v5469 = vcombine.high %v5444, %v5460
      %v5471 = vunpack.c.l.s4 1934713408
      %v5472 = vunpack.c.0.s8 %v5471
      %v5473 = vlaneseq
      %v5474 = vshrl.u32 %v5473, 7
      %v5475 = vsub.s32 %v5472, %v5474
      %v5476 = vrot.slane %v5468, %v5475
      %v5478 = vunpack.c.l.s4 1934713408
      %v5479 = vunpack.c.0.s8 %v5478
      %v5480 = vlaneseq
      %v5481 = vshrl.u32 %v5480, 7
      %v5482 = vsub.s32 %v5479, %v5481
      %v5483 = vrot.slane %v5469, %v5482
      %v5484 = vcombine.low %v5451, %v5467
      %v5485 = vcombine.high %v5451, %v5467
      %v5487 = vunpack.c.l.s4 1934713408
      %v5488 = vunpack.c.0.s8 %v5487
      %v5489 = vlaneseq
      %v5490 = vshrl.u32 %v5489, 7
      %v5491 = vsub.s32 %v5488, %v5490
      %v5492 = vrot.slane %v5484, %v5491
      %v5494 = vunpack.c.l.s4 1934713408
      %v5495 = vunpack.c.0.s8 %v5494
      %v5496 = vlaneseq
      %v5497 = vshrl.u32 %v5496, 7
      %v5498 = vsub.s32 %v5495, %v5497
      %v5499 = vrot.slane %v5485, %v5498
      %v5500 = vcombine.high %v5476, 0.0
      %v5501 = vcombine.high %v5483, 0.0
      %v5502 = vcombine.high %v5492, 0.0
      %v5503 = vcombine.high %v5499, 0.0
      %v5504 = vcombine.low %v5415, %v5423
      %v5505 = vcombine.high %v5415, %v5423
      %v5507 = vunpack.c.l.s4 1983009808
      %v5508 = vunpack.c.0.s8 %v5507
      %v5509 = vlaneseq
      %v5510 = vshrl.u32 %v5509, 7
      %v5511 = vsub.s32 %v5508, %v5510
      %v5512 = vrot.slane %v5504, %v5511
      %v5514 = vunpack.c.l.s4 1983009808
      %v5515 = vunpack.c.0.s8 %v5514
      %v5516 = vlaneseq
      %v5517 = vshrl.u32 %v5516, 7
      %v5518 = vsub.s32 %v5515, %v5517
      %v5519 = vrot.slane %v5505, %v5518
      %v5520 = vcombine.low %v5419, %v5427
      %v5521 = vcombine.high %v5419, %v5427
      %v5523 = vunpack.c.l.s4 1983009808
      %v5524 = vunpack.c.0.s8 %v5523
      %v5525 = vlaneseq
      %v5526 = vshrl.u32 %v5525, 7
      %v5527 = vsub.s32 %v5524, %v5526
      %v5528 = vrot.slane %v5520, %v5527
      %v5530 = vunpack.c.l.s4 1983009808
      %v5531 = vunpack.c.0.s8 %v5530
      %v5532 = vlaneseq
      %v5533 = vshrl.u32 %v5532, 7
      %v5534 = vsub.s32 %v5531, %v5533
      %v5535 = vrot.slane %v5521, %v5534
      %v5536 = vcombine.low %v5512, %v5528
      %v5537 = vcombine.high %v5512, %v5528
      %v5539 = vunpack.c.l.s4 1934713408
      %v5540 = vunpack.c.0.s8 %v5539
      %v5541 = vlaneseq
      %v5542 = vshrl.u32 %v5541, 7
      %v5543 = vsub.s32 %v5540, %v5542
      %v5544 = vrot.slane %v5536, %v5543
      %v5546 = vunpack.c.l.s4 1934713408
      %v5547 = vunpack.c.0.s8 %v5546
      %v5548 = vlaneseq
      %v5549 = vshrl.u32 %v5548, 7
      %v5550 = vsub.s32 %v5547, %v5549
      %v5551 = vrot.slane %v5537, %v5550
      %v5552 = vcombine.low %v5519, %v5535
      %v5553 = vcombine.high %v5519, %v5535
      %v5555 = vunpack.c.l.s4 1934713408
      %v5556 = vunpack.c.0.s8 %v5555
      %v5557 = vlaneseq
      %v5558 = vshrl.u32 %v5557, 7
      %v5559 = vsub.s32 %v5556, %v5558
      %v5560 = vrot.slane %v5552, %v5559
      %v5562 = vunpack.c.l.s4 1934713408
      %v5563 = vunpack.c.0.s8 %v5562
      %v5564 = vlaneseq
      %v5565 = vshrl.u32 %v5564, 7
      %v5566 = vsub.s32 %v5563, %v5565
      %v5567 = vrot.slane %v5553, %v5566
      %v5568 = vcombine.high %v5544, 0.0
      %v5569 = vcombine.high %v5551, 0.0
      %v5570 = vcombine.high %v5560, 0.0
      %v5571 = vcombine.high %v5567, 0.0
      %5573 = vrot.lane.b32.xlu0 %v5500, 16
      %v5574 = vpop.permute.xlu0 %5573
      %5577 = vrot.lane.b32.xlu0 %v5483, 32
      %v5578 = vpop.permute.xlu0 %5577
      %5581 = vrot.lane.b32.xlu0 %v5501, 48
      %v5582 = vpop.permute.xlu0 %5581
      %5585 = vrot.lane.b32.xlu0 %v5492, 64
      %v5586 = vpop.permute.xlu0 %5585
      %5589 = vrot.lane.b32.xlu0 %v5502, 80
      %v5590 = vpop.permute.xlu0 %5589
      %5593 = vrot.lane.b32.xlu0 %v5499, 96
      %v5594 = vpop.permute.xlu0 %5593
      %5597 = vrot.lane.b32.xlu0 %v5503, 112
      %v5598 = vpop.permute.xlu0 %5597
      %5601 = vrot.lane.b32.xlu0 %v5568, 16
      %v5602 = vpop.permute.xlu0 %5601
      %5605 = vrot.lane.b32.xlu0 %v5551, 32
      %v5606 = vpop.permute.xlu0 %5605
      %5609 = vrot.lane.b32.xlu0 %v5569, 48
      %v5610 = vpop.permute.xlu0 %5609
      %5613 = vrot.lane.b32.xlu0 %v5560, 64
      %v5614 = vpop.permute.xlu0 %5613
      %5617 = vrot.lane.b32.xlu0 %v5570, 80
      %v5618 = vpop.permute.xlu0 %5617
      %5621 = vrot.lane.b32.xlu0 %v5567, 96
      %v5622 = vpop.permute.xlu0 %5621
      %5625 = vrot.lane.b32.xlu0 %v5571, 112
      %v5626 = vpop.permute.xlu0 %5625
      %v5628 = vsel %vm426, %v5476, %v5574
      %v5629 = vsel %vm428, %v5628, %v5578
      %v5630 = vsel %vm430, %v5629, %v5582
      %v5631 = vsel %vm432, %v5630, %v5586
      %v5632 = vsel %vm434, %v5631, %v5590
      %v5633 = vsel %vm436, %v5632, %v5594
      %v5634 = vsel %vm438, %v5633, %v5598
      %v5635 = vsel %vm426, %v5544, %v5602
      %v5636 = vsel %vm428, %v5635, %v5606
      %v5637 = vsel %vm430, %v5636, %v5610
      %v5638 = vsel %vm432, %v5637, %v5614
      %v5639 = vsel %vm434, %v5638, %v5618
      %v5640 = vsel %vm436, %v5639, %v5622
      %v5641 = vsel %vm438, %v5640, %v5626
      %v5642 = vpack.c.bf16 %v5634, %v5634
      %v5643 = vpack.c.bf16 %v5641, %v5641
      %s5644 = scalar_lea.vmem %s3, 16
      %v5645 = vld [vmem:[%s5644] sm:$0x3]
      %v5647 = vsel %vm692, %v5645, 0
      %v5650 = vsel %vm696, %v5642, 0
      %v5653 = vsel %vm696, %v5643, 0
      %5655 = vmatprep.subr.bf16.mxu0 0
      %5656 = vmatpush1.bf16.msra.mxu0 0
      %5657 = vmatprep.subr.bf16.mxu0 0
      %5658 = vmatpush1.bf16.msra.mxu0 0
      %5659 = vmatprep.subr.bf16.mxu0 0
      %5660 = vmatpush1.bf16.msra.mxu0 0
      %5661 = vmatprep.subr.bf16.mxu0 0
      %5662 = vmatpush1.bf16.msra.mxu0 0
      %5663 = vmatprep.subr.bf16.mxu0 0
      %5664 = vmatpush1.bf16.msra.mxu0 0
      %5665 = vmatprep.subr.bf16.mxu0 0
      %5666 = vmatpush1.bf16.msra.mxu0 0
      %5667 = vmatprep.subr.bf16.mxu0 0
      %5668 = vmatpush1.bf16.msra.mxu0 0
      %5669 = vmatprep.subr.bf16.mxu0 %v5653
      %5670 = vmatpush1.bf16.msra.mxu0 %v5650
      %5671 = vmatprep.subr.bf16.mxu0 0
      %5672 = vmatpush2.bf16.msra.mxu0 0
      %5673 = vmatprep.subr.bf16.mxu0 0
      %5674 = vmatpush2.bf16.msra.mxu0 0
      %5675 = vmatprep.subr.bf16.mxu0 0
      %5676 = vmatpush2.bf16.msra.mxu0 0
      %5677 = vmatprep.subr.bf16.mxu0 0
      %5678 = vmatpush2.bf16.msra.mxu0 0
      %5679 = vmatprep.subr.bf16.mxu0 0
      %5680 = vmatpush2.bf16.msra.mxu0 0
      %5681 = vmatprep.subr.bf16.mxu0 0
      %5682 = vmatpush2.bf16.msra.mxu0 0
      %5683 = vmatprep.subr.bf16.mxu0 0
      %5684 = vmatpush2.bf16.msra.mxu0 0
      %5685 = vmatprep.subr.bf16.mxu0 0
      %5686 = vmatpush2.bf16.msra.mxu0 0
      %5687 = vmatprep.mubr.bf16.mxu0 0
      %5688 = vmatmul.mubr.bf16.gmra.mxu0 %v5647
      %v5689 = vpop.f32.mrf.mxu0
      %v5690 = vadd.f32 0.0, %v5689
      %v5691 = vpop.f32.mrf.mxu0
      %v5692 = vadd.f32 0.0, %v5691
      %v5693 = vpop.f32.mrf.mxu0
      %v5694 = vpop.f32.mrf.mxu0
      %5695 = vdwg.mxu0
      %v5696 = vadd.f32 %v5394, %v5690
      %v5697 = vadd.f32 %v5395, %v5692
      %v5698 = vld [vmem:[%s4] sm:$0xf]
      %5700 = vset.pattern.permute.xlu0 0
      %5701 = vperm.xlu0 %5700, %v5698
      %v5702 = vpop.permute.xlu0 %5701
      %v5704 = vadd.f32 %v5696, %v5702
      %v5705 = vadd.f32 %v5697, %v5702
      %v5706 = vld [vmem:[%s219 + $0x1] sm:$0xff]
      %v5707 = vld [vmem:[%s219 + $0x9] sm:$0xff]
      %v5708 = vld [vmem:[%s219 + $0x19] sm:$0xff]
      %v5709 = vld [vmem:[%s219 + $0x21] sm:$0xff]
      %v5710 = vld [vmem:[%s219 + $0x31] sm:$0xff]
      %v5711 = vld [vmem:[%s219 + $0x39] sm:$0xff]
      %v5712 = vld [vmem:[%s219 + $0x49] sm:$0xff]
      %v5713 = vld [vmem:[%s219 + $0x51] sm:$0xff]
      %5722 = vrot.lane.b32.xlu0 %v5706, 127
      %v5723 = vpop.permute.xlu0 %5722
      %5724 = vrot.lane.b32.xlu0 %v5707, 127
      %v5725 = vpop.permute.xlu0 %5724
      %5726 = vrot.lane.b32.xlu0 %v5708, 127
      %v5727 = vpop.permute.xlu0 %5726
      %5728 = vrot.lane.b32.xlu0 %v5709, 127
      %v5729 = vpop.permute.xlu0 %5728
      %5730 = vrot.lane.b32.xlu0 %v5710, 127
      %v5731 = vpop.permute.xlu0 %5730
      %5732 = vrot.lane.b32.xlu0 %v5711, 127
      %v5733 = vpop.permute.xlu0 %5732
      %5734 = vrot.lane.b32.xlu0 %v5712, 127
      %v5735 = vpop.permute.xlu0 %5734
      %5736 = vrot.lane.b32.xlu0 %v5713, 127
      %v5737 = vpop.permute.xlu0 %5736
      %v5746 = vcombine.low %v5723, %v5731
      %v5747 = vcombine.high %v5723, %v5731
      %v5749 = vunpack.c.l.s4 1983009808
      %v5750 = vunpack.c.0.s8 %v5749
      %v5751 = vlaneseq
      %v5752 = vshrl.u32 %v5751, 7
      %v5753 = vsub.s32 %v5750, %v5752
      %v5754 = vrot.slane %v5746, %v5753
      %v5756 = vunpack.c.l.s4 1983009808
      %v5757 = vunpack.c.0.s8 %v5756
      %v5758 = vlaneseq
      %v5759 = vshrl.u32 %v5758, 7
      %v5760 = vsub.s32 %v5757, %v5759
      %v5761 = vrot.slane %v5747, %v5760
      %v5762 = vcombine.low %v5727, %v5735
      %v5763 = vcombine.high %v5727, %v5735
      %v5765 = vunpack.c.l.s4 1983009808
      %v5766 = vunpack.c.0.s8 %v5765
      %v5767 = vlaneseq
      %v5768 = vshrl.u32 %v5767, 7
      %v5769 = vsub.s32 %v5766, %v5768
      %v5770 = vrot.slane %v5762, %v5769
      %v5772 = vunpack.c.l.s4 1983009808
      %v5773 = vunpack.c.0.s8 %v5772
      %v5774 = vlaneseq
      %v5775 = vshrl.u32 %v5774, 7
      %v5776 = vsub.s32 %v5773, %v5775
      %v5777 = vrot.slane %v5763, %v5776
      %v5778 = vcombine.low %v5754, %v5770
      %v5779 = vcombine.high %v5754, %v5770
      %v5781 = vunpack.c.l.s4 1934713408
      %v5782 = vunpack.c.0.s8 %v5781
      %v5783 = vlaneseq
      %v5784 = vshrl.u32 %v5783, 7
      %v5785 = vsub.s32 %v5782, %v5784
      %v5786 = vrot.slane %v5778, %v5785
      %v5788 = vunpack.c.l.s4 1934713408
      %v5789 = vunpack.c.0.s8 %v5788
      %v5790 = vlaneseq
      %v5791 = vshrl.u32 %v5790, 7
      %v5792 = vsub.s32 %v5789, %v5791
      %v5793 = vrot.slane %v5779, %v5792
      %v5794 = vcombine.low %v5761, %v5777
      %v5795 = vcombine.high %v5761, %v5777
      %v5797 = vunpack.c.l.s4 1934713408
      %v5798 = vunpack.c.0.s8 %v5797
      %v5799 = vlaneseq
      %v5800 = vshrl.u32 %v5799, 7
      %v5801 = vsub.s32 %v5798, %v5800
      %v5802 = vrot.slane %v5794, %v5801
      %v5804 = vunpack.c.l.s4 1934713408
      %v5805 = vunpack.c.0.s8 %v5804
      %v5806 = vlaneseq
      %v5807 = vshrl.u32 %v5806, 7
      %v5808 = vsub.s32 %v5805, %v5807
      %v5809 = vrot.slane %v5795, %v5808
      %v5810 = vcombine.high %v5786, 0.0
      %v5811 = vcombine.high %v5793, 0.0
      %v5812 = vcombine.high %v5802, 0.0
      %v5813 = vcombine.high %v5809, 0.0
      %v5814 = vcombine.low %v5725, %v5733
      %v5815 = vcombine.high %v5725, %v5733
      %v5817 = vunpack.c.l.s4 1983009808
      %v5818 = vunpack.c.0.s8 %v5817
      %v5819 = vlaneseq
      %v5820 = vshrl.u32 %v5819, 7
      %v5821 = vsub.s32 %v5818, %v5820
      %v5822 = vrot.slane %v5814, %v5821
      %v5824 = vunpack.c.l.s4 1983009808
      %v5825 = vunpack.c.0.s8 %v5824
      %v5826 = vlaneseq
      %v5827 = vshrl.u32 %v5826, 7
      %v5828 = vsub.s32 %v5825, %v5827
      %v5829 = vrot.slane %v5815, %v5828
      %v5830 = vcombine.low %v5729, %v5737
      %v5831 = vcombine.high %v5729, %v5737
      %v5833 = vunpack.c.l.s4 1983009808
      %v5834 = vunpack.c.0.s8 %v5833
      %v5835 = vlaneseq
      %v5836 = vshrl.u32 %v5835, 7
      %v5837 = vsub.s32 %v5834, %v5836
      %v5838 = vrot.slane %v5830, %v5837
      %v5840 = vunpack.c.l.s4 1983009808
      %v5841 = vunpack.c.0.s8 %v5840
      %v5842 = vlaneseq
      %v5843 = vshrl.u32 %v5842, 7
      %v5844 = vsub.s32 %v5841, %v5843
      %v5845 = vrot.slane %v5831, %v5844
      %v5846 = vcombine.low %v5822, %v5838
      %v5847 = vcombine.high %v5822, %v5838
      %v5849 = vunpack.c.l.s4 1934713408
      %v5850 = vunpack.c.0.s8 %v5849
      %v5851 = vlaneseq
      %v5852 = vshrl.u32 %v5851, 7
      %v5853 = vsub.s32 %v5850, %v5852
      %v5854 = vrot.slane %v5846, %v5853
      %v5856 = vunpack.c.l.s4 1934713408
      %v5857 = vunpack.c.0.s8 %v5856
      %v5858 = vlaneseq
      %v5859 = vshrl.u32 %v5858, 7
      %v5860 = vsub.s32 %v5857, %v5859
      %v5861 = vrot.slane %v5847, %v5860
      %v5862 = vcombine.low %v5829, %v5845
      %v5863 = vcombine.high %v5829, %v5845
      %v5865 = vunpack.c.l.s4 1934713408
      %v5866 = vunpack.c.0.s8 %v5865
      %v5867 = vlaneseq
      %v5868 = vshrl.u32 %v5867, 7
      %v5869 = vsub.s32 %v5866, %v5868
      %v5870 = vrot.slane %v5862, %v5869
      %v5872 = vunpack.c.l.s4 1934713408
      %v5873 = vunpack.c.0.s8 %v5872
      %v5874 = vlaneseq
      %v5875 = vshrl.u32 %v5874, 7
      %v5876 = vsub.s32 %v5873, %v5875
      %v5877 = vrot.slane %v5863, %v5876
      %v5878 = vcombine.high %v5854, 0.0
      %v5879 = vcombine.high %v5861, 0.0
      %v5880 = vcombine.high %v5870, 0.0
      %v5881 = vcombine.high %v5877, 0.0
      %5883 = vrot.lane.b32.xlu0 %v5810, 16
      %v5884 = vpop.permute.xlu0 %5883
      %5887 = vrot.lane.b32.xlu0 %v5793, 32
      %v5888 = vpop.permute.xlu0 %5887
      %5891 = vrot.lane.b32.xlu0 %v5811, 48
      %v5892 = vpop.permute.xlu0 %5891
      %5895 = vrot.lane.b32.xlu0 %v5802, 64
      %v5896 = vpop.permute.xlu0 %5895
      %5899 = vrot.lane.b32.xlu0 %v5812, 80
      %v5900 = vpop.permute.xlu0 %5899
      %5903 = vrot.lane.b32.xlu0 %v5809, 96
      %v5904 = vpop.permute.xlu0 %5903
      %5907 = vrot.lane.b32.xlu0 %v5813, 112
      %v5908 = vpop.permute.xlu0 %5907
      %5911 = vrot.lane.b32.xlu0 %v5878, 16
      %v5912 = vpop.permute.xlu0 %5911
      %5915 = vrot.lane.b32.xlu0 %v5861, 32
      %v5916 = vpop.permute.xlu0 %5915
      %5919 = vrot.lane.b32.xlu0 %v5879, 48
      %v5920 = vpop.permute.xlu0 %5919
      %5923 = vrot.lane.b32.xlu0 %v5870, 64
      %v5924 = vpop.permute.xlu0 %5923
      %5927 = vrot.lane.b32.xlu0 %v5880, 80
      %v5928 = vpop.permute.xlu0 %5927
      %5931 = vrot.lane.b32.xlu0 %v5877, 96
      %v5932 = vpop.permute.xlu0 %5931
      %5935 = vrot.lane.b32.xlu0 %v5881, 112
      %v5936 = vpop.permute.xlu0 %5935
      %v5938 = vsel %vm426, %v5786, %v5884
      %v5939 = vsel %vm428, %v5938, %v5888
      %v5940 = vsel %vm430, %v5939, %v5892
      %v5941 = vsel %vm432, %v5940, %v5896
      %v5942 = vsel %vm434, %v5941, %v5900
      %v5943 = vsel %vm436, %v5942, %v5904
      %v5944 = vsel %vm438, %v5943, %v5908
      %v5945 = vsel %vm426, %v5854, %v5912
      %v5946 = vsel %vm428, %v5945, %v5916
      %v5947 = vsel %vm430, %v5946, %v5920
      %v5948 = vsel %vm432, %v5947, %v5924
      %v5949 = vsel %vm434, %v5948, %v5928
      %v5950 = vsel %vm436, %v5949, %v5932
      %v5951 = vsel %vm438, %v5950, %v5936
      %v5952 = vadd.f32 %v5704, %v5944
      %v5953 = vadd.f32 %v5705, %v5951
      %v5954 = vmax.f32 %v5952, 0.0
      %v5955 = vmax.f32 %v5953, 0.0
      %v5958 = vcombine.low %v5954, %v5955
      %5960 = vst [vmem:[%s224] sm:$0xff] %v5958
      %p5961 = scmp.lt.s32.totalorder %s16, 1
      %s5962 = scalar_select %p5961, %s16, 1
      %s5963 = smul.addr %s5962, 2
      %s5964 = smul.addr %s5963, 4
      %s5965 = scalar_lea.vmem %s5, %s5964
      // Predicated region
      $region41: #{_lambda_.3} parent=39 // pred_check
        %p5966 = pneg %p144
      $region42: #{_lambda_.3} parent=39 // pred_check_branch
        %5968 = sbr.rel (%p5966) target = $region44
      $region43: #{_lambda_.3} parent=39 // pred_region
        _
      $region44: #{_lambda_.3} parent=39 // pred_fallthru
        _
    $region40: #{_lambda_.3} parent=5 // pred_fallthru
      _
    %p5969 = scmp.le.s32.totalorder 2, %s11
    // Predicated region
    $region45: #{_lambda_.3} parent=5 // pred_check
      %p5970 = pneg %p5969
    $region46: #{_lambda_.3} parent=5 // pred_check_branch
      %5972 = sbr.rel (%p5970) target = $region48
    $region47: #{_lambda_.3} parent=5 // pred_region
      %s5973 = ssub.s32 %s11, 2
      // Predicated region
      $region49: #{_lambda_.3} parent=47 // pred_check
        %p5974 = pneg %p150
      $region50: #{_lambda_.3} parent=47 // pred_check_branch
        %5976 = sbr.rel (%p5974) target = $region52
      $region51: #{_lambda_.3} parent=47 // pred_region
        %p5977 = scmp.lt.s32.totalorder %s17, 1
        %s5978 = scalar_select %p5977, %s17, 1
        %s5979 = smul.addr %s5978, 2
        %s5980 = smul.addr %s5979, 4
        %s5981 = scalar_lea.vmem %s5, %s5980
      $region52: #{_lambda_.3} parent=47 // pred_fallthru
        _
    $region48: #{_lambda_.3} parent=5 // pred_fallthru
      _
  $region6: #{_lambda_.3} parent=0 // loop_footer
    %s15 = sadd.s32 1, %s11
  $region7: #{_lambda_.3} parent=0 // loop_footer_branch
    %10 = sbr.rel target = $region3
  $region8: #{_lambda_.3} parent=0 // loop_exit
    _

</llo_original>
